<compile_context>
chip_gen: v5e
topology: v5e:2x2
jax: 0.10.0
libtpu: 0.0.40
codegen_flags: <defaults>
</compile_context>

<pallas_src>
import functools

import jax
import jax.numpy as jnp
from jax import lax
from jax.experimental import pallas as pl
from jax.experimental.pallas import tpu as pltpu

# Scaled-down VGG19 feature stack: 4 conv blocks, hook on the last ReLU of each.
BLOCK_CHANNELS = (8, 16, 32, 64)
BLOCK_CONVS = (2, 2, 4, 4)
N_LAYERS = sum(BLOCK_CONVS)          # 12
CH_TOTAL = sum(BLOCK_CHANNELS)       # 120
CH_PAD = 128                         # output channels padded to a full lane multiple
IN_CH = 3
IN_RES = 16                          # input spatial resolution
LANE = 128                           # slab lane width (w*C == 128 for every conv output)
B_TILE = 8                           # images per grid step (use 16 on v6e/v7x for M=256)


# ----------------------------------------------------------------------------
# The single fused Pallas kernel
# ----------------------------------------------------------------------------
def _backbone_kernel(x_ref, bw_ref, bias_ref, rs0_ref, rs1_ref, rs2_ref,
                     colsel_ref, my0_ref, my1_ref, my2_ref, my3_ref, g_ref,
                     out_ref, *, b_tile):
    f32, bf16 = jnp.float32, jnp.bfloat16
    dotf = functools.partial(jnp.dot, preferred_element_type=f32)
    rowsel_refs = (rs0_ref, rs1_ref, rs2_ref)
    my_refs = (my0_ref, my1_ref, my2_ref, my3_ref)

    # (b_tile*16, 128) activation slab; values are always bf16-representable f32.
    a = x_ref[...].astype(f32)
    hooked = []
    layer = 0
    h = IN_RES
    for bidx, nconv in enumerate(BLOCK_CONVS):
        n = b_tile * h
        row = lax.broadcasted_iota(jnp.int32, (n, LANE), 0) & (h - 1)
        not_top = row != 0            # a row above exists within the same image
        not_bot = row != (h - 1)      # a row below exists within the same image
        for _ in range(nconv):
            # 3x3 conv (stride 1, pad 1) + bias + ReLU as ONE K=384 MXU matmul:
            # dx taps + width zero-padding live in the banded weights, dy taps come
            # from masked sublane rotations (mask kills cross-image leakage and
            # implements the height zero-padding).
            a_dn = jnp.where(not_top, pltpu.roll(a, 1, axis=0), 0.0)      # row i <- i-1
            a_up = jnp.where(not_bot, pltpu.roll(a, n - 1, axis=0), 0.0)  # row i <- i+1
            lhs = jnp.concatenate([a_dn, a, a_up], axis=1).astype(bf16)   # (n, 384)
            acc = dotf(lhs, bw_ref[layer])                                # (n, 128) f32
            a = jnp.maximum(acc + bias_ref[layer], 0.0).astype(bf16).astype(f32)
            layer += 1
        hooked.append(a)              # hook the block's last ReLU output
        if bidx < len(BLOCK_CONVS) - 1:
            # 2x2 max pool, stride 2: pair-max via sublane/lane rotations, then
            # compaction matmuls (rows: block-diagonal even-row selector; columns:
            # even-column selector that also re-zeroes the upper lanes).
            c = BLOCK_CHANNELS[bidx]
            pr = jnp.maximum(a, pltpu.roll(a, n - 1, axis=0))             # pair rows
            mh = dotf(rowsel_refs[bidx][...], pr.astype(bf16))            # (n//2, 128)
            pc = jnp.maximum(mh, pltpu.roll(mh, LANE - c, axis=1))        # pair cols
            a = dotf(pc.astype(bf16), colsel_ref[bidx])                   # (n//2, 128)
            h //= 2

    # Bilinear resize (align_corners=False) of the 4 hooked features to (R, R) plus
    # channel concat: 4 row-interp matmuls, then ONE fused (b_tile*R, 512) @
    # (512, R*128) matmul whose RHS also scatters each feature into its channel
    # offset -> a single lane-dense (b_tile*R, R*128) output slab.
    ts = [dotf(my_refs[k][...], hooked[k].astype(bf16)) for k in range(4)]
    t_all = jnp.concatenate(ts, axis=1).astype(bf16)                      # (b_tile*R, 512)
    out_ref[...] = dotf(t_all, g_ref[...])                                # f32 out


# ----------------------------------------------------------------------------
# Host-side packing of weights and operators
# ----------------------------------------------------------------------------
def _interp_matrix_1d(out_size, in_size):
    """PyTorch bilinear, align_corners=False: (out_size, in_size) weight matrix."""
    scale = in_size / out_size
    dst = jnp.arange(out_size, dtype=jnp.float32)
    src = jnp.clip((dst + 0.5) * scale - 0.5, 0.0, float(in_size - 1))
    i0 = jnp.clip(jnp.floor(src).astype(jnp.int32), 0, in_size - 1)
    i1 = jnp.minimum(i0 + 1, in_size - 1)
    w1 = src - i0.astype(jnp.float32)
    w0 = 1.0 - w1
    return (w0[:, None] * jax.nn.one_hot(i0, in_size, dtype=jnp.float32)
            + w1[:, None] * jax.nn.one_hot(i1, in_size, dtype=jnp.float32))


def _banded_conv_weight(w, w_dim):
    """(3,3,Cin,Cout) conv kernel -> (3, 128, 128) banded slab weights.

    bw[dy, ji*Cin+ci, jo*Cout+co] = w[dy, ji-jo+1, ci, co] (zero outside the band),
    so sum_dy slab_row(i+dy-1) @ bw[dy] is the 3x3 same-padding conv in slab layout.
    """
    cin, cout = w.shape[2], w.shape[3]
    mats = []
    for dy in range(3):
        band = jnp.zeros((w_dim * cin, w_dim * cout), jnp.float32)
        for dx in range(3):
            shift = jnp.eye(w_dim, k=1 - dx, dtype=jnp.float32)   # ji == jo + dx - 1
            band = band + jnp.kron(shift, w[dy, dx])
        mats.append(jnp.zeros((LANE, LANE), jnp.float32)
                    .at[:w_dim * cin, :w_dim * cout].set(band))
    return jnp.stack(mats)


def init_params(key, channels=BLOCK_CHANNELS, in_ch=IN_CH):
    """VGG19-like blocks (2, 2, 4, 4 convs) with scaled-down channel widths."""
    # TODO(synk): the real module uses pretrained torchvision VGG19 weights; we use
    # deterministic He-init weights at reduced widths instead.
    params = []
    cin = in_ch
    for cout, nconv in zip(channels, BLOCK_CONVS):
        block = []
        for _ in range(nconv):
            key, kw, kb = jax.random.split(key, 3)
            w = jax.random.normal(kw, (3, 3, cin, cout), jnp.float32)
            w = w * jnp.sqrt(2.0 / (9.0 * cin))
            b = 0.01 * jax.random.normal(kb, (cout,), jnp.float32)
            block.append((w, b))
            cin = cout
        params.append(block)
    return params


def prepare_backbone_constants(params, feature_res, b_tile):
    """Pack conv weights and pooling / resize operators into VMEM-resident arrays."""
    R = feature_res
    bf16 = jnp.bfloat16

    # Fused K=384 banded conv weights (bf16) and biases (f32).
    bw_list, bias_list, hook_shapes = [], [], []
    h = IN_RES
    for bidx, (cout, nconv) in enumerate(zip(BLOCK_CHANNELS, BLOCK_CONVS)):
        w_dim = h                                    # square feature maps
        for (w, b) in params[bidx]:
            cin = w.shape[2]
            assert w_dim * cout == LANE and w_dim * cin <= LANE
            bw_list.append(_banded_conv_weight(w, w_dim).reshape(3 * LANE, LANE))
            bias_list.append(jnp.tile(b, w_dim)[None, :])          # (1, 128)
        hook_shapes.append((h, cout))
        if bidx < len(BLOCK_CONVS) - 1:
            h //= 2
    bw_all = jnp.stack(bw_list).astype(bf16)         # (12, 384, 128)
    bias_all = jnp.stack(bias_list)                  # (12, 1, 128) f32

    # Pooling: block-diagonal even-row selectors + even-column(lane) compactors.
    eye_bt = jnp.eye(b_tile, dtype=jnp.float32)
    rowsel, colsel_list = [], []
    for p in range(len(BLOCK_CONVS) - 1):
        hb = IN_RES >> p
        c = BLOCK_CHANNELS[p]
        h2 = hb // 2
        r = jnp.arange(h2)
        E = jnp.zeros((h2, hb), jnp.float32).at[r, 2 * r].set(1.0)
        rowsel.append(jnp.kron(eye_bt, E).astype(bf16))            # (bt*h2, bt*hb)
        S = jnp.zeros((hb, h2), jnp.float32).at[2 * r, r].set(1.0)
        cs = jnp.zeros((LANE, LANE), jnp.float32).at[:, :h2 * c].set(
            jnp.kron(S, jnp.eye(c, dtype=jnp.float32)))
        colsel_list.append(cs)
    colsel_all = jnp.stack(colsel_list).astype(bf16)               # (3, 128, 128)

    # Bilinear-resize operators (align_corners=False): block-diag row interp per
    # feature + one fused column-interp/channel-placement matrix (128-padded C).
    my_list, g_list = [], []
    off = 0
    for (fh, c) in hook_shapes:
        m1d = _interp_matrix_1d(R, fh)                             # (R, fh)
        my_list.append(jnp.kron(eye_bt, m1d).astype(bf16))         # (bt*R, bt*fh)
        q = jnp.zeros((c, CH_PAD), jnp.float32).at[:, off:off + c].set(
            jnp.eye(c, dtype=jnp.float32))
        g_list.append(jnp.kron(m1d.T, q))                          # (fh*c=128, R*128)
        off += c
    g_all = jnp.concatenate(g_list, axis=0).astype(bf16)           # (512, R*128)

    return dict(bw_all=bw_all, bias_all=bias_all,
                rowsel0=rowsel[0], rowsel1=rowsel[1], rowsel2=rowsel[2],
                colsel_all=colsel_all,
                my0=my_list[0], my1=my_list[1], my2=my_list[2], my3=my_list[3],
                g_all=g_all)


def _flops_per_step(b_tile, feature_res):
    fl = 0
    h = IN_RES
    for bidx, nconv in enumerate(BLOCK_CONVS):
        n = b_tile * h
        fl += nconv * 2 * n * (3 * LANE) * LANE
        if bidx < len(BLOCK_CONVS) - 1:
            fl += 2 * (n // 2) * n * LANE + 2 * (n // 2) * LANE * LANE
            h //= 2
    for k in range(len(BLOCK_CONVS)):
        fl += 2 * (b_tile * feature_res) * (b_tile * (IN_RES >> k)) * LANE
    fl += 2 * (b_tile * feature_res) * (4 * LANE) * (feature_res * CH_PAD)
    return fl


# ----------------------------------------------------------------------------
# Public forward (NCHW in, NCHW out), single pallas_call
# ----------------------------------------------------------------------------
@functools.partial(jax.jit, static_argnames=("feature_res", "b_tile"))
def backbone_forward(x_nchw, consts, feature_res=8, b_tile=B_TILE):
    """Mirrors BackboneModel('vgg19', [3, 8, 17, 26], feature_res).forward."""
    B = x_nchw.shape[0]
    R = feature_res
    n_steps = -(-B // b_tile)            # pick B so this is even on v7x (2 TCs)
    Bp = n_steps * b_tile

    # NCHW -> NHWC -> lane-dense (Bp*H, W*C) slab, zero-padded to 128 lanes, bf16.
    x = jnp.transpose(x_nchw, (0, 2, 3, 1)).astype(jnp.float32)
    x = x.reshape(B, IN_RES, IN_RES * IN_CH)
    x = jnp.pad(x, ((0, Bp - B), (0, 0), (0, LANE - IN_RES * IN_CH)))
    x = x.reshape(Bp * IN_RES, LANE).astype(jnp.bfloat16)

    def const_spec(arr):
        nd = arr.ndim
        return pl.BlockSpec(tuple(arr.shape), lambda *_: (0,) * nd,
                            pipeline_mode=pl.Buffered(1))   # resident, single buffer

    order = ("bw_all", "bias_all", "rowsel0", "rowsel1", "rowsel2",
             "colsel_all", "my0", "my1", "my2", "my3", "g_all")
    const_args = [consts[k] for k in order]
    const_bytes = sum(v.size * v.dtype.itemsize for v in const_args)

    cost = pl.CostEstimate(
        flops=n_steps * _flops_per_step(b_tile, R), transcendentals=0,
        bytes_accessed=x.size * x.dtype.itemsize
        + Bp * R * R * CH_PAD * 4 + const_bytes)

    kernel = functools.partial(_backbone_kernel, b_tile=b_tile)
    out_slab = pl.pallas_call(
        kernel,
        out_shape=jax.ShapeDtypeStruct((Bp * R, R * CH_PAD), jnp.float32),
        grid=(n_steps,),
        in_specs=[pl.BlockSpec((b_tile * IN_RES, LANE), lambda i: (i, 0))]
                 + [const_spec(a) for a in const_args],
        out_specs=pl.BlockSpec((b_tile * R, R * CH_PAD), lambda i: (i, 0)),
        compiler_params=pltpu.CompilerParams(
            dimension_semantics=("parallel",),
            vmem_limit_bytes=32 * 1024 * 1024),
        cost_estimate=cost,
    )(x, *const_args)

    # (Bp*R, R*128) slab is row-major NHWC (Bp, R, R, 128) -> drop pads -> NCHW.
    out = out_slab.reshape(Bp, R, R, CH_PAD)[:B, :, :, :CH_TOTAL]
    return jnp.transpose(out, (0, 3, 1, 2))


# ----------------------------------------------------------------------------
# Plain-JAX reference (same network, same bf16 quantization points) for validation
# ----------------------------------------------------------------------------
def _bf(v):
    return v.astype(jnp.bfloat16).astype(jnp.float32)


def _reference_forward(x_nchw, params, feature_res):
    hi = lax.Precision.HIGHEST
    x = _bf(jnp.transpose(x_nchw, (0, 2, 3, 1)).astype(jnp.float32))
    hooked = []
    for bidx, block in enumerate(params):
        for (w, b) in block:
            y = lax.conv_general_dilated(
                x, _bf(w), window_strides=(1, 1), padding="SAME",
                dimension_numbers=("NHWC", "HWIO", "NHWC"), precision=hi)
            x = _bf(jnp.maximum(y + b, 0.0))
        hooked.append(x)
        if bidx < len(params) - 1:
            x = lax.reduce_window(x, -jnp.inf, lax.max,
                                  (1, 2, 2, 1), (1, 2, 2, 1), "VALID")
    feats = []
    for f in hooked:
        m = _bf(_interp_matrix_1d(feature_res, f.shape[1]))
        t = _bf(jnp.einsum("ri,bijc->brjc", m, f, precision=hi))
        t = jnp.einsum("sj,brjc->brsc", m, t, precision=hi)
        feats.append(t)
    return jnp.transpose(jnp.concatenate(feats, axis=-1), (0, 3, 1, 2))


if __name__ == "__main__":
    key = jax.random.PRNGKey(0)
    B = 16                                    # 2 grid steps of B_TILE=8 images
    x = jax.random.normal(key, (B, IN_CH, IN_RES, IN_RES), jnp.float32)

    params = init_params(jax.random.PRNGKey(1))
    feature_res = 8
    consts = prepare_backbone_constants(params, feature_res, B_TILE)

    out = backbone_forward(x, consts, feature_res=feature_res, b_tile=B_TILE)
    out = jax.block_until_ready(out)

    assert out.shape == (B, CH_TOTAL, feature_res, feature_res), out.shape
    assert bool(jnp.all(jnp.isfinite(out)))

    # Validate the fused kernel against a plain-JAX reference that uses the exact
    # same bf16 quantization points (weights + post-ReLU / post-row-interp casts).
    ref = _reference_forward(x, params, feature_res)
    err = float(jnp.max(jnp.abs(out - ref)))
    assert err < 5e-3, f"max abs error vs reference: {err}"

    print("KERNEL_OK")
</pallas_src>

<mosaic_0001>
module attributes {stable_mosaic.version = 11 : i64} {
  func.func @_backbone_kernel(%arg0: i32, %arg1: memref<128x128xbf16, #tpu.memory_space<vmem>>, %arg2: memref<12x384x128xbf16, #tpu.memory_space<vmem>>, %arg3: memref<12x1x128xf32, #tpu.memory_space<vmem>>, %arg4: memref<64x128xbf16, #tpu.memory_space<vmem>>, %arg5: memref<32x64xbf16, #tpu.memory_space<vmem>>, %arg6: memref<16x32xbf16, #tpu.memory_space<vmem>>, %arg7: memref<3x128x128xbf16, #tpu.memory_space<vmem>>, %arg8: memref<64x128xbf16, #tpu.memory_space<vmem>>, %arg9: memref<64x64xbf16, #tpu.memory_space<vmem>>, %arg10: memref<64x32xbf16, #tpu.memory_space<vmem>>, %arg11: memref<64x16xbf16, #tpu.memory_space<vmem>>, %arg12: memref<512x1024xbf16, #tpu.memory_space<vmem>>, %arg13: memref<64x1024xf32, #tpu.memory_space<vmem>>) attributes {dimension_semantics = [#tpu.dimension_semantics<parallel>], iteration_bounds = array<i64: 2>, scalar_prefetch = 0 : i64, scratch_operands = 0 : i64, tpu.core_type = #tpu.core_type<tc>, window_params = [{transform_indices = @transform_0, window_bounds = array<i64: 128, 128>}, {pipeline_mode = #tpu.pipeline_mode<synchronous>, transform_indices = @transform_1, window_bounds = array<i64: 12, 384, 128>}, {pipeline_mode = #tpu.pipeline_mode<synchronous>, transform_indices = @transform_2, window_bounds = array<i64: 12, 1, 128>}, {pipeline_mode = #tpu.pipeline_mode<synchronous>, transform_indices = @transform_3, window_bounds = array<i64: 64, 128>}, {pipeline_mode = #tpu.pipeline_mode<synchronous>, transform_indices = @transform_4, window_bounds = array<i64: 32, 64>}, {pipeline_mode = #tpu.pipeline_mode<synchronous>, transform_indices = @transform_5, window_bounds = array<i64: 16, 32>}, {pipeline_mode = #tpu.pipeline_mode<synchronous>, transform_indices = @transform_6, window_bounds = array<i64: 3, 128, 128>}, {pipeline_mode = #tpu.pipeline_mode<synchronous>, transform_indices = @transform_7, window_bounds = array<i64: 64, 128>}, {pipeline_mode = #tpu.pipeline_mode<synchronous>, transform_indices = @transform_8, window_bounds = array<i64: 64, 64>}, {pipeline_mode = #tpu.pipeline_mode<synchronous>, transform_indices = @transform_9, window_bounds = array<i64: 64, 32>}, {pipeline_mode = #tpu.pipeline_mode<synchronous>, transform_indices = @transform_10, window_bounds = array<i64: 64, 16>}, {pipeline_mode = #tpu.pipeline_mode<synchronous>, transform_indices = @transform_11, window_bounds = array<i64: 512, 1024>}, {transform_indices = @transform_12, window_bounds = array<i64: 64, 1024>}]} {
    %c0 = arith.constant 0 : index
    %c0_0 = arith.constant 0 : index
    %0 = vector.load %arg1[%c0, %c0_0] : memref<128x128xbf16, #tpu.memory_space<vmem>>, vector<128x128xbf16>
    %1 = arith.extf %0 : vector<128x128xbf16> to vector<128x128xf32>
    %2 = tpu.iota {dimensions = array<i32: 0>} : vector<128x128xi32>
    %c15_i32 = arith.constant 15 : i32
    %3 = vector.broadcast %c15_i32 : i32 to vector<128x128xi32>
    %4 = arith.andi %2, %3 : vector<128x128xi32>
    %c0_i32 = arith.constant 0 : i32
    %5 = vector.broadcast %c0_i32 : i32 to vector<128x128xi32>
    %6 = arith.cmpi ne, %4, %5 : vector<128x128xi32>
    %c15_i32_1 = arith.constant 15 : i32
    %7 = vector.broadcast %c15_i32_1 : i32 to vector<128x128xi32>
    %8 = arith.cmpi ne, %4, %7 : vector<128x128xi32>
    %c1_i32 = arith.constant 1 : i32
    %9 = tpu.dynamic_rotate %1 by %c1_i32 dim 0 : vector<128x128xf32>, i32 -> vector<128x128xf32>
    %cst = arith.constant 0.000000e+00 : f32
    %10 = vector.broadcast %cst : f32 to vector<128x128xf32>
    %11 = arith.select %6, %9, %10 : vector<128x128xi1>, vector<128x128xf32>
    %c127_i32 = arith.constant 127 : i32
    %12 = tpu.dynamic_rotate %1 by %c127_i32 dim 0 : vector<128x128xf32>, i32 -> vector<128x128xf32>
    %cst_2 = arith.constant 0.000000e+00 : f32
    %13 = vector.broadcast %cst_2 : f32 to vector<128x128xf32>
    %14 = arith.select %8, %12, %13 : vector<128x128xi1>, vector<128x128xf32>
    %15 = tpu.concatenate %11, %1, %14 in 1 : vector<128x128xf32>, vector<128x128xf32>, vector<128x128xf32> -> vector<128x384xf32>
    %16 = arith.truncf %15 : vector<128x384xf32> to vector<128x384xbf16>
    %c0_3 = arith.constant 0 : index
    %c0_4 = arith.constant 0 : index
    %c0_5 = arith.constant 0 : index
    %17 = vector.load %arg2[%c0_3, %c0_4, %c0_5] : memref<12x384x128xbf16, #tpu.memory_space<vmem>>, vector<1x384x128xbf16>
    %18 = vector.shape_cast %17 : vector<1x384x128xbf16> to vector<384x128xbf16>
    %cst_6 = arith.constant dense<0.000000e+00> : vector<128x128xf32>
    %19 = tpu.matmul %16, %18, %cst_6 {dimension_numbers = #tpu.dot_dimension_numbers<[1], [0], [0], [1], [0, 0, 1, 1], [], []>} : vector<128x384xbf16>, vector<384x128xbf16>, vector<128x128xf32> -> vector<128x128xf32>
    %c0_7 = arith.constant 0 : index
    %c0_8 = arith.constant 0 : index
    %c0_9 = arith.constant 0 : index
    %20 = vector.load %arg3[%c0_7, %c0_8, %c0_9] : memref<12x1x128xf32, #tpu.memory_space<vmem>>, vector<1x1x128xf32>
    %21 = vector.shape_cast %20 : vector<1x1x128xf32> to vector<1x128xf32>
    %22 = vector.broadcast %21 : vector<1x128xf32> to vector<128x128xf32>
    %23 = arith.addf %19, %22 : vector<128x128xf32>
    %cst_10 = arith.constant 0.000000e+00 : f32
    %24 = vector.broadcast %cst_10 : f32 to vector<128x128xf32>
    %25 = arith.maximumf %23, %24 : vector<128x128xf32>
    %26 = arith.truncf %25 : vector<128x128xf32> to vector<128x128xbf16>
    %27 = arith.extf %26 : vector<128x128xbf16> to vector<128x128xf32>
    %c1_i32_11 = arith.constant 1 : i32
    %28 = tpu.dynamic_rotate %27 by %c1_i32_11 dim 0 : vector<128x128xf32>, i32 -> vector<128x128xf32>
    %cst_12 = arith.constant 0.000000e+00 : f32
    %29 = vector.broadcast %cst_12 : f32 to vector<128x128xf32>
    %30 = arith.select %6, %28, %29 : vector<128x128xi1>, vector<128x128xf32>
    %c127_i32_13 = arith.constant 127 : i32
    %31 = tpu.dynamic_rotate %27 by %c127_i32_13 dim 0 : vector<128x128xf32>, i32 -> vector<128x128xf32>
    %cst_14 = arith.constant 0.000000e+00 : f32
    %32 = vector.broadcast %cst_14 : f32 to vector<128x128xf32>
    %33 = arith.select %8, %31, %32 : vector<128x128xi1>, vector<128x128xf32>
    %34 = tpu.concatenate %30, %27, %33 in 1 : vector<128x128xf32>, vector<128x128xf32>, vector<128x128xf32> -> vector<128x384xf32>
    %35 = arith.truncf %34 : vector<128x384xf32> to vector<128x384xbf16>
    %c1 = arith.constant 1 : index
    %c0_15 = arith.constant 0 : index
    %c0_16 = arith.constant 0 : index
    %36 = vector.load %arg2[%c1, %c0_15, %c0_16] : memref<12x384x128xbf16, #tpu.memory_space<vmem>>, vector<1x384x128xbf16>
    %37 = vector.shape_cast %36 : vector<1x384x128xbf16> to vector<384x128xbf16>
    %cst_17 = arith.constant dense<0.000000e+00> : vector<128x128xf32>
    %38 = tpu.matmul %35, %37, %cst_17 {dimension_numbers = #tpu.dot_dimension_numbers<[1], [0], [0], [1], [0, 0, 1, 1], [], []>} : vector<128x384xbf16>, vector<384x128xbf16>, vector<128x128xf32> -> vector<128x128xf32>
    %c1_18 = arith.constant 1 : index
    %c0_19 = arith.constant 0 : index
    %c0_20 = arith.constant 0 : index
    %39 = vector.load %arg3[%c1_18, %c0_19, %c0_20] : memref<12x1x128xf32, #tpu.memory_space<vmem>>, vector<1x1x128xf32>
    %40 = vector.shape_cast %39 : vector<1x1x128xf32> to vector<1x128xf32>
    %41 = vector.broadcast %40 : vector<1x128xf32> to vector<128x128xf32>
    %42 = arith.addf %38, %41 : vector<128x128xf32>
    %cst_21 = arith.constant 0.000000e+00 : f32
    %43 = vector.broadcast %cst_21 : f32 to vector<128x128xf32>
    %44 = arith.maximumf %42, %43 : vector<128x128xf32>
    %45 = arith.truncf %44 : vector<128x128xf32> to vector<128x128xbf16>
    %46 = arith.extf %45 : vector<128x128xbf16> to vector<128x128xf32>
    %c127_i32_22 = arith.constant 127 : i32
    %47 = tpu.dynamic_rotate %46 by %c127_i32_22 dim 0 : vector<128x128xf32>, i32 -> vector<128x128xf32>
    %48 = arith.maximumf %46, %47 : vector<128x128xf32>
    %c0_23 = arith.constant 0 : index
    %c0_24 = arith.constant 0 : index
    %49 = vector.load %arg4[%c0_23, %c0_24] : memref<64x128xbf16, #tpu.memory_space<vmem>>, vector<64x128xbf16>
    %50 = arith.truncf %48 : vector<128x128xf32> to vector<128x128xbf16>
    %cst_25 = arith.constant dense<0.000000e+00> : vector<64x128xf32>
    %51 = tpu.matmul %49, %50, %cst_25 {dimension_numbers = #tpu.dot_dimension_numbers<[1], [0], [0], [1], [0, 0, 1, 1], [], []>} : vector<64x128xbf16>, vector<128x128xbf16>, vector<64x128xf32> -> vector<64x128xf32>
    %c120_i32 = arith.constant 120 : i32
    %52 = tpu.dynamic_rotate %51 by %c120_i32 dim 1 : vector<64x128xf32>, i32 -> vector<64x128xf32>
    %53 = arith.maximumf %51, %52 : vector<64x128xf32>
    %54 = arith.truncf %53 : vector<64x128xf32> to vector<64x128xbf16>
    %c0_26 = arith.constant 0 : index
    %c0_27 = arith.constant 0 : index
    %c0_28 = arith.constant 0 : index
    %55 = vector.load %arg7[%c0_26, %c0_27, %c0_28] : memref<3x128x128xbf16, #tpu.memory_space<vmem>>, vector<1x128x128xbf16>
    %56 = vector.shape_cast %55 : vector<1x128x128xbf16> to vector<128x128xbf16>
    %cst_29 = arith.constant dense<0.000000e+00> : vector<64x128xf32>
    %57 = tpu.matmul %54, %56, %cst_29 {dimension_numbers = #tpu.dot_dimension_numbers<[1], [0], [0], [1], [0, 0, 1, 1], [], []>} : vector<64x128xbf16>, vector<128x128xbf16>, vector<64x128xf32> -> vector<64x128xf32>
    %58 = tpu.iota {dimensions = array<i32: 0>} : vector<64x128xi32>
    %c7_i32 = arith.constant 7 : i32
    %59 = vector.broadcast %c7_i32 : i32 to vector<64x128xi32>
    %60 = arith.andi %58, %59 : vector<64x128xi32>
    %c0_i32_30 = arith.constant 0 : i32
    %61 = vector.broadcast %c0_i32_30 : i32 to vector<64x128xi32>
    %62 = arith.cmpi ne, %60, %61 : vector<64x128xi32>
    %c7_i32_31 = arith.constant 7 : i32
    %63 = vector.broadcast %c7_i32_31 : i32 to vector<64x128xi32>
    %64 = arith.cmpi ne, %60, %63 : vector<64x128xi32>
    %c1_i32_32 = arith.constant 1 : i32
    %65 = tpu.dynamic_rotate %57 by %c1_i32_32 dim 0 : vector<64x128xf32>, i32 -> vector<64x128xf32>
    %cst_33 = arith.constant 0.000000e+00 : f32
    %66 = vector.broadcast %cst_33 : f32 to vector<64x128xf32>
    %67 = arith.select %62, %65, %66 : vector<64x128xi1>, vector<64x128xf32>
    %c63_i32 = arith.constant 63 : i32
    %68 = tpu.dynamic_rotate %57 by %c63_i32 dim 0 : vector<64x128xf32>, i32 -> vector<64x128xf32>
    %cst_34 = arith.constant 0.000000e+00 : f32
    %69 = vector.broadcast %cst_34 : f32 to vector<64x128xf32>
    %70 = arith.select %64, %68, %69 : vector<64x128xi1>, vector<64x128xf32>
    %71 = tpu.concatenate %67, %57, %70 in 1 : vector<64x128xf32>, vector<64x128xf32>, vector<64x128xf32> -> vector<64x384xf32>
    %72 = arith.truncf %71 : vector<64x384xf32> to vector<64x384xbf16>
    %c2 = arith.constant 2 : index
    %c0_35 = arith.constant 0 : index
    %c0_36 = arith.constant 0 : index
    %73 = vector.load %arg2[%c2, %c0_35, %c0_36] : memref<12x384x128xbf16, #tpu.memory_space<vmem>>, vector<1x384x128xbf16>
    %74 = vector.shape_cast %73 : vector<1x384x128xbf16> to vector<384x128xbf16>
    %cst_37 = arith.constant dense<0.000000e+00> : vector<64x128xf32>
    %75 = tpu.matmul %72, %74, %cst_37 {dimension_numbers = #tpu.dot_dimension_numbers<[1], [0], [0], [1], [0, 0, 1, 1], [], []>} : vector<64x384xbf16>, vector<384x128xbf16>, vector<64x128xf32> -> vector<64x128xf32>
    %c2_38 = arith.constant 2 : index
    %c0_39 = arith.constant 0 : index
    %c0_40 = arith.constant 0 : index
    %76 = vector.load %arg3[%c2_38, %c0_39, %c0_40] : memref<12x1x128xf32, #tpu.memory_space<vmem>>, vector<1x1x128xf32>
    %77 = vector.shape_cast %76 : vector<1x1x128xf32> to vector<1x128xf32>
    %78 = vector.broadcast %77 : vector<1x128xf32> to vector<64x128xf32>
    %79 = arith.addf %75, %78 : vector<64x128xf32>
    %cst_41 = arith.constant 0.000000e+00 : f32
    %80 = vector.broadcast %cst_41 : f32 to vector<64x128xf32>
    %81 = arith.maximumf %79, %80 : vector<64x128xf32>
    %82 = arith.truncf %81 : vector<64x128xf32> to vector<64x128xbf16>
    %83 = arith.extf %82 : vector<64x128xbf16> to vector<64x128xf32>
    %c1_i32_42 = arith.constant 1 : i32
    %84 = tpu.dynamic_rotate %83 by %c1_i32_42 dim 0 : vector<64x128xf32>, i32 -> vector<64x128xf32>
    %cst_43 = arith.constant 0.000000e+00 : f32
    %85 = vector.broadcast %cst_43 : f32 to vector<64x128xf32>
    %86 = arith.select %62, %84, %85 : vector<64x128xi1>, vector<64x128xf32>
    %c63_i32_44 = arith.constant 63 : i32
    %87 = tpu.dynamic_rotate %83 by %c63_i32_44 dim 0 : vector<64x128xf32>, i32 -> vector<64x128xf32>
    %cst_45 = arith.constant 0.000000e+00 : f32
    %88 = vector.broadcast %cst_45 : f32 to vector<64x128xf32>
    %89 = arith.select %64, %87, %88 : vector<64x128xi1>, vector<64x128xf32>
    %90 = tpu.concatenate %86, %83, %89 in 1 : vector<64x128xf32>, vector<64x128xf32>, vector<64x128xf32> -> vector<64x384xf32>
    %91 = arith.truncf %90 : vector<64x384xf32> to vector<64x384xbf16>
    %c3 = arith.constant 3 : index
    %c0_46 = arith.constant 0 : index
    %c0_47 = arith.constant 0 : index
    %92 = vector.load %arg2[%c3, %c0_46, %c0_47] : memref<12x384x128xbf16, #tpu.memory_space<vmem>>, vector<1x384x128xbf16>
    %93 = vector.shape_cast %92 : vector<1x384x128xbf16> to vector<384x128xbf16>
    %cst_48 = arith.constant dense<0.000000e+00> : vector<64x128xf32>
    %94 = tpu.matmul %91, %93, %cst_48 {dimension_numbers = #tpu.dot_dimension_numbers<[1], [0], [0], [1], [0, 0, 1, 1], [], []>} : vector<64x384xbf16>, vector<384x128xbf16>, vector<64x128xf32> -> vector<64x128xf32>
    %c3_49 = arith.constant 3 : index
    %c0_50 = arith.constant 0 : index
    %c0_51 = arith.constant 0 : index
    %95 = vector.load %arg3[%c3_49, %c0_50, %c0_51] : memref<12x1x128xf32, #tpu.memory_space<vmem>>, vector<1x1x128xf32>
    %96 = vector.shape_cast %95 : vector<1x1x128xf32> to vector<1x128xf32>
    %97 = vector.broadcast %96 : vector<1x128xf32> to vector<64x128xf32>
    %98 = arith.addf %94, %97 : vector<64x128xf32>
    %cst_52 = arith.constant 0.000000e+00 : f32
    %99 = vector.broadcast %cst_52 : f32 to vector<64x128xf32>
    %100 = arith.maximumf %98, %99 : vector<64x128xf32>
    %101 = arith.truncf %100 : vector<64x128xf32> to vector<64x128xbf16>
    %102 = arith.extf %101 : vector<64x128xbf16> to vector<64x128xf32>
    %c63_i32_53 = arith.constant 63 : i32
    %103 = tpu.dynamic_rotate %102 by %c63_i32_53 dim 0 : vector<64x128xf32>, i32 -> vector<64x128xf32>
    %104 = arith.maximumf %102, %103 : vector<64x128xf32>
    %c0_54 = arith.constant 0 : index
    %c0_55 = arith.constant 0 : index
    %105 = vector.load %arg5[%c0_54, %c0_55] : memref<32x64xbf16, #tpu.memory_space<vmem>>, vector<32x64xbf16>
    %106 = arith.truncf %104 : vector<64x128xf32> to vector<64x128xbf16>
    %cst_56 = arith.constant dense<0.000000e+00> : vector<32x128xf32>
    %107 = tpu.matmul %105, %106, %cst_56 {dimension_numbers = #tpu.dot_dimension_numbers<[1], [0], [0], [1], [0, 0, 1, 1], [], []>} : vector<32x64xbf16>, vector<64x128xbf16>, vector<32x128xf32> -> vector<32x128xf32>
    %c112_i32 = arith.constant 112 : i32
    %108 = tpu.dynamic_rotate %107 by %c112_i32 dim 1 : vector<32x128xf32>, i32 -> vector<32x128xf32>
    %109 = arith.maximumf %107, %108 : vector<32x128xf32>
    %110 = arith.truncf %109 : vector<32x128xf32> to vector<32x128xbf16>
    %c1_57 = arith.constant 1 : index
    %c0_58 = arith.constant 0 : index
    %c0_59 = arith.constant 0 : index
    %111 = vector.load %arg7[%c1_57, %c0_58, %c0_59] : memref<3x128x128xbf16, #tpu.memory_space<vmem>>, vector<1x128x128xbf16>
    %112 = vector.shape_cast %111 : vector<1x128x128xbf16> to vector<128x128xbf16>
    %cst_60 = arith.constant dense<0.000000e+00> : vector<32x128xf32>
    %113 = tpu.matmul %110, %112, %cst_60 {dimension_numbers = #tpu.dot_dimension_numbers<[1], [0], [0], [1], [0, 0, 1, 1], [], []>} : vector<32x128xbf16>, vector<128x128xbf16>, vector<32x128xf32> -> vector<32x128xf32>
    %114 = tpu.iota {dimensions = array<i32: 0>} : vector<32x128xi32>
    %c3_i32 = arith.constant 3 : i32
    %115 = vector.broadcast %c3_i32 : i32 to vector<32x128xi32>
    %116 = arith.andi %114, %115 : vector<32x128xi32>
    %c0_i32_61 = arith.constant 0 : i32
    %117 = vector.broadcast %c0_i32_61 : i32 to vector<32x128xi32>
    %118 = arith.cmpi ne, %116, %117 : vector<32x128xi32>
    %c3_i32_62 = arith.constant 3 : i32
    %119 = vector.broadcast %c3_i32_62 : i32 to vector<32x128xi32>
    %120 = arith.cmpi ne, %116, %119 : vector<32x128xi32>
    %c1_i32_63 = arith.constant 1 : i32
    %121 = tpu.dynamic_rotate %113 by %c1_i32_63 dim 0 : vector<32x128xf32>, i32 -> vector<32x128xf32>
    %cst_64 = arith.constant 0.000000e+00 : f32
    %122 = vector.broadcast %cst_64 : f32 to vector<32x128xf32>
    %123 = arith.select %118, %121, %122 : vector<32x128xi1>, vector<32x128xf32>
    %c31_i32 = arith.constant 31 : i32
    %124 = tpu.dynamic_rotate %113 by %c31_i32 dim 0 : vector<32x128xf32>, i32 -> vector<32x128xf32>
    %cst_65 = arith.constant 0.000000e+00 : f32
    %125 = vector.broadcast %cst_65 : f32 to vector<32x128xf32>
    %126 = arith.select %120, %124, %125 : vector<32x128xi1>, vector<32x128xf32>
    %127 = tpu.concatenate %123, %113, %126 in 1 : vector<32x128xf32>, vector<32x128xf32>, vector<32x128xf32> -> vector<32x384xf32>
    %128 = arith.truncf %127 : vector<32x384xf32> to vector<32x384xbf16>
    %c4 = arith.constant 4 : index
    %c0_66 = arith.constant 0 : index
    %c0_67 = arith.constant 0 : index
    %129 = vector.load %arg2[%c4, %c0_66, %c0_67] : memref<12x384x128xbf16, #tpu.memory_space<vmem>>, vector<1x384x128xbf16>
    %130 = vector.shape_cast %129 : vector<1x384x128xbf16> to vector<384x128xbf16>
    %cst_68 = arith.constant dense<0.000000e+00> : vector<32x128xf32>
    %131 = tpu.matmul %128, %130, %cst_68 {dimension_numbers = #tpu.dot_dimension_numbers<[1], [0], [0], [1], [0, 0, 1, 1], [], []>} : vector<32x384xbf16>, vector<384x128xbf16>, vector<32x128xf32> -> vector<32x128xf32>
    %c4_69 = arith.constant 4 : index
    %c0_70 = arith.constant 0 : index
    %c0_71 = arith.constant 0 : index
    %132 = vector.load %arg3[%c4_69, %c0_70, %c0_71] : memref<12x1x128xf32, #tpu.memory_space<vmem>>, vector<1x1x128xf32>
    %133 = vector.shape_cast %132 : vector<1x1x128xf32> to vector<1x128xf32>
    %134 = vector.broadcast %133 : vector<1x128xf32> to vector<32x128xf32>
    %135 = arith.addf %131, %134 : vector<32x128xf32>
    %cst_72 = arith.constant 0.000000e+00 : f32
    %136 = vector.broadcast %cst_72 : f32 to vector<32x128xf32>
    %137 = arith.maximumf %135, %136 : vector<32x128xf32>
    %138 = arith.truncf %137 : vector<32x128xf32> to vector<32x128xbf16>
    %139 = arith.extf %138 : vector<32x128xbf16> to vector<32x128xf32>
    %c1_i32_73 = arith.constant 1 : i32
    %140 = tpu.dynamic_rotate %139 by %c1_i32_73 dim 0 : vector<32x128xf32>, i32 -> vector<32x128xf32>
    %cst_74 = arith.constant 0.000000e+00 : f32
    %141 = vector.broadcast %cst_74 : f32 to vector<32x128xf32>
    %142 = arith.select %118, %140, %141 : vector<32x128xi1>, vector<32x128xf32>
    %c31_i32_75 = arith.constant 31 : i32
    %143 = tpu.dynamic_rotate %139 by %c31_i32_75 dim 0 : vector<32x128xf32>, i32 -> vector<32x128xf32>
    %cst_76 = arith.constant 0.000000e+00 : f32
    %144 = vector.broadcast %cst_76 : f32 to vector<32x128xf32>
    %145 = arith.select %120, %143, %144 : vector<32x128xi1>, vector<32x128xf32>
    %146 = tpu.concatenate %142, %139, %145 in 1 : vector<32x128xf32>, vector<32x128xf32>, vector<32x128xf32> -> vector<32x384xf32>
    %147 = arith.truncf %146 : vector<32x384xf32> to vector<32x384xbf16>
    %c5 = arith.constant 5 : index
    %c0_77 = arith.constant 0 : index
    %c0_78 = arith.constant 0 : index
    %148 = vector.load %arg2[%c5, %c0_77, %c0_78] : memref<12x384x128xbf16, #tpu.memory_space<vmem>>, vector<1x384x128xbf16>
    %149 = vector.shape_cast %148 : vector<1x384x128xbf16> to vector<384x128xbf16>
    %cst_79 = arith.constant dense<0.000000e+00> : vector<32x128xf32>
    %150 = tpu.matmul %147, %149, %cst_79 {dimension_numbers = #tpu.dot_dimension_numbers<[1], [0], [0], [1], [0, 0, 1, 1], [], []>} : vector<32x384xbf16>, vector<384x128xbf16>, vector<32x128xf32> -> vector<32x128xf32>
    %c5_80 = arith.constant 5 : index
    %c0_81 = arith.constant 0 : index
    %c0_82 = arith.constant 0 : index
    %151 = vector.load %arg3[%c5_80, %c0_81, %c0_82] : memref<12x1x128xf32, #tpu.memory_space<vmem>>, vector<1x1x128xf32>
    %152 = vector.shape_cast %151 : vector<1x1x128xf32> to vector<1x128xf32>
    %153 = vector.broadcast %152 : vector<1x128xf32> to vector<32x128xf32>
    %154 = arith.addf %150, %153 : vector<32x128xf32>
    %cst_83 = arith.constant 0.000000e+00 : f32
    %155 = vector.broadcast %cst_83 : f32 to vector<32x128xf32>
    %156 = arith.maximumf %154, %155 : vector<32x128xf32>
    %157 = arith.truncf %156 : vector<32x128xf32> to vector<32x128xbf16>
    %158 = arith.extf %157 : vector<32x128xbf16> to vector<32x128xf32>
    %c1_i32_84 = arith.constant 1 : i32
    %159 = tpu.dynamic_rotate %158 by %c1_i32_84 dim 0 : vector<32x128xf32>, i32 -> vector<32x128xf32>
    %cst_85 = arith.constant 0.000000e+00 : f32
    %160 = vector.broadcast %cst_85 : f32 to vector<32x128xf32>
    %161 = arith.select %118, %159, %160 : vector<32x128xi1>, vector<32x128xf32>
    %c31_i32_86 = arith.constant 31 : i32
    %162 = tpu.dynamic_rotate %158 by %c31_i32_86 dim 0 : vector<32x128xf32>, i32 -> vector<32x128xf32>
    %cst_87 = arith.constant 0.000000e+00 : f32
    %163 = vector.broadcast %cst_87 : f32 to vector<32x128xf32>
    %164 = arith.select %120, %162, %163 : vector<32x128xi1>, vector<32x128xf32>
    %165 = tpu.concatenate %161, %158, %164 in 1 : vector<32x128xf32>, vector<32x128xf32>, vector<32x128xf32> -> vector<32x384xf32>
    %166 = arith.truncf %165 : vector<32x384xf32> to vector<32x384xbf16>
    %c6 = arith.constant 6 : index
    %c0_88 = arith.constant 0 : index
    %c0_89 = arith.constant 0 : index
    %167 = vector.load %arg2[%c6, %c0_88, %c0_89] : memref<12x384x128xbf16, #tpu.memory_space<vmem>>, vector<1x384x128xbf16>
    %168 = vector.shape_cast %167 : vector<1x384x128xbf16> to vector<384x128xbf16>
    %cst_90 = arith.constant dense<0.000000e+00> : vector<32x128xf32>
    %169 = tpu.matmul %166, %168, %cst_90 {dimension_numbers = #tpu.dot_dimension_numbers<[1], [0], [0], [1], [0, 0, 1, 1], [], []>} : vector<32x384xbf16>, vector<384x128xbf16>, vector<32x128xf32> -> vector<32x128xf32>
    %c6_91 = arith.constant 6 : index
    %c0_92 = arith.constant 0 : index
    %c0_93 = arith.constant 0 : index
    %170 = vector.load %arg3[%c6_91, %c0_92, %c0_93] : memref<12x1x128xf32, #tpu.memory_space<vmem>>, vector<1x1x128xf32>
    %171 = vector.shape_cast %170 : vector<1x1x128xf32> to vector<1x128xf32>
    %172 = vector.broadcast %171 : vector<1x128xf32> to vector<32x128xf32>
    %173 = arith.addf %169, %172 : vector<32x128xf32>
    %cst_94 = arith.constant 0.000000e+00 : f32
    %174 = vector.broadcast %cst_94 : f32 to vector<32x128xf32>
    %175 = arith.maximumf %173, %174 : vector<32x128xf32>
    %176 = arith.truncf %175 : vector<32x128xf32> to vector<32x128xbf16>
    %177 = arith.extf %176 : vector<32x128xbf16> to vector<32x128xf32>
    %c1_i32_95 = arith.constant 1 : i32
    %178 = tpu.dynamic_rotate %177 by %c1_i32_95 dim 0 : vector<32x128xf32>, i32 -> vector<32x128xf32>
    %cst_96 = arith.constant 0.000000e+00 : f32
    %179 = vector.broadcast %cst_96 : f32 to vector<32x128xf32>
    %180 = arith.select %118, %178, %179 : vector<32x128xi1>, vector<32x128xf32>
    %c31_i32_97 = arith.constant 31 : i32
    %181 = tpu.dynamic_rotate %177 by %c31_i32_97 dim 0 : vector<32x128xf32>, i32 -> vector<32x128xf32>
    %cst_98 = arith.constant 0.000000e+00 : f32
    %182 = vector.broadcast %cst_98 : f32 to vector<32x128xf32>
    %183 = arith.select %120, %181, %182 : vector<32x128xi1>, vector<32x128xf32>
    %184 = tpu.concatenate %180, %177, %183 in 1 : vector<32x128xf32>, vector<32x128xf32>, vector<32x128xf32> -> vector<32x384xf32>
    %185 = arith.truncf %184 : vector<32x384xf32> to vector<32x384xbf16>
    %c7 = arith.constant 7 : index
    %c0_99 = arith.constant 0 : index
    %c0_100 = arith.constant 0 : index
    %186 = vector.load %arg2[%c7, %c0_99, %c0_100] : memref<12x384x128xbf16, #tpu.memory_space<vmem>>, vector<1x384x128xbf16>
    %187 = vector.shape_cast %186 : vector<1x384x128xbf16> to vector<384x128xbf16>
    %cst_101 = arith.constant dense<0.000000e+00> : vector<32x128xf32>
    %188 = tpu.matmul %185, %187, %cst_101 {dimension_numbers = #tpu.dot_dimension_numbers<[1], [0], [0], [1], [0, 0, 1, 1], [], []>} : vector<32x384xbf16>, vector<384x128xbf16>, vector<32x128xf32> -> vector<32x128xf32>
    %c7_102 = arith.constant 7 : index
    %c0_103 = arith.constant 0 : index
    %c0_104 = arith.constant 0 : index
    %189 = vector.load %arg3[%c7_102, %c0_103, %c0_104] : memref<12x1x128xf32, #tpu.memory_space<vmem>>, vector<1x1x128xf32>
    %190 = vector.shape_cast %189 : vector<1x1x128xf32> to vector<1x128xf32>
    %191 = vector.broadcast %190 : vector<1x128xf32> to vector<32x128xf32>
    %192 = arith.addf %188, %191 : vector<32x128xf32>
    %cst_105 = arith.constant 0.000000e+00 : f32
    %193 = vector.broadcast %cst_105 : f32 to vector<32x128xf32>
    %194 = arith.maximumf %192, %193 : vector<32x128xf32>
    %195 = arith.truncf %194 : vector<32x128xf32> to vector<32x128xbf16>
    %196 = arith.extf %195 : vector<32x128xbf16> to vector<32x128xf32>
    %c31_i32_106 = arith.constant 31 : i32
    %197 = tpu.dynamic_rotate %196 by %c31_i32_106 dim 0 : vector<32x128xf32>, i32 -> vector<32x128xf32>
    %198 = arith.maximumf %196, %197 : vector<32x128xf32>
    %c0_107 = arith.constant 0 : index
    %c0_108 = arith.constant 0 : index
    %199 = vector.load %arg6[%c0_107, %c0_108] : memref<16x32xbf16, #tpu.memory_space<vmem>>, vector<16x32xbf16>
    %200 = arith.truncf %198 : vector<32x128xf32> to vector<32x128xbf16>
    %cst_109 = arith.constant dense<0.000000e+00> : vector<16x128xf32>
    %201 = tpu.matmul %199, %200, %cst_109 {dimension_numbers = #tpu.dot_dimension_numbers<[1], [0], [0], [1], [0, 0, 1, 1], [], []>} : vector<16x32xbf16>, vector<32x128xbf16>, vector<16x128xf32> -> vector<16x128xf32>
    %c96_i32 = arith.constant 96 : i32
    %202 = tpu.dynamic_rotate %201 by %c96_i32 dim 1 : vector<16x128xf32>, i32 -> vector<16x128xf32>
    %203 = arith.maximumf %201, %202 : vector<16x128xf32>
    %204 = arith.truncf %203 : vector<16x128xf32> to vector<16x128xbf16>
    %c2_110 = arith.constant 2 : index
    %c0_111 = arith.constant 0 : index
    %c0_112 = arith.constant 0 : index
    %205 = vector.load %arg7[%c2_110, %c0_111, %c0_112] : memref<3x128x128xbf16, #tpu.memory_space<vmem>>, vector<1x128x128xbf16>
    %206 = vector.shape_cast %205 : vector<1x128x128xbf16> to vector<128x128xbf16>
    %cst_113 = arith.constant dense<0.000000e+00> : vector<16x128xf32>
    %207 = tpu.matmul %204, %206, %cst_113 {dimension_numbers = #tpu.dot_dimension_numbers<[1], [0], [0], [1], [0, 0, 1, 1], [], []>} : vector<16x128xbf16>, vector<128x128xbf16>, vector<16x128xf32> -> vector<16x128xf32>
    %208 = tpu.iota {dimensions = array<i32: 0>} : vector<16x128xi32>
    %c1_i32_114 = arith.constant 1 : i32
    %209 = vector.broadcast %c1_i32_114 : i32 to vector<16x128xi32>
    %210 = arith.andi %208, %209 : vector<16x128xi32>
    %c0_i32_115 = arith.constant 0 : i32
    %211 = vector.broadcast %c0_i32_115 : i32 to vector<16x128xi32>
    %212 = arith.cmpi ne, %210, %211 : vector<16x128xi32>
    %c1_i32_116 = arith.constant 1 : i32
    %213 = vector.broadcast %c1_i32_116 : i32 to vector<16x128xi32>
    %214 = arith.cmpi ne, %210, %213 : vector<16x128xi32>
    %c1_i32_117 = arith.constant 1 : i32
    %215 = tpu.dynamic_rotate %207 by %c1_i32_117 dim 0 : vector<16x128xf32>, i32 -> vector<16x128xf32>
    %cst_118 = arith.constant 0.000000e+00 : f32
    %216 = vector.broadcast %cst_118 : f32 to vector<16x128xf32>
    %217 = arith.select %212, %215, %216 : vector<16x128xi1>, vector<16x128xf32>
    %c15_i32_119 = arith.constant 15 : i32
    %218 = tpu.dynamic_rotate %207 by %c15_i32_119 dim 0 : vector<16x128xf32>, i32 -> vector<16x128xf32>
    %cst_120 = arith.constant 0.000000e+00 : f32
    %219 = vector.broadcast %cst_120 : f32 to vector<16x128xf32>
    %220 = arith.select %214, %218, %219 : vector<16x128xi1>, vector<16x128xf32>
    %221 = tpu.concatenate %217, %207, %220 in 1 : vector<16x128xf32>, vector<16x128xf32>, vector<16x128xf32> -> vector<16x384xf32>
    %222 = arith.truncf %221 : vector<16x384xf32> to vector<16x384xbf16>
    %c8 = arith.constant 8 : index
    %c0_121 = arith.constant 0 : index
    %c0_122 = arith.constant 0 : index
    %223 = vector.load %arg2[%c8, %c0_121, %c0_122] : memref<12x384x128xbf16, #tpu.memory_space<vmem>>, vector<1x384x128xbf16>
    %224 = vector.shape_cast %223 : vector<1x384x128xbf16> to vector<384x128xbf16>
    %cst_123 = arith.constant dense<0.000000e+00> : vector<16x128xf32>
    %225 = tpu.matmul %222, %224, %cst_123 {dimension_numbers = #tpu.dot_dimension_numbers<[1], [0], [0], [1], [0, 0, 1, 1], [], []>} : vector<16x384xbf16>, vector<384x128xbf16>, vector<16x128xf32> -> vector<16x128xf32>
    %c8_124 = arith.constant 8 : index
    %c0_125 = arith.constant 0 : index
    %c0_126 = arith.constant 0 : index
    %226 = vector.load %arg3[%c8_124, %c0_125, %c0_126] : memref<12x1x128xf32, #tpu.memory_space<vmem>>, vector<1x1x128xf32>
    %227 = vector.shape_cast %226 : vector<1x1x128xf32> to vector<1x128xf32>
    %228 = vector.broadcast %227 : vector<1x128xf32> to vector<16x128xf32>
    %229 = arith.addf %225, %228 : vector<16x128xf32>
    %cst_127 = arith.constant 0.000000e+00 : f32
    %230 = vector.broadcast %cst_127 : f32 to vector<16x128xf32>
    %231 = arith.maximumf %229, %230 : vector<16x128xf32>
    %232 = arith.truncf %231 : vector<16x128xf32> to vector<16x128xbf16>
    %233 = arith.extf %232 : vector<16x128xbf16> to vector<16x128xf32>
    %c1_i32_128 = arith.constant 1 : i32
    %234 = tpu.dynamic_rotate %233 by %c1_i32_128 dim 0 : vector<16x128xf32>, i32 -> vector<16x128xf32>
    %cst_129 = arith.constant 0.000000e+00 : f32
    %235 = vector.broadcast %cst_129 : f32 to vector<16x128xf32>
    %236 = arith.select %212, %234, %235 : vector<16x128xi1>, vector<16x128xf32>
    %c15_i32_130 = arith.constant 15 : i32
    %237 = tpu.dynamic_rotate %233 by %c15_i32_130 dim 0 : vector<16x128xf32>, i32 -> vector<16x128xf32>
    %cst_131 = arith.constant 0.000000e+00 : f32
    %238 = vector.broadcast %cst_131 : f32 to vector<16x128xf32>
    %239 = arith.select %214, %237, %238 : vector<16x128xi1>, vector<16x128xf32>
    %240 = tpu.concatenate %236, %233, %239 in 1 : vector<16x128xf32>, vector<16x128xf32>, vector<16x128xf32> -> vector<16x384xf32>
    %241 = arith.truncf %240 : vector<16x384xf32> to vector<16x384xbf16>
    %c9 = arith.constant 9 : index
    %c0_132 = arith.constant 0 : index
    %c0_133 = arith.constant 0 : index
    %242 = vector.load %arg2[%c9, %c0_132, %c0_133] : memref<12x384x128xbf16, #tpu.memory_space<vmem>>, vector<1x384x128xbf16>
    %243 = vector.shape_cast %242 : vector<1x384x128xbf16> to vector<384x128xbf16>
    %cst_134 = arith.constant dense<0.000000e+00> : vector<16x128xf32>
    %244 = tpu.matmul %241, %243, %cst_134 {dimension_numbers = #tpu.dot_dimension_numbers<[1], [0], [0], [1], [0, 0, 1, 1], [], []>} : vector<16x384xbf16>, vector<384x128xbf16>, vector<16x128xf32> -> vector<16x128xf32>
    %c9_135 = arith.constant 9 : index
    %c0_136 = arith.constant 0 : index
    %c0_137 = arith.constant 0 : index
    %245 = vector.load %arg3[%c9_135, %c0_136, %c0_137] : memref<12x1x128xf32, #tpu.memory_space<vmem>>, vector<1x1x128xf32>
    %246 = vector.shape_cast %245 : vector<1x1x128xf32> to vector<1x128xf32>
    %247 = vector.broadcast %246 : vector<1x128xf32> to vector<16x128xf32>
    %248 = arith.addf %244, %247 : vector<16x128xf32>
    %cst_138 = arith.constant 0.000000e+00 : f32
    %249 = vector.broadcast %cst_138 : f32 to vector<16x128xf32>
    %250 = arith.maximumf %248, %249 : vector<16x128xf32>
    %251 = arith.truncf %250 : vector<16x128xf32> to vector<16x128xbf16>
    %252 = arith.extf %251 : vector<16x128xbf16> to vector<16x128xf32>
    %c1_i32_139 = arith.constant 1 : i32
    %253 = tpu.dynamic_rotate %252 by %c1_i32_139 dim 0 : vector<16x128xf32>, i32 -> vector<16x128xf32>
    %cst_140 = arith.constant 0.000000e+00 : f32
    %254 = vector.broadcast %cst_140 : f32 to vector<16x128xf32>
    %255 = arith.select %212, %253, %254 : vector<16x128xi1>, vector<16x128xf32>
    %c15_i32_141 = arith.constant 15 : i32
    %256 = tpu.dynamic_rotate %252 by %c15_i32_141 dim 0 : vector<16x128xf32>, i32 -> vector<16x128xf32>
    %cst_142 = arith.constant 0.000000e+00 : f32
    %257 = vector.broadcast %cst_142 : f32 to vector<16x128xf32>
    %258 = arith.select %214, %256, %257 : vector<16x128xi1>, vector<16x128xf32>
    %259 = tpu.concatenate %255, %252, %258 in 1 : vector<16x128xf32>, vector<16x128xf32>, vector<16x128xf32> -> vector<16x384xf32>
    %260 = arith.truncf %259 : vector<16x384xf32> to vector<16x384xbf16>
    %c10 = arith.constant 10 : index
    %c0_143 = arith.constant 0 : index
    %c0_144 = arith.constant 0 : index
    %261 = vector.load %arg2[%c10, %c0_143, %c0_144] : memref<12x384x128xbf16, #tpu.memory_space<vmem>>, vector<1x384x128xbf16>
    %262 = vector.shape_cast %261 : vector<1x384x128xbf16> to vector<384x128xbf16>
    %cst_145 = arith.constant dense<0.000000e+00> : vector<16x128xf32>
    %263 = tpu.matmul %260, %262, %cst_145 {dimension_numbers = #tpu.dot_dimension_numbers<[1], [0], [0], [1], [0, 0, 1, 1], [], []>} : vector<16x384xbf16>, vector<384x128xbf16>, vector<16x128xf32> -> vector<16x128xf32>
    %c10_146 = arith.constant 10 : index
    %c0_147 = arith.constant 0 : index
    %c0_148 = arith.constant 0 : index
    %264 = vector.load %arg3[%c10_146, %c0_147, %c0_148] : memref<12x1x128xf32, #tpu.memory_space<vmem>>, vector<1x1x128xf32>
    %265 = vector.shape_cast %264 : vector<1x1x128xf32> to vector<1x128xf32>
    %266 = vector.broadcast %265 : vector<1x128xf32> to vector<16x128xf32>
    %267 = arith.addf %263, %266 : vector<16x128xf32>
    %cst_149 = arith.constant 0.000000e+00 : f32
    %268 = vector.broadcast %cst_149 : f32 to vector<16x128xf32>
    %269 = arith.maximumf %267, %268 : vector<16x128xf32>
    %270 = arith.truncf %269 : vector<16x128xf32> to vector<16x128xbf16>
    %271 = arith.extf %270 : vector<16x128xbf16> to vector<16x128xf32>
    %c1_i32_150 = arith.constant 1 : i32
    %272 = tpu.dynamic_rotate %271 by %c1_i32_150 dim 0 : vector<16x128xf32>, i32 -> vector<16x128xf32>
    %cst_151 = arith.constant 0.000000e+00 : f32
    %273 = vector.broadcast %cst_151 : f32 to vector<16x128xf32>
    %274 = arith.select %212, %272, %273 : vector<16x128xi1>, vector<16x128xf32>
    %c15_i32_152 = arith.constant 15 : i32
    %275 = tpu.dynamic_rotate %271 by %c15_i32_152 dim 0 : vector<16x128xf32>, i32 -> vector<16x128xf32>
    %cst_153 = arith.constant 0.000000e+00 : f32
    %276 = vector.broadcast %cst_153 : f32 to vector<16x128xf32>
    %277 = arith.select %214, %275, %276 : vector<16x128xi1>, vector<16x128xf32>
    %278 = tpu.concatenate %274, %271, %277 in 1 : vector<16x128xf32>, vector<16x128xf32>, vector<16x128xf32> -> vector<16x384xf32>
    %279 = arith.truncf %278 : vector<16x384xf32> to vector<16x384xbf16>
    %c11 = arith.constant 11 : index
    %c0_154 = arith.constant 0 : index
    %c0_155 = arith.constant 0 : index
    %280 = vector.load %arg2[%c11, %c0_154, %c0_155] : memref<12x384x128xbf16, #tpu.memory_space<vmem>>, vector<1x384x128xbf16>
    %281 = vector.shape_cast %280 : vector<1x384x128xbf16> to vector<384x128xbf16>
    %cst_156 = arith.constant dense<0.000000e+00> : vector<16x128xf32>
    %282 = tpu.matmul %279, %281, %cst_156 {dimension_numbers = #tpu.dot_dimension_numbers<[1], [0], [0], [1], [0, 0, 1, 1], [], []>} : vector<16x384xbf16>, vector<384x128xbf16>, vector<16x128xf32> -> vector<16x128xf32>
    %c11_157 = arith.constant 11 : index
    %c0_158 = arith.constant 0 : index
    %c0_159 = arith.constant 0 : index
    %283 = vector.load %arg3[%c11_157, %c0_158, %c0_159] : memref<12x1x128xf32, #tpu.memory_space<vmem>>, vector<1x1x128xf32>
    %284 = vector.shape_cast %283 : vector<1x1x128xf32> to vector<1x128xf32>
    %285 = vector.broadcast %284 : vector<1x128xf32> to vector<16x128xf32>
    %286 = arith.addf %282, %285 : vector<16x128xf32>
    %cst_160 = arith.constant 0.000000e+00 : f32
    %287 = vector.broadcast %cst_160 : f32 to vector<16x128xf32>
    %288 = arith.maximumf %286, %287 : vector<16x128xf32>
    %289 = arith.truncf %288 : vector<16x128xf32> to vector<16x128xbf16>
    %290 = arith.extf %289 : vector<16x128xbf16> to vector<16x128xf32>
    %c0_161 = arith.constant 0 : index
    %c0_162 = arith.constant 0 : index
    %291 = vector.load %arg8[%c0_161, %c0_162] : memref<64x128xbf16, #tpu.memory_space<vmem>>, vector<64x128xbf16>
    %292 = arith.truncf %46 : vector<128x128xf32> to vector<128x128xbf16>
    %cst_163 = arith.constant dense<0.000000e+00> : vector<64x128xf32>
    %293 = tpu.matmul %291, %292, %cst_163 {dimension_numbers = #tpu.dot_dimension_numbers<[1], [0], [0], [1], [0, 0, 1, 1], [], []>} : vector<64x128xbf16>, vector<128x128xbf16>, vector<64x128xf32> -> vector<64x128xf32>
    %c0_164 = arith.constant 0 : index
    %c0_165 = arith.constant 0 : index
    %294 = vector.load %arg9[%c0_164, %c0_165] : memref<64x64xbf16, #tpu.memory_space<vmem>>, vector<64x64xbf16>
    %295 = arith.truncf %102 : vector<64x128xf32> to vector<64x128xbf16>
    %cst_166 = arith.constant dense<0.000000e+00> : vector<64x128xf32>
    %296 = tpu.matmul %294, %295, %cst_166 {dimension_numbers = #tpu.dot_dimension_numbers<[1], [0], [0], [1], [0, 0, 1, 1], [], []>} : vector<64x64xbf16>, vector<64x128xbf16>, vector<64x128xf32> -> vector<64x128xf32>
    %c0_167 = arith.constant 0 : index
    %c0_168 = arith.constant 0 : index
    %297 = vector.load %arg10[%c0_167, %c0_168] : memref<64x32xbf16, #tpu.memory_space<vmem>>, vector<64x32xbf16>
    %298 = arith.truncf %196 : vector<32x128xf32> to vector<32x128xbf16>
    %cst_169 = arith.constant dense<0.000000e+00> : vector<64x128xf32>
    %299 = tpu.matmul %297, %298, %cst_169 {dimension_numbers = #tpu.dot_dimension_numbers<[1], [0], [0], [1], [0, 0, 1, 1], [], []>} : vector<64x32xbf16>, vector<32x128xbf16>, vector<64x128xf32> -> vector<64x128xf32>
    %c0_170 = arith.constant 0 : index
    %c0_171 = arith.constant 0 : index
    %300 = vector.load %arg11[%c0_170, %c0_171] : memref<64x16xbf16, #tpu.memory_space<vmem>>, vector<64x16xbf16>
    %301 = arith.truncf %290 : vector<16x128xf32> to vector<16x128xbf16>
    %cst_172 = arith.constant dense<0.000000e+00> : vector<64x128xf32>
    %302 = tpu.matmul %300, %301, %cst_172 {dimension_numbers = #tpu.dot_dimension_numbers<[1], [0], [0], [1], [0, 0, 1, 1], [], []>} : vector<64x16xbf16>, vector<16x128xbf16>, vector<64x128xf32> -> vector<64x128xf32>
    %303 = tpu.concatenate %293, %296, %299, %302 in 1 : vector<64x128xf32>, vector<64x128xf32>, vector<64x128xf32>, vector<64x128xf32> -> vector<64x512xf32>
    %304 = arith.truncf %303 : vector<64x512xf32> to vector<64x512xbf16>
    %c0_173 = arith.constant 0 : index
    %c0_174 = arith.constant 0 : index
    %305 = vector.load %arg12[%c0_173, %c0_174] : memref<512x1024xbf16, #tpu.memory_space<vmem>>, vector<512x1024xbf16>
    %cst_175 = arith.constant dense<0.000000e+00> : vector<64x1024xf32>
    %306 = tpu.matmul %304, %305, %cst_175 {dimension_numbers = #tpu.dot_dimension_numbers<[1], [0], [0], [1], [0, 0, 1, 1], [], []>} : vector<64x512xbf16>, vector<512x1024xbf16>, vector<64x1024xf32> -> vector<64x1024xf32>
    %c0_176 = arith.constant 0 : index
    %c0_177 = arith.constant 0 : index
    %307 = vector.load %arg13[%c0_176, %c0_177] : memref<64x1024xf32, #tpu.memory_space<vmem>>, vector<64x1024xf32>
    tpu.vector_store %arg13[%c0_176, %c0_177], %306 {strides = array<i32>} : memref<64x1024xf32, #tpu.memory_space<vmem>>, vector<64x1024xf32>,
    return
  }
  func.func @transform_0(%arg0: i32) -> (i32, i32) {
    %c0_i32 = arith.constant 0 : i32
    %c0_i32_0 = arith.constant 0 : i32
    return %arg0, %c0_i32 : i32, i32
  }
  func.func @transform_1(%arg0: i32) -> (i32, i32, i32) {
    %c0_i32 = arith.constant 0 : i32
    %c0_i32_0 = arith.constant 0 : i32
    %c0_i32_1 = arith.constant 0 : i32
    %c0_i32_2 = arith.constant 0 : i32
    return %c0_i32, %c0_i32_0, %c0_i32_1 : i32, i32, i32
  }
  func.func @transform_2(%arg0: i32) -> (i32, i32, i32) {
    %c0_i32 = arith.constant 0 : i32
    %c0_i32_0 = arith.constant 0 : i32
    %c0_i32_1 = arith.constant 0 : i32
    %c0_i32_2 = arith.constant 0 : i32
    return %c0_i32, %c0_i32_0, %c0_i32_1 : i32, i32, i32
  }
  func.func @transform_3(%arg0: i32) -> (i32, i32) {
    %c0_i32 = arith.constant 0 : i32
    %c0_i32_0 = arith.constant 0 : i32
    %c0_i32_1 = arith.constant 0 : i32
    return %c0_i32, %c0_i32_0 : i32, i32
  }
  func.func @transform_4(%arg0: i32) -> (i32, i32) {
    %c0_i32 = arith.constant 0 : i32
    %c0_i32_0 = arith.constant 0 : i32
    %c0_i32_1 = arith.constant 0 : i32
    return %c0_i32, %c0_i32_0 : i32, i32
  }
  func.func @transform_5(%arg0: i32) -> (i32, i32) {
    %c0_i32 = arith.constant 0 : i32
    %c0_i32_0 = arith.constant 0 : i32
    %c0_i32_1 = arith.constant 0 : i32
    return %c0_i32, %c0_i32_0 : i32, i32
  }
  func.func @transform_6(%arg0: i32) -> (i32, i32, i32) {
    %c0_i32 = arith.constant 0 : i32
    %c0_i32_0 = arith.constant 0 : i32
    %c0_i32_1 = arith.constant 0 : i32
    %c0_i32_2 = arith.constant 0 : i32
    return %c0_i32, %c0_i32_0, %c0_i32_1 : i32, i32, i32
  }
  func.func @transform_7(%arg0: i32) -> (i32, i32) {
    %c0_i32 = arith.constant 0 : i32
    %c0_i32_0 = arith.constant 0 : i32
    %c0_i32_1 = arith.constant 0 : i32
    return %c0_i32, %c0_i32_0 : i32, i32
  }
  func.func @transform_8(%arg0: i32) -> (i32, i32) {
    %c0_i32 = arith.constant 0 : i32
    %c0_i32_0 = arith.constant 0 : i32
    %c0_i32_1 = arith.constant 0 : i32
    return %c0_i32, %c0_i32_0 : i32, i32
  }
  func.func @transform_9(%arg0: i32) -> (i32, i32) {
    %c0_i32 = arith.constant 0 : i32
    %c0_i32_0 = arith.constant 0 : i32
    %c0_i32_1 = arith.constant 0 : i32
    return %c0_i32, %c0_i32_0 : i32, i32
  }
  func.func @transform_10(%arg0: i32) -> (i32, i32) {
    %c0_i32 = arith.constant 0 : i32
    %c0_i32_0 = arith.constant 0 : i32
    %c0_i32_1 = arith.constant 0 : i32
    return %c0_i32, %c0_i32_0 : i32, i32
  }
  func.func @transform_11(%arg0: i32) -> (i32, i32) {
    %c0_i32 = arith.constant 0 : i32
    %c0_i32_0 = arith.constant 0 : i32
    %c0_i32_1 = arith.constant 0 : i32
    return %c0_i32, %c0_i32_0 : i32, i32
  }
  func.func @transform_12(%arg0: i32) -> (i32, i32) {
    %c0_i32 = arith.constant 0 : i32
    %c0_i32_0 = arith.constant 0 : i32
    return %arg0, %c0_i32 : i32, i32
  }
}

</mosaic_0001>

<llo_original>
// kernel: backbone_forward.1
$region0: #{backbone_forward.1}
  #allocation0 [shape = 'u32[]', space=smem, size = 0x4, offset = 0x4, fixed_abs, tag = 'smem constant byte address 0x4 - core index']
  #allocation1 [shape = 'u32[72,128]{1,0:T(1,128)}', space=vmem, size = 0x9000, scoped, tag = 'internal scratch']
  %s0 = inlined_call_operand.vmem [shape: bf16[256,128], index: 0, kind: input, shape index: {}]
  %s1 = inlined_call_operand.vmem [shape: bf16[12,384,128], index: 1, kind: input, shape index: {}]
  %s2 = inlined_call_operand.vmem [shape: f32[12,1,128], index: 2, kind: input, shape index: {}]
  %s3 = inlined_call_operand.vmem [shape: bf16[64,128], index: 3, kind: input, shape index: {}]
  %s4 = inlined_call_operand.vmem [shape: bf16[32,64], index: 4, kind: input, shape index: {}]
  %s5 = inlined_call_operand.vmem [shape: bf16[16,32], index: 5, kind: input, shape index: {}]
  %s6 = inlined_call_operand.vmem [shape: bf16[3,128,128], index: 6, kind: input, shape index: {}]
  %s7 = inlined_call_operand.vmem [shape: bf16[64,128], index: 7, kind: input, shape index: {}]
  %s8 = inlined_call_operand.vmem [shape: bf16[64,64], index: 8, kind: input, shape index: {}]
  %s9 = inlined_call_operand.vmem [shape: bf16[64,32], index: 9, kind: input, shape index: {}]
  %s10 = inlined_call_operand.vmem [shape: bf16[64,16], index: 10, kind: input, shape index: {}]
  %s11 = inlined_call_operand.hbm [shape: bf16[512,1024], index: 11, kind: input, shape index: {}]
  %s12 = inlined_call_operand.vmem [shape: f32[128,1024], index: 12, kind: output, shape index: {}]
  %s13 = sld [smem:[#allocation0]]
  $region85: #{backbone_forward.1} parent=0
    _
  %s15 = ssub.s32 1, %s13
  %s16 = scalar_select 0, %s15, %s13
  $region1: #{backbone_forward.1} parent=0
    #allocation2 [shape = 'u8[1048576]{0}', space=vmem, size = 0x100000, scoped, tag = 'input window, operand 11, single buffered']
    #allocation3 [shape = 's32[2]{0}', space=sflag, size = 0x8, scoped, tag = 'scoped memory for backbone_forward.1']
    %17 = vsyncpa [#allocation3], 0
    loop: start=0, step=1, limit=4
    $region2: #{backbone_forward.1} parent=1 // loop_pre_header
      _
    $region3: #{backbone_forward.1} parent=1 // loop_header
      %s19 = sphi 0, %s23
      %p20 = scmp.ge.s32.totalorder %s19, 4
      %s29 = sphi 0, %s31
      %s32 = sphi 0, %s29
      %s33 = sphi 0, %s32
      %s49 = sphi 0, %s33
      %s53 = sphi 0, %s53
      %s55 = sphi 0, %s53
      %s56 = sphi 0, %s55
      %s70 = sphi 0, %s56
      %s74 = sphi 0, %s74
      %s76 = sphi 0, %s74
      %s77 = sphi 0, %s76
      %s91 = sphi 0, %s77
      %s95 = sphi 0, %s95
      %s97 = sphi 0, %s95
      %s98 = sphi 0, %s97
      %s112 = sphi 0, %s98
      %s116 = sphi 0, %s116
      %s118 = sphi 0, %s116
      %s119 = sphi 0, %s118
      %s133 = sphi 0, %s119
      %s137 = sphi 0, %s137
      %s139 = sphi 0, %s137
      %s140 = sphi 0, %s139
      %s154 = sphi 0, %s140
      %s158 = sphi 0, %s158
      %s160 = sphi 0, %s158
      %s161 = sphi 0, %s160
      %s175 = sphi 0, %s161
      %s179 = sphi 0, %s179
      %s181 = sphi 0, %s179
      %s182 = sphi 0, %s181
      %s196 = sphi 0, %s182
      %s200 = sphi 0, %s200
      %s202 = sphi 0, %s200
      %s203 = sphi 0, %s202
      %s217 = sphi 0, %s203
      %s221 = sphi 0, %s221
      %s223 = sphi 0, %s221
      %s224 = sphi 0, %s223
      %s238 = sphi 0, %s224
      %s242 = sphi 0, %s242
      %s244 = sphi 0, %s242
      %s245 = sphi 0, %s244
      %s259 = sphi 0, %s245
      %s263 = sphi 0, %s263
      %s265 = sphi 0, %s263
      %s266 = sphi 0, %s265
      %s280 = sphi 0, %s266
      %s286 = sphi 0, %s288
      %s289 = sphi 0, %s286
      %s290 = sphi 0, %s289
      %s306 = sphi 0, %s290
    $region4: #{backbone_forward.1} parent=1 // loop_header_branch
      %22 = sbr.rel (%p20) target = $region8
    $region5: #{backbone_forward.1} parent=1 // loop_body
      %s24 = ssub.s32 %s19, 1
      %s25 = ssub.s32 %s19, 2
      %s26 = sadd.s32 %s19, 1
      %s27 = ssub.s32 %s19, %s26
      %p28 = scmp.eq.s32.totalorder %s27, 0
      %s30 = sadd.s32 %s29, 1
      %s31 = scalar_select %p28, %s29, %s30
      %p34 = pneg %p28
      %p35 = scmp.eq.s32.totalorder %s19, 1
      %p36 = por %p34, %p35
      %p37 = scmp.ne.s32.totalorder %s29, %s32
      %p38 = scmp.eq.s32.totalorder %s19, 0
      %p39 = por %p37, %p38
      %p40 = scmp.ne.s32.totalorder %s29, %s32
      %p41 = scmp.eq.s32.totalorder %s24, 1
      %p42 = por %p40, %p41
      %p43 = scmp.ne.s32.totalorder %s32, %s33
      %p44 = scmp.eq.s32.totalorder %s24, 0
      %p45 = por %p43, %p44
      %p46 = scmp.ne.s32.totalorder %s32, %s33
      %p47 = scmp.eq.s32.totalorder %s25, 1
      %p48 = por %p46, %p47
      %p50 = scmp.ne.s32.totalorder %s33, %s49
      %p51 = scmp.eq.s32.totalorder %s25, 0
      %p52 = por %p50, %p51
      %s54 = sadd.s32 %s53, 1
      %p57 = scmp.eq.s32.totalorder %s19, 1
      %p58 = scmp.ne.s32.totalorder %s53, %s55
      %p59 = scmp.eq.s32.totalorder %s19, 0
      %p60 = por %p58, %p59
      %p61 = scmp.ne.s32.totalorder %s53, %s55
      %p62 = scmp.eq.s32.totalorder %s24, 1
      %p63 = por %p61, %p62
      %p64 = scmp.ne.s32.totalorder %s55, %s56
      %p65 = scmp.eq.s32.totalorder %s24, 0
      %p66 = por %p64, %p65
      %p67 = scmp.ne.s32.totalorder %s55, %s56
      %p68 = scmp.eq.s32.totalorder %s25, 1
      %p69 = por %p67, %p68
      %p71 = scmp.ne.s32.totalorder %s56, %s70
      %p72 = scmp.eq.s32.totalorder %s25, 0
      %p73 = por %p71, %p72
      %s75 = sadd.s32 %s74, 1
      %p78 = scmp.eq.s32.totalorder %s19, 1
      %p79 = scmp.ne.s32.totalorder %s74, %s76
      %p80 = scmp.eq.s32.totalorder %s19, 0
      %p81 = por %p79, %p80
      %p82 = scmp.ne.s32.totalorder %s74, %s76
      %p83 = scmp.eq.s32.totalorder %s24, 1
      %p84 = por %p82, %p83
      %p85 = scmp.ne.s32.totalorder %s76, %s77
      %p86 = scmp.eq.s32.totalorder %s24, 0
      %p87 = por %p85, %p86
      %p88 = scmp.ne.s32.totalorder %s76, %s77
      %p89 = scmp.eq.s32.totalorder %s25, 1
      %p90 = por %p88, %p89
      %p92 = scmp.ne.s32.totalorder %s77, %s91
      %p93 = scmp.eq.s32.totalorder %s25, 0
      %p94 = por %p92, %p93
      %s96 = sadd.s32 %s95, 1
      %p99 = scmp.eq.s32.totalorder %s19, 1
      %p100 = scmp.ne.s32.totalorder %s95, %s97
      %p101 = scmp.eq.s32.totalorder %s19, 0
      %p102 = por %p100, %p101
      %p103 = scmp.ne.s32.totalorder %s95, %s97
      %p104 = scmp.eq.s32.totalorder %s24, 1
      %p105 = por %p103, %p104
      %p106 = scmp.ne.s32.totalorder %s97, %s98
      %p107 = scmp.eq.s32.totalorder %s24, 0
      %p108 = por %p106, %p107
      %p109 = scmp.ne.s32.totalorder %s97, %s98
      %p110 = scmp.eq.s32.totalorder %s25, 1
      %p111 = por %p109, %p110
      %p113 = scmp.ne.s32.totalorder %s98, %s112
      %p114 = scmp.eq.s32.totalorder %s25, 0
      %p115 = por %p113, %p114
      %s117 = sadd.s32 %s116, 1
      %p120 = scmp.eq.s32.totalorder %s19, 1
      %p121 = scmp.ne.s32.totalorder %s116, %s118
      %p122 = scmp.eq.s32.totalorder %s19, 0
      %p123 = por %p121, %p122
      %p124 = scmp.ne.s32.totalorder %s116, %s118
      %p125 = scmp.eq.s32.totalorder %s24, 1
      %p126 = por %p124, %p125
      %p127 = scmp.ne.s32.totalorder %s118, %s119
      %p128 = scmp.eq.s32.totalorder %s24, 0
      %p129 = por %p127, %p128
      %p130 = scmp.ne.s32.totalorder %s118, %s119
      %p131 = scmp.eq.s32.totalorder %s25, 1
      %p132 = por %p130, %p131
      %p134 = scmp.ne.s32.totalorder %s119, %s133
      %p135 = scmp.eq.s32.totalorder %s25, 0
      %p136 = por %p134, %p135
      %s138 = sadd.s32 %s137, 1
      %p141 = scmp.eq.s32.totalorder %s19, 1
      %p142 = scmp.ne.s32.totalorder %s137, %s139
      %p143 = scmp.eq.s32.totalorder %s19, 0
      %p144 = por %p142, %p143
      %p145 = scmp.ne.s32.totalorder %s137, %s139
      %p146 = scmp.eq.s32.totalorder %s24, 1
      %p147 = por %p145, %p146
      %p148 = scmp.ne.s32.totalorder %s139, %s140
      %p149 = scmp.eq.s32.totalorder %s24, 0
      %p150 = por %p148, %p149
      %p151 = scmp.ne.s32.totalorder %s139, %s140
      %p152 = scmp.eq.s32.totalorder %s25, 1
      %p153 = por %p151, %p152
      %p155 = scmp.ne.s32.totalorder %s140, %s154
      %p156 = scmp.eq.s32.totalorder %s25, 0
      %p157 = por %p155, %p156
      %s159 = sadd.s32 %s158, 1
      %p162 = scmp.eq.s32.totalorder %s19, 1
      %p163 = scmp.ne.s32.totalorder %s158, %s160
      %p164 = scmp.eq.s32.totalorder %s19, 0
      %p165 = por %p163, %p164
      %p166 = scmp.ne.s32.totalorder %s158, %s160
      %p167 = scmp.eq.s32.totalorder %s24, 1
      %p168 = por %p166, %p167
      %p169 = scmp.ne.s32.totalorder %s160, %s161
      %p170 = scmp.eq.s32.totalorder %s24, 0
      %p171 = por %p169, %p170
      %p172 = scmp.ne.s32.totalorder %s160, %s161
      %p173 = scmp.eq.s32.totalorder %s25, 1
      %p174 = por %p172, %p173
      %p176 = scmp.ne.s32.totalorder %s161, %s175
      %p177 = scmp.eq.s32.totalorder %s25, 0
      %p178 = por %p176, %p177
      %s180 = sadd.s32 %s179, 1
      %p183 = scmp.eq.s32.totalorder %s19, 1
      %p184 = scmp.ne.s32.totalorder %s179, %s181
      %p185 = scmp.eq.s32.totalorder %s19, 0
      %p186 = por %p184, %p185
      %p187 = scmp.ne.s32.totalorder %s179, %s181
      %p188 = scmp.eq.s32.totalorder %s24, 1
      %p189 = por %p187, %p188
      %p190 = scmp.ne.s32.totalorder %s181, %s182
      %p191 = scmp.eq.s32.totalorder %s24, 0
      %p192 = por %p190, %p191
      %p193 = scmp.ne.s32.totalorder %s181, %s182
      %p194 = scmp.eq.s32.totalorder %s25, 1
      %p195 = por %p193, %p194
      %p197 = scmp.ne.s32.totalorder %s182, %s196
      %p198 = scmp.eq.s32.totalorder %s25, 0
      %p199 = por %p197, %p198
      %s201 = sadd.s32 %s200, 1
      %p204 = scmp.eq.s32.totalorder %s19, 1
      %p205 = scmp.ne.s32.totalorder %s200, %s202
      %p206 = scmp.eq.s32.totalorder %s19, 0
      %p207 = por %p205, %p206
      %p208 = scmp.ne.s32.totalorder %s200, %s202
      %p209 = scmp.eq.s32.totalorder %s24, 1
      %p210 = por %p208, %p209
      %p211 = scmp.ne.s32.totalorder %s202, %s203
      %p212 = scmp.eq.s32.totalorder %s24, 0
      %p213 = por %p211, %p212
      %p214 = scmp.ne.s32.totalorder %s202, %s203
      %p215 = scmp.eq.s32.totalorder %s25, 1
      %p216 = por %p214, %p215
      %p218 = scmp.ne.s32.totalorder %s203, %s217
      %p219 = scmp.eq.s32.totalorder %s25, 0
      %p220 = por %p218, %p219
      %s222 = sadd.s32 %s221, 1
      %p225 = scmp.eq.s32.totalorder %s19, 1
      %p226 = scmp.ne.s32.totalorder %s221, %s223
      %p227 = scmp.eq.s32.totalorder %s19, 0
      %p228 = por %p226, %p227
      %p229 = scmp.ne.s32.totalorder %s221, %s223
      %p230 = scmp.eq.s32.totalorder %s24, 1
      %p231 = por %p229, %p230
      %p232 = scmp.ne.s32.totalorder %s223, %s224
      %p233 = scmp.eq.s32.totalorder %s24, 0
      %p234 = por %p232, %p233
      %p235 = scmp.ne.s32.totalorder %s223, %s224
      %p236 = scmp.eq.s32.totalorder %s25, 1
      %p237 = por %p235, %p236
      %p239 = scmp.ne.s32.totalorder %s224, %s238
      %p240 = scmp.eq.s32.totalorder %s25, 0
      %p241 = por %p239, %p240
      %s243 = sadd.s32 %s242, 1
      %p246 = scmp.eq.s32.totalorder %s19, 1
      %p247 = scmp.ne.s32.totalorder %s242, %s244
      %p248 = scmp.eq.s32.totalorder %s19, 0
      %p249 = por %p247, %p248
      %p250 = scmp.ne.s32.totalorder %s242, %s244
      %p251 = scmp.eq.s32.totalorder %s24, 1
      %p252 = por %p250, %p251
      %p253 = scmp.ne.s32.totalorder %s244, %s245
      %p254 = scmp.eq.s32.totalorder %s24, 0
      %p255 = por %p253, %p254
      %p256 = scmp.ne.s32.totalorder %s244, %s245
      %p257 = scmp.eq.s32.totalorder %s25, 1
      %p258 = por %p256, %p257
      %p260 = scmp.ne.s32.totalorder %s245, %s259
      %p261 = scmp.eq.s32.totalorder %s25, 0
      %p262 = por %p260, %p261
      %s264 = sadd.s32 %s263, 1
      %p267 = scmp.eq.s32.totalorder %s19, 1
      %p268 = scmp.ne.s32.totalorder %s263, %s265
      %p269 = scmp.eq.s32.totalorder %s19, 0
      %p270 = por %p268, %p269
      %p271 = scmp.ne.s32.totalorder %s263, %s265
      %p272 = scmp.eq.s32.totalorder %s24, 1
      %p273 = por %p271, %p272
      %p274 = scmp.ne.s32.totalorder %s265, %s266
      %p275 = scmp.eq.s32.totalorder %s24, 0
      %p276 = por %p274, %p275
      %p277 = scmp.ne.s32.totalorder %s265, %s266
      %p278 = scmp.eq.s32.totalorder %s25, 1
      %p279 = por %p277, %p278
      %p281 = scmp.ne.s32.totalorder %s266, %s280
      %p282 = scmp.eq.s32.totalorder %s25, 0
      %p283 = por %p281, %p282
      %s284 = ssub.s32 %s19, %s26
      %p285 = scmp.eq.s32.totalorder %s284, 0
      %s287 = sadd.s32 %s286, 1
      %s288 = scalar_select %p285, %s286, %s287
      %p291 = pneg %p285
      %p292 = scmp.eq.s32.totalorder %s19, 1
      %p293 = por %p291, %p292
      %p294 = scmp.ne.s32.totalorder %s286, %s289
      %p295 = scmp.eq.s32.totalorder %s19, 0
      %p296 = por %p294, %p295
      %p297 = scmp.ne.s32.totalorder %s286, %s289
      %p298 = scmp.eq.s32.totalorder %s24, 1
      %p299 = por %p297, %p298
      %p300 = scmp.ne.s32.totalorder %s289, %s290
      %p301 = scmp.eq.s32.totalorder %s24, 0
      %p302 = por %p300, %p301
      %p303 = scmp.ne.s32.totalorder %s289, %s290
      %p304 = scmp.eq.s32.totalorder %s25, 1
      %p305 = por %p303, %p304
      %p307 = scmp.ne.s32.totalorder %s290, %s306
      %p308 = scmp.eq.s32.totalorder %s25, 0
      %p309 = por %p307, %p308
      %p310 = scmp.le.s32.totalorder 1, %s19
      %p311 = scmp.lt.s32.totalorder %s19, 3
      %p312 = pnand %p310, %p311
      %p313 = pneg %p312
      // Predicated region
      $region9: #{backbone_forward.1} parent=5 // pred_check
        _
      $region10: #{backbone_forward.1} parent=5 // pred_check_branch
        %315 = sbr.rel (%p312) target = $region12
      $region11: #{backbone_forward.1} parent=5 // pred_region
        %s316 = ssub.s32 %s19, 1
        // Predicated region
        $region13: #{backbone_forward.1} parent=11 // pred_check
          %p317 = pneg %p66
        $region14: #{backbone_forward.1} parent=11 // pred_check_branch
          %319 = sbr.rel (%p317) target = $region16
        $region15: #{backbone_forward.1} parent=11 // pred_region
          _
        $region16: #{backbone_forward.1} parent=11 // pred_fallthru
          _
        // Predicated region
        $region17: #{backbone_forward.1} parent=11 // pred_check
          %p320 = pneg %p87
        $region18: #{backbone_forward.1} parent=11 // pred_check_branch
          %322 = sbr.rel (%p320) target = $region20
        $region19: #{backbone_forward.1} parent=11 // pred_region
          _
        $region20: #{backbone_forward.1} parent=11 // pred_fallthru
          _
        // Predicated region
        $region21: #{backbone_forward.1} parent=11 // pred_check
          %p323 = pneg %p108
        $region22: #{backbone_forward.1} parent=11 // pred_check_branch
          %325 = sbr.rel (%p323) target = $region24
        $region23: #{backbone_forward.1} parent=11 // pred_region
          _
        $region24: #{backbone_forward.1} parent=11 // pred_fallthru
          _
        // Predicated region
        $region25: #{backbone_forward.1} parent=11 // pred_check
          %p326 = pneg %p129
        $region26: #{backbone_forward.1} parent=11 // pred_check_branch
          %328 = sbr.rel (%p326) target = $region28
        $region27: #{backbone_forward.1} parent=11 // pred_region
          _
        $region28: #{backbone_forward.1} parent=11 // pred_fallthru
          _
        // Predicated region
        $region29: #{backbone_forward.1} parent=11 // pred_check
          %p329 = pneg %p150
        $region30: #{backbone_forward.1} parent=11 // pred_check_branch
          %331 = sbr.rel (%p329) target = $region32
        $region31: #{backbone_forward.1} parent=11 // pred_region
          _
        $region32: #{backbone_forward.1} parent=11 // pred_fallthru
          _
        // Predicated region
        $region33: #{backbone_forward.1} parent=11 // pred_check
          %p332 = pneg %p171
        $region34: #{backbone_forward.1} parent=11 // pred_check_branch
          %334 = sbr.rel (%p332) target = $region36
        $region35: #{backbone_forward.1} parent=11 // pred_region
          _
        $region36: #{backbone_forward.1} parent=11 // pred_fallthru
          _
        // Predicated region
        $region37: #{backbone_forward.1} parent=11 // pred_check
          %p335 = pneg %p192
        $region38: #{backbone_forward.1} parent=11 // pred_check_branch
          %337 = sbr.rel (%p335) target = $region40
        $region39: #{backbone_forward.1} parent=11 // pred_region
          _
        $region40: #{backbone_forward.1} parent=11 // pred_fallthru
          _
        // Predicated region
        $region41: #{backbone_forward.1} parent=11 // pred_check
          %p338 = pneg %p213
        $region42: #{backbone_forward.1} parent=11 // pred_check_branch
          %340 = sbr.rel (%p338) target = $region44
        $region43: #{backbone_forward.1} parent=11 // pred_region
          _
        $region44: #{backbone_forward.1} parent=11 // pred_fallthru
          _
        // Predicated region
        $region45: #{backbone_forward.1} parent=11 // pred_check
          %p341 = pneg %p234
        $region46: #{backbone_forward.1} parent=11 // pred_check_branch
          %343 = sbr.rel (%p341) target = $region48
        $region47: #{backbone_forward.1} parent=11 // pred_region
          _
        $region48: #{backbone_forward.1} parent=11 // pred_fallthru
          _
        // Predicated region
        $region49: #{backbone_forward.1} parent=11 // pred_check
          %p344 = pneg %p255
        $region50: #{backbone_forward.1} parent=11 // pred_check_branch
          %346 = sbr.rel (%p344) target = $region52
        $region51: #{backbone_forward.1} parent=11 // pred_region
          _
        $region52: #{backbone_forward.1} parent=11 // pred_fallthru
          _
        // Predicated region
        $region53: #{backbone_forward.1} parent=11 // pred_check
          %p347 = pneg %p276
        $region54: #{backbone_forward.1} parent=11 // pred_check_branch
          %349 = sbr.rel (%p347) target = $region56
        $region55: #{backbone_forward.1} parent=11 // pred_region
          %351 = vsyncadd [#allocation3], 0
          %s352 = sshll.u32 %s11, 4
          %s353 = int_to_ptr.hbm [resolvable:$true] %s352
          %s354 = sshll.u32 [#allocation2], 4
          %s355 = int_to_ptr.vmem [resolvable:$true] %s354
          %360 = dma.hbm_to_vmem [thread:$0]  %s353, 32768, %s355, [#allocation3], 512, 512, 32
        $region56: #{backbone_forward.1} parent=11 // pred_fallthru
          _
      $region12: #{backbone_forward.1} parent=5 // pred_fallthru
        _
      %p361 = scmp.lt.s32.totalorder %s19, 2
      // Predicated region
      $region57: #{backbone_forward.1} parent=5 // pred_check
        %p362 = pneg %p361
      $region58: #{backbone_forward.1} parent=5 // pred_check_branch
        %364 = sbr.rel (%p362) target = $region60
      $region59: #{backbone_forward.1} parent=5 // pred_region
        // Predicated region
        $region61: #{backbone_forward.1} parent=59 // pred_check
          %p365 = pneg %p39
        $region62: #{backbone_forward.1} parent=59 // pred_check_branch
          %367 = sbr.rel (%p365) target = $region64
        $region63: #{backbone_forward.1} parent=59 // pred_region
          %s368 = smul.u32 16, %s19
          %p369 = scmp.lt.s32.totalorder %s368, 31
          %s370 = scalar_select %p369, %s368, 31
          %s371 = smul.addr %s370, 4
          %s372 = scalar_lea.vmem %s0, %s371
          %s373 = smul.u32 16, %s19
        $region64: #{backbone_forward.1} parent=59 // pred_fallthru
          _
      $region60: #{backbone_forward.1} parent=5 // pred_fallthru
        _
      %p374 = scmp.le.s32.totalorder 1, %s19
      %p375 = scmp.lt.s32.totalorder %s19, 3
      %p376 = pnand %p374, %p375
      %p377 = pneg %p376
      // Predicated region
      $region65: #{backbone_forward.1} parent=5 // pred_check
        _
      $region66: #{backbone_forward.1} parent=5 // pred_check_branch
        %379 = sbr.rel (%p376) target = $region68
      $region67: #{backbone_forward.1} parent=5 // pred_region
        %s380 = ssub.s32 %s19, 1
        // Predicated region
        $region69: #{backbone_forward.1} parent=67 // pred_check
          %p381 = pneg %p276
        $region70: #{backbone_forward.1} parent=67 // pred_check_branch
          %383 = sbr.rel (%p381) target = $region72
        $region71: #{backbone_forward.1} parent=67 // pred_region
          %385 = dma.done [#allocation3], 32768
        $region72: #{backbone_forward.1} parent=67 // pred_fallthru
          _
        %s386 = smul.u32 16, %s24
        %p387 = scmp.lt.s32.totalorder %s386, 31
        %s388 = scalar_select %p387, %s386, 31
        %s389 = smul.addr %s388, 4
        %s390 = scalar_lea.vmem %s0, %s389
        %p391 = pneg %p45
        %p392 = pneg %p42
        %p393 = pneg %p66
        %p394 = pneg %p63
        %p395 = pneg %p87
        %p396 = pneg %p84
        %p397 = pneg %p108
        %p398 = pneg %p105
        %p399 = pneg %p129
        %p400 = pneg %p126
        %p401 = pneg %p150
        %p402 = pneg %p147
        %p403 = pneg %p171
        %p404 = pneg %p168
        %p405 = pneg %p192
        %p406 = pneg %p189
        %p407 = pneg %p213
        %p408 = pneg %p210
        %p409 = pneg %p234
        %p410 = pneg %p231
        %p411 = pneg %p255
        %p412 = pneg %p252
        %p413 = pneg %p276
        %p414 = pneg %p273
        %p415 = pneg %p302
        %p416 = pneg %p299
        %s417 = smul.u32 8, %s24
        %p418 = scmp.lt.s32.totalorder %s417, 15
        %s419 = scalar_select %p418, %s417, 15
        %s420 = smul.addr %s419, 8
        %s421 = smul.addr %s420, 8
        %s422 = scalar_lea.vmem %s12, %s421
        %s423 = smul.u32 16, %s24
        %p424 = scmp.lt.s32.totalorder %s423, 31
        %s425 = scalar_select %p424, %s423, 31
        %s426 = smul.addr %s425, 4
        %s427 = scalar_lea.vmem %s0, %s426
        %s428 = smul.u32 16, %s24
        %s429 = smul.u32 8, %s24
        %p430 = scmp.lt.s32.totalorder %s429, 15
        %s431 = scalar_select %p430, %s429, 15
        %s432 = smul.addr %s431, 8
        %s433 = smul.addr %s432, 8
        %s434 = scalar_lea.vmem %s12, %s433
        %s435 = smul.u32 8, %s24
        %v437 = vld [vmem:[%s427] sm:$0xf]
        %v438 = vld [vmem:[%s427 + $0x4] sm:$0xf]
        %v439 = vld [vmem:[%s427 + $0x8] sm:$0xf]
        %v440 = vld [vmem:[%s427 + $0xc] sm:$0xf]
        %v441 = vld [vmem:[%s427 + $0x10] sm:$0xf]
        %v442 = vld [vmem:[%s427 + $0x14] sm:$0xf]
        %v443 = vld [vmem:[%s427 + $0x18] sm:$0xf]
        %v444 = vld [vmem:[%s427 + $0x1c] sm:$0xf]
        %v445 = vld [vmem:[%s427 + $0x20] sm:$0xf]
        %v446 = vld [vmem:[%s427 + $0x24] sm:$0xf]
        %v447 = vld [vmem:[%s427 + $0x28] sm:$0xf]
        %v448 = vld [vmem:[%s427 + $0x2c] sm:$0xf]
        %v449 = vld [vmem:[%s427 + $0x30] sm:$0xf]
        %v450 = vld [vmem:[%s427 + $0x34] sm:$0xf]
        %v451 = vld [vmem:[%s427 + $0x38] sm:$0xf]
        %v452 = vld [vmem:[%s427 + $0x3c] sm:$0xf]
        %v453 = vunpack.c.l.bf16 %v437
        %v454 = vunpack.c.l.bf16 %v438
        %v455 = vunpack.c.l.bf16 %v439
        %v456 = vunpack.c.l.bf16 %v440
        %v457 = vunpack.c.l.bf16 %v441
        %v458 = vunpack.c.l.bf16 %v442
        %v459 = vunpack.c.l.bf16 %v443
        %v460 = vunpack.c.l.bf16 %v444
        %v461 = vunpack.c.l.bf16 %v445
        %v462 = vunpack.c.l.bf16 %v446
        %v463 = vunpack.c.l.bf16 %v447
        %v464 = vunpack.c.l.bf16 %v448
        %v465 = vunpack.c.l.bf16 %v449
        %v466 = vunpack.c.l.bf16 %v450
        %v467 = vunpack.c.l.bf16 %v451
        %v468 = vunpack.c.l.bf16 %v452
        %v469 = vlaneseq
        %v470 = vshrl.u32 %v469, 7
        %v471 = vadd.s32 %v470, 8
        %v472 = vadd.s32 %v470, 16
        %v473 = vadd.s32 %v470, 24
        %v474 = vadd.s32 %v470, 32
        %v475 = vadd.s32 %v470, 40
        %v476 = vadd.s32 %v470, 48
        %v477 = vadd.s32 %v470, 56
        %v478 = vadd.s32 %v470, 64
        %v479 = vadd.s32 %v470, 72
        %v480 = vadd.s32 %v470, 80
        %v481 = vadd.s32 %v470, 88
        %v482 = vadd.s32 %v470, 96
        %v483 = vadd.s32 %v470, 104
        %v484 = vadd.s32 %v470, 112
        %v485 = vadd.s32 %v470, 120
        %v486 = vand.u32 %v470, 15
        %v487 = vand.u32 %v471, 15
        %v488 = vand.u32 %v472, 15
        %v489 = vand.u32 %v473, 15
        %v490 = vand.u32 %v474, 15
        %v491 = vand.u32 %v475, 15
        %v492 = vand.u32 %v476, 15
        %v493 = vand.u32 %v477, 15
        %v494 = vand.u32 %v478, 15
        %v495 = vand.u32 %v479, 15
        %v496 = vand.u32 %v480, 15
        %v497 = vand.u32 %v481, 15
        %v498 = vand.u32 %v482, 15
        %v499 = vand.u32 %v483, 15
        %v500 = vand.u32 %v484, 15
        %v501 = vand.u32 %v485, 15
        %vm502 = vcmp.ne.s32.totalorder %v486, 0
        %vm503 = vcmp.ne.s32.totalorder %v487, 0
        %vm504 = vcmp.ne.s32.totalorder %v488, 0
        %vm505 = vcmp.ne.s32.totalorder %v489, 0
        %vm506 = vcmp.ne.s32.totalorder %v490, 0
        %vm507 = vcmp.ne.s32.totalorder %v491, 0
        %vm508 = vcmp.ne.s32.totalorder %v492, 0
        %vm509 = vcmp.ne.s32.totalorder %v493, 0
        %vm510 = vcmp.ne.s32.totalorder %v494, 0
        %vm511 = vcmp.ne.s32.totalorder %v495, 0
        %vm512 = vcmp.ne.s32.totalorder %v496, 0
        %vm513 = vcmp.ne.s32.totalorder %v497, 0
        %vm514 = vcmp.ne.s32.totalorder %v498, 0
        %vm515 = vcmp.ne.s32.totalorder %v499, 0
        %vm516 = vcmp.ne.s32.totalorder %v500, 0
        %vm517 = vcmp.ne.s32.totalorder %v501, 0
        %vm518 = vcmp.ne.s32.totalorder %v486, 15
        %vm519 = vcmp.ne.s32.totalorder %v487, 15
        %vm520 = vcmp.ne.s32.totalorder %v488, 15
        %vm521 = vcmp.ne.s32.totalorder %v489, 15
        %vm522 = vcmp.ne.s32.totalorder %v490, 15
        %vm523 = vcmp.ne.s32.totalorder %v491, 15
        %vm524 = vcmp.ne.s32.totalorder %v492, 15
        %vm525 = vcmp.ne.s32.totalorder %v493, 15
        %vm526 = vcmp.ne.s32.totalorder %v494, 15
        %vm527 = vcmp.ne.s32.totalorder %v495, 15
        %vm528 = vcmp.ne.s32.totalorder %v496, 15
        %vm529 = vcmp.ne.s32.totalorder %v497, 15
        %vm530 = vcmp.ne.s32.totalorder %v498, 15
        %vm531 = vcmp.ne.s32.totalorder %v499, 15
        %vm532 = vcmp.ne.s32.totalorder %v500, 15
        %vm533 = vcmp.ne.s32.totalorder %v501, 15
        %v534 = vrot.slane %v453, 7
        %v535 = vrot.slane %v454, 7
        %v536 = vrot.slane %v455, 7
        %v537 = vrot.slane %v456, 7
        %v538 = vrot.slane %v457, 7
        %v539 = vrot.slane %v458, 7
        %v540 = vrot.slane %v459, 7
        %v541 = vrot.slane %v460, 7
        %v542 = vrot.slane %v461, 7
        %v543 = vrot.slane %v462, 7
        %v544 = vrot.slane %v463, 7
        %v545 = vrot.slane %v464, 7
        %v546 = vrot.slane %v465, 7
        %v547 = vrot.slane %v466, 7
        %v548 = vrot.slane %v467, 7
        %v549 = vrot.slane %v468, 7
        %vm550 = vcmp.lt.s32.totalorder %v470, 1
        %v551 = vsel %vm550, %v548, %v549
        %v552 = vsel %vm550, %v547, %v548
        %v553 = vsel %vm550, %v546, %v547
        %v554 = vsel %vm550, %v545, %v546
        %v555 = vsel %vm550, %v544, %v545
        %v556 = vsel %vm550, %v543, %v544
        %v557 = vsel %vm550, %v542, %v543
        %v558 = vsel %vm550, %v541, %v542
        %v559 = vsel %vm550, %v540, %v541
        %v560 = vsel %vm550, %v539, %v540
        %v561 = vsel %vm550, %v538, %v539
        %v562 = vsel %vm550, %v537, %v538
        %v563 = vsel %vm550, %v536, %v537
        %v564 = vsel %vm550, %v535, %v536
        %v565 = vsel %vm550, %v534, %v535
        %v566 = vsel %vm550, %v549, %v534
        %v567 = vsel %vm502, %v566, 0.0
        %v568 = vsel %vm503, %v565, 0.0
        %v569 = vsel %vm504, %v564, 0.0
        %v570 = vsel %vm505, %v563, 0.0
        %v571 = vsel %vm506, %v562, 0.0
        %v572 = vsel %vm507, %v561, 0.0
        %v573 = vsel %vm508, %v560, 0.0
        %v574 = vsel %vm509, %v559, 0.0
        %v575 = vsel %vm510, %v558, 0.0
        %v576 = vsel %vm511, %v557, 0.0
        %v577 = vsel %vm512, %v556, 0.0
        %v578 = vsel %vm513, %v555, 0.0
        %v579 = vsel %vm514, %v554, 0.0
        %v580 = vsel %vm515, %v553, 0.0
        %v581 = vsel %vm516, %v552, 0.0
        %v582 = vsel %vm517, %v551, 0.0
        %v583 = vrot.slane %v453, 1
        %v584 = vrot.slane %v454, 1
        %v585 = vrot.slane %v455, 1
        %v586 = vrot.slane %v456, 1
        %v587 = vrot.slane %v457, 1
        %v588 = vrot.slane %v458, 1
        %v589 = vrot.slane %v459, 1
        %v590 = vrot.slane %v460, 1
        %v591 = vrot.slane %v461, 1
        %v592 = vrot.slane %v462, 1
        %v593 = vrot.slane %v463, 1
        %v594 = vrot.slane %v464, 1
        %v595 = vrot.slane %v465, 1
        %v596 = vrot.slane %v466, 1
        %v597 = vrot.slane %v467, 1
        %v598 = vrot.slane %v468, 1
        %vm599 = vcmp.lt.s32.totalorder %v470, 7
        %v600 = vsel %vm599, %v597, %v598
        %v601 = vsel %vm599, %v596, %v597
        %v602 = vsel %vm599, %v595, %v596
        %v603 = vsel %vm599, %v594, %v595
        %v604 = vsel %vm599, %v593, %v594
        %v605 = vsel %vm599, %v592, %v593
        %v606 = vsel %vm599, %v591, %v592
        %v607 = vsel %vm599, %v590, %v591
        %v608 = vsel %vm599, %v589, %v590
        %v609 = vsel %vm599, %v588, %v589
        %v610 = vsel %vm599, %v587, %v588
        %v611 = vsel %vm599, %v586, %v587
        %v612 = vsel %vm599, %v585, %v586
        %v613 = vsel %vm599, %v584, %v585
        %v614 = vsel %vm599, %v583, %v584
        %v615 = vsel %vm599, %v598, %v583
        %v616 = vsel %vm518, %v614, 0.0
        %v617 = vsel %vm519, %v613, 0.0
        %v618 = vsel %vm520, %v612, 0.0
        %v619 = vsel %vm521, %v611, 0.0
        %v620 = vsel %vm522, %v610, 0.0
        %v621 = vsel %vm523, %v609, 0.0
        %v622 = vsel %vm524, %v608, 0.0
        %v623 = vsel %vm525, %v607, 0.0
        %v624 = vsel %vm526, %v606, 0.0
        %v625 = vsel %vm527, %v605, 0.0
        %v626 = vsel %vm528, %v604, 0.0
        %v627 = vsel %vm529, %v603, 0.0
        %v628 = vsel %vm530, %v602, 0.0
        %v629 = vsel %vm531, %v601, 0.0
        %v630 = vsel %vm532, %v600, 0.0
        %v631 = vsel %vm533, %v615, 0.0
        %v632 = vpack.c.bf16 %v568, %v567
        %v633 = vpack.c.bf16 %v454, %v453
        %v634 = vpack.c.bf16 %v617, %v616
        %v635 = vpack.c.bf16 %v570, %v569
        %v636 = vpack.c.bf16 %v456, %v455
        %v637 = vpack.c.bf16 %v619, %v618
        %v638 = vpack.c.bf16 %v572, %v571
        %v639 = vpack.c.bf16 %v458, %v457
        %v640 = vpack.c.bf16 %v621, %v620
        %v641 = vpack.c.bf16 %v574, %v573
        %v642 = vpack.c.bf16 %v460, %v459
        %v643 = vpack.c.bf16 %v623, %v622
        %v644 = vpack.c.bf16 %v576, %v575
        %v645 = vpack.c.bf16 %v462, %v461
        %v646 = vpack.c.bf16 %v625, %v624
        %v647 = vpack.c.bf16 %v578, %v577
        %v648 = vpack.c.bf16 %v464, %v463
        %v649 = vpack.c.bf16 %v627, %v626
        %v650 = vpack.c.bf16 %v580, %v579
        %v651 = vpack.c.bf16 %v466, %v465
        %v652 = vpack.c.bf16 %v629, %v628
        %v653 = vpack.c.bf16 %v582, %v581
        %v654 = vpack.c.bf16 %v468, %v467
        %v655 = vpack.c.bf16 %v631, %v630
        %v656 = vld [vmem:[%s1] sm:$0xf]
        %v657 = vld [vmem:[%s1 + $0x4] sm:$0xf]
        %v658 = vld [vmem:[%s1 + $0x8] sm:$0xf]
        %v659 = vld [vmem:[%s1 + $0xc] sm:$0xf]
        %v660 = vld [vmem:[%s1 + $0x10] sm:$0xf]
        %v661 = vld [vmem:[%s1 + $0x14] sm:$0xf]
        %v662 = vld [vmem:[%s1 + $0x18] sm:$0xf]
        %v663 = vld [vmem:[%s1 + $0x1c] sm:$0xf]
        %v664 = vld [vmem:[%s1 + $0x20] sm:$0xf]
        %v665 = vld [vmem:[%s1 + $0x24] sm:$0xf]
        %v666 = vld [vmem:[%s1 + $0x28] sm:$0xf]
        %v667 = vld [vmem:[%s1 + $0x2c] sm:$0xf]
        %v668 = vld [vmem:[%s1 + $0x30] sm:$0xf]
        %v669 = vld [vmem:[%s1 + $0x34] sm:$0xf]
        %v670 = vld [vmem:[%s1 + $0x38] sm:$0xf]
        %v671 = vld [vmem:[%s1 + $0x3c] sm:$0xf]
        %v672 = vld [vmem:[%s1 + $0x40] sm:$0xf]
        %v673 = vld [vmem:[%s1 + $0x44] sm:$0xf]
        %v674 = vld [vmem:[%s1 + $0x48] sm:$0xf]
        %v675 = vld [vmem:[%s1 + $0x4c] sm:$0xf]
        %v676 = vld [vmem:[%s1 + $0x50] sm:$0xf]
        %v677 = vld [vmem:[%s1 + $0x54] sm:$0xf]
        %v678 = vld [vmem:[%s1 + $0x58] sm:$0xf]
        %v679 = vld [vmem:[%s1 + $0x5c] sm:$0xf]
        %v680 = vld [vmem:[%s1 + $0x60] sm:$0xf]
        %v681 = vld [vmem:[%s1 + $0x64] sm:$0xf]
        %v682 = vld [vmem:[%s1 + $0x68] sm:$0xf]
        %v683 = vld [vmem:[%s1 + $0x6c] sm:$0xf]
        %v684 = vld [vmem:[%s1 + $0x70] sm:$0xf]
        %v685 = vld [vmem:[%s1 + $0x74] sm:$0xf]
        %v686 = vld [vmem:[%s1 + $0x78] sm:$0xf]
        %v687 = vld [vmem:[%s1 + $0x7c] sm:$0xf]
        %v688 = vld [vmem:[%s1 + $0x80] sm:$0xf]
        %v689 = vld [vmem:[%s1 + $0x84] sm:$0xf]
        %v690 = vld [vmem:[%s1 + $0x88] sm:$0xf]
        %v691 = vld [vmem:[%s1 + $0x8c] sm:$0xf]
        %v692 = vld [vmem:[%s1 + $0x90] sm:$0xf]
        %v693 = vld [vmem:[%s1 + $0x94] sm:$0xf]
        %v694 = vld [vmem:[%s1 + $0x98] sm:$0xf]
        %v695 = vld [vmem:[%s1 + $0x9c] sm:$0xf]
        %v696 = vld [vmem:[%s1 + $0xa0] sm:$0xf]
        %v697 = vld [vmem:[%s1 + $0xa4] sm:$0xf]
        %v698 = vld [vmem:[%s1 + $0xa8] sm:$0xf]
        %v699 = vld [vmem:[%s1 + $0xac] sm:$0xf]
        %v700 = vld [vmem:[%s1 + $0xb0] sm:$0xf]
        %v701 = vld [vmem:[%s1 + $0xb4] sm:$0xf]
        %v702 = vld [vmem:[%s1 + $0xb8] sm:$0xf]
        %v703 = vld [vmem:[%s1 + $0xbc] sm:$0xf]
        %v704 = vld [vmem:[%s2] sm:$0x1]
        %v706 = vperm.slane %v704, 0
        %v756 = vunpack.c.l.b16 %v656
        %v757 = vunpack.c.l.b16 %v657
        %v758 = vunpack.c.l.b16 %v658
        %v759 = vunpack.c.l.b16 %v659
        %v760 = vunpack.c.l.b16 %v660
        %v761 = vunpack.c.l.b16 %v661
        %v762 = vunpack.c.l.b16 %v662
        %v763 = vunpack.c.l.b16 %v663
        %v764 = vunpack.c.l.b16 %v664
        %v765 = vunpack.c.l.b16 %v665
        %v766 = vunpack.c.l.b16 %v666
        %v767 = vunpack.c.l.b16 %v667
        %v768 = vunpack.c.l.b16 %v668
        %v769 = vunpack.c.l.b16 %v669
        %v770 = vunpack.c.l.b16 %v670
        %v771 = vunpack.c.l.b16 %v671
        %v772 = vunpack.c.l.b16 %v672
        %v773 = vunpack.c.l.b16 %v673
        %v774 = vunpack.c.l.b16 %v674
        %v775 = vunpack.c.l.b16 %v675
        %v776 = vunpack.c.l.b16 %v676
        %v777 = vunpack.c.l.b16 %v677
        %v778 = vunpack.c.l.b16 %v678
        %v779 = vunpack.c.l.b16 %v679
        %v780 = vunpack.c.l.b16 %v680
        %v781 = vunpack.c.l.b16 %v681
        %v782 = vunpack.c.l.b16 %v682
        %v783 = vunpack.c.l.b16 %v683
        %v784 = vunpack.c.l.b16 %v684
        %v785 = vunpack.c.l.b16 %v685
        %v786 = vunpack.c.l.b16 %v686
        %v787 = vunpack.c.l.b16 %v687
        %v788 = vunpack.c.l.b16 %v688
        %v789 = vunpack.c.l.b16 %v689
        %v790 = vunpack.c.l.b16 %v690
        %v791 = vunpack.c.l.b16 %v691
        %v792 = vunpack.c.l.b16 %v692
        %v793 = vunpack.c.l.b16 %v693
        %v794 = vunpack.c.l.b16 %v694
        %v795 = vunpack.c.l.b16 %v695
        %v796 = vunpack.c.l.b16 %v696
        %v797 = vunpack.c.l.b16 %v697
        %v798 = vunpack.c.l.b16 %v698
        %v799 = vunpack.c.l.b16 %v699
        %v800 = vunpack.c.l.b16 %v700
        %v801 = vunpack.c.l.b16 %v701
        %v802 = vunpack.c.l.b16 %v702
        %v803 = vunpack.c.l.b16 %v703
        %v804 = vpack.c.b16 %v757, %v756
        %v805 = vpack.c.b16 %v759, %v758
        %v806 = vpack.c.b16 %v761, %v760
        %v807 = vpack.c.b16 %v763, %v762
        %v808 = vpack.c.b16 %v765, %v764
        %v809 = vpack.c.b16 %v767, %v766
        %v810 = vpack.c.b16 %v769, %v768
        %v811 = vpack.c.b16 %v771, %v770
        %v812 = vpack.c.b16 %v773, %v772
        %v813 = vpack.c.b16 %v775, %v774
        %v814 = vpack.c.b16 %v777, %v776
        %v815 = vpack.c.b16 %v779, %v778
        %v816 = vpack.c.b16 %v781, %v780
        %v817 = vpack.c.b16 %v783, %v782
        %v818 = vpack.c.b16 %v785, %v784
        %v819 = vpack.c.b16 %v787, %v786
        %v820 = vpack.c.b16 %v789, %v788
        %v821 = vpack.c.b16 %v791, %v790
        %v822 = vpack.c.b16 %v793, %v792
        %v823 = vpack.c.b16 %v795, %v794
        %v824 = vpack.c.b16 %v797, %v796
        %v825 = vpack.c.b16 %v799, %v798
        %v826 = vpack.c.b16 %v801, %v800
        %v827 = vpack.c.b16 %v803, %v802
        %852 = vmatpush.bf16.msra.mxu0 %v811
        %853 = vmatpush.bf16.msra.mxu0 %v810
        %854 = vmatpush.bf16.msra.mxu0 %v809
        %855 = vmatpush.bf16.msra.mxu0 %v808
        %856 = vmatpush.bf16.msra.mxu0 %v807
        %857 = vmatpush.bf16.msra.mxu0 %v806
        %858 = vmatpush.bf16.msra.mxu0 %v805
        %859 = vmatpush.bf16.msra.mxu0 %v804
        %860 = vmatmul.bf16.gmra.mxu0 %v632
        %v861 = vpop.f32.mrf.mxu0
        %v862 = vadd.f32 %v706, %v861
        %v863 = vpop.f32.mrf.mxu0
        %v864 = vadd.f32 %v706, %v863
        %865 = vmatmul.bf16.gmra.mxu0 %v635
        %v866 = vpop.f32.mrf.mxu0
        %v867 = vadd.f32 %v706, %v866
        %v868 = vpop.f32.mrf.mxu0
        %v869 = vadd.f32 %v706, %v868
        %870 = vmatmul.bf16.gmra.mxu0 %v638
        %v871 = vpop.f32.mrf.mxu0
        %v872 = vadd.f32 %v706, %v871
        %v873 = vpop.f32.mrf.mxu0
        %v874 = vadd.f32 %v706, %v873
        %875 = vmatmul.bf16.gmra.mxu0 %v641
        %v876 = vpop.f32.mrf.mxu0
        %v877 = vadd.f32 %v706, %v876
        %v878 = vpop.f32.mrf.mxu0
        %v879 = vadd.f32 %v706, %v878
        %880 = vmatmul.bf16.gmra.mxu0 %v644
        %v881 = vpop.f32.mrf.mxu0
        %v882 = vadd.f32 %v706, %v881
        %v883 = vpop.f32.mrf.mxu0
        %v884 = vadd.f32 %v706, %v883
        %885 = vmatmul.bf16.gmra.mxu0 %v647
        %v886 = vpop.f32.mrf.mxu0
        %v887 = vadd.f32 %v706, %v886
        %v888 = vpop.f32.mrf.mxu0
        %v889 = vadd.f32 %v706, %v888
        %890 = vmatmul.bf16.gmra.mxu0 %v650
        %v891 = vpop.f32.mrf.mxu0
        %v892 = vadd.f32 %v706, %v891
        %v893 = vpop.f32.mrf.mxu0
        %v894 = vadd.f32 %v706, %v893
        %895 = vmatmul.bf16.gmra.mxu0 %v653
        %v896 = vpop.f32.mrf.mxu0
        %v897 = vadd.f32 %v706, %v896
        %v898 = vpop.f32.mrf.mxu0
        %v899 = vadd.f32 %v706, %v898
        %900 = vdwg.mxu0
        %901 = vmatpush.bf16.msra.mxu0 %v819
        %902 = vmatpush.bf16.msra.mxu0 %v818
        %903 = vmatpush.bf16.msra.mxu0 %v817
        %904 = vmatpush.bf16.msra.mxu0 %v816
        %905 = vmatpush.bf16.msra.mxu0 %v815
        %906 = vmatpush.bf16.msra.mxu0 %v814
        %907 = vmatpush.bf16.msra.mxu0 %v813
        %908 = vmatpush.bf16.msra.mxu0 %v812
        %909 = vmatmul.bf16.gmra.mxu0 %v633
        %v910 = vpop.f32.mrf.mxu0
        %v911 = vadd.f32 %v862, %v910
        %v912 = vpop.f32.mrf.mxu0
        %v913 = vadd.f32 %v864, %v912
        %914 = vmatmul.bf16.gmra.mxu0 %v636
        %v915 = vpop.f32.mrf.mxu0
        %v916 = vadd.f32 %v867, %v915
        %v917 = vpop.f32.mrf.mxu0
        %v918 = vadd.f32 %v869, %v917
        %919 = vmatmul.bf16.gmra.mxu0 %v639
        %v920 = vpop.f32.mrf.mxu0
        %v921 = vadd.f32 %v872, %v920
        %v922 = vpop.f32.mrf.mxu0
        %v923 = vadd.f32 %v874, %v922
        %924 = vmatmul.bf16.gmra.mxu0 %v642
        %v925 = vpop.f32.mrf.mxu0
        %v926 = vadd.f32 %v877, %v925
        %v927 = vpop.f32.mrf.mxu0
        %v928 = vadd.f32 %v879, %v927
        %929 = vmatmul.bf16.gmra.mxu0 %v645
        %v930 = vpop.f32.mrf.mxu0
        %v931 = vadd.f32 %v882, %v930
        %v932 = vpop.f32.mrf.mxu0
        %v933 = vadd.f32 %v884, %v932
        %934 = vmatmul.bf16.gmra.mxu0 %v648
        %v935 = vpop.f32.mrf.mxu0
        %v936 = vadd.f32 %v887, %v935
        %v937 = vpop.f32.mrf.mxu0
        %v938 = vadd.f32 %v889, %v937
        %939 = vmatmul.bf16.gmra.mxu0 %v651
        %v940 = vpop.f32.mrf.mxu0
        %v941 = vadd.f32 %v892, %v940
        %v942 = vpop.f32.mrf.mxu0
        %v943 = vadd.f32 %v894, %v942
        %944 = vmatmul.bf16.gmra.mxu0 %v654
        %v945 = vpop.f32.mrf.mxu0
        %v946 = vadd.f32 %v897, %v945
        %v947 = vpop.f32.mrf.mxu0
        %v948 = vadd.f32 %v899, %v947
        %949 = vdwg.mxu0
        %950 = vmatpush.bf16.msra.mxu0 %v827
        %951 = vmatpush.bf16.msra.mxu0 %v826
        %952 = vmatpush.bf16.msra.mxu0 %v825
        %953 = vmatpush.bf16.msra.mxu0 %v824
        %954 = vmatpush.bf16.msra.mxu0 %v823
        %955 = vmatpush.bf16.msra.mxu0 %v822
        %956 = vmatpush.bf16.msra.mxu0 %v821
        %957 = vmatpush.bf16.msra.mxu0 %v820
        %958 = vmatmul.bf16.gmra.mxu0 %v634
        %v959 = vpop.f32.mrf.mxu0
        %v960 = vadd.f32 %v911, %v959
        %v961 = vpop.f32.mrf.mxu0
        %v962 = vadd.f32 %v913, %v961
        %963 = vmatmul.bf16.gmra.mxu0 %v637
        %v964 = vpop.f32.mrf.mxu0
        %v965 = vadd.f32 %v916, %v964
        %v966 = vpop.f32.mrf.mxu0
        %v967 = vadd.f32 %v918, %v966
        %968 = vmatmul.bf16.gmra.mxu0 %v640
        %v969 = vpop.f32.mrf.mxu0
        %v970 = vadd.f32 %v921, %v969
        %v971 = vpop.f32.mrf.mxu0
        %v972 = vadd.f32 %v923, %v971
        %973 = vmatmul.bf16.gmra.mxu0 %v643
        %v974 = vpop.f32.mrf.mxu0
        %v975 = vadd.f32 %v926, %v974
        %v976 = vpop.f32.mrf.mxu0
        %v977 = vadd.f32 %v928, %v976
        %978 = vmatmul.bf16.gmra.mxu0 %v646
        %v979 = vpop.f32.mrf.mxu0
        %v980 = vadd.f32 %v931, %v979
        %v981 = vpop.f32.mrf.mxu0
        %v982 = vadd.f32 %v933, %v981
        %983 = vmatmul.bf16.gmra.mxu0 %v649
        %v984 = vpop.f32.mrf.mxu0
        %v985 = vadd.f32 %v936, %v984
        %v986 = vpop.f32.mrf.mxu0
        %v987 = vadd.f32 %v938, %v986
        %988 = vmatmul.bf16.gmra.mxu0 %v652
        %v989 = vpop.f32.mrf.mxu0
        %v990 = vadd.f32 %v941, %v989
        %v991 = vpop.f32.mrf.mxu0
        %v992 = vadd.f32 %v943, %v991
        %993 = vmatmul.bf16.gmra.mxu0 %v655
        %v994 = vpop.f32.mrf.mxu0
        %v995 = vadd.f32 %v946, %v994
        %v996 = vpop.f32.mrf.mxu0
        %v997 = vadd.f32 %v948, %v996
        %998 = vdwg.mxu0
        %v999 = vmax.f32 %v960, 0.0
        %v1000 = vmax.f32 %v962, 0.0
        %v1001 = vmax.f32 %v965, 0.0
        %v1002 = vmax.f32 %v967, 0.0
        %v1003 = vmax.f32 %v970, 0.0
        %v1004 = vmax.f32 %v972, 0.0
        %v1005 = vmax.f32 %v975, 0.0
        %v1006 = vmax.f32 %v977, 0.0
        %v1007 = vmax.f32 %v980, 0.0
        %v1008 = vmax.f32 %v982, 0.0
        %v1009 = vmax.f32 %v985, 0.0
        %v1010 = vmax.f32 %v987, 0.0
        %v1011 = vmax.f32 %v990, 0.0
        %v1012 = vmax.f32 %v992, 0.0
        %v1013 = vmax.f32 %v995, 0.0
        %v1014 = vmax.f32 %v997, 0.0
        %v1015 = vpack.c.bf16 %v999, %v999
        %v1016 = vpack.c.bf16 %v1000, %v1000
        %v1017 = vpack.c.bf16 %v1001, %v1001
        %v1018 = vpack.c.bf16 %v1002, %v1002
        %v1019 = vpack.c.bf16 %v1003, %v1003
        %v1020 = vpack.c.bf16 %v1004, %v1004
        %v1021 = vpack.c.bf16 %v1005, %v1005
        %v1022 = vpack.c.bf16 %v1006, %v1006
        %v1023 = vpack.c.bf16 %v1007, %v1007
        %v1024 = vpack.c.bf16 %v1008, %v1008
        %v1025 = vpack.c.bf16 %v1009, %v1009
        %v1026 = vpack.c.bf16 %v1010, %v1010
        %v1027 = vpack.c.bf16 %v1011, %v1011
        %v1028 = vpack.c.bf16 %v1012, %v1012
        %v1029 = vpack.c.bf16 %v1013, %v1013
        %v1030 = vpack.c.bf16 %v1014, %v1014
        %v1031 = vunpack.c.l.bf16 %v1015
        %v1032 = vunpack.c.l.bf16 %v1016
        %v1033 = vunpack.c.l.bf16 %v1017
        %v1034 = vunpack.c.l.bf16 %v1018
        %v1035 = vunpack.c.l.bf16 %v1019
        %v1036 = vunpack.c.l.bf16 %v1020
        %v1037 = vunpack.c.l.bf16 %v1021
        %v1038 = vunpack.c.l.bf16 %v1022
        %v1039 = vunpack.c.l.bf16 %v1023
        %v1040 = vunpack.c.l.bf16 %v1024
        %v1041 = vunpack.c.l.bf16 %v1025
        %v1042 = vunpack.c.l.bf16 %v1026
        %v1043 = vunpack.c.l.bf16 %v1027
        %v1044 = vunpack.c.l.bf16 %v1028
        %v1045 = vunpack.c.l.bf16 %v1029
        %v1046 = vunpack.c.l.bf16 %v1030
        %v1047 = vrot.slane %v1031, 7
        %v1048 = vrot.slane %v1032, 7
        %v1049 = vrot.slane %v1033, 7
        %v1050 = vrot.slane %v1034, 7
        %v1051 = vrot.slane %v1035, 7
        %v1052 = vrot.slane %v1036, 7
        %v1053 = vrot.slane %v1037, 7
        %v1054 = vrot.slane %v1038, 7
        %v1055 = vrot.slane %v1039, 7
        %v1056 = vrot.slane %v1040, 7
        %v1057 = vrot.slane %v1041, 7
        %v1058 = vrot.slane %v1042, 7
        %v1059 = vrot.slane %v1043, 7
        %v1060 = vrot.slane %v1044, 7
        %v1061 = vrot.slane %v1045, 7
        %v1062 = vrot.slane %v1046, 7
        %v1063 = vsel %vm550, %v1061, %v1062
        %v1064 = vsel %vm550, %v1060, %v1061
        %v1065 = vsel %vm550, %v1059, %v1060
        %v1066 = vsel %vm550, %v1058, %v1059
        %v1067 = vsel %vm550, %v1057, %v1058
        %v1068 = vsel %vm550, %v1056, %v1057
        %v1069 = vsel %vm550, %v1055, %v1056
        %v1070 = vsel %vm550, %v1054, %v1055
        %v1071 = vsel %vm550, %v1053, %v1054
        %v1072 = vsel %vm550, %v1052, %v1053
        %v1073 = vsel %vm550, %v1051, %v1052
        %v1074 = vsel %vm550, %v1050, %v1051
        %v1075 = vsel %vm550, %v1049, %v1050
        %v1076 = vsel %vm550, %v1048, %v1049
        %v1077 = vsel %vm550, %v1047, %v1048
        %v1078 = vsel %vm550, %v1062, %v1047
        %v1079 = vsel %vm502, %v1078, 0.0
        %v1080 = vsel %vm503, %v1077, 0.0
        %v1081 = vsel %vm504, %v1076, 0.0
        %v1082 = vsel %vm505, %v1075, 0.0
        %v1083 = vsel %vm506, %v1074, 0.0
        %v1084 = vsel %vm507, %v1073, 0.0
        %v1085 = vsel %vm508, %v1072, 0.0
        %v1086 = vsel %vm509, %v1071, 0.0
        %v1087 = vsel %vm510, %v1070, 0.0
        %v1088 = vsel %vm511, %v1069, 0.0
        %v1089 = vsel %vm512, %v1068, 0.0
        %v1090 = vsel %vm513, %v1067, 0.0
        %v1091 = vsel %vm514, %v1066, 0.0
        %v1092 = vsel %vm515, %v1065, 0.0
        %v1093 = vsel %vm516, %v1064, 0.0
        %v1094 = vsel %vm517, %v1063, 0.0
        %v1095 = vrot.slane %v1031, 1
        %v1096 = vrot.slane %v1032, 1
        %v1097 = vrot.slane %v1033, 1
        %v1098 = vrot.slane %v1034, 1
        %v1099 = vrot.slane %v1035, 1
        %v1100 = vrot.slane %v1036, 1
        %v1101 = vrot.slane %v1037, 1
        %v1102 = vrot.slane %v1038, 1
        %v1103 = vrot.slane %v1039, 1
        %v1104 = vrot.slane %v1040, 1
        %v1105 = vrot.slane %v1041, 1
        %v1106 = vrot.slane %v1042, 1
        %v1107 = vrot.slane %v1043, 1
        %v1108 = vrot.slane %v1044, 1
        %v1109 = vrot.slane %v1045, 1
        %v1110 = vrot.slane %v1046, 1
        %v1111 = vsel %vm599, %v1109, %v1110
        %v1112 = vsel %vm599, %v1108, %v1109
        %v1113 = vsel %vm599, %v1107, %v1108
        %v1114 = vsel %vm599, %v1106, %v1107
        %v1115 = vsel %vm599, %v1105, %v1106
        %v1116 = vsel %vm599, %v1104, %v1105
        %v1117 = vsel %vm599, %v1103, %v1104
        %v1118 = vsel %vm599, %v1102, %v1103
        %v1119 = vsel %vm599, %v1101, %v1102
        %v1120 = vsel %vm599, %v1100, %v1101
        %v1121 = vsel %vm599, %v1099, %v1100
        %v1122 = vsel %vm599, %v1098, %v1099
        %v1123 = vsel %vm599, %v1097, %v1098
        %v1124 = vsel %vm599, %v1096, %v1097
        %v1125 = vsel %vm599, %v1095, %v1096
        %v1126 = vsel %vm599, %v1110, %v1095
        %v1127 = vsel %vm518, %v1125, 0.0
        %v1128 = vsel %vm519, %v1124, 0.0
        %v1129 = vsel %vm520, %v1123, 0.0
        %v1130 = vsel %vm521, %v1122, 0.0
        %v1131 = vsel %vm522, %v1121, 0.0
        %v1132 = vsel %vm523, %v1120, 0.0
        %v1133 = vsel %vm524, %v1119, 0.0
        %v1134 = vsel %vm525, %v1118, 0.0
        %v1135 = vsel %vm526, %v1117, 0.0
        %v1136 = vsel %vm527, %v1116, 0.0
        %v1137 = vsel %vm528, %v1115, 0.0
        %v1138 = vsel %vm529, %v1114, 0.0
        %v1139 = vsel %vm530, %v1113, 0.0
        %v1140 = vsel %vm531, %v1112, 0.0
        %v1141 = vsel %vm532, %v1111, 0.0
        %v1142 = vsel %vm533, %v1126, 0.0
        %v1143 = vpack.c.bf16 %v1080, %v1079
        %v1144 = vpack.c.bf16 %v1032, %v1031
        %v1145 = vpack.c.bf16 %v1128, %v1127
        %v1146 = vpack.c.bf16 %v1082, %v1081
        %v1147 = vpack.c.bf16 %v1034, %v1033
        %v1148 = vpack.c.bf16 %v1130, %v1129
        %v1149 = vpack.c.bf16 %v1084, %v1083
        %v1150 = vpack.c.bf16 %v1036, %v1035
        %v1151 = vpack.c.bf16 %v1132, %v1131
        %v1152 = vpack.c.bf16 %v1086, %v1085
        %v1153 = vpack.c.bf16 %v1038, %v1037
        %v1154 = vpack.c.bf16 %v1134, %v1133
        %v1155 = vpack.c.bf16 %v1088, %v1087
        %v1156 = vpack.c.bf16 %v1040, %v1039
        %v1157 = vpack.c.bf16 %v1136, %v1135
        %v1158 = vpack.c.bf16 %v1090, %v1089
        %v1159 = vpack.c.bf16 %v1042, %v1041
        %v1160 = vpack.c.bf16 %v1138, %v1137
        %v1161 = vpack.c.bf16 %v1092, %v1091
        %v1162 = vpack.c.bf16 %v1044, %v1043
        %v1163 = vpack.c.bf16 %v1140, %v1139
        %v1164 = vpack.c.bf16 %v1094, %v1093
        %v1165 = vpack.c.bf16 %v1046, %v1045
        %v1166 = vpack.c.bf16 %v1142, %v1141
        %s1167 = scalar_lea.vmem %s1, 192
        %v1168 = vld [vmem:[%s1167] sm:$0xf]
        %v1169 = vld [vmem:[%s1167 + $0x4] sm:$0xf]
        %v1170 = vld [vmem:[%s1167 + $0x8] sm:$0xf]
        %v1171 = vld [vmem:[%s1167 + $0xc] sm:$0xf]
        %v1172 = vld [vmem:[%s1167 + $0x10] sm:$0xf]
        %v1173 = vld [vmem:[%s1167 + $0x14] sm:$0xf]
        %v1174 = vld [vmem:[%s1167 + $0x18] sm:$0xf]
        %v1175 = vld [vmem:[%s1167 + $0x1c] sm:$0xf]
        %v1176 = vld [vmem:[%s1167 + $0x20] sm:$0xf]
        %v1177 = vld [vmem:[%s1167 + $0x24] sm:$0xf]
        %v1178 = vld [vmem:[%s1167 + $0x28] sm:$0xf]
        %v1179 = vld [vmem:[%s1167 + $0x2c] sm:$0xf]
        %v1180 = vld [vmem:[%s1167 + $0x30] sm:$0xf]
        %v1181 = vld [vmem:[%s1167 + $0x34] sm:$0xf]
        %v1182 = vld [vmem:[%s1167 + $0x38] sm:$0xf]
        %v1183 = vld [vmem:[%s1167 + $0x3c] sm:$0xf]
        %v1184 = vld [vmem:[%s1167 + $0x40] sm:$0xf]
        %v1185 = vld [vmem:[%s1167 + $0x44] sm:$0xf]
        %v1186 = vld [vmem:[%s1167 + $0x48] sm:$0xf]
        %v1187 = vld [vmem:[%s1167 + $0x4c] sm:$0xf]
        %v1188 = vld [vmem:[%s1167 + $0x50] sm:$0xf]
        %v1189 = vld [vmem:[%s1167 + $0x54] sm:$0xf]
        %v1190 = vld [vmem:[%s1167 + $0x58] sm:$0xf]
        %v1191 = vld [vmem:[%s1167 + $0x5c] sm:$0xf]
        %v1192 = vld [vmem:[%s1167 + $0x60] sm:$0xf]
        %v1193 = vld [vmem:[%s1167 + $0x64] sm:$0xf]
        %v1194 = vld [vmem:[%s1167 + $0x68] sm:$0xf]
        %v1195 = vld [vmem:[%s1167 + $0x6c] sm:$0xf]
        %v1196 = vld [vmem:[%s1167 + $0x70] sm:$0xf]
        %v1197 = vld [vmem:[%s1167 + $0x74] sm:$0xf]
        %v1198 = vld [vmem:[%s1167 + $0x78] sm:$0xf]
        %v1199 = vld [vmem:[%s1167 + $0x7c] sm:$0xf]
        %v1200 = vld [vmem:[%s1167 + $0x80] sm:$0xf]
        %v1201 = vld [vmem:[%s1167 + $0x84] sm:$0xf]
        %v1202 = vld [vmem:[%s1167 + $0x88] sm:$0xf]
        %v1203 = vld [vmem:[%s1167 + $0x8c] sm:$0xf]
        %v1204 = vld [vmem:[%s1167 + $0x90] sm:$0xf]
        %v1205 = vld [vmem:[%s1167 + $0x94] sm:$0xf]
        %v1206 = vld [vmem:[%s1167 + $0x98] sm:$0xf]
        %v1207 = vld [vmem:[%s1167 + $0x9c] sm:$0xf]
        %v1208 = vld [vmem:[%s1167 + $0xa0] sm:$0xf]
        %v1209 = vld [vmem:[%s1167 + $0xa4] sm:$0xf]
        %v1210 = vld [vmem:[%s1167 + $0xa8] sm:$0xf]
        %v1211 = vld [vmem:[%s1167 + $0xac] sm:$0xf]
        %v1212 = vld [vmem:[%s1167 + $0xb0] sm:$0xf]
        %v1213 = vld [vmem:[%s1167 + $0xb4] sm:$0xf]
        %v1214 = vld [vmem:[%s1167 + $0xb8] sm:$0xf]
        %v1215 = vld [vmem:[%s1167 + $0xbc] sm:$0xf]
        %s1216 = scalar_lea.vmem %s2, 1
        %v1217 = vld [vmem:[%s1216] sm:$0x1]
        %v1219 = vperm.slane %v1217, 0
        %v1269 = vunpack.c.l.b16 %v1168
        %v1270 = vunpack.c.l.b16 %v1169
        %v1271 = vunpack.c.l.b16 %v1170
        %v1272 = vunpack.c.l.b16 %v1171
        %v1273 = vunpack.c.l.b16 %v1172
        %v1274 = vunpack.c.l.b16 %v1173
        %v1275 = vunpack.c.l.b16 %v1174
        %v1276 = vunpack.c.l.b16 %v1175
        %v1277 = vunpack.c.l.b16 %v1176
        %v1278 = vunpack.c.l.b16 %v1177
        %v1279 = vunpack.c.l.b16 %v1178
        %v1280 = vunpack.c.l.b16 %v1179
        %v1281 = vunpack.c.l.b16 %v1180
        %v1282 = vunpack.c.l.b16 %v1181
        %v1283 = vunpack.c.l.b16 %v1182
        %v1284 = vunpack.c.l.b16 %v1183
        %v1285 = vunpack.c.l.b16 %v1184
        %v1286 = vunpack.c.l.b16 %v1185
        %v1287 = vunpack.c.l.b16 %v1186
        %v1288 = vunpack.c.l.b16 %v1187
        %v1289 = vunpack.c.l.b16 %v1188
        %v1290 = vunpack.c.l.b16 %v1189
        %v1291 = vunpack.c.l.b16 %v1190
        %v1292 = vunpack.c.l.b16 %v1191
        %v1293 = vunpack.c.l.b16 %v1192
        %v1294 = vunpack.c.l.b16 %v1193
        %v1295 = vunpack.c.l.b16 %v1194
        %v1296 = vunpack.c.l.b16 %v1195
        %v1297 = vunpack.c.l.b16 %v1196
        %v1298 = vunpack.c.l.b16 %v1197
        %v1299 = vunpack.c.l.b16 %v1198
        %v1300 = vunpack.c.l.b16 %v1199
        %v1301 = vunpack.c.l.b16 %v1200
        %v1302 = vunpack.c.l.b16 %v1201
        %v1303 = vunpack.c.l.b16 %v1202
        %v1304 = vunpack.c.l.b16 %v1203
        %v1305 = vunpack.c.l.b16 %v1204
        %v1306 = vunpack.c.l.b16 %v1205
        %v1307 = vunpack.c.l.b16 %v1206
        %v1308 = vunpack.c.l.b16 %v1207
        %v1309 = vunpack.c.l.b16 %v1208
        %v1310 = vunpack.c.l.b16 %v1209
        %v1311 = vunpack.c.l.b16 %v1210
        %v1312 = vunpack.c.l.b16 %v1211
        %v1313 = vunpack.c.l.b16 %v1212
        %v1314 = vunpack.c.l.b16 %v1213
        %v1315 = vunpack.c.l.b16 %v1214
        %v1316 = vunpack.c.l.b16 %v1215
        %v1317 = vpack.c.b16 %v1270, %v1269
        %v1318 = vpack.c.b16 %v1272, %v1271
        %v1319 = vpack.c.b16 %v1274, %v1273
        %v1320 = vpack.c.b16 %v1276, %v1275
        %v1321 = vpack.c.b16 %v1278, %v1277
        %v1322 = vpack.c.b16 %v1280, %v1279
        %v1323 = vpack.c.b16 %v1282, %v1281
        %v1324 = vpack.c.b16 %v1284, %v1283
        %v1325 = vpack.c.b16 %v1286, %v1285
        %v1326 = vpack.c.b16 %v1288, %v1287
        %v1327 = vpack.c.b16 %v1290, %v1289
        %v1328 = vpack.c.b16 %v1292, %v1291
        %v1329 = vpack.c.b16 %v1294, %v1293
        %v1330 = vpack.c.b16 %v1296, %v1295
        %v1331 = vpack.c.b16 %v1298, %v1297
        %v1332 = vpack.c.b16 %v1300, %v1299
        %v1333 = vpack.c.b16 %v1302, %v1301
        %v1334 = vpack.c.b16 %v1304, %v1303
        %v1335 = vpack.c.b16 %v1306, %v1305
        %v1336 = vpack.c.b16 %v1308, %v1307
        %v1337 = vpack.c.b16 %v1310, %v1309
        %v1338 = vpack.c.b16 %v1312, %v1311
        %v1339 = vpack.c.b16 %v1314, %v1313
        %v1340 = vpack.c.b16 %v1316, %v1315
        %1365 = vmatpush.bf16.msra.mxu0 %v1324
        %1366 = vmatpush.bf16.msra.mxu0 %v1323
        %1367 = vmatpush.bf16.msra.mxu0 %v1322
        %1368 = vmatpush.bf16.msra.mxu0 %v1321
        %1369 = vmatpush.bf16.msra.mxu0 %v1320
        %1370 = vmatpush.bf16.msra.mxu0 %v1319
        %1371 = vmatpush.bf16.msra.mxu0 %v1318
        %1372 = vmatpush.bf16.msra.mxu0 %v1317
        %1373 = vmatmul.bf16.gmra.mxu0 %v1143
        %v1374 = vpop.f32.mrf.mxu0
        %v1375 = vadd.f32 %v1219, %v1374
        %v1376 = vpop.f32.mrf.mxu0
        %v1377 = vadd.f32 %v1219, %v1376
        %1378 = vmatmul.bf16.gmra.mxu0 %v1146
        %v1379 = vpop.f32.mrf.mxu0
        %v1380 = vadd.f32 %v1219, %v1379
        %v1381 = vpop.f32.mrf.mxu0
        %v1382 = vadd.f32 %v1219, %v1381
        %1383 = vmatmul.bf16.gmra.mxu0 %v1149
        %v1384 = vpop.f32.mrf.mxu0
        %v1385 = vadd.f32 %v1219, %v1384
        %v1386 = vpop.f32.mrf.mxu0
        %v1387 = vadd.f32 %v1219, %v1386
        %1388 = vmatmul.bf16.gmra.mxu0 %v1152
        %v1389 = vpop.f32.mrf.mxu0
        %v1390 = vadd.f32 %v1219, %v1389
        %v1391 = vpop.f32.mrf.mxu0
        %v1392 = vadd.f32 %v1219, %v1391
        %1393 = vmatmul.bf16.gmra.mxu0 %v1155
        %v1394 = vpop.f32.mrf.mxu0
        %v1395 = vadd.f32 %v1219, %v1394
        %v1396 = vpop.f32.mrf.mxu0
        %v1397 = vadd.f32 %v1219, %v1396
        %1398 = vmatmul.bf16.gmra.mxu0 %v1158
        %v1399 = vpop.f32.mrf.mxu0
        %v1400 = vadd.f32 %v1219, %v1399
        %v1401 = vpop.f32.mrf.mxu0
        %v1402 = vadd.f32 %v1219, %v1401
        %1403 = vmatmul.bf16.gmra.mxu0 %v1161
        %v1404 = vpop.f32.mrf.mxu0
        %v1405 = vadd.f32 %v1219, %v1404
        %v1406 = vpop.f32.mrf.mxu0
        %v1407 = vadd.f32 %v1219, %v1406
        %1408 = vmatmul.bf16.gmra.mxu0 %v1164
        %v1409 = vpop.f32.mrf.mxu0
        %v1410 = vadd.f32 %v1219, %v1409
        %v1411 = vpop.f32.mrf.mxu0
        %v1412 = vadd.f32 %v1219, %v1411
        %1413 = vdwg.mxu0
        %1414 = vmatpush.bf16.msra.mxu0 %v1332
        %1415 = vmatpush.bf16.msra.mxu0 %v1331
        %1416 = vmatpush.bf16.msra.mxu0 %v1330
        %1417 = vmatpush.bf16.msra.mxu0 %v1329
        %1418 = vmatpush.bf16.msra.mxu0 %v1328
        %1419 = vmatpush.bf16.msra.mxu0 %v1327
        %1420 = vmatpush.bf16.msra.mxu0 %v1326
        %1421 = vmatpush.bf16.msra.mxu0 %v1325
        %1422 = vmatmul.bf16.gmra.mxu0 %v1144
        %v1423 = vpop.f32.mrf.mxu0
        %v1424 = vadd.f32 %v1375, %v1423
        %v1425 = vpop.f32.mrf.mxu0
        %v1426 = vadd.f32 %v1377, %v1425
        %1427 = vmatmul.bf16.gmra.mxu0 %v1147
        %v1428 = vpop.f32.mrf.mxu0
        %v1429 = vadd.f32 %v1380, %v1428
        %v1430 = vpop.f32.mrf.mxu0
        %v1431 = vadd.f32 %v1382, %v1430
        %1432 = vmatmul.bf16.gmra.mxu0 %v1150
        %v1433 = vpop.f32.mrf.mxu0
        %v1434 = vadd.f32 %v1385, %v1433
        %v1435 = vpop.f32.mrf.mxu0
        %v1436 = vadd.f32 %v1387, %v1435
        %1437 = vmatmul.bf16.gmra.mxu0 %v1153
        %v1438 = vpop.f32.mrf.mxu0
        %v1439 = vadd.f32 %v1390, %v1438
        %v1440 = vpop.f32.mrf.mxu0
        %v1441 = vadd.f32 %v1392, %v1440
        %1442 = vmatmul.bf16.gmra.mxu0 %v1156
        %v1443 = vpop.f32.mrf.mxu0
        %v1444 = vadd.f32 %v1395, %v1443
        %v1445 = vpop.f32.mrf.mxu0
        %v1446 = vadd.f32 %v1397, %v1445
        %1447 = vmatmul.bf16.gmra.mxu0 %v1159
        %v1448 = vpop.f32.mrf.mxu0
        %v1449 = vadd.f32 %v1400, %v1448
        %v1450 = vpop.f32.mrf.mxu0
        %v1451 = vadd.f32 %v1402, %v1450
        %1452 = vmatmul.bf16.gmra.mxu0 %v1162
        %v1453 = vpop.f32.mrf.mxu0
        %v1454 = vadd.f32 %v1405, %v1453
        %v1455 = vpop.f32.mrf.mxu0
        %v1456 = vadd.f32 %v1407, %v1455
        %1457 = vmatmul.bf16.gmra.mxu0 %v1165
        %v1458 = vpop.f32.mrf.mxu0
        %v1459 = vadd.f32 %v1410, %v1458
        %v1460 = vpop.f32.mrf.mxu0
        %v1461 = vadd.f32 %v1412, %v1460
        %1462 = vdwg.mxu0
        %1463 = vmatpush.bf16.msra.mxu0 %v1340
        %1464 = vmatpush.bf16.msra.mxu0 %v1339
        %1465 = vmatpush.bf16.msra.mxu0 %v1338
        %1466 = vmatpush.bf16.msra.mxu0 %v1337
        %1467 = vmatpush.bf16.msra.mxu0 %v1336
        %1468 = vmatpush.bf16.msra.mxu0 %v1335
        %1469 = vmatpush.bf16.msra.mxu0 %v1334
        %1470 = vmatpush.bf16.msra.mxu0 %v1333
        %1471 = vmatmul.bf16.gmra.mxu0 %v1145
        %v1472 = vpop.f32.mrf.mxu0
        %v1473 = vadd.f32 %v1424, %v1472
        %v1474 = vpop.f32.mrf.mxu0
        %v1475 = vadd.f32 %v1426, %v1474
        %1476 = vmatmul.bf16.gmra.mxu0 %v1148
        %v1477 = vpop.f32.mrf.mxu0
        %v1478 = vadd.f32 %v1429, %v1477
        %v1479 = vpop.f32.mrf.mxu0
        %v1480 = vadd.f32 %v1431, %v1479
        %1481 = vmatmul.bf16.gmra.mxu0 %v1151
        %v1482 = vpop.f32.mrf.mxu0
        %v1483 = vadd.f32 %v1434, %v1482
        %v1484 = vpop.f32.mrf.mxu0
        %v1485 = vadd.f32 %v1436, %v1484
        %1486 = vmatmul.bf16.gmra.mxu0 %v1154
        %v1487 = vpop.f32.mrf.mxu0
        %v1488 = vadd.f32 %v1439, %v1487
        %v1489 = vpop.f32.mrf.mxu0
        %v1490 = vadd.f32 %v1441, %v1489
        %1491 = vmatmul.bf16.gmra.mxu0 %v1157
        %v1492 = vpop.f32.mrf.mxu0
        %v1493 = vadd.f32 %v1444, %v1492
        %v1494 = vpop.f32.mrf.mxu0
        %v1495 = vadd.f32 %v1446, %v1494
        %1496 = vmatmul.bf16.gmra.mxu0 %v1160
        %v1497 = vpop.f32.mrf.mxu0
        %v1498 = vadd.f32 %v1449, %v1497
        %v1499 = vpop.f32.mrf.mxu0
        %v1500 = vadd.f32 %v1451, %v1499
        %1501 = vmatmul.bf16.gmra.mxu0 %v1163
        %v1502 = vpop.f32.mrf.mxu0
        %v1503 = vadd.f32 %v1454, %v1502
        %v1504 = vpop.f32.mrf.mxu0
        %v1505 = vadd.f32 %v1456, %v1504
        %1506 = vmatmul.bf16.gmra.mxu0 %v1166
        %v1507 = vpop.f32.mrf.mxu0
        %v1508 = vadd.f32 %v1459, %v1507
        %v1509 = vpop.f32.mrf.mxu0
        %v1510 = vadd.f32 %v1461, %v1509
        %1511 = vdwg.mxu0
        %v1512 = vmax.f32 %v1473, 0.0
        %v1513 = vmax.f32 %v1475, 0.0
        %v1514 = vmax.f32 %v1478, 0.0
        %v1515 = vmax.f32 %v1480, 0.0
        %v1516 = vmax.f32 %v1483, 0.0
        %v1517 = vmax.f32 %v1485, 0.0
        %v1518 = vmax.f32 %v1488, 0.0
        %v1519 = vmax.f32 %v1490, 0.0
        %v1520 = vmax.f32 %v1493, 0.0
        %v1521 = vmax.f32 %v1495, 0.0
        %v1522 = vmax.f32 %v1498, 0.0
        %v1523 = vmax.f32 %v1500, 0.0
        %v1524 = vmax.f32 %v1503, 0.0
        %v1525 = vmax.f32 %v1505, 0.0
        %v1526 = vmax.f32 %v1508, 0.0
        %v1527 = vmax.f32 %v1510, 0.0
        %v1528 = vpack.c.bf16 %v1512, %v1512
        %v1529 = vpack.c.bf16 %v1513, %v1513
        %v1530 = vpack.c.bf16 %v1514, %v1514
        %v1531 = vpack.c.bf16 %v1515, %v1515
        %v1532 = vpack.c.bf16 %v1516, %v1516
        %v1533 = vpack.c.bf16 %v1517, %v1517
        %v1534 = vpack.c.bf16 %v1518, %v1518
        %v1535 = vpack.c.bf16 %v1519, %v1519
        %v1536 = vpack.c.bf16 %v1520, %v1520
        %v1537 = vpack.c.bf16 %v1521, %v1521
        %v1538 = vpack.c.bf16 %v1522, %v1522
        %v1539 = vpack.c.bf16 %v1523, %v1523
        %v1540 = vpack.c.bf16 %v1524, %v1524
        %v1541 = vpack.c.bf16 %v1525, %v1525
        %v1542 = vpack.c.bf16 %v1526, %v1526
        %v1543 = vpack.c.bf16 %v1527, %v1527
        %v1544 = vunpack.c.l.bf16 %v1528
        %v1545 = vunpack.c.l.bf16 %v1529
        %v1546 = vunpack.c.l.bf16 %v1530
        %v1547 = vunpack.c.l.bf16 %v1531
        %v1548 = vunpack.c.l.bf16 %v1532
        %v1549 = vunpack.c.l.bf16 %v1533
        %v1550 = vunpack.c.l.bf16 %v1534
        %v1551 = vunpack.c.l.bf16 %v1535
        %v1552 = vunpack.c.l.bf16 %v1536
        %v1553 = vunpack.c.l.bf16 %v1537
        %v1554 = vunpack.c.l.bf16 %v1538
        %v1555 = vunpack.c.l.bf16 %v1539
        %v1556 = vunpack.c.l.bf16 %v1540
        %v1557 = vunpack.c.l.bf16 %v1541
        %v1558 = vunpack.c.l.bf16 %v1542
        %v1559 = vunpack.c.l.bf16 %v1543
        %v1560 = vrot.slane %v1544, 1
        %v1561 = vrot.slane %v1545, 1
        %v1562 = vrot.slane %v1546, 1
        %v1563 = vrot.slane %v1547, 1
        %v1564 = vrot.slane %v1548, 1
        %v1565 = vrot.slane %v1549, 1
        %v1566 = vrot.slane %v1550, 1
        %v1567 = vrot.slane %v1551, 1
        %v1568 = vrot.slane %v1552, 1
        %v1569 = vrot.slane %v1553, 1
        %v1570 = vrot.slane %v1554, 1
        %v1571 = vrot.slane %v1555, 1
        %v1572 = vrot.slane %v1556, 1
        %v1573 = vrot.slane %v1557, 1
        %v1574 = vrot.slane %v1558, 1
        %v1575 = vrot.slane %v1559, 1
        %v1576 = vsel %vm599, %v1574, %v1575
        %v1577 = vsel %vm599, %v1573, %v1574
        %v1578 = vsel %vm599, %v1572, %v1573
        %v1579 = vsel %vm599, %v1571, %v1572
        %v1580 = vsel %vm599, %v1570, %v1571
        %v1581 = vsel %vm599, %v1569, %v1570
        %v1582 = vsel %vm599, %v1568, %v1569
        %v1583 = vsel %vm599, %v1567, %v1568
        %v1584 = vsel %vm599, %v1566, %v1567
        %v1585 = vsel %vm599, %v1565, %v1566
        %v1586 = vsel %vm599, %v1564, %v1565
        %v1587 = vsel %vm599, %v1563, %v1564
        %v1588 = vsel %vm599, %v1562, %v1563
        %v1589 = vsel %vm599, %v1561, %v1562
        %v1590 = vsel %vm599, %v1560, %v1561
        %v1591 = vsel %vm599, %v1575, %v1560
        %v1592 = vmax.f32 %v1544, %v1590
        %v1593 = vmax.f32 %v1545, %v1589
        %v1594 = vmax.f32 %v1546, %v1588
        %v1595 = vmax.f32 %v1547, %v1587
        %v1596 = vmax.f32 %v1548, %v1586
        %v1597 = vmax.f32 %v1549, %v1585
        %v1598 = vmax.f32 %v1550, %v1584
        %v1599 = vmax.f32 %v1551, %v1583
        %v1600 = vmax.f32 %v1552, %v1582
        %v1601 = vmax.f32 %v1553, %v1581
        %v1602 = vmax.f32 %v1554, %v1580
        %v1603 = vmax.f32 %v1555, %v1579
        %v1604 = vmax.f32 %v1556, %v1578
        %v1605 = vmax.f32 %v1557, %v1577
        %v1606 = vmax.f32 %v1558, %v1576
        %v1607 = vmax.f32 %v1559, %v1591
        %v1608 = vld [vmem:[%s3] sm:$0xf]
        %v1609 = vld [vmem:[%s3 + $0x4] sm:$0xf]
        %v1610 = vld [vmem:[%s3 + $0x8] sm:$0xf]
        %v1611 = vld [vmem:[%s3 + $0xc] sm:$0xf]
        %v1612 = vld [vmem:[%s3 + $0x10] sm:$0xf]
        %v1613 = vld [vmem:[%s3 + $0x14] sm:$0xf]
        %v1614 = vld [vmem:[%s3 + $0x18] sm:$0xf]
        %v1615 = vld [vmem:[%s3 + $0x1c] sm:$0xf]
        %v1616 = vpack.c.bf16 %v1593, %v1592
        %v1617 = vpack.c.bf16 %v1595, %v1594
        %v1618 = vpack.c.bf16 %v1597, %v1596
        %v1619 = vpack.c.bf16 %v1599, %v1598
        %v1620 = vpack.c.bf16 %v1601, %v1600
        %v1621 = vpack.c.bf16 %v1603, %v1602
        %v1622 = vpack.c.bf16 %v1605, %v1604
        %v1623 = vpack.c.bf16 %v1607, %v1606
        %v1632 = vunpack.c.l.b16 %v1608
        %v1633 = vunpack.c.l.b16 %v1609
        %v1634 = vunpack.c.l.b16 %v1610
        %v1635 = vunpack.c.l.b16 %v1611
        %v1636 = vunpack.c.l.b16 %v1612
        %v1637 = vunpack.c.l.b16 %v1613
        %v1638 = vunpack.c.l.b16 %v1614
        %v1639 = vunpack.c.l.b16 %v1615
        %v1640 = vpack.c.b16 %v1633, %v1632
        %v1641 = vpack.c.b16 %v1635, %v1634
        %v1642 = vpack.c.b16 %v1637, %v1636
        %v1643 = vpack.c.b16 %v1639, %v1638
        %1648 = vmatpush.bf16.msra.mxu0 %v1623
        %1649 = vmatpush.bf16.msra.mxu0 %v1622
        %1650 = vmatpush.bf16.msra.mxu0 %v1621
        %1651 = vmatpush.bf16.msra.mxu0 %v1620
        %1652 = vmatpush.bf16.msra.mxu0 %v1619
        %1653 = vmatpush.bf16.msra.mxu0 %v1618
        %1654 = vmatpush.bf16.msra.mxu0 %v1617
        %1655 = vmatpush.bf16.msra.mxu0 %v1616
        %1656 = vmatmul.bf16.gmra.mxu0 %v1640
        %v1657 = vpop.f32.mrf.mxu0
        %v1658 = vadd.f32 0.0, %v1657
        %v1659 = vpop.f32.mrf.mxu0
        %v1660 = vadd.f32 0.0, %v1659
        %1661 = vmatmul.bf16.gmra.mxu0 %v1641
        %v1662 = vpop.f32.mrf.mxu0
        %v1663 = vadd.f32 0.0, %v1662
        %v1664 = vpop.f32.mrf.mxu0
        %v1665 = vadd.f32 0.0, %v1664
        %1666 = vmatmul.bf16.gmra.mxu0 %v1642
        %v1667 = vpop.f32.mrf.mxu0
        %v1668 = vadd.f32 0.0, %v1667
        %v1669 = vpop.f32.mrf.mxu0
        %v1670 = vadd.f32 0.0, %v1669
        %1671 = vmatmul.bf16.gmra.mxu0 %v1643
        %v1672 = vpop.f32.mrf.mxu0
        %v1673 = vadd.f32 0.0, %v1672
        %v1674 = vpop.f32.mrf.mxu0
        %v1675 = vadd.f32 0.0, %v1674
        %1676 = vdwg.mxu0
        %1677 = vrot.lane.b32.xlu0 %v1658, 120
        %v1678 = vpop.permute.xlu0 %1677
        %1679 = vrot.lane.b32.xlu0 %v1660, 120
        %v1680 = vpop.permute.xlu0 %1679
        %1681 = vrot.lane.b32.xlu0 %v1663, 120
        %v1682 = vpop.permute.xlu0 %1681
        %1683 = vrot.lane.b32.xlu0 %v1665, 120
        %v1684 = vpop.permute.xlu0 %1683
        %1685 = vrot.lane.b32.xlu0 %v1668, 120
        %v1686 = vpop.permute.xlu0 %1685
        %1687 = vrot.lane.b32.xlu0 %v1670, 120
        %v1688 = vpop.permute.xlu0 %1687
        %1689 = vrot.lane.b32.xlu0 %v1673, 120
        %v1690 = vpop.permute.xlu0 %1689
        %1691 = vrot.lane.b32.xlu0 %v1675, 120
        %v1692 = vpop.permute.xlu0 %1691
        %v1693 = vmax.f32 %v1658, %v1678
        %v1694 = vmax.f32 %v1660, %v1680
        %v1695 = vmax.f32 %v1663, %v1682
        %v1696 = vmax.f32 %v1665, %v1684
        %v1697 = vmax.f32 %v1668, %v1686
        %v1698 = vmax.f32 %v1670, %v1688
        %v1699 = vmax.f32 %v1673, %v1690
        %v1700 = vmax.f32 %v1675, %v1692
        %v1701 = vpack.c.bf16 %v1694, %v1693
        %v1702 = vpack.c.bf16 %v1696, %v1695
        %v1703 = vpack.c.bf16 %v1698, %v1697
        %v1704 = vpack.c.bf16 %v1700, %v1699
        %v1705 = vld [vmem:[%s6] sm:$0xf]
        %v1706 = vld [vmem:[%s6 + $0x4] sm:$0xf]
        %v1707 = vld [vmem:[%s6 + $0x8] sm:$0xf]
        %v1708 = vld [vmem:[%s6 + $0xc] sm:$0xf]
        %v1709 = vld [vmem:[%s6 + $0x10] sm:$0xf]
        %v1710 = vld [vmem:[%s6 + $0x14] sm:$0xf]
        %v1711 = vld [vmem:[%s6 + $0x18] sm:$0xf]
        %v1712 = vld [vmem:[%s6 + $0x1c] sm:$0xf]
        %v1713 = vld [vmem:[%s6 + $0x20] sm:$0xf]
        %v1714 = vld [vmem:[%s6 + $0x24] sm:$0xf]
        %v1715 = vld [vmem:[%s6 + $0x28] sm:$0xf]
        %v1716 = vld [vmem:[%s6 + $0x2c] sm:$0xf]
        %v1717 = vld [vmem:[%s6 + $0x30] sm:$0xf]
        %v1718 = vld [vmem:[%s6 + $0x34] sm:$0xf]
        %v1719 = vld [vmem:[%s6 + $0x38] sm:$0xf]
        %v1720 = vld [vmem:[%s6 + $0x3c] sm:$0xf]
        %v1737 = vunpack.c.l.b16 %v1705
        %v1738 = vunpack.c.l.b16 %v1706
        %v1739 = vunpack.c.l.b16 %v1707
        %v1740 = vunpack.c.l.b16 %v1708
        %v1741 = vunpack.c.l.b16 %v1709
        %v1742 = vunpack.c.l.b16 %v1710
        %v1743 = vunpack.c.l.b16 %v1711
        %v1744 = vunpack.c.l.b16 %v1712
        %v1745 = vunpack.c.l.b16 %v1713
        %v1746 = vunpack.c.l.b16 %v1714
        %v1747 = vunpack.c.l.b16 %v1715
        %v1748 = vunpack.c.l.b16 %v1716
        %v1749 = vunpack.c.l.b16 %v1717
        %v1750 = vunpack.c.l.b16 %v1718
        %v1751 = vunpack.c.l.b16 %v1719
        %v1752 = vunpack.c.l.b16 %v1720
        %v1753 = vpack.c.b16 %v1738, %v1737
        %v1754 = vpack.c.b16 %v1740, %v1739
        %v1755 = vpack.c.b16 %v1742, %v1741
        %v1756 = vpack.c.b16 %v1744, %v1743
        %v1757 = vpack.c.b16 %v1746, %v1745
        %v1758 = vpack.c.b16 %v1748, %v1747
        %v1759 = vpack.c.b16 %v1750, %v1749
        %v1760 = vpack.c.b16 %v1752, %v1751
        %1769 = vmatpush.bf16.msra.mxu0 %v1760
        %1770 = vmatpush.bf16.msra.mxu0 %v1759
        %1771 = vmatpush.bf16.msra.mxu0 %v1758
        %1772 = vmatpush.bf16.msra.mxu0 %v1757
        %1773 = vmatpush.bf16.msra.mxu0 %v1756
        %1774 = vmatpush.bf16.msra.mxu0 %v1755
        %1775 = vmatpush.bf16.msra.mxu0 %v1754
        %1776 = vmatpush.bf16.msra.mxu0 %v1753
        %1777 = vmatmul.bf16.gmra.mxu0 %v1701
        %v1778 = vpop.f32.mrf.mxu0
        %v1779 = vadd.f32 0.0, %v1778
        %v1780 = vpop.f32.mrf.mxu0
        %v1781 = vadd.f32 0.0, %v1780
        %1782 = vmatmul.bf16.gmra.mxu0 %v1702
        %v1783 = vpop.f32.mrf.mxu0
        %v1784 = vadd.f32 0.0, %v1783
        %v1785 = vpop.f32.mrf.mxu0
        %v1786 = vadd.f32 0.0, %v1785
        %1787 = vmatmul.bf16.gmra.mxu0 %v1703
        %v1788 = vpop.f32.mrf.mxu0
        %v1789 = vadd.f32 0.0, %v1788
        %v1790 = vpop.f32.mrf.mxu0
        %v1791 = vadd.f32 0.0, %v1790
        %1792 = vmatmul.bf16.gmra.mxu0 %v1704
        %v1793 = vpop.f32.mrf.mxu0
        %v1794 = vadd.f32 0.0, %v1793
        %v1795 = vpop.f32.mrf.mxu0
        %v1796 = vadd.f32 0.0, %v1795
        %1797 = vdwg.mxu0
        %v1798 = vand.u32 %v470, 7
        %v1799 = vand.u32 %v471, 7
        %v1800 = vand.u32 %v472, 7
        %v1801 = vand.u32 %v473, 7
        %v1802 = vand.u32 %v474, 7
        %v1803 = vand.u32 %v475, 7
        %v1804 = vand.u32 %v476, 7
        %v1805 = vand.u32 %v477, 7
        %vm1806 = vcmp.ne.s32.totalorder %v1798, 0
        %vm1807 = vcmp.ne.s32.totalorder %v1799, 0
        %vm1808 = vcmp.ne.s32.totalorder %v1800, 0
        %vm1809 = vcmp.ne.s32.totalorder %v1801, 0
        %vm1810 = vcmp.ne.s32.totalorder %v1802, 0
        %vm1811 = vcmp.ne.s32.totalorder %v1803, 0
        %vm1812 = vcmp.ne.s32.totalorder %v1804, 0
        %vm1813 = vcmp.ne.s32.totalorder %v1805, 0
        %vm1814 = vcmp.ne.s32.totalorder %v1798, 7
        %vm1815 = vcmp.ne.s32.totalorder %v1799, 7
        %vm1816 = vcmp.ne.s32.totalorder %v1800, 7
        %vm1817 = vcmp.ne.s32.totalorder %v1801, 7
        %vm1818 = vcmp.ne.s32.totalorder %v1802, 7
        %vm1819 = vcmp.ne.s32.totalorder %v1803, 7
        %vm1820 = vcmp.ne.s32.totalorder %v1804, 7
        %vm1821 = vcmp.ne.s32.totalorder %v1805, 7
        %v1822 = vrot.slane %v1779, 7
        %v1823 = vrot.slane %v1781, 7
        %v1824 = vrot.slane %v1784, 7
        %v1825 = vrot.slane %v1786, 7
        %v1826 = vrot.slane %v1789, 7
        %v1827 = vrot.slane %v1791, 7
        %v1828 = vrot.slane %v1794, 7
        %v1829 = vrot.slane %v1796, 7
        %v1830 = vsel %vm550, %v1828, %v1829
        %v1831 = vsel %vm550, %v1827, %v1828
        %v1832 = vsel %vm550, %v1826, %v1827
        %v1833 = vsel %vm550, %v1825, %v1826
        %v1834 = vsel %vm550, %v1824, %v1825
        %v1835 = vsel %vm550, %v1823, %v1824
        %v1836 = vsel %vm550, %v1822, %v1823
        %v1837 = vsel %vm550, %v1829, %v1822
        %v1838 = vsel %vm1806, %v1837, 0.0
        %v1839 = vsel %vm1807, %v1836, 0.0
        %v1840 = vsel %vm1808, %v1835, 0.0
        %v1841 = vsel %vm1809, %v1834, 0.0
        %v1842 = vsel %vm1810, %v1833, 0.0
        %v1843 = vsel %vm1811, %v1832, 0.0
        %v1844 = vsel %vm1812, %v1831, 0.0
        %v1845 = vsel %vm1813, %v1830, 0.0
        %v1846 = vrot.slane %v1779, 1
        %v1847 = vrot.slane %v1781, 1
        %v1848 = vrot.slane %v1784, 1
        %v1849 = vrot.slane %v1786, 1
        %v1850 = vrot.slane %v1789, 1
        %v1851 = vrot.slane %v1791, 1
        %v1852 = vrot.slane %v1794, 1
        %v1853 = vrot.slane %v1796, 1
        %v1854 = vsel %vm599, %v1852, %v1853
        %v1855 = vsel %vm599, %v1851, %v1852
        %v1856 = vsel %vm599, %v1850, %v1851
        %v1857 = vsel %vm599, %v1849, %v1850
        %v1858 = vsel %vm599, %v1848, %v1849
        %v1859 = vsel %vm599, %v1847, %v1848
        %v1860 = vsel %vm599, %v1846, %v1847
        %v1861 = vsel %vm599, %v1853, %v1846
        %v1862 = vsel %vm1814, %v1860, 0.0
        %v1863 = vsel %vm1815, %v1859, 0.0
        %v1864 = vsel %vm1816, %v1858, 0.0
        %v1865 = vsel %vm1817, %v1857, 0.0
        %v1866 = vsel %vm1818, %v1856, 0.0
        %v1867 = vsel %vm1819, %v1855, 0.0
        %v1868 = vsel %vm1820, %v1854, 0.0
        %v1869 = vsel %vm1821, %v1861, 0.0
        %v1870 = vpack.c.bf16 %v1839, %v1838
        %v1871 = vpack.c.bf16 %v1781, %v1779
        %v1872 = vpack.c.bf16 %v1863, %v1862
        %v1873 = vpack.c.bf16 %v1841, %v1840
        %v1874 = vpack.c.bf16 %v1786, %v1784
        %v1875 = vpack.c.bf16 %v1865, %v1864
        %v1876 = vpack.c.bf16 %v1843, %v1842
        %v1877 = vpack.c.bf16 %v1791, %v1789
        %v1878 = vpack.c.bf16 %v1867, %v1866
        %v1879 = vpack.c.bf16 %v1845, %v1844
        %v1880 = vpack.c.bf16 %v1796, %v1794
        %v1881 = vpack.c.bf16 %v1869, %v1868
        %s1882 = scalar_lea.vmem %s1, 384
        %v1883 = vld [vmem:[%s1882] sm:$0xf]
        %v1884 = vld [vmem:[%s1882 + $0x4] sm:$0xf]
        %v1885 = vld [vmem:[%s1882 + $0x8] sm:$0xf]
        %v1886 = vld [vmem:[%s1882 + $0xc] sm:$0xf]
        %v1887 = vld [vmem:[%s1882 + $0x10] sm:$0xf]
        %v1888 = vld [vmem:[%s1882 + $0x14] sm:$0xf]
        %v1889 = vld [vmem:[%s1882 + $0x18] sm:$0xf]
        %v1890 = vld [vmem:[%s1882 + $0x1c] sm:$0xf]
        %v1891 = vld [vmem:[%s1882 + $0x20] sm:$0xf]
        %v1892 = vld [vmem:[%s1882 + $0x24] sm:$0xf]
        %v1893 = vld [vmem:[%s1882 + $0x28] sm:$0xf]
        %v1894 = vld [vmem:[%s1882 + $0x2c] sm:$0xf]
        %v1895 = vld [vmem:[%s1882 + $0x30] sm:$0xf]
        %v1896 = vld [vmem:[%s1882 + $0x34] sm:$0xf]
        %v1897 = vld [vmem:[%s1882 + $0x38] sm:$0xf]
        %v1898 = vld [vmem:[%s1882 + $0x3c] sm:$0xf]
        %v1899 = vld [vmem:[%s1882 + $0x40] sm:$0xf]
        %v1900 = vld [vmem:[%s1882 + $0x44] sm:$0xf]
        %v1901 = vld [vmem:[%s1882 + $0x48] sm:$0xf]
        %v1902 = vld [vmem:[%s1882 + $0x4c] sm:$0xf]
        %v1903 = vld [vmem:[%s1882 + $0x50] sm:$0xf]
        %v1904 = vld [vmem:[%s1882 + $0x54] sm:$0xf]
        %v1905 = vld [vmem:[%s1882 + $0x58] sm:$0xf]
        %v1906 = vld [vmem:[%s1882 + $0x5c] sm:$0xf]
        %v1907 = vld [vmem:[%s1882 + $0x60] sm:$0xf]
        %v1908 = vld [vmem:[%s1882 + $0x64] sm:$0xf]
        %v1909 = vld [vmem:[%s1882 + $0x68] sm:$0xf]
        %v1910 = vld [vmem:[%s1882 + $0x6c] sm:$0xf]
        %v1911 = vld [vmem:[%s1882 + $0x70] sm:$0xf]
        %v1912 = vld [vmem:[%s1882 + $0x74] sm:$0xf]
        %v1913 = vld [vmem:[%s1882 + $0x78] sm:$0xf]
        %v1914 = vld [vmem:[%s1882 + $0x7c] sm:$0xf]
        %v1915 = vld [vmem:[%s1882 + $0x80] sm:$0xf]
        %v1916 = vld [vmem:[%s1882 + $0x84] sm:$0xf]
        %v1917 = vld [vmem:[%s1882 + $0x88] sm:$0xf]
        %v1918 = vld [vmem:[%s1882 + $0x8c] sm:$0xf]
        %v1919 = vld [vmem:[%s1882 + $0x90] sm:$0xf]
        %v1920 = vld [vmem:[%s1882 + $0x94] sm:$0xf]
        %v1921 = vld [vmem:[%s1882 + $0x98] sm:$0xf]
        %v1922 = vld [vmem:[%s1882 + $0x9c] sm:$0xf]
        %v1923 = vld [vmem:[%s1882 + $0xa0] sm:$0xf]
        %v1924 = vld [vmem:[%s1882 + $0xa4] sm:$0xf]
        %v1925 = vld [vmem:[%s1882 + $0xa8] sm:$0xf]
        %v1926 = vld [vmem:[%s1882 + $0xac] sm:$0xf]
        %v1927 = vld [vmem:[%s1882 + $0xb0] sm:$0xf]
        %v1928 = vld [vmem:[%s1882 + $0xb4] sm:$0xf]
        %v1929 = vld [vmem:[%s1882 + $0xb8] sm:$0xf]
        %v1930 = vld [vmem:[%s1882 + $0xbc] sm:$0xf]
        %s1931 = scalar_lea.vmem %s2, 2
        %v1932 = vld [vmem:[%s1931] sm:$0x1]
        %v1934 = vperm.slane %v1932, 0
        %v1984 = vunpack.c.l.b16 %v1883
        %v1985 = vunpack.c.l.b16 %v1884
        %v1986 = vunpack.c.l.b16 %v1885
        %v1987 = vunpack.c.l.b16 %v1886
        %v1988 = vunpack.c.l.b16 %v1887
        %v1989 = vunpack.c.l.b16 %v1888
        %v1990 = vunpack.c.l.b16 %v1889
        %v1991 = vunpack.c.l.b16 %v1890
        %v1992 = vunpack.c.l.b16 %v1891
        %v1993 = vunpack.c.l.b16 %v1892
        %v1994 = vunpack.c.l.b16 %v1893
        %v1995 = vunpack.c.l.b16 %v1894
        %v1996 = vunpack.c.l.b16 %v1895
        %v1997 = vunpack.c.l.b16 %v1896
        %v1998 = vunpack.c.l.b16 %v1897
        %v1999 = vunpack.c.l.b16 %v1898
        %v2000 = vunpack.c.l.b16 %v1899
        %v2001 = vunpack.c.l.b16 %v1900
        %v2002 = vunpack.c.l.b16 %v1901
        %v2003 = vunpack.c.l.b16 %v1902
        %v2004 = vunpack.c.l.b16 %v1903
        %v2005 = vunpack.c.l.b16 %v1904
        %v2006 = vunpack.c.l.b16 %v1905
        %v2007 = vunpack.c.l.b16 %v1906
        %v2008 = vunpack.c.l.b16 %v1907
        %v2009 = vunpack.c.l.b16 %v1908
        %v2010 = vunpack.c.l.b16 %v1909
        %v2011 = vunpack.c.l.b16 %v1910
        %v2012 = vunpack.c.l.b16 %v1911
        %v2013 = vunpack.c.l.b16 %v1912
        %v2014 = vunpack.c.l.b16 %v1913
        %v2015 = vunpack.c.l.b16 %v1914
        %v2016 = vunpack.c.l.b16 %v1915
        %v2017 = vunpack.c.l.b16 %v1916
        %v2018 = vunpack.c.l.b16 %v1917
        %v2019 = vunpack.c.l.b16 %v1918
        %v2020 = vunpack.c.l.b16 %v1919
        %v2021 = vunpack.c.l.b16 %v1920
        %v2022 = vunpack.c.l.b16 %v1921
        %v2023 = vunpack.c.l.b16 %v1922
        %v2024 = vunpack.c.l.b16 %v1923
        %v2025 = vunpack.c.l.b16 %v1924
        %v2026 = vunpack.c.l.b16 %v1925
        %v2027 = vunpack.c.l.b16 %v1926
        %v2028 = vunpack.c.l.b16 %v1927
        %v2029 = vunpack.c.l.b16 %v1928
        %v2030 = vunpack.c.l.b16 %v1929
        %v2031 = vunpack.c.l.b16 %v1930
        %v2032 = vpack.c.b16 %v1985, %v1984
        %v2033 = vpack.c.b16 %v1987, %v1986
        %v2034 = vpack.c.b16 %v1989, %v1988
        %v2035 = vpack.c.b16 %v1991, %v1990
        %v2036 = vpack.c.b16 %v1993, %v1992
        %v2037 = vpack.c.b16 %v1995, %v1994
        %v2038 = vpack.c.b16 %v1997, %v1996
        %v2039 = vpack.c.b16 %v1999, %v1998
        %v2040 = vpack.c.b16 %v2001, %v2000
        %v2041 = vpack.c.b16 %v2003, %v2002
        %v2042 = vpack.c.b16 %v2005, %v2004
        %v2043 = vpack.c.b16 %v2007, %v2006
        %v2044 = vpack.c.b16 %v2009, %v2008
        %v2045 = vpack.c.b16 %v2011, %v2010
        %v2046 = vpack.c.b16 %v2013, %v2012
        %v2047 = vpack.c.b16 %v2015, %v2014
        %v2048 = vpack.c.b16 %v2017, %v2016
        %v2049 = vpack.c.b16 %v2019, %v2018
        %v2050 = vpack.c.b16 %v2021, %v2020
        %v2051 = vpack.c.b16 %v2023, %v2022
        %v2052 = vpack.c.b16 %v2025, %v2024
        %v2053 = vpack.c.b16 %v2027, %v2026
        %v2054 = vpack.c.b16 %v2029, %v2028
        %v2055 = vpack.c.b16 %v2031, %v2030
        %2080 = vmatpush.bf16.msra.mxu0 %v2039
        %2081 = vmatpush.bf16.msra.mxu0 %v2038
        %2082 = vmatpush.bf16.msra.mxu0 %v2037
        %2083 = vmatpush.bf16.msra.mxu0 %v2036
        %2084 = vmatpush.bf16.msra.mxu0 %v2035
        %2085 = vmatpush.bf16.msra.mxu0 %v2034
        %2086 = vmatpush.bf16.msra.mxu0 %v2033
        %2087 = vmatpush.bf16.msra.mxu0 %v2032
        %2088 = vmatmul.bf16.gmra.mxu0 %v1870
        %v2089 = vpop.f32.mrf.mxu0
        %v2090 = vadd.f32 %v1934, %v2089
        %v2091 = vpop.f32.mrf.mxu0
        %v2092 = vadd.f32 %v1934, %v2091
        %2093 = vmatmul.bf16.gmra.mxu0 %v1873
        %v2094 = vpop.f32.mrf.mxu0
        %v2095 = vadd.f32 %v1934, %v2094
        %v2096 = vpop.f32.mrf.mxu0
        %v2097 = vadd.f32 %v1934, %v2096
        %2098 = vmatmul.bf16.gmra.mxu0 %v1876
        %v2099 = vpop.f32.mrf.mxu0
        %v2100 = vadd.f32 %v1934, %v2099
        %v2101 = vpop.f32.mrf.mxu0
        %v2102 = vadd.f32 %v1934, %v2101
        %2103 = vmatmul.bf16.gmra.mxu0 %v1879
        %v2104 = vpop.f32.mrf.mxu0
        %v2105 = vadd.f32 %v1934, %v2104
        %v2106 = vpop.f32.mrf.mxu0
        %v2107 = vadd.f32 %v1934, %v2106
        %2108 = vdwg.mxu0
        %2109 = vmatpush.bf16.msra.mxu0 %v2047
        %2110 = vmatpush.bf16.msra.mxu0 %v2046
        %2111 = vmatpush.bf16.msra.mxu0 %v2045
        %2112 = vmatpush.bf16.msra.mxu0 %v2044
        %2113 = vmatpush.bf16.msra.mxu0 %v2043
        %2114 = vmatpush.bf16.msra.mxu0 %v2042
        %2115 = vmatpush.bf16.msra.mxu0 %v2041
        %2116 = vmatpush.bf16.msra.mxu0 %v2040
        %2117 = vmatmul.bf16.gmra.mxu0 %v1871
        %v2118 = vpop.f32.mrf.mxu0
        %v2119 = vadd.f32 %v2090, %v2118
        %v2120 = vpop.f32.mrf.mxu0
        %v2121 = vadd.f32 %v2092, %v2120
        %2122 = vmatmul.bf16.gmra.mxu0 %v1874
        %v2123 = vpop.f32.mrf.mxu0
        %v2124 = vadd.f32 %v2095, %v2123
        %v2125 = vpop.f32.mrf.mxu0
        %v2126 = vadd.f32 %v2097, %v2125
        %2127 = vmatmul.bf16.gmra.mxu0 %v1877
        %v2128 = vpop.f32.mrf.mxu0
        %v2129 = vadd.f32 %v2100, %v2128
        %v2130 = vpop.f32.mrf.mxu0
        %v2131 = vadd.f32 %v2102, %v2130
        %2132 = vmatmul.bf16.gmra.mxu0 %v1880
        %v2133 = vpop.f32.mrf.mxu0
        %v2134 = vadd.f32 %v2105, %v2133
        %v2135 = vpop.f32.mrf.mxu0
        %v2136 = vadd.f32 %v2107, %v2135
        %2137 = vdwg.mxu0
        %2138 = vmatpush.bf16.msra.mxu0 %v2055
        %2139 = vmatpush.bf16.msra.mxu0 %v2054
        %2140 = vmatpush.bf16.msra.mxu0 %v2053
        %2141 = vmatpush.bf16.msra.mxu0 %v2052
        %2142 = vmatpush.bf16.msra.mxu0 %v2051
        %2143 = vmatpush.bf16.msra.mxu0 %v2050
        %2144 = vmatpush.bf16.msra.mxu0 %v2049
        %2145 = vmatpush.bf16.msra.mxu0 %v2048
        %2146 = vmatmul.bf16.gmra.mxu0 %v1872
        %v2147 = vpop.f32.mrf.mxu0
        %v2148 = vadd.f32 %v2119, %v2147
        %v2149 = vpop.f32.mrf.mxu0
        %v2150 = vadd.f32 %v2121, %v2149
        %2151 = vmatmul.bf16.gmra.mxu0 %v1875
        %v2152 = vpop.f32.mrf.mxu0
        %v2153 = vadd.f32 %v2124, %v2152
        %v2154 = vpop.f32.mrf.mxu0
        %v2155 = vadd.f32 %v2126, %v2154
        %2156 = vmatmul.bf16.gmra.mxu0 %v1878
        %v2157 = vpop.f32.mrf.mxu0
        %v2158 = vadd.f32 %v2129, %v2157
        %v2159 = vpop.f32.mrf.mxu0
        %v2160 = vadd.f32 %v2131, %v2159
        %2161 = vmatmul.bf16.gmra.mxu0 %v1881
        %v2162 = vpop.f32.mrf.mxu0
        %v2163 = vadd.f32 %v2134, %v2162
        %v2164 = vpop.f32.mrf.mxu0
        %v2165 = vadd.f32 %v2136, %v2164
        %2166 = vdwg.mxu0
        %v2167 = vmax.f32 %v2148, 0.0
        %v2168 = vmax.f32 %v2150, 0.0
        %v2169 = vmax.f32 %v2153, 0.0
        %v2170 = vmax.f32 %v2155, 0.0
        %v2171 = vmax.f32 %v2158, 0.0
        %v2172 = vmax.f32 %v2160, 0.0
        %v2173 = vmax.f32 %v2163, 0.0
        %v2174 = vmax.f32 %v2165, 0.0
        %v2175 = vpack.c.bf16 %v2167, %v2167
        %v2176 = vpack.c.bf16 %v2168, %v2168
        %v2177 = vpack.c.bf16 %v2169, %v2169
        %v2178 = vpack.c.bf16 %v2170, %v2170
        %v2179 = vpack.c.bf16 %v2171, %v2171
        %v2180 = vpack.c.bf16 %v2172, %v2172
        %v2181 = vpack.c.bf16 %v2173, %v2173
        %v2182 = vpack.c.bf16 %v2174, %v2174
        %v2183 = vunpack.c.l.bf16 %v2175
        %v2184 = vunpack.c.l.bf16 %v2176
        %v2185 = vunpack.c.l.bf16 %v2177
        %v2186 = vunpack.c.l.bf16 %v2178
        %v2187 = vunpack.c.l.bf16 %v2179
        %v2188 = vunpack.c.l.bf16 %v2180
        %v2189 = vunpack.c.l.bf16 %v2181
        %v2190 = vunpack.c.l.bf16 %v2182
        %v2191 = vrot.slane %v2183, 7
        %v2192 = vrot.slane %v2184, 7
        %v2193 = vrot.slane %v2185, 7
        %v2194 = vrot.slane %v2186, 7
        %v2195 = vrot.slane %v2187, 7
        %v2196 = vrot.slane %v2188, 7
        %v2197 = vrot.slane %v2189, 7
        %v2198 = vrot.slane %v2190, 7
        %v2199 = vsel %vm550, %v2197, %v2198
        %v2200 = vsel %vm550, %v2196, %v2197
        %v2201 = vsel %vm550, %v2195, %v2196
        %v2202 = vsel %vm550, %v2194, %v2195
        %v2203 = vsel %vm550, %v2193, %v2194
        %v2204 = vsel %vm550, %v2192, %v2193
        %v2205 = vsel %vm550, %v2191, %v2192
        %v2206 = vsel %vm550, %v2198, %v2191
        %v2207 = vsel %vm1806, %v2206, 0.0
        %v2208 = vsel %vm1807, %v2205, 0.0
        %v2209 = vsel %vm1808, %v2204, 0.0
        %v2210 = vsel %vm1809, %v2203, 0.0
        %v2211 = vsel %vm1810, %v2202, 0.0
        %v2212 = vsel %vm1811, %v2201, 0.0
        %v2213 = vsel %vm1812, %v2200, 0.0
        %v2214 = vsel %vm1813, %v2199, 0.0
        %v2215 = vrot.slane %v2183, 1
        %v2216 = vrot.slane %v2184, 1
        %v2217 = vrot.slane %v2185, 1
        %v2218 = vrot.slane %v2186, 1
        %v2219 = vrot.slane %v2187, 1
        %v2220 = vrot.slane %v2188, 1
        %v2221 = vrot.slane %v2189, 1
        %v2222 = vrot.slane %v2190, 1
        %v2223 = vsel %vm599, %v2221, %v2222
        %v2224 = vsel %vm599, %v2220, %v2221
        %v2225 = vsel %vm599, %v2219, %v2220
        %v2226 = vsel %vm599, %v2218, %v2219
        %v2227 = vsel %vm599, %v2217, %v2218
        %v2228 = vsel %vm599, %v2216, %v2217
        %v2229 = vsel %vm599, %v2215, %v2216
        %v2230 = vsel %vm599, %v2222, %v2215
        %v2231 = vsel %vm1814, %v2229, 0.0
        %v2232 = vsel %vm1815, %v2228, 0.0
        %v2233 = vsel %vm1816, %v2227, 0.0
        %v2234 = vsel %vm1817, %v2226, 0.0
        %v2235 = vsel %vm1818, %v2225, 0.0
        %v2236 = vsel %vm1819, %v2224, 0.0
        %v2237 = vsel %vm1820, %v2223, 0.0
        %v2238 = vsel %vm1821, %v2230, 0.0
        %v2239 = vpack.c.bf16 %v2208, %v2207
        %v2240 = vpack.c.bf16 %v2184, %v2183
        %v2241 = vpack.c.bf16 %v2232, %v2231
        %v2242 = vpack.c.bf16 %v2210, %v2209
        %v2243 = vpack.c.bf16 %v2186, %v2185
        %v2244 = vpack.c.bf16 %v2234, %v2233
        %v2245 = vpack.c.bf16 %v2212, %v2211
        %v2246 = vpack.c.bf16 %v2188, %v2187
        %v2247 = vpack.c.bf16 %v2236, %v2235
        %v2248 = vpack.c.bf16 %v2214, %v2213
        %v2249 = vpack.c.bf16 %v2190, %v2189
        %v2250 = vpack.c.bf16 %v2238, %v2237
        %s2251 = scalar_lea.vmem %s1, 576
        %v2252 = vld [vmem:[%s2251] sm:$0xf]
        %v2253 = vld [vmem:[%s2251 + $0x4] sm:$0xf]
        %v2254 = vld [vmem:[%s2251 + $0x8] sm:$0xf]
        %v2255 = vld [vmem:[%s2251 + $0xc] sm:$0xf]
        %v2256 = vld [vmem:[%s2251 + $0x10] sm:$0xf]
        %v2257 = vld [vmem:[%s2251 + $0x14] sm:$0xf]
        %v2258 = vld [vmem:[%s2251 + $0x18] sm:$0xf]
        %v2259 = vld [vmem:[%s2251 + $0x1c] sm:$0xf]
        %v2260 = vld [vmem:[%s2251 + $0x20] sm:$0xf]
        %v2261 = vld [vmem:[%s2251 + $0x24] sm:$0xf]
        %v2262 = vld [vmem:[%s2251 + $0x28] sm:$0xf]
        %v2263 = vld [vmem:[%s2251 + $0x2c] sm:$0xf]
        %v2264 = vld [vmem:[%s2251 + $0x30] sm:$0xf]
        %v2265 = vld [vmem:[%s2251 + $0x34] sm:$0xf]
        %v2266 = vld [vmem:[%s2251 + $0x38] sm:$0xf]
        %v2267 = vld [vmem:[%s2251 + $0x3c] sm:$0xf]
        %v2268 = vld [vmem:[%s2251 + $0x40] sm:$0xf]
        %v2269 = vld [vmem:[%s2251 + $0x44] sm:$0xf]
        %v2270 = vld [vmem:[%s2251 + $0x48] sm:$0xf]
        %v2271 = vld [vmem:[%s2251 + $0x4c] sm:$0xf]
        %v2272 = vld [vmem:[%s2251 + $0x50] sm:$0xf]
        %v2273 = vld [vmem:[%s2251 + $0x54] sm:$0xf]
        %v2274 = vld [vmem:[%s2251 + $0x58] sm:$0xf]
        %v2275 = vld [vmem:[%s2251 + $0x5c] sm:$0xf]
        %v2276 = vld [vmem:[%s2251 + $0x60] sm:$0xf]
        %v2277 = vld [vmem:[%s2251 + $0x64] sm:$0xf]
        %v2278 = vld [vmem:[%s2251 + $0x68] sm:$0xf]
        %v2279 = vld [vmem:[%s2251 + $0x6c] sm:$0xf]
        %v2280 = vld [vmem:[%s2251 + $0x70] sm:$0xf]
        %v2281 = vld [vmem:[%s2251 + $0x74] sm:$0xf]
        %v2282 = vld [vmem:[%s2251 + $0x78] sm:$0xf]
        %v2283 = vld [vmem:[%s2251 + $0x7c] sm:$0xf]
        %v2284 = vld [vmem:[%s2251 + $0x80] sm:$0xf]
        %v2285 = vld [vmem:[%s2251 + $0x84] sm:$0xf]
        %v2286 = vld [vmem:[%s2251 + $0x88] sm:$0xf]
        %v2287 = vld [vmem:[%s2251 + $0x8c] sm:$0xf]
        %v2288 = vld [vmem:[%s2251 + $0x90] sm:$0xf]
        %v2289 = vld [vmem:[%s2251 + $0x94] sm:$0xf]
        %v2290 = vld [vmem:[%s2251 + $0x98] sm:$0xf]
        %v2291 = vld [vmem:[%s2251 + $0x9c] sm:$0xf]
        %v2292 = vld [vmem:[%s2251 + $0xa0] sm:$0xf]
        %v2293 = vld [vmem:[%s2251 + $0xa4] sm:$0xf]
        %v2294 = vld [vmem:[%s2251 + $0xa8] sm:$0xf]
        %v2295 = vld [vmem:[%s2251 + $0xac] sm:$0xf]
        %v2296 = vld [vmem:[%s2251 + $0xb0] sm:$0xf]
        %v2297 = vld [vmem:[%s2251 + $0xb4] sm:$0xf]
        %v2298 = vld [vmem:[%s2251 + $0xb8] sm:$0xf]
        %v2299 = vld [vmem:[%s2251 + $0xbc] sm:$0xf]
        %s2300 = scalar_lea.vmem %s2, 3
        %v2301 = vld [vmem:[%s2300] sm:$0x1]
        %v2303 = vperm.slane %v2301, 0
        %v2353 = vunpack.c.l.b16 %v2252
        %v2354 = vunpack.c.l.b16 %v2253
        %v2355 = vunpack.c.l.b16 %v2254
        %v2356 = vunpack.c.l.b16 %v2255
        %v2357 = vunpack.c.l.b16 %v2256
        %v2358 = vunpack.c.l.b16 %v2257
        %v2359 = vunpack.c.l.b16 %v2258
        %v2360 = vunpack.c.l.b16 %v2259
        %v2361 = vunpack.c.l.b16 %v2260
        %v2362 = vunpack.c.l.b16 %v2261
        %v2363 = vunpack.c.l.b16 %v2262
        %v2364 = vunpack.c.l.b16 %v2263
        %v2365 = vunpack.c.l.b16 %v2264
        %v2366 = vunpack.c.l.b16 %v2265
        %v2367 = vunpack.c.l.b16 %v2266
        %v2368 = vunpack.c.l.b16 %v2267
        %v2369 = vunpack.c.l.b16 %v2268
        %v2370 = vunpack.c.l.b16 %v2269
        %v2371 = vunpack.c.l.b16 %v2270
        %v2372 = vunpack.c.l.b16 %v2271
        %v2373 = vunpack.c.l.b16 %v2272
        %v2374 = vunpack.c.l.b16 %v2273
        %v2375 = vunpack.c.l.b16 %v2274
        %v2376 = vunpack.c.l.b16 %v2275
        %v2377 = vunpack.c.l.b16 %v2276
        %v2378 = vunpack.c.l.b16 %v2277
        %v2379 = vunpack.c.l.b16 %v2278
        %v2380 = vunpack.c.l.b16 %v2279
        %v2381 = vunpack.c.l.b16 %v2280
        %v2382 = vunpack.c.l.b16 %v2281
        %v2383 = vunpack.c.l.b16 %v2282
        %v2384 = vunpack.c.l.b16 %v2283
        %v2385 = vunpack.c.l.b16 %v2284
        %v2386 = vunpack.c.l.b16 %v2285
        %v2387 = vunpack.c.l.b16 %v2286
        %v2388 = vunpack.c.l.b16 %v2287
        %v2389 = vunpack.c.l.b16 %v2288
        %v2390 = vunpack.c.l.b16 %v2289
        %v2391 = vunpack.c.l.b16 %v2290
        %v2392 = vunpack.c.l.b16 %v2291
        %v2393 = vunpack.c.l.b16 %v2292
        %v2394 = vunpack.c.l.b16 %v2293
        %v2395 = vunpack.c.l.b16 %v2294
        %v2396 = vunpack.c.l.b16 %v2295
        %v2397 = vunpack.c.l.b16 %v2296
        %v2398 = vunpack.c.l.b16 %v2297
        %v2399 = vunpack.c.l.b16 %v2298
        %v2400 = vunpack.c.l.b16 %v2299
        %v2401 = vpack.c.b16 %v2354, %v2353
        %v2402 = vpack.c.b16 %v2356, %v2355
        %v2403 = vpack.c.b16 %v2358, %v2357
        %v2404 = vpack.c.b16 %v2360, %v2359
        %v2405 = vpack.c.b16 %v2362, %v2361
        %v2406 = vpack.c.b16 %v2364, %v2363
        %v2407 = vpack.c.b16 %v2366, %v2365
        %v2408 = vpack.c.b16 %v2368, %v2367
        %v2409 = vpack.c.b16 %v2370, %v2369
        %v2410 = vpack.c.b16 %v2372, %v2371
        %v2411 = vpack.c.b16 %v2374, %v2373
        %v2412 = vpack.c.b16 %v2376, %v2375
        %v2413 = vpack.c.b16 %v2378, %v2377
        %v2414 = vpack.c.b16 %v2380, %v2379
        %v2415 = vpack.c.b16 %v2382, %v2381
        %v2416 = vpack.c.b16 %v2384, %v2383
        %v2417 = vpack.c.b16 %v2386, %v2385
        %v2418 = vpack.c.b16 %v2388, %v2387
        %v2419 = vpack.c.b16 %v2390, %v2389
        %v2420 = vpack.c.b16 %v2392, %v2391
        %v2421 = vpack.c.b16 %v2394, %v2393
        %v2422 = vpack.c.b16 %v2396, %v2395
        %v2423 = vpack.c.b16 %v2398, %v2397
        %v2424 = vpack.c.b16 %v2400, %v2399
        %2449 = vmatpush.bf16.msra.mxu0 %v2408
        %2450 = vmatpush.bf16.msra.mxu0 %v2407
        %2451 = vmatpush.bf16.msra.mxu0 %v2406
        %2452 = vmatpush.bf16.msra.mxu0 %v2405
        %2453 = vmatpush.bf16.msra.mxu0 %v2404
        %2454 = vmatpush.bf16.msra.mxu0 %v2403
        %2455 = vmatpush.bf16.msra.mxu0 %v2402
        %2456 = vmatpush.bf16.msra.mxu0 %v2401
        %2457 = vmatmul.bf16.gmra.mxu0 %v2239
        %v2458 = vpop.f32.mrf.mxu0
        %v2459 = vadd.f32 %v2303, %v2458
        %v2460 = vpop.f32.mrf.mxu0
        %v2461 = vadd.f32 %v2303, %v2460
        %2462 = vmatmul.bf16.gmra.mxu0 %v2242
        %v2463 = vpop.f32.mrf.mxu0
        %v2464 = vadd.f32 %v2303, %v2463
        %v2465 = vpop.f32.mrf.mxu0
        %v2466 = vadd.f32 %v2303, %v2465
        %2467 = vmatmul.bf16.gmra.mxu0 %v2245
        %v2468 = vpop.f32.mrf.mxu0
        %v2469 = vadd.f32 %v2303, %v2468
        %v2470 = vpop.f32.mrf.mxu0
        %v2471 = vadd.f32 %v2303, %v2470
        %2472 = vmatmul.bf16.gmra.mxu0 %v2248
        %v2473 = vpop.f32.mrf.mxu0
        %v2474 = vadd.f32 %v2303, %v2473
        %v2475 = vpop.f32.mrf.mxu0
        %v2476 = vadd.f32 %v2303, %v2475
        %2477 = vdwg.mxu0
        %2478 = vmatpush.bf16.msra.mxu0 %v2416
        %2479 = vmatpush.bf16.msra.mxu0 %v2415
        %2480 = vmatpush.bf16.msra.mxu0 %v2414
        %2481 = vmatpush.bf16.msra.mxu0 %v2413
        %2482 = vmatpush.bf16.msra.mxu0 %v2412
        %2483 = vmatpush.bf16.msra.mxu0 %v2411
        %2484 = vmatpush.bf16.msra.mxu0 %v2410
        %2485 = vmatpush.bf16.msra.mxu0 %v2409
        %2486 = vmatmul.bf16.gmra.mxu0 %v2240
        %v2487 = vpop.f32.mrf.mxu0
        %v2488 = vadd.f32 %v2459, %v2487
        %v2489 = vpop.f32.mrf.mxu0
        %v2490 = vadd.f32 %v2461, %v2489
        %2491 = vmatmul.bf16.gmra.mxu0 %v2243
        %v2492 = vpop.f32.mrf.mxu0
        %v2493 = vadd.f32 %v2464, %v2492
        %v2494 = vpop.f32.mrf.mxu0
        %v2495 = vadd.f32 %v2466, %v2494
        %2496 = vmatmul.bf16.gmra.mxu0 %v2246
        %v2497 = vpop.f32.mrf.mxu0
        %v2498 = vadd.f32 %v2469, %v2497
        %v2499 = vpop.f32.mrf.mxu0
        %v2500 = vadd.f32 %v2471, %v2499
        %2501 = vmatmul.bf16.gmra.mxu0 %v2249
        %v2502 = vpop.f32.mrf.mxu0
        %v2503 = vadd.f32 %v2474, %v2502
        %v2504 = vpop.f32.mrf.mxu0
        %v2505 = vadd.f32 %v2476, %v2504
        %2506 = vdwg.mxu0
        %2507 = vmatpush.bf16.msra.mxu0 %v2424
        %2508 = vmatpush.bf16.msra.mxu0 %v2423
        %2509 = vmatpush.bf16.msra.mxu0 %v2422
        %2510 = vmatpush.bf16.msra.mxu0 %v2421
        %2511 = vmatpush.bf16.msra.mxu0 %v2420
        %2512 = vmatpush.bf16.msra.mxu0 %v2419
        %2513 = vmatpush.bf16.msra.mxu0 %v2418
        %2514 = vmatpush.bf16.msra.mxu0 %v2417
        %2515 = vmatmul.bf16.gmra.mxu0 %v2241
        %v2516 = vpop.f32.mrf.mxu0
        %v2517 = vadd.f32 %v2488, %v2516
        %v2518 = vpop.f32.mrf.mxu0
        %v2519 = vadd.f32 %v2490, %v2518
        %2520 = vmatmul.bf16.gmra.mxu0 %v2244
        %v2521 = vpop.f32.mrf.mxu0
        %v2522 = vadd.f32 %v2493, %v2521
        %v2523 = vpop.f32.mrf.mxu0
        %v2524 = vadd.f32 %v2495, %v2523
        %2525 = vmatmul.bf16.gmra.mxu0 %v2247
        %v2526 = vpop.f32.mrf.mxu0
        %v2527 = vadd.f32 %v2498, %v2526
        %v2528 = vpop.f32.mrf.mxu0
        %v2529 = vadd.f32 %v2500, %v2528
        %2530 = vmatmul.bf16.gmra.mxu0 %v2250
        %v2531 = vpop.f32.mrf.mxu0
        %v2532 = vadd.f32 %v2503, %v2531
        %v2533 = vpop.f32.mrf.mxu0
        %v2534 = vadd.f32 %v2505, %v2533
        %2535 = vdwg.mxu0
        %v2536 = vmax.f32 %v2517, 0.0
        %v2537 = vmax.f32 %v2519, 0.0
        %v2538 = vmax.f32 %v2522, 0.0
        %v2539 = vmax.f32 %v2524, 0.0
        %v2540 = vmax.f32 %v2527, 0.0
        %v2541 = vmax.f32 %v2529, 0.0
        %v2542 = vmax.f32 %v2532, 0.0
        %v2543 = vmax.f32 %v2534, 0.0
        %v2544 = vpack.c.bf16 %v2536, %v2536
        %v2545 = vpack.c.bf16 %v2537, %v2537
        %v2546 = vpack.c.bf16 %v2538, %v2538
        %v2547 = vpack.c.bf16 %v2539, %v2539
        %v2548 = vpack.c.bf16 %v2540, %v2540
        %v2549 = vpack.c.bf16 %v2541, %v2541
        %v2550 = vpack.c.bf16 %v2542, %v2542
        %v2551 = vpack.c.bf16 %v2543, %v2543
        %v2552 = vunpack.c.l.bf16 %v2544
        %v2553 = vunpack.c.l.bf16 %v2545
        %v2554 = vunpack.c.l.bf16 %v2546
        %v2555 = vunpack.c.l.bf16 %v2547
        %v2556 = vunpack.c.l.bf16 %v2548
        %v2557 = vunpack.c.l.bf16 %v2549
        %v2558 = vunpack.c.l.bf16 %v2550
        %v2559 = vunpack.c.l.bf16 %v2551
        %v2560 = vrot.slane %v2552, 1
        %v2561 = vrot.slane %v2553, 1
        %v2562 = vrot.slane %v2554, 1
        %v2563 = vrot.slane %v2555, 1
        %v2564 = vrot.slane %v2556, 1
        %v2565 = vrot.slane %v2557, 1
        %v2566 = vrot.slane %v2558, 1
        %v2567 = vrot.slane %v2559, 1
        %v2568 = vsel %vm599, %v2566, %v2567
        %v2569 = vsel %vm599, %v2565, %v2566
        %v2570 = vsel %vm599, %v2564, %v2565
        %v2571 = vsel %vm599, %v2563, %v2564
        %v2572 = vsel %vm599, %v2562, %v2563
        %v2573 = vsel %vm599, %v2561, %v2562
        %v2574 = vsel %vm599, %v2560, %v2561
        %v2575 = vsel %vm599, %v2567, %v2560
        %v2576 = vmax.f32 %v2552, %v2574
        %v2577 = vmax.f32 %v2553, %v2573
        %v2578 = vmax.f32 %v2554, %v2572
        %v2579 = vmax.f32 %v2555, %v2571
        %v2580 = vmax.f32 %v2556, %v2570
        %v2581 = vmax.f32 %v2557, %v2569
        %v2582 = vmax.f32 %v2558, %v2568
        %v2583 = vmax.f32 %v2559, %v2575
        %v2584 = vld [vmem:[%s4] sm:$0xf]
        %v2585 = vld [vmem:[%s4 + $0x4] sm:$0xf]
        %v2586 = vld [vmem:[%s4 + $0x8] sm:$0xf]
        %v2587 = vld [vmem:[%s4 + $0xc] sm:$0xf]
        %v2588 = vpack.c.bf16 %v2577, %v2576
        %v2589 = vpack.c.bf16 %v2579, %v2578
        %v2590 = vpack.c.bf16 %v2581, %v2580
        %v2591 = vpack.c.bf16 %v2583, %v2582
        %v2596 = vunpack.c.l.b16 %v2584
        %v2597 = vunpack.c.l.b16 %v2585
        %v2598 = vunpack.c.l.b16 %v2586
        %v2599 = vunpack.c.l.b16 %v2587
        %v2600 = vpack.c.b16 %v2597, %v2596
        %v2601 = vpack.c.b16 %v2599, %v2598
        %vm2602 = vcmask 523264
        %v2604 = vsel %vm2602, %v2600, 0
        %v2607 = vsel %vm2602, %v2601, 0
        %2609 = vmatpush.bf16.msra.mxu0 0
        %2610 = vmatpush.bf16.msra.mxu0 0
        %2611 = vmatpush.bf16.msra.mxu0 0
        %2612 = vmatpush.bf16.msra.mxu0 0
        %2613 = vmatpush.bf16.msra.mxu0 %v2591
        %2614 = vmatpush.bf16.msra.mxu0 %v2590
        %2615 = vmatpush.bf16.msra.mxu0 %v2589
        %2616 = vmatpush.bf16.msra.mxu0 %v2588
        %2617 = vmatmul.bf16.gmra.mxu0 %v2604
        %v2618 = vpop.f32.mrf.mxu0
        %v2619 = vadd.f32 0.0, %v2618
        %v2620 = vpop.f32.mrf.mxu0
        %v2621 = vadd.f32 0.0, %v2620
        %2622 = vmatmul.bf16.gmra.mxu0 %v2607
        %v2623 = vpop.f32.mrf.mxu0
        %v2624 = vadd.f32 0.0, %v2623
        %v2625 = vpop.f32.mrf.mxu0
        %v2626 = vadd.f32 0.0, %v2625
        %2627 = vdwg.mxu0
        %2628 = vrot.lane.b32.xlu0 %v2619, 112
        %v2629 = vpop.permute.xlu0 %2628
        %2630 = vrot.lane.b32.xlu0 %v2621, 112
        %v2631 = vpop.permute.xlu0 %2630
        %2632 = vrot.lane.b32.xlu0 %v2624, 112
        %v2633 = vpop.permute.xlu0 %2632
        %2634 = vrot.lane.b32.xlu0 %v2626, 112
        %v2635 = vpop.permute.xlu0 %2634
        %v2636 = vmax.f32 %v2619, %v2629
        %v2637 = vmax.f32 %v2621, %v2631
        %v2638 = vmax.f32 %v2624, %v2633
        %v2639 = vmax.f32 %v2626, %v2635
        %v2640 = vpack.c.bf16 %v2637, %v2636
        %v2641 = vpack.c.bf16 %v2639, %v2638
        %s2642 = scalar_lea.vmem %s6, 64
        %v2643 = vld [vmem:[%s2642] sm:$0xf]
        %v2644 = vld [vmem:[%s2642 + $0x4] sm:$0xf]
        %v2645 = vld [vmem:[%s2642 + $0x8] sm:$0xf]
        %v2646 = vld [vmem:[%s2642 + $0xc] sm:$0xf]
        %v2647 = vld [vmem:[%s2642 + $0x10] sm:$0xf]
        %v2648 = vld [vmem:[%s2642 + $0x14] sm:$0xf]
        %v2649 = vld [vmem:[%s2642 + $0x18] sm:$0xf]
        %v2650 = vld [vmem:[%s2642 + $0x1c] sm:$0xf]
        %v2651 = vld [vmem:[%s2642 + $0x20] sm:$0xf]
        %v2652 = vld [vmem:[%s2642 + $0x24] sm:$0xf]
        %v2653 = vld [vmem:[%s2642 + $0x28] sm:$0xf]
        %v2654 = vld [vmem:[%s2642 + $0x2c] sm:$0xf]
        %v2655 = vld [vmem:[%s2642 + $0x30] sm:$0xf]
        %v2656 = vld [vmem:[%s2642 + $0x34] sm:$0xf]
        %v2657 = vld [vmem:[%s2642 + $0x38] sm:$0xf]
        %v2658 = vld [vmem:[%s2642 + $0x3c] sm:$0xf]
        %v2675 = vunpack.c.l.b16 %v2643
        %v2676 = vunpack.c.l.b16 %v2644
        %v2677 = vunpack.c.l.b16 %v2645
        %v2678 = vunpack.c.l.b16 %v2646
        %v2679 = vunpack.c.l.b16 %v2647
        %v2680 = vunpack.c.l.b16 %v2648
        %v2681 = vunpack.c.l.b16 %v2649
        %v2682 = vunpack.c.l.b16 %v2650
        %v2683 = vunpack.c.l.b16 %v2651
        %v2684 = vunpack.c.l.b16 %v2652
        %v2685 = vunpack.c.l.b16 %v2653
        %v2686 = vunpack.c.l.b16 %v2654
        %v2687 = vunpack.c.l.b16 %v2655
        %v2688 = vunpack.c.l.b16 %v2656
        %v2689 = vunpack.c.l.b16 %v2657
        %v2690 = vunpack.c.l.b16 %v2658
        %v2691 = vpack.c.b16 %v2676, %v2675
        %v2692 = vpack.c.b16 %v2678, %v2677
        %v2693 = vpack.c.b16 %v2680, %v2679
        %v2694 = vpack.c.b16 %v2682, %v2681
        %v2695 = vpack.c.b16 %v2684, %v2683
        %v2696 = vpack.c.b16 %v2686, %v2685
        %v2697 = vpack.c.b16 %v2688, %v2687
        %v2698 = vpack.c.b16 %v2690, %v2689
        %2707 = vmatpush.bf16.msra.mxu0 %v2698
        %2708 = vmatpush.bf16.msra.mxu0 %v2697
        %2709 = vmatpush.bf16.msra.mxu0 %v2696
        %2710 = vmatpush.bf16.msra.mxu0 %v2695
        %2711 = vmatpush.bf16.msra.mxu0 %v2694
        %2712 = vmatpush.bf16.msra.mxu0 %v2693
        %2713 = vmatpush.bf16.msra.mxu0 %v2692
        %2714 = vmatpush.bf16.msra.mxu0 %v2691
        %2715 = vmatmul.bf16.gmra.mxu0 %v2640
        %v2716 = vpop.f32.mrf.mxu0
        %v2717 = vadd.f32 0.0, %v2716
        %v2718 = vpop.f32.mrf.mxu0
        %v2719 = vadd.f32 0.0, %v2718
        %2720 = vmatmul.bf16.gmra.mxu0 %v2641
        %v2721 = vpop.f32.mrf.mxu0
        %v2722 = vadd.f32 0.0, %v2721
        %v2723 = vpop.f32.mrf.mxu0
        %v2724 = vadd.f32 0.0, %v2723
        %2725 = vdwg.mxu0
        %v2726 = vand.u32 %v470, 3
        %v2727 = vand.u32 %v471, 3
        %v2728 = vand.u32 %v472, 3
        %v2729 = vand.u32 %v473, 3
        %vm2730 = vcmp.ne.s32.totalorder %v2726, 0
        %vm2731 = vcmp.ne.s32.totalorder %v2727, 0
        %vm2732 = vcmp.ne.s32.totalorder %v2728, 0
        %vm2733 = vcmp.ne.s32.totalorder %v2729, 0
        %vm2734 = vcmp.ne.s32.totalorder %v2726, 3
        %vm2735 = vcmp.ne.s32.totalorder %v2727, 3
        %vm2736 = vcmp.ne.s32.totalorder %v2728, 3
        %vm2737 = vcmp.ne.s32.totalorder %v2729, 3
        %v2738 = vrot.slane %v2717, 7
        %v2739 = vrot.slane %v2719, 7
        %v2740 = vrot.slane %v2722, 7
        %v2741 = vrot.slane %v2724, 7
        %v2742 = vsel %vm550, %v2740, %v2741
        %v2743 = vsel %vm550, %v2739, %v2740
        %v2744 = vsel %vm550, %v2738, %v2739
        %v2745 = vsel %vm550, %v2741, %v2738
        %v2746 = vsel %vm2730, %v2745, 0.0
        %v2747 = vsel %vm2731, %v2744, 0.0
        %v2748 = vsel %vm2732, %v2743, 0.0
        %v2749 = vsel %vm2733, %v2742, 0.0
        %v2750 = vrot.slane %v2717, 1
        %v2751 = vrot.slane %v2719, 1
        %v2752 = vrot.slane %v2722, 1
        %v2753 = vrot.slane %v2724, 1
        %v2754 = vsel %vm599, %v2752, %v2753
        %v2755 = vsel %vm599, %v2751, %v2752
        %v2756 = vsel %vm599, %v2750, %v2751
        %v2757 = vsel %vm599, %v2753, %v2750
        %v2758 = vsel %vm2734, %v2756, 0.0
        %v2759 = vsel %vm2735, %v2755, 0.0
        %v2760 = vsel %vm2736, %v2754, 0.0
        %v2761 = vsel %vm2737, %v2757, 0.0
        %v2762 = vpack.c.bf16 %v2747, %v2746
        %v2763 = vpack.c.bf16 %v2719, %v2717
        %v2764 = vpack.c.bf16 %v2759, %v2758
        %v2765 = vpack.c.bf16 %v2749, %v2748
        %v2766 = vpack.c.bf16 %v2724, %v2722
        %v2767 = vpack.c.bf16 %v2761, %v2760
        %s2768 = scalar_lea.vmem %s1, 768
        %v2769 = vld [vmem:[%s2768] sm:$0xf]
        %v2770 = vld [vmem:[%s2768 + $0x4] sm:$0xf]
        %v2771 = vld [vmem:[%s2768 + $0x8] sm:$0xf]
        %v2772 = vld [vmem:[%s2768 + $0xc] sm:$0xf]
        %v2773 = vld [vmem:[%s2768 + $0x10] sm:$0xf]
        %v2774 = vld [vmem:[%s2768 + $0x14] sm:$0xf]
        %v2775 = vld [vmem:[%s2768 + $0x18] sm:$0xf]
        %v2776 = vld [vmem:[%s2768 + $0x1c] sm:$0xf]
        %v2777 = vld [vmem:[%s2768 + $0x20] sm:$0xf]
        %v2778 = vld [vmem:[%s2768 + $0x24] sm:$0xf]
        %v2779 = vld [vmem:[%s2768 + $0x28] sm:$0xf]
        %v2780 = vld [vmem:[%s2768 + $0x2c] sm:$0xf]
        %v2781 = vld [vmem:[%s2768 + $0x30] sm:$0xf]
        %v2782 = vld [vmem:[%s2768 + $0x34] sm:$0xf]
        %v2783 = vld [vmem:[%s2768 + $0x38] sm:$0xf]
        %v2784 = vld [vmem:[%s2768 + $0x3c] sm:$0xf]
        %v2785 = vld [vmem:[%s2768 + $0x40] sm:$0xf]
        %v2786 = vld [vmem:[%s2768 + $0x44] sm:$0xf]
        %v2787 = vld [vmem:[%s2768 + $0x48] sm:$0xf]
        %v2788 = vld [vmem:[%s2768 + $0x4c] sm:$0xf]
        %v2789 = vld [vmem:[%s2768 + $0x50] sm:$0xf]
        %v2790 = vld [vmem:[%s2768 + $0x54] sm:$0xf]
        %v2791 = vld [vmem:[%s2768 + $0x58] sm:$0xf]
        %v2792 = vld [vmem:[%s2768 + $0x5c] sm:$0xf]
        %v2793 = vld [vmem:[%s2768 + $0x60] sm:$0xf]
        %v2794 = vld [vmem:[%s2768 + $0x64] sm:$0xf]
        %v2795 = vld [vmem:[%s2768 + $0x68] sm:$0xf]
        %v2796 = vld [vmem:[%s2768 + $0x6c] sm:$0xf]
        %v2797 = vld [vmem:[%s2768 + $0x70] sm:$0xf]
        %v2798 = vld [vmem:[%s2768 + $0x74] sm:$0xf]
        %v2799 = vld [vmem:[%s2768 + $0x78] sm:$0xf]
        %v2800 = vld [vmem:[%s2768 + $0x7c] sm:$0xf]
        %v2801 = vld [vmem:[%s2768 + $0x80] sm:$0xf]
        %v2802 = vld [vmem:[%s2768 + $0x84] sm:$0xf]
        %v2803 = vld [vmem:[%s2768 + $0x88] sm:$0xf]
        %v2804 = vld [vmem:[%s2768 + $0x8c] sm:$0xf]
        %v2805 = vld [vmem:[%s2768 + $0x90] sm:$0xf]
        %v2806 = vld [vmem:[%s2768 + $0x94] sm:$0xf]
        %v2807 = vld [vmem:[%s2768 + $0x98] sm:$0xf]
        %v2808 = vld [vmem:[%s2768 + $0x9c] sm:$0xf]
        %v2809 = vld [vmem:[%s2768 + $0xa0] sm:$0xf]
        %v2810 = vld [vmem:[%s2768 + $0xa4] sm:$0xf]
        %v2811 = vld [vmem:[%s2768 + $0xa8] sm:$0xf]
        %v2812 = vld [vmem:[%s2768 + $0xac] sm:$0xf]
        %v2813 = vld [vmem:[%s2768 + $0xb0] sm:$0xf]
        %v2814 = vld [vmem:[%s2768 + $0xb4] sm:$0xf]
        %v2815 = vld [vmem:[%s2768 + $0xb8] sm:$0xf]
        %v2816 = vld [vmem:[%s2768 + $0xbc] sm:$0xf]
        %s2817 = scalar_lea.vmem %s2, 4
        %v2818 = vld [vmem:[%s2817] sm:$0x1]
        %v2820 = vperm.slane %v2818, 0
        %v2870 = vunpack.c.l.b16 %v2769
        %v2871 = vunpack.c.l.b16 %v2770
        %v2872 = vunpack.c.l.b16 %v2771
        %v2873 = vunpack.c.l.b16 %v2772
        %v2874 = vunpack.c.l.b16 %v2773
        %v2875 = vunpack.c.l.b16 %v2774
        %v2876 = vunpack.c.l.b16 %v2775
        %v2877 = vunpack.c.l.b16 %v2776
        %v2878 = vunpack.c.l.b16 %v2777
        %v2879 = vunpack.c.l.b16 %v2778
        %v2880 = vunpack.c.l.b16 %v2779
        %v2881 = vunpack.c.l.b16 %v2780
        %v2882 = vunpack.c.l.b16 %v2781
        %v2883 = vunpack.c.l.b16 %v2782
        %v2884 = vunpack.c.l.b16 %v2783
        %v2885 = vunpack.c.l.b16 %v2784
        %v2886 = vunpack.c.l.b16 %v2785
        %v2887 = vunpack.c.l.b16 %v2786
        %v2888 = vunpack.c.l.b16 %v2787
        %v2889 = vunpack.c.l.b16 %v2788
        %v2890 = vunpack.c.l.b16 %v2789
        %v2891 = vunpack.c.l.b16 %v2790
        %v2892 = vunpack.c.l.b16 %v2791
        %v2893 = vunpack.c.l.b16 %v2792
        %v2894 = vunpack.c.l.b16 %v2793
        %v2895 = vunpack.c.l.b16 %v2794
        %v2896 = vunpack.c.l.b16 %v2795
        %v2897 = vunpack.c.l.b16 %v2796
        %v2898 = vunpack.c.l.b16 %v2797
        %v2899 = vunpack.c.l.b16 %v2798
        %v2900 = vunpack.c.l.b16 %v2799
        %v2901 = vunpack.c.l.b16 %v2800
        %v2902 = vunpack.c.l.b16 %v2801
        %v2903 = vunpack.c.l.b16 %v2802
        %v2904 = vunpack.c.l.b16 %v2803
        %v2905 = vunpack.c.l.b16 %v2804
        %v2906 = vunpack.c.l.b16 %v2805
        %v2907 = vunpack.c.l.b16 %v2806
        %v2908 = vunpack.c.l.b16 %v2807
        %v2909 = vunpack.c.l.b16 %v2808
        %v2910 = vunpack.c.l.b16 %v2809
        %v2911 = vunpack.c.l.b16 %v2810
        %v2912 = vunpack.c.l.b16 %v2811
        %v2913 = vunpack.c.l.b16 %v2812
        %v2914 = vunpack.c.l.b16 %v2813
        %v2915 = vunpack.c.l.b16 %v2814
        %v2916 = vunpack.c.l.b16 %v2815
        %v2917 = vunpack.c.l.b16 %v2816
        %v2918 = vpack.c.b16 %v2871, %v2870
        %v2919 = vpack.c.b16 %v2873, %v2872
        %v2920 = vpack.c.b16 %v2875, %v2874
        %v2921 = vpack.c.b16 %v2877, %v2876
        %v2922 = vpack.c.b16 %v2879, %v2878
        %v2923 = vpack.c.b16 %v2881, %v2880
        %v2924 = vpack.c.b16 %v2883, %v2882
        %v2925 = vpack.c.b16 %v2885, %v2884
        %v2926 = vpack.c.b16 %v2887, %v2886
        %v2927 = vpack.c.b16 %v2889, %v2888
        %v2928 = vpack.c.b16 %v2891, %v2890
        %v2929 = vpack.c.b16 %v2893, %v2892
        %v2930 = vpack.c.b16 %v2895, %v2894
        %v2931 = vpack.c.b16 %v2897, %v2896
        %v2932 = vpack.c.b16 %v2899, %v2898
        %v2933 = vpack.c.b16 %v2901, %v2900
        %v2934 = vpack.c.b16 %v2903, %v2902
        %v2935 = vpack.c.b16 %v2905, %v2904
        %v2936 = vpack.c.b16 %v2907, %v2906
        %v2937 = vpack.c.b16 %v2909, %v2908
        %v2938 = vpack.c.b16 %v2911, %v2910
        %v2939 = vpack.c.b16 %v2913, %v2912
        %v2940 = vpack.c.b16 %v2915, %v2914
        %v2941 = vpack.c.b16 %v2917, %v2916
        %2966 = vmatpush.bf16.msra.mxu0 %v2925
        %2967 = vmatpush.bf16.msra.mxu0 %v2924
        %2968 = vmatpush.bf16.msra.mxu0 %v2923
        %2969 = vmatpush.bf16.msra.mxu0 %v2922
        %2970 = vmatpush.bf16.msra.mxu0 %v2921
        %2971 = vmatpush.bf16.msra.mxu0 %v2920
        %2972 = vmatpush.bf16.msra.mxu0 %v2919
        %2973 = vmatpush.bf16.msra.mxu0 %v2918
        %2974 = vmatmul.bf16.gmra.mxu0 %v2762
        %v2975 = vpop.f32.mrf.mxu0
        %v2976 = vadd.f32 %v2820, %v2975
        %v2977 = vpop.f32.mrf.mxu0
        %v2978 = vadd.f32 %v2820, %v2977
        %2979 = vmatmul.bf16.gmra.mxu0 %v2765
        %v2980 = vpop.f32.mrf.mxu0
        %v2981 = vadd.f32 %v2820, %v2980
        %v2982 = vpop.f32.mrf.mxu0
        %v2983 = vadd.f32 %v2820, %v2982
        %2984 = vdwg.mxu0
        %2985 = vmatpush.bf16.msra.mxu0 %v2933
        %2986 = vmatpush.bf16.msra.mxu0 %v2932
        %2987 = vmatpush.bf16.msra.mxu0 %v2931
        %2988 = vmatpush.bf16.msra.mxu0 %v2930
        %2989 = vmatpush.bf16.msra.mxu0 %v2929
        %2990 = vmatpush.bf16.msra.mxu0 %v2928
        %2991 = vmatpush.bf16.msra.mxu0 %v2927
        %2992 = vmatpush.bf16.msra.mxu0 %v2926
        %2993 = vmatmul.bf16.gmra.mxu0 %v2763
        %v2994 = vpop.f32.mrf.mxu0
        %v2995 = vadd.f32 %v2976, %v2994
        %v2996 = vpop.f32.mrf.mxu0
        %v2997 = vadd.f32 %v2978, %v2996
        %2998 = vmatmul.bf16.gmra.mxu0 %v2766
        %v2999 = vpop.f32.mrf.mxu0
        %v3000 = vadd.f32 %v2981, %v2999
        %v3001 = vpop.f32.mrf.mxu0
        %v3002 = vadd.f32 %v2983, %v3001
        %3003 = vdwg.mxu0
        %3004 = vmatpush.bf16.msra.mxu0 %v2941
        %3005 = vmatpush.bf16.msra.mxu0 %v2940
        %3006 = vmatpush.bf16.msra.mxu0 %v2939
        %3007 = vmatpush.bf16.msra.mxu0 %v2938
        %3008 = vmatpush.bf16.msra.mxu0 %v2937
        %3009 = vmatpush.bf16.msra.mxu0 %v2936
        %3010 = vmatpush.bf16.msra.mxu0 %v2935
        %3011 = vmatpush.bf16.msra.mxu0 %v2934
        %3012 = vmatmul.bf16.gmra.mxu0 %v2764
        %v3013 = vpop.f32.mrf.mxu0
        %v3014 = vadd.f32 %v2995, %v3013
        %v3015 = vpop.f32.mrf.mxu0
        %v3016 = vadd.f32 %v2997, %v3015
        %3017 = vmatmul.bf16.gmra.mxu0 %v2767
        %v3018 = vpop.f32.mrf.mxu0
        %v3019 = vadd.f32 %v3000, %v3018
        %v3020 = vpop.f32.mrf.mxu0
        %v3021 = vadd.f32 %v3002, %v3020
        %3022 = vdwg.mxu0
        %v3023 = vmax.f32 %v3014, 0.0
        %v3024 = vmax.f32 %v3016, 0.0
        %v3025 = vmax.f32 %v3019, 0.0
        %v3026 = vmax.f32 %v3021, 0.0
        %v3027 = vpack.c.bf16 %v3023, %v3023
        %v3028 = vpack.c.bf16 %v3024, %v3024
        %v3029 = vpack.c.bf16 %v3025, %v3025
        %v3030 = vpack.c.bf16 %v3026, %v3026
        %v3031 = vunpack.c.l.bf16 %v3027
        %v3032 = vunpack.c.l.bf16 %v3028
        %v3033 = vunpack.c.l.bf16 %v3029
        %v3034 = vunpack.c.l.bf16 %v3030
        %v3035 = vrot.slane %v3031, 7
        %v3036 = vrot.slane %v3032, 7
        %v3037 = vrot.slane %v3033, 7
        %v3038 = vrot.slane %v3034, 7
        %v3039 = vsel %vm550, %v3037, %v3038
        %v3040 = vsel %vm550, %v3036, %v3037
        %v3041 = vsel %vm550, %v3035, %v3036
        %v3042 = vsel %vm550, %v3038, %v3035
        %v3043 = vsel %vm2730, %v3042, 0.0
        %v3044 = vsel %vm2731, %v3041, 0.0
        %v3045 = vsel %vm2732, %v3040, 0.0
        %v3046 = vsel %vm2733, %v3039, 0.0
        %v3047 = vrot.slane %v3031, 1
        %v3048 = vrot.slane %v3032, 1
        %v3049 = vrot.slane %v3033, 1
        %v3050 = vrot.slane %v3034, 1
        %v3051 = vsel %vm599, %v3049, %v3050
        %v3052 = vsel %vm599, %v3048, %v3049
        %v3053 = vsel %vm599, %v3047, %v3048
        %v3054 = vsel %vm599, %v3050, %v3047
        %v3055 = vsel %vm2734, %v3053, 0.0
        %v3056 = vsel %vm2735, %v3052, 0.0
        %v3057 = vsel %vm2736, %v3051, 0.0
        %v3058 = vsel %vm2737, %v3054, 0.0
        %v3059 = vpack.c.bf16 %v3044, %v3043
        %v3060 = vpack.c.bf16 %v3032, %v3031
        %v3061 = vpack.c.bf16 %v3056, %v3055
        %v3062 = vpack.c.bf16 %v3046, %v3045
        %v3063 = vpack.c.bf16 %v3034, %v3033
        %v3064 = vpack.c.bf16 %v3058, %v3057
        %s3065 = scalar_lea.vmem %s1, 960
        %v3066 = vld [vmem:[%s3065] sm:$0xf]
        %v3067 = vld [vmem:[%s3065 + $0x4] sm:$0xf]
        %v3068 = vld [vmem:[%s3065 + $0x8] sm:$0xf]
        %v3069 = vld [vmem:[%s3065 + $0xc] sm:$0xf]
        %v3070 = vld [vmem:[%s3065 + $0x10] sm:$0xf]
        %v3071 = vld [vmem:[%s3065 + $0x14] sm:$0xf]
        %v3072 = vld [vmem:[%s3065 + $0x18] sm:$0xf]
        %v3073 = vld [vmem:[%s3065 + $0x1c] sm:$0xf]
        %v3074 = vld [vmem:[%s3065 + $0x20] sm:$0xf]
        %v3075 = vld [vmem:[%s3065 + $0x24] sm:$0xf]
        %v3076 = vld [vmem:[%s3065 + $0x28] sm:$0xf]
        %v3077 = vld [vmem:[%s3065 + $0x2c] sm:$0xf]
        %v3078 = vld [vmem:[%s3065 + $0x30] sm:$0xf]
        %v3079 = vld [vmem:[%s3065 + $0x34] sm:$0xf]
        %v3080 = vld [vmem:[%s3065 + $0x38] sm:$0xf]
        %v3081 = vld [vmem:[%s3065 + $0x3c] sm:$0xf]
        %v3082 = vld [vmem:[%s3065 + $0x40] sm:$0xf]
        %v3083 = vld [vmem:[%s3065 + $0x44] sm:$0xf]
        %v3084 = vld [vmem:[%s3065 + $0x48] sm:$0xf]
        %v3085 = vld [vmem:[%s3065 + $0x4c] sm:$0xf]
        %v3086 = vld [vmem:[%s3065 + $0x50] sm:$0xf]
        %v3087 = vld [vmem:[%s3065 + $0x54] sm:$0xf]
        %v3088 = vld [vmem:[%s3065 + $0x58] sm:$0xf]
        %v3089 = vld [vmem:[%s3065 + $0x5c] sm:$0xf]
        %v3090 = vld [vmem:[%s3065 + $0x60] sm:$0xf]
        %v3091 = vld [vmem:[%s3065 + $0x64] sm:$0xf]
        %v3092 = vld [vmem:[%s3065 + $0x68] sm:$0xf]
        %v3093 = vld [vmem:[%s3065 + $0x6c] sm:$0xf]
        %v3094 = vld [vmem:[%s3065 + $0x70] sm:$0xf]
        %v3095 = vld [vmem:[%s3065 + $0x74] sm:$0xf]
        %v3096 = vld [vmem:[%s3065 + $0x78] sm:$0xf]
        %v3097 = vld [vmem:[%s3065 + $0x7c] sm:$0xf]
        %v3098 = vld [vmem:[%s3065 + $0x80] sm:$0xf]
        %v3099 = vld [vmem:[%s3065 + $0x84] sm:$0xf]
        %v3100 = vld [vmem:[%s3065 + $0x88] sm:$0xf]
        %v3101 = vld [vmem:[%s3065 + $0x8c] sm:$0xf]
        %v3102 = vld [vmem:[%s3065 + $0x90] sm:$0xf]
        %v3103 = vld [vmem:[%s3065 + $0x94] sm:$0xf]
        %v3104 = vld [vmem:[%s3065 + $0x98] sm:$0xf]
        %v3105 = vld [vmem:[%s3065 + $0x9c] sm:$0xf]
        %v3106 = vld [vmem:[%s3065 + $0xa0] sm:$0xf]
        %v3107 = vld [vmem:[%s3065 + $0xa4] sm:$0xf]
        %v3108 = vld [vmem:[%s3065 + $0xa8] sm:$0xf]
        %v3109 = vld [vmem:[%s3065 + $0xac] sm:$0xf]
        %v3110 = vld [vmem:[%s3065 + $0xb0] sm:$0xf]
        %v3111 = vld [vmem:[%s3065 + $0xb4] sm:$0xf]
        %v3112 = vld [vmem:[%s3065 + $0xb8] sm:$0xf]
        %v3113 = vld [vmem:[%s3065 + $0xbc] sm:$0xf]
        %s3114 = scalar_lea.vmem %s2, 5
        %v3115 = vld [vmem:[%s3114] sm:$0x1]
        %v3117 = vperm.slane %v3115, 0
        %v3167 = vunpack.c.l.b16 %v3066
        %v3168 = vunpack.c.l.b16 %v3067
        %v3169 = vunpack.c.l.b16 %v3068
        %v3170 = vunpack.c.l.b16 %v3069
        %v3171 = vunpack.c.l.b16 %v3070
        %v3172 = vunpack.c.l.b16 %v3071
        %v3173 = vunpack.c.l.b16 %v3072
        %v3174 = vunpack.c.l.b16 %v3073
        %v3175 = vunpack.c.l.b16 %v3074
        %v3176 = vunpack.c.l.b16 %v3075
        %v3177 = vunpack.c.l.b16 %v3076
        %v3178 = vunpack.c.l.b16 %v3077
        %v3179 = vunpack.c.l.b16 %v3078
        %v3180 = vunpack.c.l.b16 %v3079
        %v3181 = vunpack.c.l.b16 %v3080
        %v3182 = vunpack.c.l.b16 %v3081
        %v3183 = vunpack.c.l.b16 %v3082
        %v3184 = vunpack.c.l.b16 %v3083
        %v3185 = vunpack.c.l.b16 %v3084
        %v3186 = vunpack.c.l.b16 %v3085
        %v3187 = vunpack.c.l.b16 %v3086
        %v3188 = vunpack.c.l.b16 %v3087
        %v3189 = vunpack.c.l.b16 %v3088
        %v3190 = vunpack.c.l.b16 %v3089
        %v3191 = vunpack.c.l.b16 %v3090
        %v3192 = vunpack.c.l.b16 %v3091
        %v3193 = vunpack.c.l.b16 %v3092
        %v3194 = vunpack.c.l.b16 %v3093
        %v3195 = vunpack.c.l.b16 %v3094
        %v3196 = vunpack.c.l.b16 %v3095
        %v3197 = vunpack.c.l.b16 %v3096
        %v3198 = vunpack.c.l.b16 %v3097
        %v3199 = vunpack.c.l.b16 %v3098
        %v3200 = vunpack.c.l.b16 %v3099
        %v3201 = vunpack.c.l.b16 %v3100
        %v3202 = vunpack.c.l.b16 %v3101
        %v3203 = vunpack.c.l.b16 %v3102
        %v3204 = vunpack.c.l.b16 %v3103
        %v3205 = vunpack.c.l.b16 %v3104
        %v3206 = vunpack.c.l.b16 %v3105
        %v3207 = vunpack.c.l.b16 %v3106
        %v3208 = vunpack.c.l.b16 %v3107
        %v3209 = vunpack.c.l.b16 %v3108
        %v3210 = vunpack.c.l.b16 %v3109
        %v3211 = vunpack.c.l.b16 %v3110
        %v3212 = vunpack.c.l.b16 %v3111
        %v3213 = vunpack.c.l.b16 %v3112
        %v3214 = vunpack.c.l.b16 %v3113
        %v3215 = vpack.c.b16 %v3168, %v3167
        %v3216 = vpack.c.b16 %v3170, %v3169
        %v3217 = vpack.c.b16 %v3172, %v3171
        %v3218 = vpack.c.b16 %v3174, %v3173
        %v3219 = vpack.c.b16 %v3176, %v3175
        %v3220 = vpack.c.b16 %v3178, %v3177
        %v3221 = vpack.c.b16 %v3180, %v3179
        %v3222 = vpack.c.b16 %v3182, %v3181
        %v3223 = vpack.c.b16 %v3184, %v3183
        %v3224 = vpack.c.b16 %v3186, %v3185
        %v3225 = vpack.c.b16 %v3188, %v3187
        %v3226 = vpack.c.b16 %v3190, %v3189
        %v3227 = vpack.c.b16 %v3192, %v3191
        %v3228 = vpack.c.b16 %v3194, %v3193
        %v3229 = vpack.c.b16 %v3196, %v3195
        %v3230 = vpack.c.b16 %v3198, %v3197
        %v3231 = vpack.c.b16 %v3200, %v3199
        %v3232 = vpack.c.b16 %v3202, %v3201
        %v3233 = vpack.c.b16 %v3204, %v3203
        %v3234 = vpack.c.b16 %v3206, %v3205
        %v3235 = vpack.c.b16 %v3208, %v3207
        %v3236 = vpack.c.b16 %v3210, %v3209
        %v3237 = vpack.c.b16 %v3212, %v3211
        %v3238 = vpack.c.b16 %v3214, %v3213
        %3263 = vmatpush.bf16.msra.mxu0 %v3222
        %3264 = vmatpush.bf16.msra.mxu0 %v3221
        %3265 = vmatpush.bf16.msra.mxu0 %v3220
        %3266 = vmatpush.bf16.msra.mxu0 %v3219
        %3267 = vmatpush.bf16.msra.mxu0 %v3218
        %3268 = vmatpush.bf16.msra.mxu0 %v3217
        %3269 = vmatpush.bf16.msra.mxu0 %v3216
        %3270 = vmatpush.bf16.msra.mxu0 %v3215
        %3271 = vmatmul.bf16.gmra.mxu0 %v3059
        %v3272 = vpop.f32.mrf.mxu0
        %v3273 = vadd.f32 %v3117, %v3272
        %v3274 = vpop.f32.mrf.mxu0
        %v3275 = vadd.f32 %v3117, %v3274
        %3276 = vmatmul.bf16.gmra.mxu0 %v3062
        %v3277 = vpop.f32.mrf.mxu0
        %v3278 = vadd.f32 %v3117, %v3277
        %v3279 = vpop.f32.mrf.mxu0
        %v3280 = vadd.f32 %v3117, %v3279
        %3281 = vdwg.mxu0
        %3282 = vmatpush.bf16.msra.mxu0 %v3230
        %3283 = vmatpush.bf16.msra.mxu0 %v3229
        %3284 = vmatpush.bf16.msra.mxu0 %v3228
        %3285 = vmatpush.bf16.msra.mxu0 %v3227
        %3286 = vmatpush.bf16.msra.mxu0 %v3226
        %3287 = vmatpush.bf16.msra.mxu0 %v3225
        %3288 = vmatpush.bf16.msra.mxu0 %v3224
        %3289 = vmatpush.bf16.msra.mxu0 %v3223
        %3290 = vmatmul.bf16.gmra.mxu0 %v3060
        %v3291 = vpop.f32.mrf.mxu0
        %v3292 = vadd.f32 %v3273, %v3291
        %v3293 = vpop.f32.mrf.mxu0
        %v3294 = vadd.f32 %v3275, %v3293
        %3295 = vmatmul.bf16.gmra.mxu0 %v3063
        %v3296 = vpop.f32.mrf.mxu0
        %v3297 = vadd.f32 %v3278, %v3296
        %v3298 = vpop.f32.mrf.mxu0
        %v3299 = vadd.f32 %v3280, %v3298
        %3300 = vdwg.mxu0
        %3301 = vmatpush.bf16.msra.mxu0 %v3238
        %3302 = vmatpush.bf16.msra.mxu0 %v3237
        %3303 = vmatpush.bf16.msra.mxu0 %v3236
        %3304 = vmatpush.bf16.msra.mxu0 %v3235
        %3305 = vmatpush.bf16.msra.mxu0 %v3234
        %3306 = vmatpush.bf16.msra.mxu0 %v3233
        %3307 = vmatpush.bf16.msra.mxu0 %v3232
        %3308 = vmatpush.bf16.msra.mxu0 %v3231
        %3309 = vmatmul.bf16.gmra.mxu0 %v3061
        %v3310 = vpop.f32.mrf.mxu0
        %v3311 = vadd.f32 %v3292, %v3310
        %v3312 = vpop.f32.mrf.mxu0
        %v3313 = vadd.f32 %v3294, %v3312
        %3314 = vmatmul.bf16.gmra.mxu0 %v3064
        %v3315 = vpop.f32.mrf.mxu0
        %v3316 = vadd.f32 %v3297, %v3315
        %v3317 = vpop.f32.mrf.mxu0
        %v3318 = vadd.f32 %v3299, %v3317
        %3319 = vdwg.mxu0
        %v3320 = vmax.f32 %v3311, 0.0
        %v3321 = vmax.f32 %v3313, 0.0
        %v3322 = vmax.f32 %v3316, 0.0
        %v3323 = vmax.f32 %v3318, 0.0
        %v3324 = vpack.c.bf16 %v3320, %v3320
        %v3325 = vpack.c.bf16 %v3321, %v3321
        %v3326 = vpack.c.bf16 %v3322, %v3322
        %v3327 = vpack.c.bf16 %v3323, %v3323
        %v3328 = vunpack.c.l.bf16 %v3324
        %v3329 = vunpack.c.l.bf16 %v3325
        %v3330 = vunpack.c.l.bf16 %v3326
        %v3331 = vunpack.c.l.bf16 %v3327
        %v3332 = vrot.slane %v3328, 7
        %v3333 = vrot.slane %v3329, 7
        %v3334 = vrot.slane %v3330, 7
        %v3335 = vrot.slane %v3331, 7
        %v3336 = vsel %vm550, %v3334, %v3335
        %v3337 = vsel %vm550, %v3333, %v3334
        %v3338 = vsel %vm550, %v3332, %v3333
        %v3339 = vsel %vm550, %v3335, %v3332
        %v3340 = vsel %vm2730, %v3339, 0.0
        %v3341 = vsel %vm2731, %v3338, 0.0
        %v3342 = vsel %vm2732, %v3337, 0.0
        %v3343 = vsel %vm2733, %v3336, 0.0
        %v3344 = vrot.slane %v3328, 1
        %v3345 = vrot.slane %v3329, 1
        %v3346 = vrot.slane %v3330, 1
        %v3347 = vrot.slane %v3331, 1
        %v3348 = vsel %vm599, %v3346, %v3347
        %v3349 = vsel %vm599, %v3345, %v3346
        %v3350 = vsel %vm599, %v3344, %v3345
        %v3351 = vsel %vm599, %v3347, %v3344
        %v3352 = vsel %vm2734, %v3350, 0.0
        %v3353 = vsel %vm2735, %v3349, 0.0
        %v3354 = vsel %vm2736, %v3348, 0.0
        %v3355 = vsel %vm2737, %v3351, 0.0
        %v3356 = vpack.c.bf16 %v3341, %v3340
        %v3357 = vpack.c.bf16 %v3329, %v3328
        %v3358 = vpack.c.bf16 %v3353, %v3352
        %v3359 = vpack.c.bf16 %v3343, %v3342
        %v3360 = vpack.c.bf16 %v3331, %v3330
        %v3361 = vpack.c.bf16 %v3355, %v3354
        %s3362 = scalar_lea.vmem %s1, 1152
        %v3363 = vld [vmem:[%s3362] sm:$0xf]
        %v3364 = vld [vmem:[%s3362 + $0x4] sm:$0xf]
        %v3365 = vld [vmem:[%s3362 + $0x8] sm:$0xf]
        %v3366 = vld [vmem:[%s3362 + $0xc] sm:$0xf]
        %v3367 = vld [vmem:[%s3362 + $0x10] sm:$0xf]
        %v3368 = vld [vmem:[%s3362 + $0x14] sm:$0xf]
        %v3369 = vld [vmem:[%s3362 + $0x18] sm:$0xf]
        %v3370 = vld [vmem:[%s3362 + $0x1c] sm:$0xf]
        %v3371 = vld [vmem:[%s3362 + $0x20] sm:$0xf]
        %v3372 = vld [vmem:[%s3362 + $0x24] sm:$0xf]
        %v3373 = vld [vmem:[%s3362 + $0x28] sm:$0xf]
        %v3374 = vld [vmem:[%s3362 + $0x2c] sm:$0xf]
        %v3375 = vld [vmem:[%s3362 + $0x30] sm:$0xf]
        %v3376 = vld [vmem:[%s3362 + $0x34] sm:$0xf]
        %v3377 = vld [vmem:[%s3362 + $0x38] sm:$0xf]
        %v3378 = vld [vmem:[%s3362 + $0x3c] sm:$0xf]
        %v3379 = vld [vmem:[%s3362 + $0x40] sm:$0xf]
        %v3380 = vld [vmem:[%s3362 + $0x44] sm:$0xf]
        %v3381 = vld [vmem:[%s3362 + $0x48] sm:$0xf]
        %v3382 = vld [vmem:[%s3362 + $0x4c] sm:$0xf]
        %v3383 = vld [vmem:[%s3362 + $0x50] sm:$0xf]
        %v3384 = vld [vmem:[%s3362 + $0x54] sm:$0xf]
        %v3385 = vld [vmem:[%s3362 + $0x58] sm:$0xf]
        %v3386 = vld [vmem:[%s3362 + $0x5c] sm:$0xf]
        %v3387 = vld [vmem:[%s3362 + $0x60] sm:$0xf]
        %v3388 = vld [vmem:[%s3362 + $0x64] sm:$0xf]
        %v3389 = vld [vmem:[%s3362 + $0x68] sm:$0xf]
        %v3390 = vld [vmem:[%s3362 + $0x6c] sm:$0xf]
        %v3391 = vld [vmem:[%s3362 + $0x70] sm:$0xf]
        %v3392 = vld [vmem:[%s3362 + $0x74] sm:$0xf]
        %v3393 = vld [vmem:[%s3362 + $0x78] sm:$0xf]
        %v3394 = vld [vmem:[%s3362 + $0x7c] sm:$0xf]
        %v3395 = vld [vmem:[%s3362 + $0x80] sm:$0xf]
        %v3396 = vld [vmem:[%s3362 + $0x84] sm:$0xf]
        %v3397 = vld [vmem:[%s3362 + $0x88] sm:$0xf]
        %v3398 = vld [vmem:[%s3362 + $0x8c] sm:$0xf]
        %v3399 = vld [vmem:[%s3362 + $0x90] sm:$0xf]
        %v3400 = vld [vmem:[%s3362 + $0x94] sm:$0xf]
        %v3401 = vld [vmem:[%s3362 + $0x98] sm:$0xf]
        %v3402 = vld [vmem:[%s3362 + $0x9c] sm:$0xf]
        %v3403 = vld [vmem:[%s3362 + $0xa0] sm:$0xf]
        %v3404 = vld [vmem:[%s3362 + $0xa4] sm:$0xf]
        %v3405 = vld [vmem:[%s3362 + $0xa8] sm:$0xf]
        %v3406 = vld [vmem:[%s3362 + $0xac] sm:$0xf]
        %v3407 = vld [vmem:[%s3362 + $0xb0] sm:$0xf]
        %v3408 = vld [vmem:[%s3362 + $0xb4] sm:$0xf]
        %v3409 = vld [vmem:[%s3362 + $0xb8] sm:$0xf]
        %v3410 = vld [vmem:[%s3362 + $0xbc] sm:$0xf]
        %s3411 = scalar_lea.vmem %s2, 6
        %v3412 = vld [vmem:[%s3411] sm:$0x1]
        %v3414 = vperm.slane %v3412, 0
        %v3464 = vunpack.c.l.b16 %v3363
        %v3465 = vunpack.c.l.b16 %v3364
        %v3466 = vunpack.c.l.b16 %v3365
        %v3467 = vunpack.c.l.b16 %v3366
        %v3468 = vunpack.c.l.b16 %v3367
        %v3469 = vunpack.c.l.b16 %v3368
        %v3470 = vunpack.c.l.b16 %v3369
        %v3471 = vunpack.c.l.b16 %v3370
        %v3472 = vunpack.c.l.b16 %v3371
        %v3473 = vunpack.c.l.b16 %v3372
        %v3474 = vunpack.c.l.b16 %v3373
        %v3475 = vunpack.c.l.b16 %v3374
        %v3476 = vunpack.c.l.b16 %v3375
        %v3477 = vunpack.c.l.b16 %v3376
        %v3478 = vunpack.c.l.b16 %v3377
        %v3479 = vunpack.c.l.b16 %v3378
        %v3480 = vunpack.c.l.b16 %v3379
        %v3481 = vunpack.c.l.b16 %v3380
        %v3482 = vunpack.c.l.b16 %v3381
        %v3483 = vunpack.c.l.b16 %v3382
        %v3484 = vunpack.c.l.b16 %v3383
        %v3485 = vunpack.c.l.b16 %v3384
        %v3486 = vunpack.c.l.b16 %v3385
        %v3487 = vunpack.c.l.b16 %v3386
        %v3488 = vunpack.c.l.b16 %v3387
        %v3489 = vunpack.c.l.b16 %v3388
        %v3490 = vunpack.c.l.b16 %v3389
        %v3491 = vunpack.c.l.b16 %v3390
        %v3492 = vunpack.c.l.b16 %v3391
        %v3493 = vunpack.c.l.b16 %v3392
        %v3494 = vunpack.c.l.b16 %v3393
        %v3495 = vunpack.c.l.b16 %v3394
        %v3496 = vunpack.c.l.b16 %v3395
        %v3497 = vunpack.c.l.b16 %v3396
        %v3498 = vunpack.c.l.b16 %v3397
        %v3499 = vunpack.c.l.b16 %v3398
        %v3500 = vunpack.c.l.b16 %v3399
        %v3501 = vunpack.c.l.b16 %v3400
        %v3502 = vunpack.c.l.b16 %v3401
        %v3503 = vunpack.c.l.b16 %v3402
        %v3504 = vunpack.c.l.b16 %v3403
        %v3505 = vunpack.c.l.b16 %v3404
        %v3506 = vunpack.c.l.b16 %v3405
        %v3507 = vunpack.c.l.b16 %v3406
        %v3508 = vunpack.c.l.b16 %v3407
        %v3509 = vunpack.c.l.b16 %v3408
        %v3510 = vunpack.c.l.b16 %v3409
        %v3511 = vunpack.c.l.b16 %v3410
        %v3512 = vpack.c.b16 %v3465, %v3464
        %v3513 = vpack.c.b16 %v3467, %v3466
        %v3514 = vpack.c.b16 %v3469, %v3468
        %v3515 = vpack.c.b16 %v3471, %v3470
        %v3516 = vpack.c.b16 %v3473, %v3472
        %v3517 = vpack.c.b16 %v3475, %v3474
        %v3518 = vpack.c.b16 %v3477, %v3476
        %v3519 = vpack.c.b16 %v3479, %v3478
        %v3520 = vpack.c.b16 %v3481, %v3480
        %v3521 = vpack.c.b16 %v3483, %v3482
        %v3522 = vpack.c.b16 %v3485, %v3484
        %v3523 = vpack.c.b16 %v3487, %v3486
        %v3524 = vpack.c.b16 %v3489, %v3488
        %v3525 = vpack.c.b16 %v3491, %v3490
        %v3526 = vpack.c.b16 %v3493, %v3492
        %v3527 = vpack.c.b16 %v3495, %v3494
        %v3528 = vpack.c.b16 %v3497, %v3496
        %v3529 = vpack.c.b16 %v3499, %v3498
        %v3530 = vpack.c.b16 %v3501, %v3500
        %v3531 = vpack.c.b16 %v3503, %v3502
        %v3532 = vpack.c.b16 %v3505, %v3504
        %v3533 = vpack.c.b16 %v3507, %v3506
        %v3534 = vpack.c.b16 %v3509, %v3508
        %v3535 = vpack.c.b16 %v3511, %v3510
        %3560 = vmatpush.bf16.msra.mxu0 %v3519
        %3561 = vmatpush.bf16.msra.mxu0 %v3518
        %3562 = vmatpush.bf16.msra.mxu0 %v3517
        %3563 = vmatpush.bf16.msra.mxu0 %v3516
        %3564 = vmatpush.bf16.msra.mxu0 %v3515
        %3565 = vmatpush.bf16.msra.mxu0 %v3514
        %3566 = vmatpush.bf16.msra.mxu0 %v3513
        %3567 = vmatpush.bf16.msra.mxu0 %v3512
        %3568 = vmatmul.bf16.gmra.mxu0 %v3356
        %v3569 = vpop.f32.mrf.mxu0
        %v3570 = vadd.f32 %v3414, %v3569
        %v3571 = vpop.f32.mrf.mxu0
        %v3572 = vadd.f32 %v3414, %v3571
        %3573 = vmatmul.bf16.gmra.mxu0 %v3359
        %v3574 = vpop.f32.mrf.mxu0
        %v3575 = vadd.f32 %v3414, %v3574
        %v3576 = vpop.f32.mrf.mxu0
        %v3577 = vadd.f32 %v3414, %v3576
        %3578 = vdwg.mxu0
        %3579 = vmatpush.bf16.msra.mxu0 %v3527
        %3580 = vmatpush.bf16.msra.mxu0 %v3526
        %3581 = vmatpush.bf16.msra.mxu0 %v3525
        %3582 = vmatpush.bf16.msra.mxu0 %v3524
        %3583 = vmatpush.bf16.msra.mxu0 %v3523
        %3584 = vmatpush.bf16.msra.mxu0 %v3522
        %3585 = vmatpush.bf16.msra.mxu0 %v3521
        %3586 = vmatpush.bf16.msra.mxu0 %v3520
        %3587 = vmatmul.bf16.gmra.mxu0 %v3357
        %v3588 = vpop.f32.mrf.mxu0
        %v3589 = vadd.f32 %v3570, %v3588
        %v3590 = vpop.f32.mrf.mxu0
        %v3591 = vadd.f32 %v3572, %v3590
        %3592 = vmatmul.bf16.gmra.mxu0 %v3360
        %v3593 = vpop.f32.mrf.mxu0
        %v3594 = vadd.f32 %v3575, %v3593
        %v3595 = vpop.f32.mrf.mxu0
        %v3596 = vadd.f32 %v3577, %v3595
        %3597 = vdwg.mxu0
        %3598 = vmatpush.bf16.msra.mxu0 %v3535
        %3599 = vmatpush.bf16.msra.mxu0 %v3534
        %3600 = vmatpush.bf16.msra.mxu0 %v3533
        %3601 = vmatpush.bf16.msra.mxu0 %v3532
        %3602 = vmatpush.bf16.msra.mxu0 %v3531
        %3603 = vmatpush.bf16.msra.mxu0 %v3530
        %3604 = vmatpush.bf16.msra.mxu0 %v3529
        %3605 = vmatpush.bf16.msra.mxu0 %v3528
        %3606 = vmatmul.bf16.gmra.mxu0 %v3358
        %v3607 = vpop.f32.mrf.mxu0
        %v3608 = vadd.f32 %v3589, %v3607
        %v3609 = vpop.f32.mrf.mxu0
        %v3610 = vadd.f32 %v3591, %v3609
        %3611 = vmatmul.bf16.gmra.mxu0 %v3361
        %v3612 = vpop.f32.mrf.mxu0
        %v3613 = vadd.f32 %v3594, %v3612
        %v3614 = vpop.f32.mrf.mxu0
        %v3615 = vadd.f32 %v3596, %v3614
        %3616 = vdwg.mxu0
        %v3617 = vmax.f32 %v3608, 0.0
        %v3618 = vmax.f32 %v3610, 0.0
        %v3619 = vmax.f32 %v3613, 0.0
        %v3620 = vmax.f32 %v3615, 0.0
        %v3621 = vpack.c.bf16 %v3617, %v3617
        %v3622 = vpack.c.bf16 %v3618, %v3618
        %v3623 = vpack.c.bf16 %v3619, %v3619
        %v3624 = vpack.c.bf16 %v3620, %v3620
        %v3625 = vunpack.c.l.bf16 %v3621
        %v3626 = vunpack.c.l.bf16 %v3622
        %v3627 = vunpack.c.l.bf16 %v3623
        %v3628 = vunpack.c.l.bf16 %v3624
        %v3629 = vrot.slane %v3625, 7
        %v3630 = vrot.slane %v3626, 7
        %v3631 = vrot.slane %v3627, 7
        %v3632 = vrot.slane %v3628, 7
        %v3633 = vsel %vm550, %v3631, %v3632
        %v3634 = vsel %vm550, %v3630, %v3631
        %v3635 = vsel %vm550, %v3629, %v3630
        %v3636 = vsel %vm550, %v3632, %v3629
        %v3637 = vsel %vm2730, %v3636, 0.0
        %v3638 = vsel %vm2731, %v3635, 0.0
        %v3639 = vsel %vm2732, %v3634, 0.0
        %v3640 = vsel %vm2733, %v3633, 0.0
        %v3641 = vrot.slane %v3625, 1
        %v3642 = vrot.slane %v3626, 1
        %v3643 = vrot.slane %v3627, 1
        %v3644 = vrot.slane %v3628, 1
        %v3645 = vsel %vm599, %v3643, %v3644
        %v3646 = vsel %vm599, %v3642, %v3643
        %v3647 = vsel %vm599, %v3641, %v3642
        %v3648 = vsel %vm599, %v3644, %v3641
        %v3649 = vsel %vm2734, %v3647, 0.0
        %v3650 = vsel %vm2735, %v3646, 0.0
        %v3651 = vsel %vm2736, %v3645, 0.0
        %v3652 = vsel %vm2737, %v3648, 0.0
        %v3653 = vpack.c.bf16 %v3638, %v3637
        %v3654 = vpack.c.bf16 %v3626, %v3625
        %v3655 = vpack.c.bf16 %v3650, %v3649
        %v3656 = vpack.c.bf16 %v3640, %v3639
        %v3657 = vpack.c.bf16 %v3628, %v3627
        %v3658 = vpack.c.bf16 %v3652, %v3651
        %s3659 = scalar_lea.vmem %s1, 1344
        %v3660 = vld [vmem:[%s3659] sm:$0xf]
        %v3661 = vld [vmem:[%s3659 + $0x4] sm:$0xf]
        %v3662 = vld [vmem:[%s3659 + $0x8] sm:$0xf]
        %v3663 = vld [vmem:[%s3659 + $0xc] sm:$0xf]
        %v3664 = vld [vmem:[%s3659 + $0x10] sm:$0xf]
        %v3665 = vld [vmem:[%s3659 + $0x14] sm:$0xf]
        %v3666 = vld [vmem:[%s3659 + $0x18] sm:$0xf]
        %v3667 = vld [vmem:[%s3659 + $0x1c] sm:$0xf]
        %v3668 = vld [vmem:[%s3659 + $0x20] sm:$0xf]
        %v3669 = vld [vmem:[%s3659 + $0x24] sm:$0xf]
        %v3670 = vld [vmem:[%s3659 + $0x28] sm:$0xf]
        %v3671 = vld [vmem:[%s3659 + $0x2c] sm:$0xf]
        %v3672 = vld [vmem:[%s3659 + $0x30] sm:$0xf]
        %v3673 = vld [vmem:[%s3659 + $0x34] sm:$0xf]
        %v3674 = vld [vmem:[%s3659 + $0x38] sm:$0xf]
        %v3675 = vld [vmem:[%s3659 + $0x3c] sm:$0xf]
        %v3676 = vld [vmem:[%s3659 + $0x40] sm:$0xf]
        %v3677 = vld [vmem:[%s3659 + $0x44] sm:$0xf]
        %v3678 = vld [vmem:[%s3659 + $0x48] sm:$0xf]
        %v3679 = vld [vmem:[%s3659 + $0x4c] sm:$0xf]
        %v3680 = vld [vmem:[%s3659 + $0x50] sm:$0xf]
        %v3681 = vld [vmem:[%s3659 + $0x54] sm:$0xf]
        %v3682 = vld [vmem:[%s3659 + $0x58] sm:$0xf]
        %v3683 = vld [vmem:[%s3659 + $0x5c] sm:$0xf]
        %v3684 = vld [vmem:[%s3659 + $0x60] sm:$0xf]
        %v3685 = vld [vmem:[%s3659 + $0x64] sm:$0xf]
        %v3686 = vld [vmem:[%s3659 + $0x68] sm:$0xf]
        %v3687 = vld [vmem:[%s3659 + $0x6c] sm:$0xf]
        %v3688 = vld [vmem:[%s3659 + $0x70] sm:$0xf]
        %v3689 = vld [vmem:[%s3659 + $0x74] sm:$0xf]
        %v3690 = vld [vmem:[%s3659 + $0x78] sm:$0xf]
        %v3691 = vld [vmem:[%s3659 + $0x7c] sm:$0xf]
        %v3692 = vld [vmem:[%s3659 + $0x80] sm:$0xf]
        %v3693 = vld [vmem:[%s3659 + $0x84] sm:$0xf]
        %v3694 = vld [vmem:[%s3659 + $0x88] sm:$0xf]
        %v3695 = vld [vmem:[%s3659 + $0x8c] sm:$0xf]
        %v3696 = vld [vmem:[%s3659 + $0x90] sm:$0xf]
        %v3697 = vld [vmem:[%s3659 + $0x94] sm:$0xf]
        %v3698 = vld [vmem:[%s3659 + $0x98] sm:$0xf]
        %v3699 = vld [vmem:[%s3659 + $0x9c] sm:$0xf]
        %v3700 = vld [vmem:[%s3659 + $0xa0] sm:$0xf]
        %v3701 = vld [vmem:[%s3659 + $0xa4] sm:$0xf]
        %v3702 = vld [vmem:[%s3659 + $0xa8] sm:$0xf]
        %v3703 = vld [vmem:[%s3659 + $0xac] sm:$0xf]
        %v3704 = vld [vmem:[%s3659 + $0xb0] sm:$0xf]
        %v3705 = vld [vmem:[%s3659 + $0xb4] sm:$0xf]
        %v3706 = vld [vmem:[%s3659 + $0xb8] sm:$0xf]
        %v3707 = vld [vmem:[%s3659 + $0xbc] sm:$0xf]
        %s3708 = scalar_lea.vmem %s2, 7
        %v3709 = vld [vmem:[%s3708] sm:$0x1]
        %v3711 = vperm.slane %v3709, 0
        %v3761 = vunpack.c.l.b16 %v3660
        %v3762 = vunpack.c.l.b16 %v3661
        %v3763 = vunpack.c.l.b16 %v3662
        %v3764 = vunpack.c.l.b16 %v3663
        %v3765 = vunpack.c.l.b16 %v3664
        %v3766 = vunpack.c.l.b16 %v3665
        %v3767 = vunpack.c.l.b16 %v3666
        %v3768 = vunpack.c.l.b16 %v3667
        %v3769 = vunpack.c.l.b16 %v3668
        %v3770 = vunpack.c.l.b16 %v3669
        %v3771 = vunpack.c.l.b16 %v3670
        %v3772 = vunpack.c.l.b16 %v3671
        %v3773 = vunpack.c.l.b16 %v3672
        %v3774 = vunpack.c.l.b16 %v3673
        %v3775 = vunpack.c.l.b16 %v3674
        %v3776 = vunpack.c.l.b16 %v3675
        %v3777 = vunpack.c.l.b16 %v3676
        %v3778 = vunpack.c.l.b16 %v3677
        %v3779 = vunpack.c.l.b16 %v3678
        %v3780 = vunpack.c.l.b16 %v3679
        %v3781 = vunpack.c.l.b16 %v3680
        %v3782 = vunpack.c.l.b16 %v3681
        %v3783 = vunpack.c.l.b16 %v3682
        %v3784 = vunpack.c.l.b16 %v3683
        %v3785 = vunpack.c.l.b16 %v3684
        %v3786 = vunpack.c.l.b16 %v3685
        %v3787 = vunpack.c.l.b16 %v3686
        %v3788 = vunpack.c.l.b16 %v3687
        %v3789 = vunpack.c.l.b16 %v3688
        %v3790 = vunpack.c.l.b16 %v3689
        %v3791 = vunpack.c.l.b16 %v3690
        %v3792 = vunpack.c.l.b16 %v3691
        %v3793 = vunpack.c.l.b16 %v3692
        %v3794 = vunpack.c.l.b16 %v3693
        %v3795 = vunpack.c.l.b16 %v3694
        %v3796 = vunpack.c.l.b16 %v3695
        %v3797 = vunpack.c.l.b16 %v3696
        %v3798 = vunpack.c.l.b16 %v3697
        %v3799 = vunpack.c.l.b16 %v3698
        %v3800 = vunpack.c.l.b16 %v3699
        %v3801 = vunpack.c.l.b16 %v3700
        %v3802 = vunpack.c.l.b16 %v3701
        %v3803 = vunpack.c.l.b16 %v3702
        %v3804 = vunpack.c.l.b16 %v3703
        %v3805 = vunpack.c.l.b16 %v3704
        %v3806 = vunpack.c.l.b16 %v3705
        %v3807 = vunpack.c.l.b16 %v3706
        %v3808 = vunpack.c.l.b16 %v3707
        %v3809 = vpack.c.b16 %v3762, %v3761
        %v3810 = vpack.c.b16 %v3764, %v3763
        %v3811 = vpack.c.b16 %v3766, %v3765
        %v3812 = vpack.c.b16 %v3768, %v3767
        %v3813 = vpack.c.b16 %v3770, %v3769
        %v3814 = vpack.c.b16 %v3772, %v3771
        %v3815 = vpack.c.b16 %v3774, %v3773
        %v3816 = vpack.c.b16 %v3776, %v3775
        %v3817 = vpack.c.b16 %v3778, %v3777
        %v3818 = vpack.c.b16 %v3780, %v3779
        %v3819 = vpack.c.b16 %v3782, %v3781
        %v3820 = vpack.c.b16 %v3784, %v3783
        %v3821 = vpack.c.b16 %v3786, %v3785
        %v3822 = vpack.c.b16 %v3788, %v3787
        %v3823 = vpack.c.b16 %v3790, %v3789
        %v3824 = vpack.c.b16 %v3792, %v3791
        %v3825 = vpack.c.b16 %v3794, %v3793
        %v3826 = vpack.c.b16 %v3796, %v3795
        %v3827 = vpack.c.b16 %v3798, %v3797
        %v3828 = vpack.c.b16 %v3800, %v3799
        %v3829 = vpack.c.b16 %v3802, %v3801
        %v3830 = vpack.c.b16 %v3804, %v3803
        %v3831 = vpack.c.b16 %v3806, %v3805
        %v3832 = vpack.c.b16 %v3808, %v3807
        %3857 = vmatpush.bf16.msra.mxu0 %v3816
        %3858 = vmatpush.bf16.msra.mxu0 %v3815
        %3859 = vmatpush.bf16.msra.mxu0 %v3814
        %3860 = vmatpush.bf16.msra.mxu0 %v3813
        %3861 = vmatpush.bf16.msra.mxu0 %v3812
        %3862 = vmatpush.bf16.msra.mxu0 %v3811
        %3863 = vmatpush.bf16.msra.mxu0 %v3810
        %3864 = vmatpush.bf16.msra.mxu0 %v3809
        %3865 = vmatmul.bf16.gmra.mxu0 %v3653
        %v3866 = vpop.f32.mrf.mxu0
        %v3867 = vadd.f32 %v3711, %v3866
        %v3868 = vpop.f32.mrf.mxu0
        %v3869 = vadd.f32 %v3711, %v3868
        %3870 = vmatmul.bf16.gmra.mxu0 %v3656
        %v3871 = vpop.f32.mrf.mxu0
        %v3872 = vadd.f32 %v3711, %v3871
        %v3873 = vpop.f32.mrf.mxu0
        %v3874 = vadd.f32 %v3711, %v3873
        %3875 = vdwg.mxu0
        %3876 = vmatpush.bf16.msra.mxu0 %v3824
        %3877 = vmatpush.bf16.msra.mxu0 %v3823
        %3878 = vmatpush.bf16.msra.mxu0 %v3822
        %3879 = vmatpush.bf16.msra.mxu0 %v3821
        %3880 = vmatpush.bf16.msra.mxu0 %v3820
        %3881 = vmatpush.bf16.msra.mxu0 %v3819
        %3882 = vmatpush.bf16.msra.mxu0 %v3818
        %3883 = vmatpush.bf16.msra.mxu0 %v3817
        %3884 = vmatmul.bf16.gmra.mxu0 %v3654
        %v3885 = vpop.f32.mrf.mxu0
        %v3886 = vadd.f32 %v3867, %v3885
        %v3887 = vpop.f32.mrf.mxu0
        %v3888 = vadd.f32 %v3869, %v3887
        %3889 = vmatmul.bf16.gmra.mxu0 %v3657
        %v3890 = vpop.f32.mrf.mxu0
        %v3891 = vadd.f32 %v3872, %v3890
        %v3892 = vpop.f32.mrf.mxu0
        %v3893 = vadd.f32 %v3874, %v3892
        %3894 = vdwg.mxu0
        %3895 = vmatpush.bf16.msra.mxu0 %v3832
        %3896 = vmatpush.bf16.msra.mxu0 %v3831
        %3897 = vmatpush.bf16.msra.mxu0 %v3830
        %3898 = vmatpush.bf16.msra.mxu0 %v3829
        %3899 = vmatpush.bf16.msra.mxu0 %v3828
        %3900 = vmatpush.bf16.msra.mxu0 %v3827
        %3901 = vmatpush.bf16.msra.mxu0 %v3826
        %3902 = vmatpush.bf16.msra.mxu0 %v3825
        %3903 = vmatmul.bf16.gmra.mxu0 %v3655
        %v3904 = vpop.f32.mrf.mxu0
        %v3905 = vadd.f32 %v3886, %v3904
        %v3906 = vpop.f32.mrf.mxu0
        %v3907 = vadd.f32 %v3888, %v3906
        %3908 = vmatmul.bf16.gmra.mxu0 %v3658
        %v3909 = vpop.f32.mrf.mxu0
        %v3910 = vadd.f32 %v3891, %v3909
        %v3911 = vpop.f32.mrf.mxu0
        %v3912 = vadd.f32 %v3893, %v3911
        %3913 = vdwg.mxu0
        %v3914 = vmax.f32 %v3905, 0.0
        %v3915 = vmax.f32 %v3907, 0.0
        %v3916 = vmax.f32 %v3910, 0.0
        %v3917 = vmax.f32 %v3912, 0.0
        %v3918 = vpack.c.bf16 %v3914, %v3914
        %v3919 = vpack.c.bf16 %v3915, %v3915
        %v3920 = vpack.c.bf16 %v3916, %v3916
        %v3921 = vpack.c.bf16 %v3917, %v3917
        %v3922 = vunpack.c.l.bf16 %v3918
        %v3923 = vunpack.c.l.bf16 %v3919
        %v3924 = vunpack.c.l.bf16 %v3920
        %v3925 = vunpack.c.l.bf16 %v3921
        %v3926 = vrot.slane %v3922, 1
        %v3927 = vrot.slane %v3923, 1
        %v3928 = vrot.slane %v3924, 1
        %v3929 = vrot.slane %v3925, 1
        %v3930 = vsel %vm599, %v3928, %v3929
        %v3931 = vsel %vm599, %v3927, %v3928
        %v3932 = vsel %vm599, %v3926, %v3927
        %v3933 = vsel %vm599, %v3929, %v3926
        %v3934 = vmax.f32 %v3922, %v3932
        %v3935 = vmax.f32 %v3923, %v3931
        %v3936 = vmax.f32 %v3924, %v3930
        %v3937 = vmax.f32 %v3925, %v3933
        %v3938 = vld [vmem:[%s5] sm:$0xf]
        %v3939 = vld [vmem:[%s5 + $0x4] sm:$0xf]
        %v3940 = vpack.c.bf16 %v3935, %v3934
        %v3941 = vpack.c.bf16 %v3937, %v3936
        %v3944 = vunpack.c.l.b16 %v3938
        %v3945 = vunpack.c.l.b16 %v3939
        %v3946 = vpack.c.b16 %v3945, %v3944
        %vm3947 = vcmask 261120
        %v3949 = vsel %vm3947, %v3946, 0
        %3951 = vmatpush.bf16.msra.mxu0 0
        %3952 = vmatpush.bf16.msra.mxu0 0
        %3953 = vmatpush.bf16.msra.mxu0 0
        %3954 = vmatpush.bf16.msra.mxu0 0
        %3955 = vmatpush.bf16.msra.mxu0 0
        %3956 = vmatpush.bf16.msra.mxu0 0
        %3957 = vmatpush.bf16.msra.mxu0 %v3941
        %3958 = vmatpush.bf16.msra.mxu0 %v3940
        %3959 = vmatmul.bf16.gmra.mxu0 %v3949
        %v3960 = vpop.f32.mrf.mxu0
        %v3961 = vadd.f32 0.0, %v3960
        %v3962 = vpop.f32.mrf.mxu0
        %v3963 = vadd.f32 0.0, %v3962
        %3964 = vdwg.mxu0
        %3965 = vrot.lane.b32.xlu0 %v3961, 96
        %v3966 = vpop.permute.xlu0 %3965
        %3967 = vrot.lane.b32.xlu0 %v3963, 96
        %v3968 = vpop.permute.xlu0 %3967
        %v3969 = vmax.f32 %v3961, %v3966
        %v3970 = vmax.f32 %v3963, %v3968
        %v3971 = vpack.c.bf16 %v3970, %v3969
        %s3972 = scalar_lea.vmem %s6, 128
        %v3973 = vld [vmem:[%s3972] sm:$0xf]
        %v3974 = vld [vmem:[%s3972 + $0x4] sm:$0xf]
        %v3975 = vld [vmem:[%s3972 + $0x8] sm:$0xf]
        %v3976 = vld [vmem:[%s3972 + $0xc] sm:$0xf]
        %v3977 = vld [vmem:[%s3972 + $0x10] sm:$0xf]
        %v3978 = vld [vmem:[%s3972 + $0x14] sm:$0xf]
        %v3979 = vld [vmem:[%s3972 + $0x18] sm:$0xf]
        %v3980 = vld [vmem:[%s3972 + $0x1c] sm:$0xf]
        %v3981 = vld [vmem:[%s3972 + $0x20] sm:$0xf]
        %v3982 = vld [vmem:[%s3972 + $0x24] sm:$0xf]
        %v3983 = vld [vmem:[%s3972 + $0x28] sm:$0xf]
        %v3984 = vld [vmem:[%s3972 + $0x2c] sm:$0xf]
        %v3985 = vld [vmem:[%s3972 + $0x30] sm:$0xf]
        %v3986 = vld [vmem:[%s3972 + $0x34] sm:$0xf]
        %v3987 = vld [vmem:[%s3972 + $0x38] sm:$0xf]
        %v3988 = vld [vmem:[%s3972 + $0x3c] sm:$0xf]
        %v4005 = vunpack.c.l.b16 %v3973
        %v4006 = vunpack.c.l.b16 %v3974
        %v4007 = vunpack.c.l.b16 %v3975
        %v4008 = vunpack.c.l.b16 %v3976
        %v4009 = vunpack.c.l.b16 %v3977
        %v4010 = vunpack.c.l.b16 %v3978
        %v4011 = vunpack.c.l.b16 %v3979
        %v4012 = vunpack.c.l.b16 %v3980
        %v4013 = vunpack.c.l.b16 %v3981
        %v4014 = vunpack.c.l.b16 %v3982
        %v4015 = vunpack.c.l.b16 %v3983
        %v4016 = vunpack.c.l.b16 %v3984
        %v4017 = vunpack.c.l.b16 %v3985
        %v4018 = vunpack.c.l.b16 %v3986
        %v4019 = vunpack.c.l.b16 %v3987
        %v4020 = vunpack.c.l.b16 %v3988
        %v4021 = vpack.c.b16 %v4006, %v4005
        %v4022 = vpack.c.b16 %v4008, %v4007
        %v4023 = vpack.c.b16 %v4010, %v4009
        %v4024 = vpack.c.b16 %v4012, %v4011
        %v4025 = vpack.c.b16 %v4014, %v4013
        %v4026 = vpack.c.b16 %v4016, %v4015
        %v4027 = vpack.c.b16 %v4018, %v4017
        %v4028 = vpack.c.b16 %v4020, %v4019
        %4037 = vmatpush.bf16.msra.mxu0 %v4028
        %4038 = vmatpush.bf16.msra.mxu0 %v4027
        %4039 = vmatpush.bf16.msra.mxu0 %v4026
        %4040 = vmatpush.bf16.msra.mxu0 %v4025
        %4041 = vmatpush.bf16.msra.mxu0 %v4024
        %4042 = vmatpush.bf16.msra.mxu0 %v4023
        %4043 = vmatpush.bf16.msra.mxu0 %v4022
        %4044 = vmatpush.bf16.msra.mxu0 %v4021
        %4045 = vmatmul.bf16.gmra.mxu0 %v3971
        %v4046 = vpop.f32.mrf.mxu0
        %v4047 = vadd.f32 0.0, %v4046
        %v4048 = vpop.f32.mrf.mxu0
        %v4049 = vadd.f32 0.0, %v4048
        %4050 = vdwg.mxu0
        %v4051 = vand.u32 %v470, 1
        %v4052 = vand.u32 %v471, 1
        %vm4053 = vcmp.ne.s32.totalorder %v4051, 0
        %vm4054 = vcmp.ne.s32.totalorder %v4052, 0
        %vm4055 = vcmp.ne.s32.totalorder %v4051, 1
        %vm4056 = vcmp.ne.s32.totalorder %v4052, 1
        %v4057 = vrot.slane %v4047, 7
        %v4058 = vrot.slane %v4049, 7
        %v4059 = vsel %vm550, %v4057, %v4058
        %v4060 = vsel %vm550, %v4058, %v4057
        %v4061 = vsel %vm4053, %v4060, 0.0
        %v4062 = vsel %vm4054, %v4059, 0.0
        %v4063 = vrot.slane %v4047, 1
        %v4064 = vrot.slane %v4049, 1
        %v4065 = vsel %vm599, %v4063, %v4064
        %v4066 = vsel %vm599, %v4064, %v4063
        %v4067 = vsel %vm4055, %v4065, 0.0
        %v4068 = vsel %vm4056, %v4066, 0.0
        %v4069 = vpack.c.bf16 %v4062, %v4061
        %v4070 = vpack.c.bf16 %v4049, %v4047
        %v4071 = vpack.c.bf16 %v4068, %v4067
        %s4072 = scalar_lea.vmem %s1, 1536
        %v4073 = vld [vmem:[%s4072] sm:$0xf]
        %v4074 = vld [vmem:[%s4072 + $0x4] sm:$0xf]
        %v4075 = vld [vmem:[%s4072 + $0x8] sm:$0xf]
        %v4076 = vld [vmem:[%s4072 + $0xc] sm:$0xf]
        %v4077 = vld [vmem:[%s4072 + $0x10] sm:$0xf]
        %v4078 = vld [vmem:[%s4072 + $0x14] sm:$0xf]
        %v4079 = vld [vmem:[%s4072 + $0x18] sm:$0xf]
        %v4080 = vld [vmem:[%s4072 + $0x1c] sm:$0xf]
        %v4081 = vld [vmem:[%s4072 + $0x20] sm:$0xf]
        %v4082 = vld [vmem:[%s4072 + $0x24] sm:$0xf]
        %v4083 = vld [vmem:[%s4072 + $0x28] sm:$0xf]
        %v4084 = vld [vmem:[%s4072 + $0x2c] sm:$0xf]
        %v4085 = vld [vmem:[%s4072 + $0x30] sm:$0xf]
        %v4086 = vld [vmem:[%s4072 + $0x34] sm:$0xf]
        %v4087 = vld [vmem:[%s4072 + $0x38] sm:$0xf]
        %v4088 = vld [vmem:[%s4072 + $0x3c] sm:$0xf]
        %v4089 = vld [vmem:[%s4072 + $0x40] sm:$0xf]
        %v4090 = vld [vmem:[%s4072 + $0x44] sm:$0xf]
        %v4091 = vld [vmem:[%s4072 + $0x48] sm:$0xf]
        %v4092 = vld [vmem:[%s4072 + $0x4c] sm:$0xf]
        %v4093 = vld [vmem:[%s4072 + $0x50] sm:$0xf]
        %v4094 = vld [vmem:[%s4072 + $0x54] sm:$0xf]
        %v4095 = vld [vmem:[%s4072 + $0x58] sm:$0xf]
        %v4096 = vld [vmem:[%s4072 + $0x5c] sm:$0xf]
        %v4097 = vld [vmem:[%s4072 + $0x60] sm:$0xf]
        %v4098 = vld [vmem:[%s4072 + $0x64] sm:$0xf]
        %v4099 = vld [vmem:[%s4072 + $0x68] sm:$0xf]
        %v4100 = vld [vmem:[%s4072 + $0x6c] sm:$0xf]
        %v4101 = vld [vmem:[%s4072 + $0x70] sm:$0xf]
        %v4102 = vld [vmem:[%s4072 + $0x74] sm:$0xf]
        %v4103 = vld [vmem:[%s4072 + $0x78] sm:$0xf]
        %v4104 = vld [vmem:[%s4072 + $0x7c] sm:$0xf]
        %v4105 = vld [vmem:[%s4072 + $0x80] sm:$0xf]
        %v4106 = vld [vmem:[%s4072 + $0x84] sm:$0xf]
        %v4107 = vld [vmem:[%s4072 + $0x88] sm:$0xf]
        %v4108 = vld [vmem:[%s4072 + $0x8c] sm:$0xf]
        %v4109 = vld [vmem:[%s4072 + $0x90] sm:$0xf]
        %v4110 = vld [vmem:[%s4072 + $0x94] sm:$0xf]
        %v4111 = vld [vmem:[%s4072 + $0x98] sm:$0xf]
        %v4112 = vld [vmem:[%s4072 + $0x9c] sm:$0xf]
        %v4113 = vld [vmem:[%s4072 + $0xa0] sm:$0xf]
        %v4114 = vld [vmem:[%s4072 + $0xa4] sm:$0xf]
        %v4115 = vld [vmem:[%s4072 + $0xa8] sm:$0xf]
        %v4116 = vld [vmem:[%s4072 + $0xac] sm:$0xf]
        %v4117 = vld [vmem:[%s4072 + $0xb0] sm:$0xf]
        %v4118 = vld [vmem:[%s4072 + $0xb4] sm:$0xf]
        %v4119 = vld [vmem:[%s4072 + $0xb8] sm:$0xf]
        %v4120 = vld [vmem:[%s4072 + $0xbc] sm:$0xf]
        %s4121 = scalar_lea.vmem %s2, 8
        %v4122 = vld [vmem:[%s4121] sm:$0x1]
        %v4124 = vperm.slane %v4122, 0
        %v4174 = vunpack.c.l.b16 %v4073
        %v4175 = vunpack.c.l.b16 %v4074
        %v4176 = vunpack.c.l.b16 %v4075
        %v4177 = vunpack.c.l.b16 %v4076
        %v4178 = vunpack.c.l.b16 %v4077
        %v4179 = vunpack.c.l.b16 %v4078
        %v4180 = vunpack.c.l.b16 %v4079
        %v4181 = vunpack.c.l.b16 %v4080
        %v4182 = vunpack.c.l.b16 %v4081
        %v4183 = vunpack.c.l.b16 %v4082
        %v4184 = vunpack.c.l.b16 %v4083
        %v4185 = vunpack.c.l.b16 %v4084
        %v4186 = vunpack.c.l.b16 %v4085
        %v4187 = vunpack.c.l.b16 %v4086
        %v4188 = vunpack.c.l.b16 %v4087
        %v4189 = vunpack.c.l.b16 %v4088
        %v4190 = vunpack.c.l.b16 %v4089
        %v4191 = vunpack.c.l.b16 %v4090
        %v4192 = vunpack.c.l.b16 %v4091
        %v4193 = vunpack.c.l.b16 %v4092
        %v4194 = vunpack.c.l.b16 %v4093
        %v4195 = vunpack.c.l.b16 %v4094
        %v4196 = vunpack.c.l.b16 %v4095
        %v4197 = vunpack.c.l.b16 %v4096
        %v4198 = vunpack.c.l.b16 %v4097
        %v4199 = vunpack.c.l.b16 %v4098
        %v4200 = vunpack.c.l.b16 %v4099
        %v4201 = vunpack.c.l.b16 %v4100
        %v4202 = vunpack.c.l.b16 %v4101
        %v4203 = vunpack.c.l.b16 %v4102
        %v4204 = vunpack.c.l.b16 %v4103
        %v4205 = vunpack.c.l.b16 %v4104
        %v4206 = vunpack.c.l.b16 %v4105
        %v4207 = vunpack.c.l.b16 %v4106
        %v4208 = vunpack.c.l.b16 %v4107
        %v4209 = vunpack.c.l.b16 %v4108
        %v4210 = vunpack.c.l.b16 %v4109
        %v4211 = vunpack.c.l.b16 %v4110
        %v4212 = vunpack.c.l.b16 %v4111
        %v4213 = vunpack.c.l.b16 %v4112
        %v4214 = vunpack.c.l.b16 %v4113
        %v4215 = vunpack.c.l.b16 %v4114
        %v4216 = vunpack.c.l.b16 %v4115
        %v4217 = vunpack.c.l.b16 %v4116
        %v4218 = vunpack.c.l.b16 %v4117
        %v4219 = vunpack.c.l.b16 %v4118
        %v4220 = vunpack.c.l.b16 %v4119
        %v4221 = vunpack.c.l.b16 %v4120
        %v4222 = vpack.c.b16 %v4175, %v4174
        %v4223 = vpack.c.b16 %v4177, %v4176
        %v4224 = vpack.c.b16 %v4179, %v4178
        %v4225 = vpack.c.b16 %v4181, %v4180
        %v4226 = vpack.c.b16 %v4183, %v4182
        %v4227 = vpack.c.b16 %v4185, %v4184
        %v4228 = vpack.c.b16 %v4187, %v4186
        %v4229 = vpack.c.b16 %v4189, %v4188
        %v4230 = vpack.c.b16 %v4191, %v4190
        %v4231 = vpack.c.b16 %v4193, %v4192
        %v4232 = vpack.c.b16 %v4195, %v4194
        %v4233 = vpack.c.b16 %v4197, %v4196
        %v4234 = vpack.c.b16 %v4199, %v4198
        %v4235 = vpack.c.b16 %v4201, %v4200
        %v4236 = vpack.c.b16 %v4203, %v4202
        %v4237 = vpack.c.b16 %v4205, %v4204
        %v4238 = vpack.c.b16 %v4207, %v4206
        %v4239 = vpack.c.b16 %v4209, %v4208
        %v4240 = vpack.c.b16 %v4211, %v4210
        %v4241 = vpack.c.b16 %v4213, %v4212
        %v4242 = vpack.c.b16 %v4215, %v4214
        %v4243 = vpack.c.b16 %v4217, %v4216
        %v4244 = vpack.c.b16 %v4219, %v4218
        %v4245 = vpack.c.b16 %v4221, %v4220
        %4270 = vmatpush.bf16.msra.mxu0 %v4229
        %4271 = vmatpush.bf16.msra.mxu0 %v4228
        %4272 = vmatpush.bf16.msra.mxu0 %v4227
        %4273 = vmatpush.bf16.msra.mxu0 %v4226
        %4274 = vmatpush.bf16.msra.mxu0 %v4225
        %4275 = vmatpush.bf16.msra.mxu0 %v4224
        %4276 = vmatpush.bf16.msra.mxu0 %v4223
        %4277 = vmatpush.bf16.msra.mxu0 %v4222
        %4278 = vmatmul.bf16.gmra.mxu0 %v4069
        %v4279 = vpop.f32.mrf.mxu0
        %v4280 = vadd.f32 %v4124, %v4279
        %v4281 = vpop.f32.mrf.mxu0
        %v4282 = vadd.f32 %v4124, %v4281
        %4283 = vdwg.mxu0
        %4284 = vmatpush.bf16.msra.mxu0 %v4237
        %4285 = vmatpush.bf16.msra.mxu0 %v4236
        %4286 = vmatpush.bf16.msra.mxu0 %v4235
        %4287 = vmatpush.bf16.msra.mxu0 %v4234
        %4288 = vmatpush.bf16.msra.mxu0 %v4233
        %4289 = vmatpush.bf16.msra.mxu0 %v4232
        %4290 = vmatpush.bf16.msra.mxu0 %v4231
        %4291 = vmatpush.bf16.msra.mxu0 %v4230
        %4292 = vmatmul.bf16.gmra.mxu0 %v4070
        %v4293 = vpop.f32.mrf.mxu0
        %v4294 = vadd.f32 %v4280, %v4293
        %v4295 = vpop.f32.mrf.mxu0
        %v4296 = vadd.f32 %v4282, %v4295
        %4297 = vdwg.mxu0
        %4298 = vmatpush.bf16.msra.mxu0 %v4245
        %4299 = vmatpush.bf16.msra.mxu0 %v4244
        %4300 = vmatpush.bf16.msra.mxu0 %v4243
        %4301 = vmatpush.bf16.msra.mxu0 %v4242
        %4302 = vmatpush.bf16.msra.mxu0 %v4241
        %4303 = vmatpush.bf16.msra.mxu0 %v4240
        %4304 = vmatpush.bf16.msra.mxu0 %v4239
        %4305 = vmatpush.bf16.msra.mxu0 %v4238
        %4306 = vmatmul.bf16.gmra.mxu0 %v4071
        %v4307 = vpop.f32.mrf.mxu0
        %v4308 = vadd.f32 %v4294, %v4307
        %v4309 = vpop.f32.mrf.mxu0
        %v4310 = vadd.f32 %v4296, %v4309
        %4311 = vdwg.mxu0
        %v4312 = vmax.f32 %v4308, 0.0
        %v4313 = vmax.f32 %v4310, 0.0
        %v4314 = vpack.c.bf16 %v4312, %v4312
        %v4315 = vpack.c.bf16 %v4313, %v4313
        %v4316 = vunpack.c.l.bf16 %v4314
        %v4317 = vunpack.c.l.bf16 %v4315
        %v4318 = vrot.slane %v4316, 7
        %v4319 = vrot.slane %v4317, 7
        %v4320 = vsel %vm550, %v4318, %v4319
        %v4321 = vsel %vm550, %v4319, %v4318
        %v4322 = vsel %vm4053, %v4321, 0.0
        %v4323 = vsel %vm4054, %v4320, 0.0
        %v4324 = vrot.slane %v4316, 1
        %v4325 = vrot.slane %v4317, 1
        %v4326 = vsel %vm599, %v4324, %v4325
        %v4327 = vsel %vm599, %v4325, %v4324
        %v4328 = vsel %vm4055, %v4326, 0.0
        %v4329 = vsel %vm4056, %v4327, 0.0
        %v4330 = vpack.c.bf16 %v4323, %v4322
        %v4331 = vpack.c.bf16 %v4317, %v4316
        %v4332 = vpack.c.bf16 %v4329, %v4328
        %s4333 = scalar_lea.vmem %s1, 1728
        %v4334 = vld [vmem:[%s4333] sm:$0xf]
        %v4335 = vld [vmem:[%s4333 + $0x4] sm:$0xf]
        %v4336 = vld [vmem:[%s4333 + $0x8] sm:$0xf]
        %v4337 = vld [vmem:[%s4333 + $0xc] sm:$0xf]
        %v4338 = vld [vmem:[%s4333 + $0x10] sm:$0xf]
        %v4339 = vld [vmem:[%s4333 + $0x14] sm:$0xf]
        %v4340 = vld [vmem:[%s4333 + $0x18] sm:$0xf]
        %v4341 = vld [vmem:[%s4333 + $0x1c] sm:$0xf]
        %v4342 = vld [vmem:[%s4333 + $0x20] sm:$0xf]
        %v4343 = vld [vmem:[%s4333 + $0x24] sm:$0xf]
        %v4344 = vld [vmem:[%s4333 + $0x28] sm:$0xf]
        %v4345 = vld [vmem:[%s4333 + $0x2c] sm:$0xf]
        %v4346 = vld [vmem:[%s4333 + $0x30] sm:$0xf]
        %v4347 = vld [vmem:[%s4333 + $0x34] sm:$0xf]
        %v4348 = vld [vmem:[%s4333 + $0x38] sm:$0xf]
        %v4349 = vld [vmem:[%s4333 + $0x3c] sm:$0xf]
        %v4350 = vld [vmem:[%s4333 + $0x40] sm:$0xf]
        %v4351 = vld [vmem:[%s4333 + $0x44] sm:$0xf]
        %v4352 = vld [vmem:[%s4333 + $0x48] sm:$0xf]
        %v4353 = vld [vmem:[%s4333 + $0x4c] sm:$0xf]
        %v4354 = vld [vmem:[%s4333 + $0x50] sm:$0xf]
        %v4355 = vld [vmem:[%s4333 + $0x54] sm:$0xf]
        %v4356 = vld [vmem:[%s4333 + $0x58] sm:$0xf]
        %v4357 = vld [vmem:[%s4333 + $0x5c] sm:$0xf]
        %v4358 = vld [vmem:[%s4333 + $0x60] sm:$0xf]
        %v4359 = vld [vmem:[%s4333 + $0x64] sm:$0xf]
        %v4360 = vld [vmem:[%s4333 + $0x68] sm:$0xf]
        %v4361 = vld [vmem:[%s4333 + $0x6c] sm:$0xf]
        %v4362 = vld [vmem:[%s4333 + $0x70] sm:$0xf]
        %v4363 = vld [vmem:[%s4333 + $0x74] sm:$0xf]
        %v4364 = vld [vmem:[%s4333 + $0x78] sm:$0xf]
        %v4365 = vld [vmem:[%s4333 + $0x7c] sm:$0xf]
        %v4366 = vld [vmem:[%s4333 + $0x80] sm:$0xf]
        %v4367 = vld [vmem:[%s4333 + $0x84] sm:$0xf]
        %v4368 = vld [vmem:[%s4333 + $0x88] sm:$0xf]
        %v4369 = vld [vmem:[%s4333 + $0x8c] sm:$0xf]
        %v4370 = vld [vmem:[%s4333 + $0x90] sm:$0xf]
        %v4371 = vld [vmem:[%s4333 + $0x94] sm:$0xf]
        %v4372 = vld [vmem:[%s4333 + $0x98] sm:$0xf]
        %v4373 = vld [vmem:[%s4333 + $0x9c] sm:$0xf]
        %v4374 = vld [vmem:[%s4333 + $0xa0] sm:$0xf]
        %v4375 = vld [vmem:[%s4333 + $0xa4] sm:$0xf]
        %v4376 = vld [vmem:[%s4333 + $0xa8] sm:$0xf]
        %v4377 = vld [vmem:[%s4333 + $0xac] sm:$0xf]
        %v4378 = vld [vmem:[%s4333 + $0xb0] sm:$0xf]
        %v4379 = vld [vmem:[%s4333 + $0xb4] sm:$0xf]
        %v4380 = vld [vmem:[%s4333 + $0xb8] sm:$0xf]
        %v4381 = vld [vmem:[%s4333 + $0xbc] sm:$0xf]
        %s4382 = scalar_lea.vmem %s2, 9
        %v4383 = vld [vmem:[%s4382] sm:$0x1]
        %v4385 = vperm.slane %v4383, 0
        %v4435 = vunpack.c.l.b16 %v4334
        %v4436 = vunpack.c.l.b16 %v4335
        %v4437 = vunpack.c.l.b16 %v4336
        %v4438 = vunpack.c.l.b16 %v4337
        %v4439 = vunpack.c.l.b16 %v4338
        %v4440 = vunpack.c.l.b16 %v4339
        %v4441 = vunpack.c.l.b16 %v4340
        %v4442 = vunpack.c.l.b16 %v4341
        %v4443 = vunpack.c.l.b16 %v4342
        %v4444 = vunpack.c.l.b16 %v4343
        %v4445 = vunpack.c.l.b16 %v4344
        %v4446 = vunpack.c.l.b16 %v4345
        %v4447 = vunpack.c.l.b16 %v4346
        %v4448 = vunpack.c.l.b16 %v4347
        %v4449 = vunpack.c.l.b16 %v4348
        %v4450 = vunpack.c.l.b16 %v4349
        %v4451 = vunpack.c.l.b16 %v4350
        %v4452 = vunpack.c.l.b16 %v4351
        %v4453 = vunpack.c.l.b16 %v4352
        %v4454 = vunpack.c.l.b16 %v4353
        %v4455 = vunpack.c.l.b16 %v4354
        %v4456 = vunpack.c.l.b16 %v4355
        %v4457 = vunpack.c.l.b16 %v4356
        %v4458 = vunpack.c.l.b16 %v4357
        %v4459 = vunpack.c.l.b16 %v4358
        %v4460 = vunpack.c.l.b16 %v4359
        %v4461 = vunpack.c.l.b16 %v4360
        %v4462 = vunpack.c.l.b16 %v4361
        %v4463 = vunpack.c.l.b16 %v4362
        %v4464 = vunpack.c.l.b16 %v4363
        %v4465 = vunpack.c.l.b16 %v4364
        %v4466 = vunpack.c.l.b16 %v4365
        %v4467 = vunpack.c.l.b16 %v4366
        %v4468 = vunpack.c.l.b16 %v4367
        %v4469 = vunpack.c.l.b16 %v4368
        %v4470 = vunpack.c.l.b16 %v4369
        %v4471 = vunpack.c.l.b16 %v4370
        %v4472 = vunpack.c.l.b16 %v4371
        %v4473 = vunpack.c.l.b16 %v4372
        %v4474 = vunpack.c.l.b16 %v4373
        %v4475 = vunpack.c.l.b16 %v4374
        %v4476 = vunpack.c.l.b16 %v4375
        %v4477 = vunpack.c.l.b16 %v4376
        %v4478 = vunpack.c.l.b16 %v4377
        %v4479 = vunpack.c.l.b16 %v4378
        %v4480 = vunpack.c.l.b16 %v4379
        %v4481 = vunpack.c.l.b16 %v4380
        %v4482 = vunpack.c.l.b16 %v4381
        %v4483 = vpack.c.b16 %v4436, %v4435
        %v4484 = vpack.c.b16 %v4438, %v4437
        %v4485 = vpack.c.b16 %v4440, %v4439
        %v4486 = vpack.c.b16 %v4442, %v4441
        %v4487 = vpack.c.b16 %v4444, %v4443
        %v4488 = vpack.c.b16 %v4446, %v4445
        %v4489 = vpack.c.b16 %v4448, %v4447
        %v4490 = vpack.c.b16 %v4450, %v4449
        %v4491 = vpack.c.b16 %v4452, %v4451
        %v4492 = vpack.c.b16 %v4454, %v4453
        %v4493 = vpack.c.b16 %v4456, %v4455
        %v4494 = vpack.c.b16 %v4458, %v4457
        %v4495 = vpack.c.b16 %v4460, %v4459
        %v4496 = vpack.c.b16 %v4462, %v4461
        %v4497 = vpack.c.b16 %v4464, %v4463
        %v4498 = vpack.c.b16 %v4466, %v4465
        %v4499 = vpack.c.b16 %v4468, %v4467
        %v4500 = vpack.c.b16 %v4470, %v4469
        %v4501 = vpack.c.b16 %v4472, %v4471
        %v4502 = vpack.c.b16 %v4474, %v4473
        %v4503 = vpack.c.b16 %v4476, %v4475
        %v4504 = vpack.c.b16 %v4478, %v4477
        %v4505 = vpack.c.b16 %v4480, %v4479
        %v4506 = vpack.c.b16 %v4482, %v4481
        %4531 = vmatpush.bf16.msra.mxu0 %v4490
        %4532 = vmatpush.bf16.msra.mxu0 %v4489
        %4533 = vmatpush.bf16.msra.mxu0 %v4488
        %4534 = vmatpush.bf16.msra.mxu0 %v4487
        %4535 = vmatpush.bf16.msra.mxu0 %v4486
        %4536 = vmatpush.bf16.msra.mxu0 %v4485
        %4537 = vmatpush.bf16.msra.mxu0 %v4484
        %4538 = vmatpush.bf16.msra.mxu0 %v4483
        %4539 = vmatmul.bf16.gmra.mxu0 %v4330
        %v4540 = vpop.f32.mrf.mxu0
        %v4541 = vadd.f32 %v4385, %v4540
        %v4542 = vpop.f32.mrf.mxu0
        %v4543 = vadd.f32 %v4385, %v4542
        %4544 = vdwg.mxu0
        %4545 = vmatpush.bf16.msra.mxu0 %v4498
        %4546 = vmatpush.bf16.msra.mxu0 %v4497
        %4547 = vmatpush.bf16.msra.mxu0 %v4496
        %4548 = vmatpush.bf16.msra.mxu0 %v4495
        %4549 = vmatpush.bf16.msra.mxu0 %v4494
        %4550 = vmatpush.bf16.msra.mxu0 %v4493
        %4551 = vmatpush.bf16.msra.mxu0 %v4492
        %4552 = vmatpush.bf16.msra.mxu0 %v4491
        %4553 = vmatmul.bf16.gmra.mxu0 %v4331
        %v4554 = vpop.f32.mrf.mxu0
        %v4555 = vadd.f32 %v4541, %v4554
        %v4556 = vpop.f32.mrf.mxu0
        %v4557 = vadd.f32 %v4543, %v4556
        %4558 = vdwg.mxu0
        %4559 = vmatpush.bf16.msra.mxu0 %v4506
        %4560 = vmatpush.bf16.msra.mxu0 %v4505
        %4561 = vmatpush.bf16.msra.mxu0 %v4504
        %4562 = vmatpush.bf16.msra.mxu0 %v4503
        %4563 = vmatpush.bf16.msra.mxu0 %v4502
        %4564 = vmatpush.bf16.msra.mxu0 %v4501
        %4565 = vmatpush.bf16.msra.mxu0 %v4500
        %4566 = vmatpush.bf16.msra.mxu0 %v4499
        %4567 = vmatmul.bf16.gmra.mxu0 %v4332
        %v4568 = vpop.f32.mrf.mxu0
        %v4569 = vadd.f32 %v4555, %v4568
        %v4570 = vpop.f32.mrf.mxu0
        %v4571 = vadd.f32 %v4557, %v4570
        %4572 = vdwg.mxu0
        %v4573 = vmax.f32 %v4569, 0.0
        %v4574 = vmax.f32 %v4571, 0.0
        %v4575 = vpack.c.bf16 %v4573, %v4573
        %v4576 = vpack.c.bf16 %v4574, %v4574
        %v4577 = vunpack.c.l.bf16 %v4575
        %v4578 = vunpack.c.l.bf16 %v4576
        %v4579 = vrot.slane %v4577, 7
        %v4580 = vrot.slane %v4578, 7
        %v4581 = vsel %vm550, %v4579, %v4580
        %v4582 = vsel %vm550, %v4580, %v4579
        %v4583 = vsel %vm4053, %v4582, 0.0
        %v4584 = vsel %vm4054, %v4581, 0.0
        %v4585 = vrot.slane %v4577, 1
        %v4586 = vrot.slane %v4578, 1
        %v4587 = vsel %vm599, %v4585, %v4586
        %v4588 = vsel %vm599, %v4586, %v4585
        %v4589 = vsel %vm4055, %v4587, 0.0
        %v4590 = vsel %vm4056, %v4588, 0.0
        %v4591 = vpack.c.bf16 %v4584, %v4583
        %v4592 = vpack.c.bf16 %v4578, %v4577
        %v4593 = vpack.c.bf16 %v4590, %v4589
        %s4594 = scalar_lea.vmem %s1, 1920
        %v4595 = vld [vmem:[%s4594] sm:$0xf]
        %v4596 = vld [vmem:[%s4594 + $0x4] sm:$0xf]
        %v4597 = vld [vmem:[%s4594 + $0x8] sm:$0xf]
        %v4598 = vld [vmem:[%s4594 + $0xc] sm:$0xf]
        %v4599 = vld [vmem:[%s4594 + $0x10] sm:$0xf]
        %v4600 = vld [vmem:[%s4594 + $0x14] sm:$0xf]
        %v4601 = vld [vmem:[%s4594 + $0x18] sm:$0xf]
        %v4602 = vld [vmem:[%s4594 + $0x1c] sm:$0xf]
        %v4603 = vld [vmem:[%s4594 + $0x20] sm:$0xf]
        %v4604 = vld [vmem:[%s4594 + $0x24] sm:$0xf]
        %v4605 = vld [vmem:[%s4594 + $0x28] sm:$0xf]
        %v4606 = vld [vmem:[%s4594 + $0x2c] sm:$0xf]
        %v4607 = vld [vmem:[%s4594 + $0x30] sm:$0xf]
        %v4608 = vld [vmem:[%s4594 + $0x34] sm:$0xf]
        %v4609 = vld [vmem:[%s4594 + $0x38] sm:$0xf]
        %v4610 = vld [vmem:[%s4594 + $0x3c] sm:$0xf]
        %v4611 = vld [vmem:[%s4594 + $0x40] sm:$0xf]
        %v4612 = vld [vmem:[%s4594 + $0x44] sm:$0xf]
        %v4613 = vld [vmem:[%s4594 + $0x48] sm:$0xf]
        %v4614 = vld [vmem:[%s4594 + $0x4c] sm:$0xf]
        %v4615 = vld [vmem:[%s4594 + $0x50] sm:$0xf]
        %v4616 = vld [vmem:[%s4594 + $0x54] sm:$0xf]
        %v4617 = vld [vmem:[%s4594 + $0x58] sm:$0xf]
        %v4618 = vld [vmem:[%s4594 + $0x5c] sm:$0xf]
        %v4619 = vld [vmem:[%s4594 + $0x60] sm:$0xf]
        %v4620 = vld [vmem:[%s4594 + $0x64] sm:$0xf]
        %v4621 = vld [vmem:[%s4594 + $0x68] sm:$0xf]
        %v4622 = vld [vmem:[%s4594 + $0x6c] sm:$0xf]
        %v4623 = vld [vmem:[%s4594 + $0x70] sm:$0xf]
        %v4624 = vld [vmem:[%s4594 + $0x74] sm:$0xf]
        %v4625 = vld [vmem:[%s4594 + $0x78] sm:$0xf]
        %v4626 = vld [vmem:[%s4594 + $0x7c] sm:$0xf]
        %v4627 = vld [vmem:[%s4594 + $0x80] sm:$0xf]
        %v4628 = vld [vmem:[%s4594 + $0x84] sm:$0xf]
        %v4629 = vld [vmem:[%s4594 + $0x88] sm:$0xf]
        %v4630 = vld [vmem:[%s4594 + $0x8c] sm:$0xf]
        %v4631 = vld [vmem:[%s4594 + $0x90] sm:$0xf]
        %v4632 = vld [vmem:[%s4594 + $0x94] sm:$0xf]
        %v4633 = vld [vmem:[%s4594 + $0x98] sm:$0xf]
        %v4634 = vld [vmem:[%s4594 + $0x9c] sm:$0xf]
        %v4635 = vld [vmem:[%s4594 + $0xa0] sm:$0xf]
        %v4636 = vld [vmem:[%s4594 + $0xa4] sm:$0xf]
        %v4637 = vld [vmem:[%s4594 + $0xa8] sm:$0xf]
        %v4638 = vld [vmem:[%s4594 + $0xac] sm:$0xf]
        %v4639 = vld [vmem:[%s4594 + $0xb0] sm:$0xf]
        %v4640 = vld [vmem:[%s4594 + $0xb4] sm:$0xf]
        %v4641 = vld [vmem:[%s4594 + $0xb8] sm:$0xf]
        %v4642 = vld [vmem:[%s4594 + $0xbc] sm:$0xf]
        %s4643 = scalar_lea.vmem %s2, 10
        %v4644 = vld [vmem:[%s4643] sm:$0x1]
        %v4646 = vperm.slane %v4644, 0
        %v4696 = vunpack.c.l.b16 %v4595
        %v4697 = vunpack.c.l.b16 %v4596
        %v4698 = vunpack.c.l.b16 %v4597
        %v4699 = vunpack.c.l.b16 %v4598
        %v4700 = vunpack.c.l.b16 %v4599
        %v4701 = vunpack.c.l.b16 %v4600
        %v4702 = vunpack.c.l.b16 %v4601
        %v4703 = vunpack.c.l.b16 %v4602
        %v4704 = vunpack.c.l.b16 %v4603
        %v4705 = vunpack.c.l.b16 %v4604
        %v4706 = vunpack.c.l.b16 %v4605
        %v4707 = vunpack.c.l.b16 %v4606
        %v4708 = vunpack.c.l.b16 %v4607
        %v4709 = vunpack.c.l.b16 %v4608
        %v4710 = vunpack.c.l.b16 %v4609
        %v4711 = vunpack.c.l.b16 %v4610
        %v4712 = vunpack.c.l.b16 %v4611
        %v4713 = vunpack.c.l.b16 %v4612
        %v4714 = vunpack.c.l.b16 %v4613
        %v4715 = vunpack.c.l.b16 %v4614
        %v4716 = vunpack.c.l.b16 %v4615
        %v4717 = vunpack.c.l.b16 %v4616
        %v4718 = vunpack.c.l.b16 %v4617
        %v4719 = vunpack.c.l.b16 %v4618
        %v4720 = vunpack.c.l.b16 %v4619
        %v4721 = vunpack.c.l.b16 %v4620
        %v4722 = vunpack.c.l.b16 %v4621
        %v4723 = vunpack.c.l.b16 %v4622
        %v4724 = vunpack.c.l.b16 %v4623
        %v4725 = vunpack.c.l.b16 %v4624
        %v4726 = vunpack.c.l.b16 %v4625
        %v4727 = vunpack.c.l.b16 %v4626
        %v4728 = vunpack.c.l.b16 %v4627
        %v4729 = vunpack.c.l.b16 %v4628
        %v4730 = vunpack.c.l.b16 %v4629
        %v4731 = vunpack.c.l.b16 %v4630
        %v4732 = vunpack.c.l.b16 %v4631
        %v4733 = vunpack.c.l.b16 %v4632
        %v4734 = vunpack.c.l.b16 %v4633
        %v4735 = vunpack.c.l.b16 %v4634
        %v4736 = vunpack.c.l.b16 %v4635
        %v4737 = vunpack.c.l.b16 %v4636
        %v4738 = vunpack.c.l.b16 %v4637
        %v4739 = vunpack.c.l.b16 %v4638
        %v4740 = vunpack.c.l.b16 %v4639
        %v4741 = vunpack.c.l.b16 %v4640
        %v4742 = vunpack.c.l.b16 %v4641
        %v4743 = vunpack.c.l.b16 %v4642
        %v4744 = vpack.c.b16 %v4697, %v4696
        %v4745 = vpack.c.b16 %v4699, %v4698
        %v4746 = vpack.c.b16 %v4701, %v4700
        %v4747 = vpack.c.b16 %v4703, %v4702
        %v4748 = vpack.c.b16 %v4705, %v4704
        %v4749 = vpack.c.b16 %v4707, %v4706
        %v4750 = vpack.c.b16 %v4709, %v4708
        %v4751 = vpack.c.b16 %v4711, %v4710
        %v4752 = vpack.c.b16 %v4713, %v4712
        %v4753 = vpack.c.b16 %v4715, %v4714
        %v4754 = vpack.c.b16 %v4717, %v4716
        %v4755 = vpack.c.b16 %v4719, %v4718
        %v4756 = vpack.c.b16 %v4721, %v4720
        %v4757 = vpack.c.b16 %v4723, %v4722
        %v4758 = vpack.c.b16 %v4725, %v4724
        %v4759 = vpack.c.b16 %v4727, %v4726
        %v4760 = vpack.c.b16 %v4729, %v4728
        %v4761 = vpack.c.b16 %v4731, %v4730
        %v4762 = vpack.c.b16 %v4733, %v4732
        %v4763 = vpack.c.b16 %v4735, %v4734
        %v4764 = vpack.c.b16 %v4737, %v4736
        %v4765 = vpack.c.b16 %v4739, %v4738
        %v4766 = vpack.c.b16 %v4741, %v4740
        %v4767 = vpack.c.b16 %v4743, %v4742
        %4792 = vmatpush.bf16.msra.mxu0 %v4751
        %4793 = vmatpush.bf16.msra.mxu0 %v4750
        %4794 = vmatpush.bf16.msra.mxu0 %v4749
        %4795 = vmatpush.bf16.msra.mxu0 %v4748
        %4796 = vmatpush.bf16.msra.mxu0 %v4747
        %4797 = vmatpush.bf16.msra.mxu0 %v4746
        %4798 = vmatpush.bf16.msra.mxu0 %v4745
        %4799 = vmatpush.bf16.msra.mxu0 %v4744
        %4800 = vmatmul.bf16.gmra.mxu0 %v4591
        %v4801 = vpop.f32.mrf.mxu0
        %v4802 = vadd.f32 %v4646, %v4801
        %v4803 = vpop.f32.mrf.mxu0
        %v4804 = vadd.f32 %v4646, %v4803
        %4805 = vdwg.mxu0
        %4806 = vmatpush.bf16.msra.mxu0 %v4759
        %4807 = vmatpush.bf16.msra.mxu0 %v4758
        %4808 = vmatpush.bf16.msra.mxu0 %v4757
        %4809 = vmatpush.bf16.msra.mxu0 %v4756
        %4810 = vmatpush.bf16.msra.mxu0 %v4755
        %4811 = vmatpush.bf16.msra.mxu0 %v4754
        %4812 = vmatpush.bf16.msra.mxu0 %v4753
        %4813 = vmatpush.bf16.msra.mxu0 %v4752
        %4814 = vmatmul.bf16.gmra.mxu0 %v4592
        %v4815 = vpop.f32.mrf.mxu0
        %v4816 = vadd.f32 %v4802, %v4815
        %v4817 = vpop.f32.mrf.mxu0
        %v4818 = vadd.f32 %v4804, %v4817
        %4819 = vdwg.mxu0
        %4820 = vmatpush.bf16.msra.mxu0 %v4767
        %4821 = vmatpush.bf16.msra.mxu0 %v4766
        %4822 = vmatpush.bf16.msra.mxu0 %v4765
        %4823 = vmatpush.bf16.msra.mxu0 %v4764
        %4824 = vmatpush.bf16.msra.mxu0 %v4763
        %4825 = vmatpush.bf16.msra.mxu0 %v4762
        %4826 = vmatpush.bf16.msra.mxu0 %v4761
        %4827 = vmatpush.bf16.msra.mxu0 %v4760
        %4828 = vmatmul.bf16.gmra.mxu0 %v4593
        %v4829 = vpop.f32.mrf.mxu0
        %v4830 = vadd.f32 %v4816, %v4829
        %v4831 = vpop.f32.mrf.mxu0
        %v4832 = vadd.f32 %v4818, %v4831
        %4833 = vdwg.mxu0
        %v4834 = vmax.f32 %v4830, 0.0
        %v4835 = vmax.f32 %v4832, 0.0
        %v4836 = vpack.c.bf16 %v4834, %v4834
        %v4837 = vpack.c.bf16 %v4835, %v4835
        %v4838 = vunpack.c.l.bf16 %v4836
        %v4839 = vunpack.c.l.bf16 %v4837
        %v4840 = vrot.slane %v4838, 7
        %v4841 = vrot.slane %v4839, 7
        %v4842 = vsel %vm550, %v4840, %v4841
        %v4843 = vsel %vm550, %v4841, %v4840
        %v4844 = vsel %vm4053, %v4843, 0.0
        %v4845 = vsel %vm4054, %v4842, 0.0
        %v4846 = vrot.slane %v4838, 1
        %v4847 = vrot.slane %v4839, 1
        %v4848 = vsel %vm599, %v4846, %v4847
        %v4849 = vsel %vm599, %v4847, %v4846
        %v4850 = vsel %vm4055, %v4848, 0.0
        %v4851 = vsel %vm4056, %v4849, 0.0
        %v4852 = vpack.c.bf16 %v4845, %v4844
        %v4853 = vpack.c.bf16 %v4839, %v4838
        %v4854 = vpack.c.bf16 %v4851, %v4850
        %s4855 = scalar_lea.vmem %s1, 2112
        %v4856 = vld [vmem:[%s4855] sm:$0xf]
        %v4857 = vld [vmem:[%s4855 + $0x4] sm:$0xf]
        %v4858 = vld [vmem:[%s4855 + $0x8] sm:$0xf]
        %v4859 = vld [vmem:[%s4855 + $0xc] sm:$0xf]
        %v4860 = vld [vmem:[%s4855 + $0x10] sm:$0xf]
        %v4861 = vld [vmem:[%s4855 + $0x14] sm:$0xf]
        %v4862 = vld [vmem:[%s4855 + $0x18] sm:$0xf]
        %v4863 = vld [vmem:[%s4855 + $0x1c] sm:$0xf]
        %v4864 = vld [vmem:[%s4855 + $0x20] sm:$0xf]
        %v4865 = vld [vmem:[%s4855 + $0x24] sm:$0xf]
        %v4866 = vld [vmem:[%s4855 + $0x28] sm:$0xf]
        %v4867 = vld [vmem:[%s4855 + $0x2c] sm:$0xf]
        %v4868 = vld [vmem:[%s4855 + $0x30] sm:$0xf]
        %v4869 = vld [vmem:[%s4855 + $0x34] sm:$0xf]
        %v4870 = vld [vmem:[%s4855 + $0x38] sm:$0xf]
        %v4871 = vld [vmem:[%s4855 + $0x3c] sm:$0xf]
        %v4872 = vld [vmem:[%s4855 + $0x40] sm:$0xf]
        %v4873 = vld [vmem:[%s4855 + $0x44] sm:$0xf]
        %v4874 = vld [vmem:[%s4855 + $0x48] sm:$0xf]
        %v4875 = vld [vmem:[%s4855 + $0x4c] sm:$0xf]
        %v4876 = vld [vmem:[%s4855 + $0x50] sm:$0xf]
        %v4877 = vld [vmem:[%s4855 + $0x54] sm:$0xf]
        %v4878 = vld [vmem:[%s4855 + $0x58] sm:$0xf]
        %v4879 = vld [vmem:[%s4855 + $0x5c] sm:$0xf]
        %v4880 = vld [vmem:[%s4855 + $0x60] sm:$0xf]
        %v4881 = vld [vmem:[%s4855 + $0x64] sm:$0xf]
        %v4882 = vld [vmem:[%s4855 + $0x68] sm:$0xf]
        %v4883 = vld [vmem:[%s4855 + $0x6c] sm:$0xf]
        %v4884 = vld [vmem:[%s4855 + $0x70] sm:$0xf]
        %v4885 = vld [vmem:[%s4855 + $0x74] sm:$0xf]
        %v4886 = vld [vmem:[%s4855 + $0x78] sm:$0xf]
        %v4887 = vld [vmem:[%s4855 + $0x7c] sm:$0xf]
        %v4888 = vld [vmem:[%s4855 + $0x80] sm:$0xf]
        %v4889 = vld [vmem:[%s4855 + $0x84] sm:$0xf]
        %v4890 = vld [vmem:[%s4855 + $0x88] sm:$0xf]
        %v4891 = vld [vmem:[%s4855 + $0x8c] sm:$0xf]
        %v4892 = vld [vmem:[%s4855 + $0x90] sm:$0xf]
        %v4893 = vld [vmem:[%s4855 + $0x94] sm:$0xf]
        %v4894 = vld [vmem:[%s4855 + $0x98] sm:$0xf]
        %v4895 = vld [vmem:[%s4855 + $0x9c] sm:$0xf]
        %v4896 = vld [vmem:[%s4855 + $0xa0] sm:$0xf]
        %v4897 = vld [vmem:[%s4855 + $0xa4] sm:$0xf]
        %v4898 = vld [vmem:[%s4855 + $0xa8] sm:$0xf]
        %v4899 = vld [vmem:[%s4855 + $0xac] sm:$0xf]
        %v4900 = vld [vmem:[%s4855 + $0xb0] sm:$0xf]
        %v4901 = vld [vmem:[%s4855 + $0xb4] sm:$0xf]
        %v4902 = vld [vmem:[%s4855 + $0xb8] sm:$0xf]
        %v4903 = vld [vmem:[%s4855 + $0xbc] sm:$0xf]
        %s4904 = scalar_lea.vmem %s2, 11
        %v4905 = vld [vmem:[%s4904] sm:$0x1]
        %v4907 = vperm.slane %v4905, 0
        %v4957 = vunpack.c.l.b16 %v4856
        %v4958 = vunpack.c.l.b16 %v4857
        %v4959 = vunpack.c.l.b16 %v4858
        %v4960 = vunpack.c.l.b16 %v4859
        %v4961 = vunpack.c.l.b16 %v4860
        %v4962 = vunpack.c.l.b16 %v4861
        %v4963 = vunpack.c.l.b16 %v4862
        %v4964 = vunpack.c.l.b16 %v4863
        %v4965 = vunpack.c.l.b16 %v4864
        %v4966 = vunpack.c.l.b16 %v4865
        %v4967 = vunpack.c.l.b16 %v4866
        %v4968 = vunpack.c.l.b16 %v4867
        %v4969 = vunpack.c.l.b16 %v4868
        %v4970 = vunpack.c.l.b16 %v4869
        %v4971 = vunpack.c.l.b16 %v4870
        %v4972 = vunpack.c.l.b16 %v4871
        %v4973 = vunpack.c.l.b16 %v4872
        %v4974 = vunpack.c.l.b16 %v4873
        %v4975 = vunpack.c.l.b16 %v4874
        %v4976 = vunpack.c.l.b16 %v4875
        %v4977 = vunpack.c.l.b16 %v4876
        %v4978 = vunpack.c.l.b16 %v4877
        %v4979 = vunpack.c.l.b16 %v4878
        %v4980 = vunpack.c.l.b16 %v4879
        %v4981 = vunpack.c.l.b16 %v4880
        %v4982 = vunpack.c.l.b16 %v4881
        %v4983 = vunpack.c.l.b16 %v4882
        %v4984 = vunpack.c.l.b16 %v4883
        %v4985 = vunpack.c.l.b16 %v4884
        %v4986 = vunpack.c.l.b16 %v4885
        %v4987 = vunpack.c.l.b16 %v4886
        %v4988 = vunpack.c.l.b16 %v4887
        %v4989 = vunpack.c.l.b16 %v4888
        %v4990 = vunpack.c.l.b16 %v4889
        %v4991 = vunpack.c.l.b16 %v4890
        %v4992 = vunpack.c.l.b16 %v4891
        %v4993 = vunpack.c.l.b16 %v4892
        %v4994 = vunpack.c.l.b16 %v4893
        %v4995 = vunpack.c.l.b16 %v4894
        %v4996 = vunpack.c.l.b16 %v4895
        %v4997 = vunpack.c.l.b16 %v4896
        %v4998 = vunpack.c.l.b16 %v4897
        %v4999 = vunpack.c.l.b16 %v4898
        %v5000 = vunpack.c.l.b16 %v4899
        %v5001 = vunpack.c.l.b16 %v4900
        %v5002 = vunpack.c.l.b16 %v4901
        %v5003 = vunpack.c.l.b16 %v4902
        %v5004 = vunpack.c.l.b16 %v4903
        %v5005 = vpack.c.b16 %v4958, %v4957
        %v5006 = vpack.c.b16 %v4960, %v4959
        %v5007 = vpack.c.b16 %v4962, %v4961
        %v5008 = vpack.c.b16 %v4964, %v4963
        %v5009 = vpack.c.b16 %v4966, %v4965
        %v5010 = vpack.c.b16 %v4968, %v4967
        %v5011 = vpack.c.b16 %v4970, %v4969
        %v5012 = vpack.c.b16 %v4972, %v4971
        %v5013 = vpack.c.b16 %v4974, %v4973
        %v5014 = vpack.c.b16 %v4976, %v4975
        %v5015 = vpack.c.b16 %v4978, %v4977
        %v5016 = vpack.c.b16 %v4980, %v4979
        %v5017 = vpack.c.b16 %v4982, %v4981
        %v5018 = vpack.c.b16 %v4984, %v4983
        %v5019 = vpack.c.b16 %v4986, %v4985
        %v5020 = vpack.c.b16 %v4988, %v4987
        %v5021 = vpack.c.b16 %v4990, %v4989
        %v5022 = vpack.c.b16 %v4992, %v4991
        %v5023 = vpack.c.b16 %v4994, %v4993
        %v5024 = vpack.c.b16 %v4996, %v4995
        %v5025 = vpack.c.b16 %v4998, %v4997
        %v5026 = vpack.c.b16 %v5000, %v4999
        %v5027 = vpack.c.b16 %v5002, %v5001
        %v5028 = vpack.c.b16 %v5004, %v5003
        %5053 = vmatpush.bf16.msra.mxu0 %v5012
        %5054 = vmatpush.bf16.msra.mxu0 %v5011
        %5055 = vmatpush.bf16.msra.mxu0 %v5010
        %5056 = vmatpush.bf16.msra.mxu0 %v5009
        %5057 = vmatpush.bf16.msra.mxu0 %v5008
        %5058 = vmatpush.bf16.msra.mxu0 %v5007
        %5059 = vmatpush.bf16.msra.mxu0 %v5006
        %5060 = vmatpush.bf16.msra.mxu0 %v5005
        %5061 = vmatmul.bf16.gmra.mxu0 %v4852
        %v5062 = vpop.f32.mrf.mxu0
        %v5063 = vadd.f32 %v4907, %v5062
        %v5064 = vpop.f32.mrf.mxu0
        %v5065 = vadd.f32 %v4907, %v5064
        %5066 = vdwg.mxu0
        %5067 = vmatpush.bf16.msra.mxu0 %v5020
        %5068 = vmatpush.bf16.msra.mxu0 %v5019
        %5069 = vmatpush.bf16.msra.mxu0 %v5018
        %5070 = vmatpush.bf16.msra.mxu0 %v5017
        %5071 = vmatpush.bf16.msra.mxu0 %v5016
        %5072 = vmatpush.bf16.msra.mxu0 %v5015
        %5073 = vmatpush.bf16.msra.mxu0 %v5014
        %5074 = vmatpush.bf16.msra.mxu0 %v5013
        %5075 = vmatmul.bf16.gmra.mxu0 %v4853
        %v5076 = vpop.f32.mrf.mxu0
        %v5077 = vadd.f32 %v5063, %v5076
        %v5078 = vpop.f32.mrf.mxu0
        %v5079 = vadd.f32 %v5065, %v5078
        %5080 = vdwg.mxu0
        %5081 = vmatpush.bf16.msra.mxu0 %v5028
        %5082 = vmatpush.bf16.msra.mxu0 %v5027
        %5083 = vmatpush.bf16.msra.mxu0 %v5026
        %5084 = vmatpush.bf16.msra.mxu0 %v5025
        %5085 = vmatpush.bf16.msra.mxu0 %v5024
        %5086 = vmatpush.bf16.msra.mxu0 %v5023
        %5087 = vmatpush.bf16.msra.mxu0 %v5022
        %5088 = vmatpush.bf16.msra.mxu0 %v5021
        %5089 = vmatmul.bf16.gmra.mxu0 %v4854
        %v5090 = vpop.f32.mrf.mxu0
        %v5091 = vadd.f32 %v5077, %v5090
        %v5092 = vpop.f32.mrf.mxu0
        %v5093 = vadd.f32 %v5079, %v5092
        %5094 = vdwg.mxu0
        %v5095 = vmax.f32 %v5091, 0.0
        %v5096 = vmax.f32 %v5093, 0.0
        %v5097 = vpack.c.bf16 %v5096, %v5095
        %v5098 = vld [vmem:[%s7] sm:$0xf]
        %v5099 = vld [vmem:[%s7 + $0x4] sm:$0xf]
        %v5100 = vld [vmem:[%s7 + $0x8] sm:$0xf]
        %v5101 = vld [vmem:[%s7 + $0xc] sm:$0xf]
        %v5102 = vld [vmem:[%s7 + $0x10] sm:$0xf]
        %v5103 = vld [vmem:[%s7 + $0x14] sm:$0xf]
        %v5104 = vld [vmem:[%s7 + $0x18] sm:$0xf]
        %v5105 = vld [vmem:[%s7 + $0x1c] sm:$0xf]
        %v5114 = vunpack.c.l.b16 %v5098
        %v5115 = vunpack.c.l.b16 %v5099
        %v5116 = vunpack.c.l.b16 %v5100
        %v5117 = vunpack.c.l.b16 %v5101
        %v5118 = vunpack.c.l.b16 %v5102
        %v5119 = vunpack.c.l.b16 %v5103
        %v5120 = vunpack.c.l.b16 %v5104
        %v5121 = vunpack.c.l.b16 %v5105
        %v5122 = vpack.c.b16 %v5115, %v5114
        %v5123 = vpack.c.b16 %v5117, %v5116
        %v5124 = vpack.c.b16 %v5119, %v5118
        %v5125 = vpack.c.b16 %v5121, %v5120
        %v5146 = vunpack.c.l.b16 %v1528
        %v5147 = vunpack.c.l.b16 %v1529
        %v5148 = vunpack.c.l.b16 %v1530
        %v5149 = vunpack.c.l.b16 %v1531
        %v5150 = vunpack.c.l.b16 %v1532
        %v5151 = vunpack.c.l.b16 %v1533
        %v5152 = vunpack.c.l.b16 %v1534
        %v5153 = vunpack.c.l.b16 %v1535
        %v5154 = vunpack.c.l.b16 %v1536
        %v5155 = vunpack.c.l.b16 %v1537
        %v5156 = vunpack.c.l.b16 %v1538
        %v5157 = vunpack.c.l.b16 %v1539
        %v5158 = vunpack.c.l.b16 %v1540
        %v5159 = vunpack.c.l.b16 %v1541
        %v5160 = vunpack.c.l.b16 %v1542
        %v5161 = vunpack.c.l.b16 %v1543
        %v5162 = vpack.c.b16 %v5147, %v5146
        %v5163 = vpack.c.b16 %v5149, %v5148
        %v5164 = vpack.c.b16 %v5151, %v5150
        %v5165 = vpack.c.b16 %v5153, %v5152
        %v5166 = vpack.c.b16 %v5155, %v5154
        %v5167 = vpack.c.b16 %v5157, %v5156
        %v5168 = vpack.c.b16 %v5159, %v5158
        %v5169 = vpack.c.b16 %v5161, %v5160
        %5178 = vmatpush.bf16.msra.mxu0 %v5169
        %5179 = vmatpush.bf16.msra.mxu0 %v5168
        %5180 = vmatpush.bf16.msra.mxu0 %v5167
        %5181 = vmatpush.bf16.msra.mxu0 %v5166
        %5182 = vmatpush.bf16.msra.mxu0 %v5165
        %5183 = vmatpush.bf16.msra.mxu0 %v5164
        %5184 = vmatpush.bf16.msra.mxu0 %v5163
        %5185 = vmatpush.bf16.msra.mxu0 %v5162
        %5186 = vmatmul.bf16.gmra.mxu0 %v5122
        %v5187 = vpop.f32.mrf.mxu0
        %v5188 = vadd.f32 0.0, %v5187
        %v5189 = vpop.f32.mrf.mxu0
        %v5190 = vadd.f32 0.0, %v5189
        %5191 = vmatmul.bf16.gmra.mxu0 %v5123
        %v5192 = vpop.f32.mrf.mxu0
        %v5193 = vadd.f32 0.0, %v5192
        %v5194 = vpop.f32.mrf.mxu0
        %v5195 = vadd.f32 0.0, %v5194
        %5196 = vmatmul.bf16.gmra.mxu0 %v5124
        %v5197 = vpop.f32.mrf.mxu0
        %v5198 = vadd.f32 0.0, %v5197
        %v5199 = vpop.f32.mrf.mxu0
        %v5200 = vadd.f32 0.0, %v5199
        %5201 = vmatmul.bf16.gmra.mxu0 %v5125
        %v5202 = vpop.f32.mrf.mxu0
        %v5203 = vadd.f32 0.0, %v5202
        %v5204 = vpop.f32.mrf.mxu0
        %v5205 = vadd.f32 0.0, %v5204
        %5206 = vdwg.mxu0
        %v5207 = vld [vmem:[%s8] sm:$0xf]
        %v5208 = vld [vmem:[%s8 + $0x4] sm:$0xf]
        %v5209 = vld [vmem:[%s8 + $0x8] sm:$0xf]
        %v5210 = vld [vmem:[%s8 + $0xc] sm:$0xf]
        %v5211 = vld [vmem:[%s8 + $0x10] sm:$0xf]
        %v5212 = vld [vmem:[%s8 + $0x14] sm:$0xf]
        %v5213 = vld [vmem:[%s8 + $0x18] sm:$0xf]
        %v5214 = vld [vmem:[%s8 + $0x1c] sm:$0xf]
        %v5223 = vunpack.c.l.b16 %v5207
        %v5224 = vunpack.c.l.b16 %v5208
        %v5225 = vunpack.c.l.b16 %v5209
        %v5226 = vunpack.c.l.b16 %v5210
        %v5227 = vunpack.c.l.b16 %v5211
        %v5228 = vunpack.c.l.b16 %v5212
        %v5229 = vunpack.c.l.b16 %v5213
        %v5230 = vunpack.c.l.b16 %v5214
        %v5231 = vpack.c.b16 %v5224, %v5223
        %v5232 = vpack.c.b16 %v5226, %v5225
        %v5233 = vpack.c.b16 %v5228, %v5227
        %v5234 = vpack.c.b16 %v5230, %v5229
        %v5243 = vunpack.c.l.b16 %v2544
        %v5244 = vunpack.c.l.b16 %v2545
        %v5245 = vunpack.c.l.b16 %v2546
        %v5246 = vunpack.c.l.b16 %v2547
        %v5247 = vunpack.c.l.b16 %v2548
        %v5248 = vunpack.c.l.b16 %v2549
        %v5249 = vunpack.c.l.b16 %v2550
        %v5250 = vunpack.c.l.b16 %v2551
        %v5251 = vpack.c.b16 %v5244, %v5243
        %v5252 = vpack.c.b16 %v5246, %v5245
        %v5253 = vpack.c.b16 %v5248, %v5247
        %v5254 = vpack.c.b16 %v5250, %v5249
        %v5260 = vsel %vm2602, %v5231, 0
        %v5263 = vsel %vm2602, %v5232, 0
        %v5266 = vsel %vm2602, %v5233, 0
        %v5269 = vsel %vm2602, %v5234, 0
        %5271 = vmatpush.bf16.msra.mxu0 0
        %5272 = vmatpush.bf16.msra.mxu0 0
        %5273 = vmatpush.bf16.msra.mxu0 0
        %5274 = vmatpush.bf16.msra.mxu0 0
        %5275 = vmatpush.bf16.msra.mxu0 %v5254
        %5276 = vmatpush.bf16.msra.mxu0 %v5253
        %5277 = vmatpush.bf16.msra.mxu0 %v5252
        %5278 = vmatpush.bf16.msra.mxu0 %v5251
        %5279 = vmatmul.bf16.gmra.mxu0 %v5260
        %v5280 = vpop.f32.mrf.mxu0
        %v5281 = vadd.f32 0.0, %v5280
        %v5282 = vpop.f32.mrf.mxu0
        %v5283 = vadd.f32 0.0, %v5282
        %5284 = vmatmul.bf16.gmra.mxu0 %v5263
        %v5285 = vpop.f32.mrf.mxu0
        %v5286 = vadd.f32 0.0, %v5285
        %v5287 = vpop.f32.mrf.mxu0
        %v5288 = vadd.f32 0.0, %v5287
        %5289 = vmatmul.bf16.gmra.mxu0 %v5266
        %v5290 = vpop.f32.mrf.mxu0
        %v5291 = vadd.f32 0.0, %v5290
        %v5292 = vpop.f32.mrf.mxu0
        %v5293 = vadd.f32 0.0, %v5292
        %5294 = vmatmul.bf16.gmra.mxu0 %v5269
        %v5295 = vpop.f32.mrf.mxu0
        %v5296 = vadd.f32 0.0, %v5295
        %v5297 = vpop.f32.mrf.mxu0
        %v5298 = vadd.f32 0.0, %v5297
        %5299 = vdwg.mxu0
        %v5300 = vld [vmem:[%s9] sm:$0xf]
        %v5301 = vld [vmem:[%s9 + $0x4] sm:$0xf]
        %v5302 = vld [vmem:[%s9 + $0x8] sm:$0xf]
        %v5303 = vld [vmem:[%s9 + $0xc] sm:$0xf]
        %v5304 = vld [vmem:[%s9 + $0x10] sm:$0xf]
        %v5305 = vld [vmem:[%s9 + $0x14] sm:$0xf]
        %v5306 = vld [vmem:[%s9 + $0x18] sm:$0xf]
        %v5307 = vld [vmem:[%s9 + $0x1c] sm:$0xf]
        %v5316 = vunpack.c.l.b16 %v5300
        %v5317 = vunpack.c.l.b16 %v5301
        %v5318 = vunpack.c.l.b16 %v5302
        %v5319 = vunpack.c.l.b16 %v5303
        %v5320 = vunpack.c.l.b16 %v5304
        %v5321 = vunpack.c.l.b16 %v5305
        %v5322 = vunpack.c.l.b16 %v5306
        %v5323 = vunpack.c.l.b16 %v5307
        %v5324 = vpack.c.b16 %v5317, %v5316
        %v5325 = vpack.c.b16 %v5319, %v5318
        %v5326 = vpack.c.b16 %v5321, %v5320
        %v5327 = vpack.c.b16 %v5323, %v5322
        %v5332 = vunpack.c.l.b16 %v3918
        %v5333 = vunpack.c.l.b16 %v3919
        %v5334 = vunpack.c.l.b16 %v3920
        %v5335 = vunpack.c.l.b16 %v3921
        %v5336 = vpack.c.b16 %v5333, %v5332
        %v5337 = vpack.c.b16 %v5335, %v5334
        %v5341 = vsel %vm3947, %v5324, 0
        %v5344 = vsel %vm3947, %v5325, 0
        %v5347 = vsel %vm3947, %v5326, 0
        %v5350 = vsel %vm3947, %v5327, 0
        %5352 = vmatpush.bf16.msra.mxu0 0
        %5353 = vmatpush.bf16.msra.mxu0 0
        %5354 = vmatpush.bf16.msra.mxu0 0
        %5355 = vmatpush.bf16.msra.mxu0 0
        %5356 = vmatpush.bf16.msra.mxu0 0
        %5357 = vmatpush.bf16.msra.mxu0 0
        %5358 = vmatpush.bf16.msra.mxu0 %v5337
        %5359 = vmatpush.bf16.msra.mxu0 %v5336
        %5360 = vmatmul.bf16.gmra.mxu0 %v5341
        %v5361 = vpop.f32.mrf.mxu0
        %v5362 = vadd.f32 0.0, %v5361
        %v5363 = vpop.f32.mrf.mxu0
        %v5364 = vadd.f32 0.0, %v5363
        %5365 = vmatmul.bf16.gmra.mxu0 %v5344
        %v5366 = vpop.f32.mrf.mxu0
        %v5367 = vadd.f32 0.0, %v5366
        %v5368 = vpop.f32.mrf.mxu0
        %v5369 = vadd.f32 0.0, %v5368
        %5370 = vmatmul.bf16.gmra.mxu0 %v5347
        %v5371 = vpop.f32.mrf.mxu0
        %v5372 = vadd.f32 0.0, %v5371
        %v5373 = vpop.f32.mrf.mxu0
        %v5374 = vadd.f32 0.0, %v5373
        %5375 = vmatmul.bf16.gmra.mxu0 %v5350
        %v5376 = vpop.f32.mrf.mxu0
        %v5377 = vadd.f32 0.0, %v5376
        %v5378 = vpop.f32.mrf.mxu0
        %v5379 = vadd.f32 0.0, %v5378
        %5380 = vdwg.mxu0
        %v5381 = vld [vmem:[%s10] sm:$0xf]
        %v5382 = vld [vmem:[%s10 + $0x4] sm:$0xf]
        %v5383 = vld [vmem:[%s10 + $0x8] sm:$0xf]
        %v5384 = vld [vmem:[%s10 + $0xc] sm:$0xf]
        %v5385 = vld [vmem:[%s10 + $0x10] sm:$0xf]
        %v5386 = vld [vmem:[%s10 + $0x14] sm:$0xf]
        %v5387 = vld [vmem:[%s10 + $0x18] sm:$0xf]
        %v5388 = vld [vmem:[%s10 + $0x1c] sm:$0xf]
        %v5397 = vunpack.c.l.b16 %v5381
        %v5398 = vunpack.c.l.b16 %v5382
        %v5399 = vunpack.c.l.b16 %v5383
        %v5400 = vunpack.c.l.b16 %v5384
        %v5401 = vunpack.c.l.b16 %v5385
        %v5402 = vunpack.c.l.b16 %v5386
        %v5403 = vunpack.c.l.b16 %v5387
        %v5404 = vunpack.c.l.b16 %v5388
        %v5405 = vpack.c.b16 %v5398, %v5397
        %v5406 = vpack.c.b16 %v5400, %v5399
        %v5407 = vpack.c.b16 %v5402, %v5401
        %v5408 = vpack.c.b16 %v5404, %v5403
        %vm5409 = vcmask 130048
        %v5411 = vsel %vm5409, %v5405, 0
        %v5414 = vsel %vm5409, %v5406, 0
        %v5417 = vsel %vm5409, %v5407, 0
        %v5420 = vsel %vm5409, %v5408, 0
        %5422 = vmatpush.bf16.msra.mxu0 0
        %5423 = vmatpush.bf16.msra.mxu0 0
        %5424 = vmatpush.bf16.msra.mxu0 0
        %5425 = vmatpush.bf16.msra.mxu0 0
        %5426 = vmatpush.bf16.msra.mxu0 0
        %5427 = vmatpush.bf16.msra.mxu0 0
        %5428 = vmatpush.bf16.msra.mxu0 0
        %5429 = vmatpush.bf16.msra.mxu0 %v5097
        %5430 = vmatmul.bf16.gmra.mxu0 %v5411
        %v5431 = vpop.f32.mrf.mxu0
        %v5432 = vadd.f32 0.0, %v5431
        %v5433 = vpop.f32.mrf.mxu0
        %v5434 = vadd.f32 0.0, %v5433
        %5435 = vmatmul.bf16.gmra.mxu0 %v5414
        %v5436 = vpop.f32.mrf.mxu0
        %v5437 = vadd.f32 0.0, %v5436
        %v5438 = vpop.f32.mrf.mxu0
        %v5439 = vadd.f32 0.0, %v5438
        %5440 = vmatmul.bf16.gmra.mxu0 %v5417
        %v5441 = vpop.f32.mrf.mxu0
        %v5442 = vadd.f32 0.0, %v5441
        %v5443 = vpop.f32.mrf.mxu0
        %v5444 = vadd.f32 0.0, %v5443
        %5445 = vmatmul.bf16.gmra.mxu0 %v5420
        %v5446 = vpop.f32.mrf.mxu0
        %v5447 = vadd.f32 0.0, %v5446
        %v5448 = vpop.f32.mrf.mxu0
        %v5449 = vadd.f32 0.0, %v5448
        %5450 = vdwg.mxu0
        %v5451 = vpack.c.bf16 %v5190, %v5188
        %v5452 = vpack.c.bf16 %v5283, %v5281
        %v5453 = vpack.c.bf16 %v5364, %v5362
        %v5454 = vpack.c.bf16 %v5434, %v5432
        %v5455 = vpack.c.bf16 %v5195, %v5193
        %v5456 = vpack.c.bf16 %v5288, %v5286
        %v5457 = vpack.c.bf16 %v5369, %v5367
        %v5458 = vpack.c.bf16 %v5439, %v5437
        %v5459 = vpack.c.bf16 %v5200, %v5198
        %v5460 = vpack.c.bf16 %v5293, %v5291
        %v5461 = vpack.c.bf16 %v5374, %v5372
        %v5462 = vpack.c.bf16 %v5444, %v5442
        %v5463 = vpack.c.bf16 %v5205, %v5203
        %v5464 = vpack.c.bf16 %v5298, %v5296
        %v5465 = vpack.c.bf16 %v5379, %v5377
        %v5466 = vpack.c.bf16 %v5449, %v5447
        %v5467 = vld [vmem:[#allocation2] sm:$0xff]
        %v5468 = vld [vmem:[#allocation2 + $0x8] sm:$0xff]
        %v5469 = vld [vmem:[#allocation2 + $0x10] sm:$0xff]
        %v5470 = vld [vmem:[#allocation2 + $0x18] sm:$0xff]
        %v5471 = vld [vmem:[#allocation2 + $0x20] sm:$0xff]
        %v5472 = vld [vmem:[#allocation2 + $0x28] sm:$0xff]
        %v5473 = vld [vmem:[#allocation2 + $0x30] sm:$0xff]
        %v5474 = vld [vmem:[#allocation2 + $0x38] sm:$0xff]
        %v5475 = vld [vmem:[#allocation2 + $0x40] sm:$0xff]
        %v5476 = vld [vmem:[#allocation2 + $0x48] sm:$0xff]
        %v5477 = vld [vmem:[#allocation2 + $0x50] sm:$0xff]
        %v5478 = vld [vmem:[#allocation2 + $0x58] sm:$0xff]
        %v5479 = vld [vmem:[#allocation2 + $0x60] sm:$0xff]
        %v5480 = vld [vmem:[#allocation2 + $0x68] sm:$0xff]
        %v5481 = vld [vmem:[#allocation2 + $0x70] sm:$0xff]
        %v5482 = vld [vmem:[#allocation2 + $0x78] sm:$0xff]
        %v5483 = vld [vmem:[#allocation2 + $0x80] sm:$0xff]
        %v5484 = vld [vmem:[#allocation2 + $0x88] sm:$0xff]
        %v5485 = vld [vmem:[#allocation2 + $0x90] sm:$0xff]
        %v5486 = vld [vmem:[#allocation2 + $0x98] sm:$0xff]
        %v5487 = vld [vmem:[#allocation2 + $0xa0] sm:$0xff]
        %v5488 = vld [vmem:[#allocation2 + $0xa8] sm:$0xff]
        %v5489 = vld [vmem:[#allocation2 + $0xb0] sm:$0xff]
        %v5490 = vld [vmem:[#allocation2 + $0xb8] sm:$0xff]
        %v5491 = vld [vmem:[#allocation2 + $0xc0] sm:$0xff]
        %v5492 = vld [vmem:[#allocation2 + $0xc8] sm:$0xff]
        %v5493 = vld [vmem:[#allocation2 + $0xd0] sm:$0xff]
        %v5494 = vld [vmem:[#allocation2 + $0xd8] sm:$0xff]
        %v5495 = vld [vmem:[#allocation2 + $0xe0] sm:$0xff]
        %v5496 = vld [vmem:[#allocation2 + $0xe8] sm:$0xff]
        %v5497 = vld [vmem:[#allocation2 + $0xf0] sm:$0xff]
        %v5498 = vld [vmem:[#allocation2 + $0xf8] sm:$0xff]
        %v5499 = vld [vmem:[#allocation2 + $0x100] sm:$0xff]
        %v5500 = vld [vmem:[#allocation2 + $0x108] sm:$0xff]
        %v5501 = vld [vmem:[#allocation2 + $0x110] sm:$0xff]
        %v5502 = vld [vmem:[#allocation2 + $0x118] sm:$0xff]
        %v5503 = vld [vmem:[#allocation2 + $0x120] sm:$0xff]
        %v5504 = vld [vmem:[#allocation2 + $0x128] sm:$0xff]
        %v5505 = vld [vmem:[#allocation2 + $0x130] sm:$0xff]
        %v5506 = vld [vmem:[#allocation2 + $0x138] sm:$0xff]
        %v5507 = vld [vmem:[#allocation2 + $0x140] sm:$0xff]
        %v5508 = vld [vmem:[#allocation2 + $0x148] sm:$0xff]
        %v5509 = vld [vmem:[#allocation2 + $0x150] sm:$0xff]
        %v5510 = vld [vmem:[#allocation2 + $0x158] sm:$0xff]
        %v5511 = vld [vmem:[#allocation2 + $0x160] sm:$0xff]
        %v5512 = vld [vmem:[#allocation2 + $0x168] sm:$0xff]
        %v5513 = vld [vmem:[#allocation2 + $0x170] sm:$0xff]
        %v5514 = vld [vmem:[#allocation2 + $0x178] sm:$0xff]
        %v5515 = vld [vmem:[#allocation2 + $0x180] sm:$0xff]
        %v5516 = vld [vmem:[#allocation2 + $0x188] sm:$0xff]
        %v5517 = vld [vmem:[#allocation2 + $0x190] sm:$0xff]
        %v5518 = vld [vmem:[#allocation2 + $0x198] sm:$0xff]
        %v5519 = vld [vmem:[#allocation2 + $0x1a0] sm:$0xff]
        %v5520 = vld [vmem:[#allocation2 + $0x1a8] sm:$0xff]
        %v5521 = vld [vmem:[#allocation2 + $0x1b0] sm:$0xff]
        %v5522 = vld [vmem:[#allocation2 + $0x1b8] sm:$0xff]
        %v5523 = vld [vmem:[#allocation2 + $0x1c0] sm:$0xff]
        %v5524 = vld [vmem:[#allocation2 + $0x1c8] sm:$0xff]
        %v5525 = vld [vmem:[#allocation2 + $0x1d0] sm:$0xff]
        %v5526 = vld [vmem:[#allocation2 + $0x1d8] sm:$0xff]
        %v5527 = vld [vmem:[#allocation2 + $0x1e0] sm:$0xff]
        %v5528 = vld [vmem:[#allocation2 + $0x1e8] sm:$0xff]
        %v5529 = vld [vmem:[#allocation2 + $0x1f0] sm:$0xff]
        %v5530 = vld [vmem:[#allocation2 + $0x1f8] sm:$0xff]
        %v5531 = vld [vmem:[#allocation2 + $0x200] sm:$0xff]
        %v5532 = vld [vmem:[#allocation2 + $0x208] sm:$0xff]
        %v5533 = vld [vmem:[#allocation2 + $0x210] sm:$0xff]
        %v5534 = vld [vmem:[#allocation2 + $0x218] sm:$0xff]
        %v5535 = vld [vmem:[#allocation2 + $0x220] sm:$0xff]
        %v5536 = vld [vmem:[#allocation2 + $0x228] sm:$0xff]
        %v5537 = vld [vmem:[#allocation2 + $0x230] sm:$0xff]
        %v5538 = vld [vmem:[#allocation2 + $0x238] sm:$0xff]
        %v5539 = vld [vmem:[#allocation2 + $0x240] sm:$0xff]
        %v5540 = vld [vmem:[#allocation2 + $0x248] sm:$0xff]
        %v5541 = vld [vmem:[#allocation2 + $0x250] sm:$0xff]
        %v5542 = vld [vmem:[#allocation2 + $0x258] sm:$0xff]
        %v5543 = vld [vmem:[#allocation2 + $0x260] sm:$0xff]
        %v5544 = vld [vmem:[#allocation2 + $0x268] sm:$0xff]
        %v5545 = vld [vmem:[#allocation2 + $0x270] sm:$0xff]
        %v5546 = vld [vmem:[#allocation2 + $0x278] sm:$0xff]
        %v5547 = vld [vmem:[#allocation2 + $0x280] sm:$0xff]
        %v5548 = vld [vmem:[#allocation2 + $0x288] sm:$0xff]
        %v5549 = vld [vmem:[#allocation2 + $0x290] sm:$0xff]
        %v5550 = vld [vmem:[#allocation2 + $0x298] sm:$0xff]
        %v5551 = vld [vmem:[#allocation2 + $0x2a0] sm:$0xff]
        %v5552 = vld [vmem:[#allocation2 + $0x2a8] sm:$0xff]
        %v5553 = vld [vmem:[#allocation2 + $0x2b0] sm:$0xff]
        %v5554 = vld [vmem:[#allocation2 + $0x2b8] sm:$0xff]
        %v5555 = vld [vmem:[#allocation2 + $0x2c0] sm:$0xff]
        %v5556 = vld [vmem:[#allocation2 + $0x2c8] sm:$0xff]
        %v5557 = vld [vmem:[#allocation2 + $0x2d0] sm:$0xff]
        %v5558 = vld [vmem:[#allocation2 + $0x2d8] sm:$0xff]
        %v5559 = vld [vmem:[#allocation2 + $0x2e0] sm:$0xff]
        %v5560 = vld [vmem:[#allocation2 + $0x2e8] sm:$0xff]
        %v5561 = vld [vmem:[#allocation2 + $0x2f0] sm:$0xff]
        %v5562 = vld [vmem:[#allocation2 + $0x2f8] sm:$0xff]
        %v5563 = vld [vmem:[#allocation2 + $0x300] sm:$0xff]
        %v5564 = vld [vmem:[#allocation2 + $0x308] sm:$0xff]
        %v5565 = vld [vmem:[#allocation2 + $0x310] sm:$0xff]
        %v5566 = vld [vmem:[#allocation2 + $0x318] sm:$0xff]
        %v5567 = vld [vmem:[#allocation2 + $0x320] sm:$0xff]
        %v5568 = vld [vmem:[#allocation2 + $0x328] sm:$0xff]
        %v5569 = vld [vmem:[#allocation2 + $0x330] sm:$0xff]
        %v5570 = vld [vmem:[#allocation2 + $0x338] sm:$0xff]
        %v5571 = vld [vmem:[#allocation2 + $0x340] sm:$0xff]
        %v5572 = vld [vmem:[#allocation2 + $0x348] sm:$0xff]
        %v5573 = vld [vmem:[#allocation2 + $0x350] sm:$0xff]
        %v5574 = vld [vmem:[#allocation2 + $0x358] sm:$0xff]
        %v5575 = vld [vmem:[#allocation2 + $0x360] sm:$0xff]
        %v5576 = vld [vmem:[#allocation2 + $0x368] sm:$0xff]
        %v5577 = vld [vmem:[#allocation2 + $0x370] sm:$0xff]
        %v5578 = vld [vmem:[#allocation2 + $0x378] sm:$0xff]
        %v5579 = vld [vmem:[#allocation2 + $0x380] sm:$0xff]
        %v5580 = vld [vmem:[#allocation2 + $0x388] sm:$0xff]
        %v5581 = vld [vmem:[#allocation2 + $0x390] sm:$0xff]
        %v5582 = vld [vmem:[#allocation2 + $0x398] sm:$0xff]
        %v5583 = vld [vmem:[#allocation2 + $0x3a0] sm:$0xff]
        %v5584 = vld [vmem:[#allocation2 + $0x3a8] sm:$0xff]
        %v5585 = vld [vmem:[#allocation2 + $0x3b0] sm:$0xff]
        %v5586 = vld [vmem:[#allocation2 + $0x3b8] sm:$0xff]
        %v5587 = vld [vmem:[#allocation2 + $0x3c0] sm:$0xff]
        %v5588 = vld [vmem:[#allocation2 + $0x3c8] sm:$0xff]
        %v5589 = vld [vmem:[#allocation2 + $0x3d0] sm:$0xff]
        %v5590 = vld [vmem:[#allocation2 + $0x3d8] sm:$0xff]
        %v5591 = vld [vmem:[#allocation2 + $0x3e0] sm:$0xff]
        %v5592 = vld [vmem:[#allocation2 + $0x3e8] sm:$0xff]
        %v5593 = vld [vmem:[#allocation2 + $0x3f0] sm:$0xff]
        %v5594 = vld [vmem:[#allocation2 + $0x3f8] sm:$0xff]
        %v5595 = vld [vmem:[#allocation2 + $0x400] sm:$0xff]
        %v5596 = vld [vmem:[#allocation2 + $0x408] sm:$0xff]
        %v5597 = vld [vmem:[#allocation2 + $0x410] sm:$0xff]
        %v5598 = vld [vmem:[#allocation2 + $0x418] sm:$0xff]
        %v5599 = vld [vmem:[#allocation2 + $0x420] sm:$0xff]
        %v5600 = vld [vmem:[#allocation2 + $0x428] sm:$0xff]
        %v5601 = vld [vmem:[#allocation2 + $0x430] sm:$0xff]
        %v5602 = vld [vmem:[#allocation2 + $0x438] sm:$0xff]
        %v5603 = vld [vmem:[#allocation2 + $0x440] sm:$0xff]
        %v5604 = vld [vmem:[#allocation2 + $0x448] sm:$0xff]
        %v5605 = vld [vmem:[#allocation2 + $0x450] sm:$0xff]
        %v5606 = vld [vmem:[#allocation2 + $0x458] sm:$0xff]
        %v5607 = vld [vmem:[#allocation2 + $0x460] sm:$0xff]
        %v5608 = vld [vmem:[#allocation2 + $0x468] sm:$0xff]
        %v5609 = vld [vmem:[#allocation2 + $0x470] sm:$0xff]
        %v5610 = vld [vmem:[#allocation2 + $0x478] sm:$0xff]
        %v5611 = vld [vmem:[#allocation2 + $0x480] sm:$0xff]
        %v5612 = vld [vmem:[#allocation2 + $0x488] sm:$0xff]
        %v5613 = vld [vmem:[#allocation2 + $0x490] sm:$0xff]
        %v5614 = vld [vmem:[#allocation2 + $0x498] sm:$0xff]
        %v5615 = vld [vmem:[#allocation2 + $0x4a0] sm:$0xff]
        %v5616 = vld [vmem:[#allocation2 + $0x4a8] sm:$0xff]
        %v5617 = vld [vmem:[#allocation2 + $0x4b0] sm:$0xff]
        %v5618 = vld [vmem:[#allocation2 + $0x4b8] sm:$0xff]
        %v5619 = vld [vmem:[#allocation2 + $0x4c0] sm:$0xff]
        %v5620 = vld [vmem:[#allocation2 + $0x4c8] sm:$0xff]
        %v5621 = vld [vmem:[#allocation2 + $0x4d0] sm:$0xff]
        %v5622 = vld [vmem:[#allocation2 + $0x4d8] sm:$0xff]
        %v5623 = vld [vmem:[#allocation2 + $0x4e0] sm:$0xff]
        %v5624 = vld [vmem:[#allocation2 + $0x4e8] sm:$0xff]
        %v5625 = vld [vmem:[#allocation2 + $0x4f0] sm:$0xff]
        %v5626 = vld [vmem:[#allocation2 + $0x4f8] sm:$0xff]
        %v5627 = vld [vmem:[#allocation2 + $0x500] sm:$0xff]
        %v5628 = vld [vmem:[#allocation2 + $0x508] sm:$0xff]
        %v5629 = vld [vmem:[#allocation2 + $0x510] sm:$0xff]
        %v5630 = vld [vmem:[#allocation2 + $0x518] sm:$0xff]
        %v5631 = vld [vmem:[#allocation2 + $0x520] sm:$0xff]
        %v5632 = vld [vmem:[#allocation2 + $0x528] sm:$0xff]
        %v5633 = vld [vmem:[#allocation2 + $0x530] sm:$0xff]
        %v5634 = vld [vmem:[#allocation2 + $0x538] sm:$0xff]
        %v5635 = vld [vmem:[#allocation2 + $0x540] sm:$0xff]
        %v5636 = vld [vmem:[#allocation2 + $0x548] sm:$0xff]
        %v5637 = vld [vmem:[#allocation2 + $0x550] sm:$0xff]
        %v5638 = vld [vmem:[#allocation2 + $0x558] sm:$0xff]
        %v5639 = vld [vmem:[#allocation2 + $0x560] sm:$0xff]
        %v5640 = vld [vmem:[#allocation2 + $0x568] sm:$0xff]
        %v5641 = vld [vmem:[#allocation2 + $0x570] sm:$0xff]
        %v5642 = vld [vmem:[#allocation2 + $0x578] sm:$0xff]
        %v5643 = vld [vmem:[#allocation2 + $0x580] sm:$0xff]
        %v5644 = vld [vmem:[#allocation2 + $0x588] sm:$0xff]
        %v5645 = vld [vmem:[#allocation2 + $0x590] sm:$0xff]
        %v5646 = vld [vmem:[#allocation2 + $0x598] sm:$0xff]
        %v5647 = vld [vmem:[#allocation2 + $0x5a0] sm:$0xff]
        %v5648 = vld [vmem:[#allocation2 + $0x5a8] sm:$0xff]
        %v5649 = vld [vmem:[#allocation2 + $0x5b0] sm:$0xff]
        %v5650 = vld [vmem:[#allocation2 + $0x5b8] sm:$0xff]
        %v5651 = vld [vmem:[#allocation2 + $0x5c0] sm:$0xff]
        %v5652 = vld [vmem:[#allocation2 + $0x5c8] sm:$0xff]
        %v5653 = vld [vmem:[#allocation2 + $0x5d0] sm:$0xff]
        %v5654 = vld [vmem:[#allocation2 + $0x5d8] sm:$0xff]
        %v5655 = vld [vmem:[#allocation2 + $0x5e0] sm:$0xff]
        %v5656 = vld [vmem:[#allocation2 + $0x5e8] sm:$0xff]
        %v5657 = vld [vmem:[#allocation2 + $0x5f0] sm:$0xff]
        %v5658 = vld [vmem:[#allocation2 + $0x5f8] sm:$0xff]
        %v5659 = vld [vmem:[#allocation2 + $0x600] sm:$0xff]
        %v5660 = vld [vmem:[#allocation2 + $0x608] sm:$0xff]
        %v5661 = vld [vmem:[#allocation2 + $0x610] sm:$0xff]
        %v5662 = vld [vmem:[#allocation2 + $0x618] sm:$0xff]
        %v5663 = vld [vmem:[#allocation2 + $0x620] sm:$0xff]
        %v5664 = vld [vmem:[#allocation2 + $0x628] sm:$0xff]
        %v5665 = vld [vmem:[#allocation2 + $0x630] sm:$0xff]
        %v5666 = vld [vmem:[#allocation2 + $0x638] sm:$0xff]
        %v5667 = vld [vmem:[#allocation2 + $0x640] sm:$0xff]
        %v5668 = vld [vmem:[#allocation2 + $0x648] sm:$0xff]
        %v5669 = vld [vmem:[#allocation2 + $0x650] sm:$0xff]
        %v5670 = vld [vmem:[#allocation2 + $0x658] sm:$0xff]
        %v5671 = vld [vmem:[#allocation2 + $0x660] sm:$0xff]
        %v5672 = vld [vmem:[#allocation2 + $0x668] sm:$0xff]
        %v5673 = vld [vmem:[#allocation2 + $0x670] sm:$0xff]
        %v5674 = vld [vmem:[#allocation2 + $0x678] sm:$0xff]
        %v5675 = vld [vmem:[#allocation2 + $0x680] sm:$0xff]
        %v5676 = vld [vmem:[#allocation2 + $0x688] sm:$0xff]
        %v5677 = vld [vmem:[#allocation2 + $0x690] sm:$0xff]
        %v5678 = vld [vmem:[#allocation2 + $0x698] sm:$0xff]
        %v5679 = vld [vmem:[#allocation2 + $0x6a0] sm:$0xff]
        %v5680 = vld [vmem:[#allocation2 + $0x6a8] sm:$0xff]
        %v5681 = vld [vmem:[#allocation2 + $0x6b0] sm:$0xff]
        %v5682 = vld [vmem:[#allocation2 + $0x6b8] sm:$0xff]
        %v5683 = vld [vmem:[#allocation2 + $0x6c0] sm:$0xff]
        %v5684 = vld [vmem:[#allocation2 + $0x6c8] sm:$0xff]
        %v5685 = vld [vmem:[#allocation2 + $0x6d0] sm:$0xff]
        %v5686 = vld [vmem:[#allocation2 + $0x6d8] sm:$0xff]
        %v5687 = vld [vmem:[#allocation2 + $0x6e0] sm:$0xff]
        %v5688 = vld [vmem:[#allocation2 + $0x6e8] sm:$0xff]
        %v5689 = vld [vmem:[#allocation2 + $0x6f0] sm:$0xff]
        %v5690 = vld [vmem:[#allocation2 + $0x6f8] sm:$0xff]
        %v5691 = vld [vmem:[#allocation2 + $0x700] sm:$0xff]
        %v5692 = vld [vmem:[#allocation2 + $0x708] sm:$0xff]
        %v5693 = vld [vmem:[#allocation2 + $0x710] sm:$0xff]
        %v5694 = vld [vmem:[#allocation2 + $0x718] sm:$0xff]
        %v5695 = vld [vmem:[#allocation2 + $0x720] sm:$0xff]
        %v5696 = vld [vmem:[#allocation2 + $0x728] sm:$0xff]
        %v5697 = vld [vmem:[#allocation2 + $0x730] sm:$0xff]
        %v5698 = vld [vmem:[#allocation2 + $0x738] sm:$0xff]
        %v5699 = vld [vmem:[#allocation2 + $0x740] sm:$0xff]
        %v5700 = vld [vmem:[#allocation2 + $0x748] sm:$0xff]
        %v5701 = vld [vmem:[#allocation2 + $0x750] sm:$0xff]
        %v5702 = vld [vmem:[#allocation2 + $0x758] sm:$0xff]
        %v5703 = vld [vmem:[#allocation2 + $0x760] sm:$0xff]
        %v5704 = vld [vmem:[#allocation2 + $0x768] sm:$0xff]
        %v5705 = vld [vmem:[#allocation2 + $0x770] sm:$0xff]
        %v5706 = vld [vmem:[#allocation2 + $0x778] sm:$0xff]
        %v5707 = vld [vmem:[#allocation2 + $0x780] sm:$0xff]
        %v5708 = vld [vmem:[#allocation2 + $0x788] sm:$0xff]
        %v5709 = vld [vmem:[#allocation2 + $0x790] sm:$0xff]
        %v5710 = vld [vmem:[#allocation2 + $0x798] sm:$0xff]
        %v5711 = vld [vmem:[#allocation2 + $0x7a0] sm:$0xff]
        %v5712 = vld [vmem:[#allocation2 + $0x7a8] sm:$0xff]
        %v5713 = vld [vmem:[#allocation2 + $0x7b0] sm:$0xff]
        %v5714 = vld [vmem:[#allocation2 + $0x7b8] sm:$0xff]
        %v5715 = vld [vmem:[#allocation2 + $0x7c0] sm:$0xff]
        %v5716 = vld [vmem:[#allocation2 + $0x7c8] sm:$0xff]
        %v5717 = vld [vmem:[#allocation2 + $0x7d0] sm:$0xff]
        %v5718 = vld [vmem:[#allocation2 + $0x7d8] sm:$0xff]
        %v5719 = vld [vmem:[#allocation2 + $0x7e0] sm:$0xff]
        %v5720 = vld [vmem:[#allocation2 + $0x7e8] sm:$0xff]
        %v5721 = vld [vmem:[#allocation2 + $0x7f0] sm:$0xff]
        %v5722 = vld [vmem:[#allocation2 + $0x7f8] sm:$0xff]
        %v5979 = vunpack.c.l.b16 %v5467
        %v5980 = vunpack.c.h.b16 %v5467
        %v5981 = vunpack.c.l.b16 %v5468
        %v5982 = vunpack.c.h.b16 %v5468
        %v5983 = vunpack.c.l.b16 %v5469
        %v5984 = vunpack.c.h.b16 %v5469
        %v5985 = vunpack.c.l.b16 %v5470
        %v5986 = vunpack.c.h.b16 %v5470
        %v5987 = vunpack.c.l.b16 %v5471
        %v5988 = vunpack.c.h.b16 %v5471
        %v5989 = vunpack.c.l.b16 %v5472
        %v5990 = vunpack.c.h.b16 %v5472
        %v5991 = vunpack.c.l.b16 %v5473
        %v5992 = vunpack.c.h.b16 %v5473
        %v5993 = vunpack.c.l.b16 %v5474
        %v5994 = vunpack.c.h.b16 %v5474
        %v5995 = vunpack.c.l.b16 %v5475
        %v5996 = vunpack.c.h.b16 %v5475
        %v5997 = vunpack.c.l.b16 %v5476
        %v5998 = vunpack.c.h.b16 %v5476
        %v5999 = vunpack.c.l.b16 %v5477
        %v6000 = vunpack.c.h.b16 %v5477
        %v6001 = vunpack.c.l.b16 %v5478
        %v6002 = vunpack.c.h.b16 %v5478
        %v6003 = vunpack.c.l.b16 %v5479
        %v6004 = vunpack.c.h.b16 %v5479
        %v6005 = vunpack.c.l.b16 %v5480
        %v6006 = vunpack.c.h.b16 %v5480
        %v6007 = vunpack.c.l.b16 %v5481
        %v6008 = vunpack.c.h.b16 %v5481
        %v6009 = vunpack.c.l.b16 %v5482
        %v6010 = vunpack.c.h.b16 %v5482
        %v6011 = vunpack.c.l.b16 %v5483
        %v6012 = vunpack.c.h.b16 %v5483
        %v6013 = vunpack.c.l.b16 %v5484
        %v6014 = vunpack.c.h.b16 %v5484
        %v6015 = vunpack.c.l.b16 %v5485
        %v6016 = vunpack.c.h.b16 %v5485
        %v6017 = vunpack.c.l.b16 %v5486
        %v6018 = vunpack.c.h.b16 %v5486
        %v6019 = vunpack.c.l.b16 %v5487
        %v6020 = vunpack.c.h.b16 %v5487
        %v6021 = vunpack.c.l.b16 %v5488
        %v6022 = vunpack.c.h.b16 %v5488
        %v6023 = vunpack.c.l.b16 %v5489
        %v6024 = vunpack.c.h.b16 %v5489
        %v6025 = vunpack.c.l.b16 %v5490
        %v6026 = vunpack.c.h.b16 %v5490
        %v6027 = vunpack.c.l.b16 %v5491
        %v6028 = vunpack.c.h.b16 %v5491
        %v6029 = vunpack.c.l.b16 %v5492
        %v6030 = vunpack.c.h.b16 %v5492
        %v6031 = vunpack.c.l.b16 %v5493
        %v6032 = vunpack.c.h.b16 %v5493
        %v6033 = vunpack.c.l.b16 %v5494
        %v6034 = vunpack.c.h.b16 %v5494
        %v6035 = vunpack.c.l.b16 %v5495
        %v6036 = vunpack.c.h.b16 %v5495
        %v6037 = vunpack.c.l.b16 %v5496
        %v6038 = vunpack.c.h.b16 %v5496
        %v6039 = vunpack.c.l.b16 %v5497
        %v6040 = vunpack.c.h.b16 %v5497
        %v6041 = vunpack.c.l.b16 %v5498
        %v6042 = vunpack.c.h.b16 %v5498
        %v6043 = vunpack.c.l.b16 %v5499
        %v6044 = vunpack.c.h.b16 %v5499
        %v6045 = vunpack.c.l.b16 %v5500
        %v6046 = vunpack.c.h.b16 %v5500
        %v6047 = vunpack.c.l.b16 %v5501
        %v6048 = vunpack.c.h.b16 %v5501
        %v6049 = vunpack.c.l.b16 %v5502
        %v6050 = vunpack.c.h.b16 %v5502
        %v6051 = vunpack.c.l.b16 %v5503
        %v6052 = vunpack.c.h.b16 %v5503
        %v6053 = vunpack.c.l.b16 %v5504
        %v6054 = vunpack.c.h.b16 %v5504
        %v6055 = vunpack.c.l.b16 %v5505
        %v6056 = vunpack.c.h.b16 %v5505
        %v6057 = vunpack.c.l.b16 %v5506
        %v6058 = vunpack.c.h.b16 %v5506
        %v6059 = vunpack.c.l.b16 %v5507
        %v6060 = vunpack.c.h.b16 %v5507
        %v6061 = vunpack.c.l.b16 %v5508
        %v6062 = vunpack.c.h.b16 %v5508
        %v6063 = vunpack.c.l.b16 %v5509
        %v6064 = vunpack.c.h.b16 %v5509
        %v6065 = vunpack.c.l.b16 %v5510
        %v6066 = vunpack.c.h.b16 %v5510
        %v6067 = vunpack.c.l.b16 %v5511
        %v6068 = vunpack.c.h.b16 %v5511
        %v6069 = vunpack.c.l.b16 %v5512
        %v6070 = vunpack.c.h.b16 %v5512
        %v6071 = vunpack.c.l.b16 %v5513
        %v6072 = vunpack.c.h.b16 %v5513
        %v6073 = vunpack.c.l.b16 %v5514
        %v6074 = vunpack.c.h.b16 %v5514
        %v6075 = vunpack.c.l.b16 %v5515
        %v6076 = vunpack.c.h.b16 %v5515
        %v6077 = vunpack.c.l.b16 %v5516
        %v6078 = vunpack.c.h.b16 %v5516
        %v6079 = vunpack.c.l.b16 %v5517
        %v6080 = vunpack.c.h.b16 %v5517
        %v6081 = vunpack.c.l.b16 %v5518
        %v6082 = vunpack.c.h.b16 %v5518
        %v6083 = vunpack.c.l.b16 %v5519
        %v6084 = vunpack.c.h.b16 %v5519
        %v6085 = vunpack.c.l.b16 %v5520
        %v6086 = vunpack.c.h.b16 %v5520
        %v6087 = vunpack.c.l.b16 %v5521
        %v6088 = vunpack.c.h.b16 %v5521
        %v6089 = vunpack.c.l.b16 %v5522
        %v6090 = vunpack.c.h.b16 %v5522
        %v6091 = vunpack.c.l.b16 %v5523
        %v6092 = vunpack.c.h.b16 %v5523
        %v6093 = vunpack.c.l.b16 %v5524
        %v6094 = vunpack.c.h.b16 %v5524
        %v6095 = vunpack.c.l.b16 %v5525
        %v6096 = vunpack.c.h.b16 %v5525
        %v6097 = vunpack.c.l.b16 %v5526
        %v6098 = vunpack.c.h.b16 %v5526
        %v6099 = vunpack.c.l.b16 %v5527
        %v6100 = vunpack.c.h.b16 %v5527
        %v6101 = vunpack.c.l.b16 %v5528
        %v6102 = vunpack.c.h.b16 %v5528
        %v6103 = vunpack.c.l.b16 %v5529
        %v6104 = vunpack.c.h.b16 %v5529
        %v6105 = vunpack.c.l.b16 %v5530
        %v6106 = vunpack.c.h.b16 %v5530
        %v6107 = vunpack.c.l.b16 %v5531
        %v6108 = vunpack.c.h.b16 %v5531
        %v6109 = vunpack.c.l.b16 %v5532
        %v6110 = vunpack.c.h.b16 %v5532
        %v6111 = vunpack.c.l.b16 %v5533
        %v6112 = vunpack.c.h.b16 %v5533
        %v6113 = vunpack.c.l.b16 %v5534
        %v6114 = vunpack.c.h.b16 %v5534
        %v6115 = vunpack.c.l.b16 %v5535
        %v6116 = vunpack.c.h.b16 %v5535
        %v6117 = vunpack.c.l.b16 %v5536
        %v6118 = vunpack.c.h.b16 %v5536
        %v6119 = vunpack.c.l.b16 %v5537
        %v6120 = vunpack.c.h.b16 %v5537
        %v6121 = vunpack.c.l.b16 %v5538
        %v6122 = vunpack.c.h.b16 %v5538
        %v6123 = vunpack.c.l.b16 %v5539
        %v6124 = vunpack.c.h.b16 %v5539
        %v6125 = vunpack.c.l.b16 %v5540
        %v6126 = vunpack.c.h.b16 %v5540
        %v6127 = vunpack.c.l.b16 %v5541
        %v6128 = vunpack.c.h.b16 %v5541
        %v6129 = vunpack.c.l.b16 %v5542
        %v6130 = vunpack.c.h.b16 %v5542
        %v6131 = vunpack.c.l.b16 %v5543
        %v6132 = vunpack.c.h.b16 %v5543
        %v6133 = vunpack.c.l.b16 %v5544
        %v6134 = vunpack.c.h.b16 %v5544
        %v6135 = vunpack.c.l.b16 %v5545
        %v6136 = vunpack.c.h.b16 %v5545
        %v6137 = vunpack.c.l.b16 %v5546
        %v6138 = vunpack.c.h.b16 %v5546
        %v6139 = vunpack.c.l.b16 %v5547
        %v6140 = vunpack.c.h.b16 %v5547
        %v6141 = vunpack.c.l.b16 %v5548
        %v6142 = vunpack.c.h.b16 %v5548
        %v6143 = vunpack.c.l.b16 %v5549
        %v6144 = vunpack.c.h.b16 %v5549
        %v6145 = vunpack.c.l.b16 %v5550
        %v6146 = vunpack.c.h.b16 %v5550
        %v6147 = vunpack.c.l.b16 %v5551
        %v6148 = vunpack.c.h.b16 %v5551
        %v6149 = vunpack.c.l.b16 %v5552
        %v6150 = vunpack.c.h.b16 %v5552
        %v6151 = vunpack.c.l.b16 %v5553
        %v6152 = vunpack.c.h.b16 %v5553
        %v6153 = vunpack.c.l.b16 %v5554
        %v6154 = vunpack.c.h.b16 %v5554
        %v6155 = vunpack.c.l.b16 %v5555
        %v6156 = vunpack.c.h.b16 %v5555
        %v6157 = vunpack.c.l.b16 %v5556
        %v6158 = vunpack.c.h.b16 %v5556
        %v6159 = vunpack.c.l.b16 %v5557
        %v6160 = vunpack.c.h.b16 %v5557
        %v6161 = vunpack.c.l.b16 %v5558
        %v6162 = vunpack.c.h.b16 %v5558
        %v6163 = vunpack.c.l.b16 %v5559
        %v6164 = vunpack.c.h.b16 %v5559
        %v6165 = vunpack.c.l.b16 %v5560
        %v6166 = vunpack.c.h.b16 %v5560
        %v6167 = vunpack.c.l.b16 %v5561
        %v6168 = vunpack.c.h.b16 %v5561
        %v6169 = vunpack.c.l.b16 %v5562
        %v6170 = vunpack.c.h.b16 %v5562
        %v6171 = vunpack.c.l.b16 %v5563
        %v6172 = vunpack.c.h.b16 %v5563
        %v6173 = vunpack.c.l.b16 %v5564
        %v6174 = vunpack.c.h.b16 %v5564
        %v6175 = vunpack.c.l.b16 %v5565
        %v6176 = vunpack.c.h.b16 %v5565
        %v6177 = vunpack.c.l.b16 %v5566
        %v6178 = vunpack.c.h.b16 %v5566
        %v6179 = vunpack.c.l.b16 %v5567
        %v6180 = vunpack.c.h.b16 %v5567
        %v6181 = vunpack.c.l.b16 %v5568
        %v6182 = vunpack.c.h.b16 %v5568
        %v6183 = vunpack.c.l.b16 %v5569
        %v6184 = vunpack.c.h.b16 %v5569
        %v6185 = vunpack.c.l.b16 %v5570
        %v6186 = vunpack.c.h.b16 %v5570
        %v6187 = vunpack.c.l.b16 %v5571
        %v6188 = vunpack.c.h.b16 %v5571
        %v6189 = vunpack.c.l.b16 %v5572
        %v6190 = vunpack.c.h.b16 %v5572
        %v6191 = vunpack.c.l.b16 %v5573
        %v6192 = vunpack.c.h.b16 %v5573
        %v6193 = vunpack.c.l.b16 %v5574
        %v6194 = vunpack.c.h.b16 %v5574
        %v6195 = vunpack.c.l.b16 %v5575
        %v6196 = vunpack.c.h.b16 %v5575
        %v6197 = vunpack.c.l.b16 %v5576
        %v6198 = vunpack.c.h.b16 %v5576
        %v6199 = vunpack.c.l.b16 %v5577
        %v6200 = vunpack.c.h.b16 %v5577
        %v6201 = vunpack.c.l.b16 %v5578
        %v6202 = vunpack.c.h.b16 %v5578
        %v6203 = vunpack.c.l.b16 %v5579
        %v6204 = vunpack.c.h.b16 %v5579
        %v6205 = vunpack.c.l.b16 %v5580
        %v6206 = vunpack.c.h.b16 %v5580
        %v6207 = vunpack.c.l.b16 %v5581
        %v6208 = vunpack.c.h.b16 %v5581
        %v6209 = vunpack.c.l.b16 %v5582
        %v6210 = vunpack.c.h.b16 %v5582
        %v6211 = vunpack.c.l.b16 %v5583
        %v6212 = vunpack.c.h.b16 %v5583
        %v6213 = vunpack.c.l.b16 %v5584
        %v6214 = vunpack.c.h.b16 %v5584
        %v6215 = vunpack.c.l.b16 %v5585
        %v6216 = vunpack.c.h.b16 %v5585
        %v6217 = vunpack.c.l.b16 %v5586
        %v6218 = vunpack.c.h.b16 %v5586
        %v6219 = vunpack.c.l.b16 %v5587
        %v6220 = vunpack.c.h.b16 %v5587
        %v6221 = vunpack.c.l.b16 %v5588
        %v6222 = vunpack.c.h.b16 %v5588
        %v6223 = vunpack.c.l.b16 %v5589
        %v6224 = vunpack.c.h.b16 %v5589
        %v6225 = vunpack.c.l.b16 %v5590
        %v6226 = vunpack.c.h.b16 %v5590
        %v6227 = vunpack.c.l.b16 %v5591
        %v6228 = vunpack.c.h.b16 %v5591
        %v6229 = vunpack.c.l.b16 %v5592
        %v6230 = vunpack.c.h.b16 %v5592
        %v6231 = vunpack.c.l.b16 %v5593
        %v6232 = vunpack.c.h.b16 %v5593
        %v6233 = vunpack.c.l.b16 %v5594
        %v6234 = vunpack.c.h.b16 %v5594
        %v6235 = vunpack.c.l.b16 %v5595
        %v6236 = vunpack.c.h.b16 %v5595
        %v6237 = vunpack.c.l.b16 %v5596
        %v6238 = vunpack.c.h.b16 %v5596
        %v6239 = vunpack.c.l.b16 %v5597
        %v6240 = vunpack.c.h.b16 %v5597
        %v6241 = vunpack.c.l.b16 %v5598
        %v6242 = vunpack.c.h.b16 %v5598
        %v6243 = vunpack.c.l.b16 %v5599
        %v6244 = vunpack.c.h.b16 %v5599
        %v6245 = vunpack.c.l.b16 %v5600
        %v6246 = vunpack.c.h.b16 %v5600
        %v6247 = vunpack.c.l.b16 %v5601
        %v6248 = vunpack.c.h.b16 %v5601
        %v6249 = vunpack.c.l.b16 %v5602
        %v6250 = vunpack.c.h.b16 %v5602
        %v6251 = vunpack.c.l.b16 %v5603
        %v6252 = vunpack.c.h.b16 %v5603
        %v6253 = vunpack.c.l.b16 %v5604
        %v6254 = vunpack.c.h.b16 %v5604
        %v6255 = vunpack.c.l.b16 %v5605
        %v6256 = vunpack.c.h.b16 %v5605
        %v6257 = vunpack.c.l.b16 %v5606
        %v6258 = vunpack.c.h.b16 %v5606
        %v6259 = vunpack.c.l.b16 %v5607
        %v6260 = vunpack.c.h.b16 %v5607
        %v6261 = vunpack.c.l.b16 %v5608
        %v6262 = vunpack.c.h.b16 %v5608
        %v6263 = vunpack.c.l.b16 %v5609
        %v6264 = vunpack.c.h.b16 %v5609
        %v6265 = vunpack.c.l.b16 %v5610
        %v6266 = vunpack.c.h.b16 %v5610
        %v6267 = vunpack.c.l.b16 %v5611
        %v6268 = vunpack.c.h.b16 %v5611
        %v6269 = vunpack.c.l.b16 %v5612
        %v6270 = vunpack.c.h.b16 %v5612
        %v6271 = vunpack.c.l.b16 %v5613
        %v6272 = vunpack.c.h.b16 %v5613
        %v6273 = vunpack.c.l.b16 %v5614
        %v6274 = vunpack.c.h.b16 %v5614
        %v6275 = vunpack.c.l.b16 %v5615
        %v6276 = vunpack.c.h.b16 %v5615
        %v6277 = vunpack.c.l.b16 %v5616
        %v6278 = vunpack.c.h.b16 %v5616
        %v6279 = vunpack.c.l.b16 %v5617
        %v6280 = vunpack.c.h.b16 %v5617
        %v6281 = vunpack.c.l.b16 %v5618
        %v6282 = vunpack.c.h.b16 %v5618
        %v6283 = vunpack.c.l.b16 %v5619
        %v6284 = vunpack.c.h.b16 %v5619
        %v6285 = vunpack.c.l.b16 %v5620
        %v6286 = vunpack.c.h.b16 %v5620
        %v6287 = vunpack.c.l.b16 %v5621
        %v6288 = vunpack.c.h.b16 %v5621
        %v6289 = vunpack.c.l.b16 %v5622
        %v6290 = vunpack.c.h.b16 %v5622
        %v6291 = vunpack.c.l.b16 %v5623
        %v6292 = vunpack.c.h.b16 %v5623
        %v6293 = vunpack.c.l.b16 %v5624
        %v6294 = vunpack.c.h.b16 %v5624
        %v6295 = vunpack.c.l.b16 %v5625
        %v6296 = vunpack.c.h.b16 %v5625
        %v6297 = vunpack.c.l.b16 %v5626
        %v6298 = vunpack.c.h.b16 %v5626
        %v6299 = vunpack.c.l.b16 %v5627
        %v6300 = vunpack.c.h.b16 %v5627
        %v6301 = vunpack.c.l.b16 %v5628
        %v6302 = vunpack.c.h.b16 %v5628
        %v6303 = vunpack.c.l.b16 %v5629
        %v6304 = vunpack.c.h.b16 %v5629
        %v6305 = vunpack.c.l.b16 %v5630
        %v6306 = vunpack.c.h.b16 %v5630
        %v6307 = vunpack.c.l.b16 %v5631
        %v6308 = vunpack.c.h.b16 %v5631
        %v6309 = vunpack.c.l.b16 %v5632
        %v6310 = vunpack.c.h.b16 %v5632
        %v6311 = vunpack.c.l.b16 %v5633
        %v6312 = vunpack.c.h.b16 %v5633
        %v6313 = vunpack.c.l.b16 %v5634
        %v6314 = vunpack.c.h.b16 %v5634
        %v6315 = vunpack.c.l.b16 %v5635
        %v6316 = vunpack.c.h.b16 %v5635
        %v6317 = vunpack.c.l.b16 %v5636
        %v6318 = vunpack.c.h.b16 %v5636
        %v6319 = vunpack.c.l.b16 %v5637
        %v6320 = vunpack.c.h.b16 %v5637
        %v6321 = vunpack.c.l.b16 %v5638
        %v6322 = vunpack.c.h.b16 %v5638
        %v6323 = vunpack.c.l.b16 %v5639
        %v6324 = vunpack.c.h.b16 %v5639
        %v6325 = vunpack.c.l.b16 %v5640
        %v6326 = vunpack.c.h.b16 %v5640
        %v6327 = vunpack.c.l.b16 %v5641
        %v6328 = vunpack.c.h.b16 %v5641
        %v6329 = vunpack.c.l.b16 %v5642
        %v6330 = vunpack.c.h.b16 %v5642
        %v6331 = vunpack.c.l.b16 %v5643
        %v6332 = vunpack.c.h.b16 %v5643
        %v6333 = vunpack.c.l.b16 %v5644
        %v6334 = vunpack.c.h.b16 %v5644
        %v6335 = vunpack.c.l.b16 %v5645
        %v6336 = vunpack.c.h.b16 %v5645
        %v6337 = vunpack.c.l.b16 %v5646
        %v6338 = vunpack.c.h.b16 %v5646
        %v6339 = vunpack.c.l.b16 %v5647
        %v6340 = vunpack.c.h.b16 %v5647
        %v6341 = vunpack.c.l.b16 %v5648
        %v6342 = vunpack.c.h.b16 %v5648
        %v6343 = vunpack.c.l.b16 %v5649
        %v6344 = vunpack.c.h.b16 %v5649
        %v6345 = vunpack.c.l.b16 %v5650
        %v6346 = vunpack.c.h.b16 %v5650
        %v6347 = vunpack.c.l.b16 %v5651
        %v6348 = vunpack.c.h.b16 %v5651
        %v6349 = vunpack.c.l.b16 %v5652
        %v6350 = vunpack.c.h.b16 %v5652
        %v6351 = vunpack.c.l.b16 %v5653
        %v6352 = vunpack.c.h.b16 %v5653
        %v6353 = vunpack.c.l.b16 %v5654
        %v6354 = vunpack.c.h.b16 %v5654
        %v6355 = vunpack.c.l.b16 %v5655
        %v6356 = vunpack.c.h.b16 %v5655
        %v6357 = vunpack.c.l.b16 %v5656
        %v6358 = vunpack.c.h.b16 %v5656
        %v6359 = vunpack.c.l.b16 %v5657
        %v6360 = vunpack.c.h.b16 %v5657
        %v6361 = vunpack.c.l.b16 %v5658
        %v6362 = vunpack.c.h.b16 %v5658
        %v6363 = vunpack.c.l.b16 %v5659
        %v6364 = vunpack.c.h.b16 %v5659
        %v6365 = vunpack.c.l.b16 %v5660
        %v6366 = vunpack.c.h.b16 %v5660
        %v6367 = vunpack.c.l.b16 %v5661
        %v6368 = vunpack.c.h.b16 %v5661
        %v6369 = vunpack.c.l.b16 %v5662
        %v6370 = vunpack.c.h.b16 %v5662
        %v6371 = vunpack.c.l.b16 %v5663
        %v6372 = vunpack.c.h.b16 %v5663
        %v6373 = vunpack.c.l.b16 %v5664
        %v6374 = vunpack.c.h.b16 %v5664
        %v6375 = vunpack.c.l.b16 %v5665
        %v6376 = vunpack.c.h.b16 %v5665
        %v6377 = vunpack.c.l.b16 %v5666
        %v6378 = vunpack.c.h.b16 %v5666
        %v6379 = vunpack.c.l.b16 %v5667
        %v6380 = vunpack.c.h.b16 %v5667
        %v6381 = vunpack.c.l.b16 %v5668
        %v6382 = vunpack.c.h.b16 %v5668
        %v6383 = vunpack.c.l.b16 %v5669
        %v6384 = vunpack.c.h.b16 %v5669
        %v6385 = vunpack.c.l.b16 %v5670
        %v6386 = vunpack.c.h.b16 %v5670
        %v6387 = vunpack.c.l.b16 %v5671
        %v6388 = vunpack.c.h.b16 %v5671
        %v6389 = vunpack.c.l.b16 %v5672
        %v6390 = vunpack.c.h.b16 %v5672
        %v6391 = vunpack.c.l.b16 %v5673
        %v6392 = vunpack.c.h.b16 %v5673
        %v6393 = vunpack.c.l.b16 %v5674
        %v6394 = vunpack.c.h.b16 %v5674
        %v6395 = vunpack.c.l.b16 %v5675
        %v6396 = vunpack.c.h.b16 %v5675
        %v6397 = vunpack.c.l.b16 %v5676
        %v6398 = vunpack.c.h.b16 %v5676
        %v6399 = vunpack.c.l.b16 %v5677
        %v6400 = vunpack.c.h.b16 %v5677
        %v6401 = vunpack.c.l.b16 %v5678
        %v6402 = vunpack.c.h.b16 %v5678
        %v6403 = vunpack.c.l.b16 %v5679
        %v6404 = vunpack.c.h.b16 %v5679
        %v6405 = vunpack.c.l.b16 %v5680
        %v6406 = vunpack.c.h.b16 %v5680
        %v6407 = vunpack.c.l.b16 %v5681
        %v6408 = vunpack.c.h.b16 %v5681
        %v6409 = vunpack.c.l.b16 %v5682
        %v6410 = vunpack.c.h.b16 %v5682
        %v6411 = vunpack.c.l.b16 %v5683
        %v6412 = vunpack.c.h.b16 %v5683
        %v6413 = vunpack.c.l.b16 %v5684
        %v6414 = vunpack.c.h.b16 %v5684
        %v6415 = vunpack.c.l.b16 %v5685
        %v6416 = vunpack.c.h.b16 %v5685
        %v6417 = vunpack.c.l.b16 %v5686
        %v6418 = vunpack.c.h.b16 %v5686
        %v6419 = vunpack.c.l.b16 %v5687
        %v6420 = vunpack.c.h.b16 %v5687
        %v6421 = vunpack.c.l.b16 %v5688
        %v6422 = vunpack.c.h.b16 %v5688
        %v6423 = vunpack.c.l.b16 %v5689
        %v6424 = vunpack.c.h.b16 %v5689
        %v6425 = vunpack.c.l.b16 %v5690
        %v6426 = vunpack.c.h.b16 %v5690
        %v6427 = vunpack.c.l.b16 %v5691
        %v6428 = vunpack.c.h.b16 %v5691
        %v6429 = vunpack.c.l.b16 %v5692
        %v6430 = vunpack.c.h.b16 %v5692
        %v6431 = vunpack.c.l.b16 %v5693
        %v6432 = vunpack.c.h.b16 %v5693
        %v6433 = vunpack.c.l.b16 %v5694
        %v6434 = vunpack.c.h.b16 %v5694
        %v6435 = vunpack.c.l.b16 %v5695
        %v6436 = vunpack.c.h.b16 %v5695
        %v6437 = vunpack.c.l.b16 %v5696
        %v6438 = vunpack.c.h.b16 %v5696
        %v6439 = vunpack.c.l.b16 %v5697
        %v6440 = vunpack.c.h.b16 %v5697
        %v6441 = vunpack.c.l.b16 %v5698
        %v6442 = vunpack.c.h.b16 %v5698
        %v6443 = vunpack.c.l.b16 %v5699
        %v6444 = vunpack.c.h.b16 %v5699
        %v6445 = vunpack.c.l.b16 %v5700
        %v6446 = vunpack.c.h.b16 %v5700
        %v6447 = vunpack.c.l.b16 %v5701
        %v6448 = vunpack.c.h.b16 %v5701
        %v6449 = vunpack.c.l.b16 %v5702
        %v6450 = vunpack.c.h.b16 %v5702
        %v6451 = vunpack.c.l.b16 %v5703
        %v6452 = vunpack.c.h.b16 %v5703
        %v6453 = vunpack.c.l.b16 %v5704
        %v6454 = vunpack.c.h.b16 %v5704
        %v6455 = vunpack.c.l.b16 %v5705
        %v6456 = vunpack.c.h.b16 %v5705
        %v6457 = vunpack.c.l.b16 %v5706
        %v6458 = vunpack.c.h.b16 %v5706
        %v6459 = vunpack.c.l.b16 %v5707
        %v6460 = vunpack.c.h.b16 %v5707
        %v6461 = vunpack.c.l.b16 %v5708
        %v6462 = vunpack.c.h.b16 %v5708
        %v6463 = vunpack.c.l.b16 %v5709
        %v6464 = vunpack.c.h.b16 %v5709
        %v6465 = vunpack.c.l.b16 %v5710
        %v6466 = vunpack.c.h.b16 %v5710
        %v6467 = vunpack.c.l.b16 %v5711
        %v6468 = vunpack.c.h.b16 %v5711
        %v6469 = vunpack.c.l.b16 %v5712
        %v6470 = vunpack.c.h.b16 %v5712
        %v6471 = vunpack.c.l.b16 %v5713
        %v6472 = vunpack.c.h.b16 %v5713
        %v6473 = vunpack.c.l.b16 %v5714
        %v6474 = vunpack.c.h.b16 %v5714
        %v6475 = vunpack.c.l.b16 %v5715
        %v6476 = vunpack.c.h.b16 %v5715
        %v6477 = vunpack.c.l.b16 %v5716
        %v6478 = vunpack.c.h.b16 %v5716
        %v6479 = vunpack.c.l.b16 %v5717
        %v6480 = vunpack.c.h.b16 %v5717
        %v6481 = vunpack.c.l.b16 %v5718
        %v6482 = vunpack.c.h.b16 %v5718
        %v6483 = vunpack.c.l.b16 %v5719
        %v6484 = vunpack.c.h.b16 %v5719
        %v6485 = vunpack.c.l.b16 %v5720
        %v6486 = vunpack.c.h.b16 %v5720
        %v6487 = vunpack.c.l.b16 %v5721
        %v6488 = vunpack.c.h.b16 %v5721
        %v6489 = vunpack.c.l.b16 %v5722
        %v6490 = vunpack.c.h.b16 %v5722
        %v6491 = vpack.c.b16 %v5987, %v5979
        %v6492 = vpack.c.b16 %v5988, %v5980
        %v6493 = vpack.c.b16 %v5989, %v5981
        %v6494 = vpack.c.b16 %v5990, %v5982
        %v6495 = vpack.c.b16 %v5991, %v5983
        %v6496 = vpack.c.b16 %v5992, %v5984
        %v6497 = vpack.c.b16 %v5993, %v5985
        %v6498 = vpack.c.b16 %v5994, %v5986
        %v6499 = vpack.c.b16 %v6003, %v5995
        %v6500 = vpack.c.b16 %v6004, %v5996
        %v6501 = vpack.c.b16 %v6005, %v5997
        %v6502 = vpack.c.b16 %v6006, %v5998
        %v6503 = vpack.c.b16 %v6007, %v5999
        %v6504 = vpack.c.b16 %v6008, %v6000
        %v6505 = vpack.c.b16 %v6009, %v6001
        %v6506 = vpack.c.b16 %v6010, %v6002
        %v6507 = vpack.c.b16 %v6019, %v6011
        %v6508 = vpack.c.b16 %v6020, %v6012
        %v6509 = vpack.c.b16 %v6021, %v6013
        %v6510 = vpack.c.b16 %v6022, %v6014
        %v6511 = vpack.c.b16 %v6023, %v6015
        %v6512 = vpack.c.b16 %v6024, %v6016
        %v6513 = vpack.c.b16 %v6025, %v6017
        %v6514 = vpack.c.b16 %v6026, %v6018
        %v6515 = vpack.c.b16 %v6035, %v6027
        %v6516 = vpack.c.b16 %v6036, %v6028
        %v6517 = vpack.c.b16 %v6037, %v6029
        %v6518 = vpack.c.b16 %v6038, %v6030
        %v6519 = vpack.c.b16 %v6039, %v6031
        %v6520 = vpack.c.b16 %v6040, %v6032
        %v6521 = vpack.c.b16 %v6041, %v6033
        %v6522 = vpack.c.b16 %v6042, %v6034
        %v6523 = vpack.c.b16 %v6051, %v6043
        %v6524 = vpack.c.b16 %v6052, %v6044
        %v6525 = vpack.c.b16 %v6053, %v6045
        %v6526 = vpack.c.b16 %v6054, %v6046
        %v6527 = vpack.c.b16 %v6055, %v6047
        %v6528 = vpack.c.b16 %v6056, %v6048
        %v6529 = vpack.c.b16 %v6057, %v6049
        %v6530 = vpack.c.b16 %v6058, %v6050
        %v6531 = vpack.c.b16 %v6067, %v6059
        %v6532 = vpack.c.b16 %v6068, %v6060
        %v6533 = vpack.c.b16 %v6069, %v6061
        %v6534 = vpack.c.b16 %v6070, %v6062
        %v6535 = vpack.c.b16 %v6071, %v6063
        %v6536 = vpack.c.b16 %v6072, %v6064
        %v6537 = vpack.c.b16 %v6073, %v6065
        %v6538 = vpack.c.b16 %v6074, %v6066
        %v6539 = vpack.c.b16 %v6083, %v6075
        %v6540 = vpack.c.b16 %v6084, %v6076
        %v6541 = vpack.c.b16 %v6085, %v6077
        %v6542 = vpack.c.b16 %v6086, %v6078
        %v6543 = vpack.c.b16 %v6087, %v6079
        %v6544 = vpack.c.b16 %v6088, %v6080
        %v6545 = vpack.c.b16 %v6089, %v6081
        %v6546 = vpack.c.b16 %v6090, %v6082
        %v6547 = vpack.c.b16 %v6099, %v6091
        %v6548 = vpack.c.b16 %v6100, %v6092
        %v6549 = vpack.c.b16 %v6101, %v6093
        %v6550 = vpack.c.b16 %v6102, %v6094
        %v6551 = vpack.c.b16 %v6103, %v6095
        %v6552 = vpack.c.b16 %v6104, %v6096
        %v6553 = vpack.c.b16 %v6105, %v6097
        %v6554 = vpack.c.b16 %v6106, %v6098
        %v6555 = vpack.c.b16 %v6115, %v6107
        %v6556 = vpack.c.b16 %v6116, %v6108
        %v6557 = vpack.c.b16 %v6117, %v6109
        %v6558 = vpack.c.b16 %v6118, %v6110
        %v6559 = vpack.c.b16 %v6119, %v6111
        %v6560 = vpack.c.b16 %v6120, %v6112
        %v6561 = vpack.c.b16 %v6121, %v6113
        %v6562 = vpack.c.b16 %v6122, %v6114
        %v6563 = vpack.c.b16 %v6131, %v6123
        %v6564 = vpack.c.b16 %v6132, %v6124
        %v6565 = vpack.c.b16 %v6133, %v6125
        %v6566 = vpack.c.b16 %v6134, %v6126
        %v6567 = vpack.c.b16 %v6135, %v6127
        %v6568 = vpack.c.b16 %v6136, %v6128
        %v6569 = vpack.c.b16 %v6137, %v6129
        %v6570 = vpack.c.b16 %v6138, %v6130
        %v6571 = vpack.c.b16 %v6147, %v6139
        %v6572 = vpack.c.b16 %v6148, %v6140
        %v6573 = vpack.c.b16 %v6149, %v6141
        %v6574 = vpack.c.b16 %v6150, %v6142
        %v6575 = vpack.c.b16 %v6151, %v6143
        %v6576 = vpack.c.b16 %v6152, %v6144
        %v6577 = vpack.c.b16 %v6153, %v6145
        %v6578 = vpack.c.b16 %v6154, %v6146
        %v6579 = vpack.c.b16 %v6163, %v6155
        %v6580 = vpack.c.b16 %v6164, %v6156
        %v6581 = vpack.c.b16 %v6165, %v6157
        %v6582 = vpack.c.b16 %v6166, %v6158
        %v6583 = vpack.c.b16 %v6167, %v6159
        %v6584 = vpack.c.b16 %v6168, %v6160
        %v6585 = vpack.c.b16 %v6169, %v6161
        %v6586 = vpack.c.b16 %v6170, %v6162
        %v6587 = vpack.c.b16 %v6179, %v6171
        %v6588 = vpack.c.b16 %v6180, %v6172
        %v6589 = vpack.c.b16 %v6181, %v6173
        %v6590 = vpack.c.b16 %v6182, %v6174
        %v6591 = vpack.c.b16 %v6183, %v6175
        %v6592 = vpack.c.b16 %v6184, %v6176
        %v6593 = vpack.c.b16 %v6185, %v6177
        %v6594 = vpack.c.b16 %v6186, %v6178
        %v6595 = vpack.c.b16 %v6195, %v6187
        %v6596 = vpack.c.b16 %v6196, %v6188
        %v6597 = vpack.c.b16 %v6197, %v6189
        %v6598 = vpack.c.b16 %v6198, %v6190
        %v6599 = vpack.c.b16 %v6199, %v6191
        %v6600 = vpack.c.b16 %v6200, %v6192
        %v6601 = vpack.c.b16 %v6201, %v6193
        %v6602 = vpack.c.b16 %v6202, %v6194
        %v6603 = vpack.c.b16 %v6211, %v6203
        %v6604 = vpack.c.b16 %v6212, %v6204
        %v6605 = vpack.c.b16 %v6213, %v6205
        %v6606 = vpack.c.b16 %v6214, %v6206
        %v6607 = vpack.c.b16 %v6215, %v6207
        %v6608 = vpack.c.b16 %v6216, %v6208
        %v6609 = vpack.c.b16 %v6217, %v6209
        %v6610 = vpack.c.b16 %v6218, %v6210
        %v6611 = vpack.c.b16 %v6227, %v6219
        %v6612 = vpack.c.b16 %v6228, %v6220
        %v6613 = vpack.c.b16 %v6229, %v6221
        %v6614 = vpack.c.b16 %v6230, %v6222
        %v6615 = vpack.c.b16 %v6231, %v6223
        %v6616 = vpack.c.b16 %v6232, %v6224
        %v6617 = vpack.c.b16 %v6233, %v6225
        %v6618 = vpack.c.b16 %v6234, %v6226
        %v6619 = vpack.c.b16 %v6243, %v6235
        %v6620 = vpack.c.b16 %v6244, %v6236
        %v6621 = vpack.c.b16 %v6245, %v6237
        %v6622 = vpack.c.b16 %v6246, %v6238
        %v6623 = vpack.c.b16 %v6247, %v6239
        %v6624 = vpack.c.b16 %v6248, %v6240
        %v6625 = vpack.c.b16 %v6249, %v6241
        %v6626 = vpack.c.b16 %v6250, %v6242
        %v6627 = vpack.c.b16 %v6259, %v6251
        %v6628 = vpack.c.b16 %v6260, %v6252
        %v6629 = vpack.c.b16 %v6261, %v6253
        %v6630 = vpack.c.b16 %v6262, %v6254
        %v6631 = vpack.c.b16 %v6263, %v6255
        %v6632 = vpack.c.b16 %v6264, %v6256
        %v6633 = vpack.c.b16 %v6265, %v6257
        %v6634 = vpack.c.b16 %v6266, %v6258
        %v6635 = vpack.c.b16 %v6275, %v6267
        %v6636 = vpack.c.b16 %v6276, %v6268
        %v6637 = vpack.c.b16 %v6277, %v6269
        %v6638 = vpack.c.b16 %v6278, %v6270
        %v6639 = vpack.c.b16 %v6279, %v6271
        %v6640 = vpack.c.b16 %v6280, %v6272
        %v6641 = vpack.c.b16 %v6281, %v6273
        %v6642 = vpack.c.b16 %v6282, %v6274
        %v6643 = vpack.c.b16 %v6291, %v6283
        %v6644 = vpack.c.b16 %v6292, %v6284
        %v6645 = vpack.c.b16 %v6293, %v6285
        %v6646 = vpack.c.b16 %v6294, %v6286
        %v6647 = vpack.c.b16 %v6295, %v6287
        %v6648 = vpack.c.b16 %v6296, %v6288
        %v6649 = vpack.c.b16 %v6297, %v6289
        %v6650 = vpack.c.b16 %v6298, %v6290
        %v6651 = vpack.c.b16 %v6307, %v6299
        %v6652 = vpack.c.b16 %v6308, %v6300
        %v6653 = vpack.c.b16 %v6309, %v6301
        %v6654 = vpack.c.b16 %v6310, %v6302
        %v6655 = vpack.c.b16 %v6311, %v6303
        %v6656 = vpack.c.b16 %v6312, %v6304
        %v6657 = vpack.c.b16 %v6313, %v6305
        %v6658 = vpack.c.b16 %v6314, %v6306
        %v6659 = vpack.c.b16 %v6323, %v6315
        %v6660 = vpack.c.b16 %v6324, %v6316
        %v6661 = vpack.c.b16 %v6325, %v6317
        %v6662 = vpack.c.b16 %v6326, %v6318
        %v6663 = vpack.c.b16 %v6327, %v6319
        %v6664 = vpack.c.b16 %v6328, %v6320
        %v6665 = vpack.c.b16 %v6329, %v6321
        %v6666 = vpack.c.b16 %v6330, %v6322
        %v6667 = vpack.c.b16 %v6339, %v6331
        %v6668 = vpack.c.b16 %v6340, %v6332
        %v6669 = vpack.c.b16 %v6341, %v6333
        %v6670 = vpack.c.b16 %v6342, %v6334
        %v6671 = vpack.c.b16 %v6343, %v6335
        %v6672 = vpack.c.b16 %v6344, %v6336
        %v6673 = vpack.c.b16 %v6345, %v6337
        %v6674 = vpack.c.b16 %v6346, %v6338
        %v6675 = vpack.c.b16 %v6355, %v6347
        %v6676 = vpack.c.b16 %v6356, %v6348
        %v6677 = vpack.c.b16 %v6357, %v6349
        %v6678 = vpack.c.b16 %v6358, %v6350
        %v6679 = vpack.c.b16 %v6359, %v6351
        %v6680 = vpack.c.b16 %v6360, %v6352
        %v6681 = vpack.c.b16 %v6361, %v6353
        %v6682 = vpack.c.b16 %v6362, %v6354
        %v6683 = vpack.c.b16 %v6371, %v6363
        %v6684 = vpack.c.b16 %v6372, %v6364
        %v6685 = vpack.c.b16 %v6373, %v6365
        %v6686 = vpack.c.b16 %v6374, %v6366
        %v6687 = vpack.c.b16 %v6375, %v6367
        %v6688 = vpack.c.b16 %v6376, %v6368
        %v6689 = vpack.c.b16 %v6377, %v6369
        %v6690 = vpack.c.b16 %v6378, %v6370
        %v6691 = vpack.c.b16 %v6387, %v6379
        %v6692 = vpack.c.b16 %v6388, %v6380
        %v6693 = vpack.c.b16 %v6389, %v6381
        %v6694 = vpack.c.b16 %v6390, %v6382
        %v6695 = vpack.c.b16 %v6391, %v6383
        %v6696 = vpack.c.b16 %v6392, %v6384
        %v6697 = vpack.c.b16 %v6393, %v6385
        %v6698 = vpack.c.b16 %v6394, %v6386
        %v6699 = vpack.c.b16 %v6403, %v6395
        %v6700 = vpack.c.b16 %v6404, %v6396
        %v6701 = vpack.c.b16 %v6405, %v6397
        %v6702 = vpack.c.b16 %v6406, %v6398
        %v6703 = vpack.c.b16 %v6407, %v6399
        %v6704 = vpack.c.b16 %v6408, %v6400
        %v6705 = vpack.c.b16 %v6409, %v6401
        %v6706 = vpack.c.b16 %v6410, %v6402
        %v6707 = vpack.c.b16 %v6419, %v6411
        %v6708 = vpack.c.b16 %v6420, %v6412
        %v6709 = vpack.c.b16 %v6421, %v6413
        %v6710 = vpack.c.b16 %v6422, %v6414
        %v6711 = vpack.c.b16 %v6423, %v6415
        %v6712 = vpack.c.b16 %v6424, %v6416
        %v6713 = vpack.c.b16 %v6425, %v6417
        %v6714 = vpack.c.b16 %v6426, %v6418
        %v6715 = vpack.c.b16 %v6435, %v6427
        %v6716 = vpack.c.b16 %v6436, %v6428
        %v6717 = vpack.c.b16 %v6437, %v6429
        %v6718 = vpack.c.b16 %v6438, %v6430
        %v6719 = vpack.c.b16 %v6439, %v6431
        %v6720 = vpack.c.b16 %v6440, %v6432
        %v6721 = vpack.c.b16 %v6441, %v6433
        %v6722 = vpack.c.b16 %v6442, %v6434
        %v6723 = vpack.c.b16 %v6451, %v6443
        %v6724 = vpack.c.b16 %v6452, %v6444
        %v6725 = vpack.c.b16 %v6453, %v6445
        %v6726 = vpack.c.b16 %v6454, %v6446
        %v6727 = vpack.c.b16 %v6455, %v6447
        %v6728 = vpack.c.b16 %v6456, %v6448
        %v6729 = vpack.c.b16 %v6457, %v6449
        %v6730 = vpack.c.b16 %v6458, %v6450
        %v6731 = vpack.c.b16 %v6467, %v6459
        %v6732 = vpack.c.b16 %v6468, %v6460
        %v6733 = vpack.c.b16 %v6469, %v6461
        %v6734 = vpack.c.b16 %v6470, %v6462
        %v6735 = vpack.c.b16 %v6471, %v6463
        %v6736 = vpack.c.b16 %v6472, %v6464
        %v6737 = vpack.c.b16 %v6473, %v6465
        %v6738 = vpack.c.b16 %v6474, %v6466
        %v6739 = vpack.c.b16 %v6483, %v6475
        %v6740 = vpack.c.b16 %v6484, %v6476
        %v6741 = vpack.c.b16 %v6485, %v6477
        %v6742 = vpack.c.b16 %v6486, %v6478
        %v6743 = vpack.c.b16 %v6487, %v6479
        %v6744 = vpack.c.b16 %v6488, %v6480
        %v6745 = vpack.c.b16 %v6489, %v6481
        %v6746 = vpack.c.b16 %v6490, %v6482
        %7003 = vmatpush.bf16.msra.mxu0 %v6547
        %7004 = vmatpush.bf16.msra.mxu0 %v6539
        %7005 = vmatpush.bf16.msra.mxu0 %v6531
        %7006 = vmatpush.bf16.msra.mxu0 %v6523
        %7007 = vmatpush.bf16.msra.mxu0 %v6515
        %7008 = vmatpush.bf16.msra.mxu0 %v6507
        %7009 = vmatpush.bf16.msra.mxu0 %v6499
        %7010 = vmatpush.bf16.msra.mxu0 %v6491
        %7011 = vmatmul.bf16.gmra.mxu0 %v5451
        %v7012 = vpop.f32.mrf.mxu0
        %v7013 = vadd.f32 0.0, %v7012
        %v7014 = vpop.f32.mrf.mxu0
        %v7015 = vadd.f32 0.0, %v7014
        %7016 = vmatmul.bf16.gmra.mxu0 %v5455
        %v7017 = vpop.f32.mrf.mxu0
        %v7018 = vadd.f32 0.0, %v7017
        %v7019 = vpop.f32.mrf.mxu0
        %v7020 = vadd.f32 0.0, %v7019
        %7021 = vmatmul.bf16.gmra.mxu0 %v5459
        %v7022 = vpop.f32.mrf.mxu0
        %v7023 = vadd.f32 0.0, %v7022
        %v7024 = vpop.f32.mrf.mxu0
        %v7025 = vadd.f32 0.0, %v7024
        %7026 = vmatmul.bf16.gmra.mxu0 %v5463
        %v7027 = vpop.f32.mrf.mxu0
        %v7028 = vadd.f32 0.0, %v7027
        %v7029 = vpop.f32.mrf.mxu0
        %v7030 = vadd.f32 0.0, %v7029
        %7031 = vdwg.mxu0
        %7032 = vmatpush.bf16.msra.mxu0 %v6611
        %7033 = vmatpush.bf16.msra.mxu0 %v6603
        %7034 = vmatpush.bf16.msra.mxu0 %v6595
        %7035 = vmatpush.bf16.msra.mxu0 %v6587
        %7036 = vmatpush.bf16.msra.mxu0 %v6579
        %7037 = vmatpush.bf16.msra.mxu0 %v6571
        %7038 = vmatpush.bf16.msra.mxu0 %v6563
        %7039 = vmatpush.bf16.msra.mxu0 %v6555
        %7040 = vmatmul.bf16.gmra.mxu0 %v5452
        %v7041 = vpop.f32.mrf.mxu0
        %v7042 = vadd.f32 %v7013, %v7041
        %v7043 = vpop.f32.mrf.mxu0
        %v7044 = vadd.f32 %v7015, %v7043
        %7045 = vmatmul.bf16.gmra.mxu0 %v5456
        %v7046 = vpop.f32.mrf.mxu0
        %v7047 = vadd.f32 %v7018, %v7046
        %v7048 = vpop.f32.mrf.mxu0
        %v7049 = vadd.f32 %v7020, %v7048
        %7050 = vmatmul.bf16.gmra.mxu0 %v5460
        %v7051 = vpop.f32.mrf.mxu0
        %v7052 = vadd.f32 %v7023, %v7051
        %v7053 = vpop.f32.mrf.mxu0
        %v7054 = vadd.f32 %v7025, %v7053
        %7055 = vmatmul.bf16.gmra.mxu0 %v5464
        %v7056 = vpop.f32.mrf.mxu0
        %v7057 = vadd.f32 %v7028, %v7056
        %v7058 = vpop.f32.mrf.mxu0
        %v7059 = vadd.f32 %v7030, %v7058
        %7060 = vdwg.mxu0
        %7061 = vmatpush.bf16.msra.mxu0 %v6675
        %7062 = vmatpush.bf16.msra.mxu0 %v6667
        %7063 = vmatpush.bf16.msra.mxu0 %v6659
        %7064 = vmatpush.bf16.msra.mxu0 %v6651
        %7065 = vmatpush.bf16.msra.mxu0 %v6643
        %7066 = vmatpush.bf16.msra.mxu0 %v6635
        %7067 = vmatpush.bf16.msra.mxu0 %v6627
        %7068 = vmatpush.bf16.msra.mxu0 %v6619
        %7069 = vmatmul.bf16.gmra.mxu0 %v5453
        %v7070 = vpop.f32.mrf.mxu0
        %v7071 = vadd.f32 %v7042, %v7070
        %v7072 = vpop.f32.mrf.mxu0
        %v7073 = vadd.f32 %v7044, %v7072
        %7074 = vmatmul.bf16.gmra.mxu0 %v5457
        %v7075 = vpop.f32.mrf.mxu0
        %v7076 = vadd.f32 %v7047, %v7075
        %v7077 = vpop.f32.mrf.mxu0
        %v7078 = vadd.f32 %v7049, %v7077
        %7079 = vmatmul.bf16.gmra.mxu0 %v5461
        %v7080 = vpop.f32.mrf.mxu0
        %v7081 = vadd.f32 %v7052, %v7080
        %v7082 = vpop.f32.mrf.mxu0
        %v7083 = vadd.f32 %v7054, %v7082
        %7084 = vmatmul.bf16.gmra.mxu0 %v5465
        %v7085 = vpop.f32.mrf.mxu0
        %v7086 = vadd.f32 %v7057, %v7085
        %v7087 = vpop.f32.mrf.mxu0
        %v7088 = vadd.f32 %v7059, %v7087
        %7089 = vdwg.mxu0
        %7090 = vmatpush.bf16.msra.mxu0 %v6739
        %7091 = vmatpush.bf16.msra.mxu0 %v6731
        %7092 = vmatpush.bf16.msra.mxu0 %v6723
        %7093 = vmatpush.bf16.msra.mxu0 %v6715
        %7094 = vmatpush.bf16.msra.mxu0 %v6707
        %7095 = vmatpush.bf16.msra.mxu0 %v6699
        %7096 = vmatpush.bf16.msra.mxu0 %v6691
        %7097 = vmatpush.bf16.msra.mxu0 %v6683
        %7098 = vmatmul.bf16.gmra.mxu0 %v5454
        %v7099 = vpop.f32.mrf.mxu0
        %v7100 = vadd.f32 %v7071, %v7099
        %v7101 = vpop.f32.mrf.mxu0
        %v7102 = vadd.f32 %v7073, %v7101
        %7103 = vmatmul.bf16.gmra.mxu0 %v5458
        %v7104 = vpop.f32.mrf.mxu0
        %v7105 = vadd.f32 %v7076, %v7104
        %v7106 = vpop.f32.mrf.mxu0
        %v7107 = vadd.f32 %v7078, %v7106
        %7108 = vmatmul.bf16.gmra.mxu0 %v5462
        %v7109 = vpop.f32.mrf.mxu0
        %v7110 = vadd.f32 %v7081, %v7109
        %v7111 = vpop.f32.mrf.mxu0
        %v7112 = vadd.f32 %v7083, %v7111
        %7113 = vmatmul.bf16.gmra.mxu0 %v5466
        %v7114 = vpop.f32.mrf.mxu0
        %v7115 = vadd.f32 %v7086, %v7114
        %v7116 = vpop.f32.mrf.mxu0
        %v7117 = vadd.f32 %v7088, %v7116
        %7118 = vdwg.mxu0
        %7119 = vmatpush.bf16.msra.mxu0 %v6548
        %7120 = vmatpush.bf16.msra.mxu0 %v6540
        %7121 = vmatpush.bf16.msra.mxu0 %v6532
        %7122 = vmatpush.bf16.msra.mxu0 %v6524
        %7123 = vmatpush.bf16.msra.mxu0 %v6516
        %7124 = vmatpush.bf16.msra.mxu0 %v6508
        %7125 = vmatpush.bf16.msra.mxu0 %v6500
        %7126 = vmatpush.bf16.msra.mxu0 %v6492
        %7127 = vmatmul.bf16.gmra.mxu0 %v5451
        %v7128 = vpop.f32.mrf.mxu0
        %v7129 = vadd.f32 0.0, %v7128
        %v7130 = vpop.f32.mrf.mxu0
        %v7131 = vadd.f32 0.0, %v7130
        %7132 = vmatmul.bf16.gmra.mxu0 %v5455
        %v7133 = vpop.f32.mrf.mxu0
        %v7134 = vadd.f32 0.0, %v7133
        %v7135 = vpop.f32.mrf.mxu0
        %v7136 = vadd.f32 0.0, %v7135
        %7137 = vmatmul.bf16.gmra.mxu0 %v5459
        %v7138 = vpop.f32.mrf.mxu0
        %v7139 = vadd.f32 0.0, %v7138
        %v7140 = vpop.f32.mrf.mxu0
        %v7141 = vadd.f32 0.0, %v7140
        %7142 = vmatmul.bf16.gmra.mxu0 %v5463
        %v7143 = vpop.f32.mrf.mxu0
        %v7144 = vadd.f32 0.0, %v7143
        %v7145 = vpop.f32.mrf.mxu0
        %v7146 = vadd.f32 0.0, %v7145
        %7147 = vdwg.mxu0
        %7148 = vmatpush.bf16.msra.mxu0 %v6612
        %7149 = vmatpush.bf16.msra.mxu0 %v6604
        %7150 = vmatpush.bf16.msra.mxu0 %v6596
        %7151 = vmatpush.bf16.msra.mxu0 %v6588
        %7152 = vmatpush.bf16.msra.mxu0 %v6580
        %7153 = vmatpush.bf16.msra.mxu0 %v6572
        %7154 = vmatpush.bf16.msra.mxu0 %v6564
        %7155 = vmatpush.bf16.msra.mxu0 %v6556
        %7156 = vmatmul.bf16.gmra.mxu0 %v5452
        %v7157 = vpop.f32.mrf.mxu0
        %v7158 = vadd.f32 %v7129, %v7157
        %v7159 = vpop.f32.mrf.mxu0
        %v7160 = vadd.f32 %v7131, %v7159
        %7161 = vmatmul.bf16.gmra.mxu0 %v5456
        %v7162 = vpop.f32.mrf.mxu0
        %v7163 = vadd.f32 %v7134, %v7162
        %v7164 = vpop.f32.mrf.mxu0
        %v7165 = vadd.f32 %v7136, %v7164
        %7166 = vmatmul.bf16.gmra.mxu0 %v5460
        %v7167 = vpop.f32.mrf.mxu0
        %v7168 = vadd.f32 %v7139, %v7167
        %v7169 = vpop.f32.mrf.mxu0
        %v7170 = vadd.f32 %v7141, %v7169
        %7171 = vmatmul.bf16.gmra.mxu0 %v5464
        %v7172 = vpop.f32.mrf.mxu0
        %v7173 = vadd.f32 %v7144, %v7172
        %v7174 = vpop.f32.mrf.mxu0
        %v7175 = vadd.f32 %v7146, %v7174
        %7176 = vdwg.mxu0
        %7177 = vmatpush.bf16.msra.mxu0 %v6676
        %7178 = vmatpush.bf16.msra.mxu0 %v6668
        %7179 = vmatpush.bf16.msra.mxu0 %v6660
        %7180 = vmatpush.bf16.msra.mxu0 %v6652
        %7181 = vmatpush.bf16.msra.mxu0 %v6644
        %7182 = vmatpush.bf16.msra.mxu0 %v6636
        %7183 = vmatpush.bf16.msra.mxu0 %v6628
        %7184 = vmatpush.bf16.msra.mxu0 %v6620
        %7185 = vmatmul.bf16.gmra.mxu0 %v5453
        %v7186 = vpop.f32.mrf.mxu0
        %v7187 = vadd.f32 %v7158, %v7186
        %v7188 = vpop.f32.mrf.mxu0
        %v7189 = vadd.f32 %v7160, %v7188
        %7190 = vmatmul.bf16.gmra.mxu0 %v5457
        %v7191 = vpop.f32.mrf.mxu0
        %v7192 = vadd.f32 %v7163, %v7191
        %v7193 = vpop.f32.mrf.mxu0
        %v7194 = vadd.f32 %v7165, %v7193
        %7195 = vmatmul.bf16.gmra.mxu0 %v5461
        %v7196 = vpop.f32.mrf.mxu0
        %v7197 = vadd.f32 %v7168, %v7196
        %v7198 = vpop.f32.mrf.mxu0
        %v7199 = vadd.f32 %v7170, %v7198
        %7200 = vmatmul.bf16.gmra.mxu0 %v5465
        %v7201 = vpop.f32.mrf.mxu0
        %v7202 = vadd.f32 %v7173, %v7201
        %v7203 = vpop.f32.mrf.mxu0
        %v7204 = vadd.f32 %v7175, %v7203
        %7205 = vdwg.mxu0
        %7206 = vmatpush.bf16.msra.mxu0 %v6740
        %7207 = vmatpush.bf16.msra.mxu0 %v6732
        %7208 = vmatpush.bf16.msra.mxu0 %v6724
        %7209 = vmatpush.bf16.msra.mxu0 %v6716
        %7210 = vmatpush.bf16.msra.mxu0 %v6708
        %7211 = vmatpush.bf16.msra.mxu0 %v6700
        %7212 = vmatpush.bf16.msra.mxu0 %v6692
        %7213 = vmatpush.bf16.msra.mxu0 %v6684
        %7214 = vmatmul.bf16.gmra.mxu0 %v5454
        %v7215 = vpop.f32.mrf.mxu0
        %v7216 = vadd.f32 %v7187, %v7215
        %v7217 = vpop.f32.mrf.mxu0
        %v7218 = vadd.f32 %v7189, %v7217
        %7219 = vmatmul.bf16.gmra.mxu0 %v5458
        %v7220 = vpop.f32.mrf.mxu0
        %v7221 = vadd.f32 %v7192, %v7220
        %v7222 = vpop.f32.mrf.mxu0
        %v7223 = vadd.f32 %v7194, %v7222
        %7224 = vmatmul.bf16.gmra.mxu0 %v5462
        %v7225 = vpop.f32.mrf.mxu0
        %v7226 = vadd.f32 %v7197, %v7225
        %v7227 = vpop.f32.mrf.mxu0
        %v7228 = vadd.f32 %v7199, %v7227
        %7229 = vmatmul.bf16.gmra.mxu0 %v5466
        %v7230 = vpop.f32.mrf.mxu0
        %v7231 = vadd.f32 %v7202, %v7230
        %v7232 = vpop.f32.mrf.mxu0
        %v7233 = vadd.f32 %v7204, %v7232
        %7234 = vdwg.mxu0
        %7235 = vmatpush.bf16.msra.mxu0 %v6549
        %7236 = vmatpush.bf16.msra.mxu0 %v6541
        %7237 = vmatpush.bf16.msra.mxu0 %v6533
        %7238 = vmatpush.bf16.msra.mxu0 %v6525
        %7239 = vmatpush.bf16.msra.mxu0 %v6517
        %7240 = vmatpush.bf16.msra.mxu0 %v6509
        %7241 = vmatpush.bf16.msra.mxu0 %v6501
        %7242 = vmatpush.bf16.msra.mxu0 %v6493
        %7243 = vmatmul.bf16.gmra.mxu0 %v5451
        %v7244 = vpop.f32.mrf.mxu0
        %v7245 = vadd.f32 0.0, %v7244
        %v7246 = vpop.f32.mrf.mxu0
        %v7247 = vadd.f32 0.0, %v7246
        %7248 = vmatmul.bf16.gmra.mxu0 %v5455
        %v7249 = vpop.f32.mrf.mxu0
        %v7250 = vadd.f32 0.0, %v7249
        %v7251 = vpop.f32.mrf.mxu0
        %v7252 = vadd.f32 0.0, %v7251
        %7253 = vmatmul.bf16.gmra.mxu0 %v5459
        %v7254 = vpop.f32.mrf.mxu0
        %v7255 = vadd.f32 0.0, %v7254
        %v7256 = vpop.f32.mrf.mxu0
        %v7257 = vadd.f32 0.0, %v7256
        %7258 = vmatmul.bf16.gmra.mxu0 %v5463
        %v7259 = vpop.f32.mrf.mxu0
        %v7260 = vadd.f32 0.0, %v7259
        %v7261 = vpop.f32.mrf.mxu0
        %v7262 = vadd.f32 0.0, %v7261
        %7263 = vdwg.mxu0
        %7264 = vmatpush.bf16.msra.mxu0 %v6613
        %7265 = vmatpush.bf16.msra.mxu0 %v6605
        %7266 = vmatpush.bf16.msra.mxu0 %v6597
        %7267 = vmatpush.bf16.msra.mxu0 %v6589
        %7268 = vmatpush.bf16.msra.mxu0 %v6581
        %7269 = vmatpush.bf16.msra.mxu0 %v6573
        %7270 = vmatpush.bf16.msra.mxu0 %v6565
        %7271 = vmatpush.bf16.msra.mxu0 %v6557
        %7272 = vmatmul.bf16.gmra.mxu0 %v5452
        %v7273 = vpop.f32.mrf.mxu0
        %v7274 = vadd.f32 %v7245, %v7273
        %v7275 = vpop.f32.mrf.mxu0
        %v7276 = vadd.f32 %v7247, %v7275
        %7277 = vmatmul.bf16.gmra.mxu0 %v5456
        %v7278 = vpop.f32.mrf.mxu0
        %v7279 = vadd.f32 %v7250, %v7278
        %v7280 = vpop.f32.mrf.mxu0
        %v7281 = vadd.f32 %v7252, %v7280
        %7282 = vmatmul.bf16.gmra.mxu0 %v5460
        %v7283 = vpop.f32.mrf.mxu0
        %v7284 = vadd.f32 %v7255, %v7283
        %v7285 = vpop.f32.mrf.mxu0
        %v7286 = vadd.f32 %v7257, %v7285
        %7287 = vmatmul.bf16.gmra.mxu0 %v5464
        %v7288 = vpop.f32.mrf.mxu0
        %v7289 = vadd.f32 %v7260, %v7288
        %v7290 = vpop.f32.mrf.mxu0
        %v7291 = vadd.f32 %v7262, %v7290
        %7292 = vdwg.mxu0
        %7293 = vmatpush.bf16.msra.mxu0 %v6677
        %7294 = vmatpush.bf16.msra.mxu0 %v6669
        %7295 = vmatpush.bf16.msra.mxu0 %v6661
        %7296 = vmatpush.bf16.msra.mxu0 %v6653
        %7297 = vmatpush.bf16.msra.mxu0 %v6645
        %7298 = vmatpush.bf16.msra.mxu0 %v6637
        %7299 = vmatpush.bf16.msra.mxu0 %v6629
        %7300 = vmatpush.bf16.msra.mxu0 %v6621
        %7301 = vmatmul.bf16.gmra.mxu0 %v5453
        %v7302 = vpop.f32.mrf.mxu0
        %v7303 = vadd.f32 %v7274, %v7302
        %v7304 = vpop.f32.mrf.mxu0
        %v7305 = vadd.f32 %v7276, %v7304
        %7306 = vmatmul.bf16.gmra.mxu0 %v5457
        %v7307 = vpop.f32.mrf.mxu0
        %v7308 = vadd.f32 %v7279, %v7307
        %v7309 = vpop.f32.mrf.mxu0
        %v7310 = vadd.f32 %v7281, %v7309
        %7311 = vmatmul.bf16.gmra.mxu0 %v5461
        %v7312 = vpop.f32.mrf.mxu0
        %v7313 = vadd.f32 %v7284, %v7312
        %v7314 = vpop.f32.mrf.mxu0
        %v7315 = vadd.f32 %v7286, %v7314
        %7316 = vmatmul.bf16.gmra.mxu0 %v5465
        %v7317 = vpop.f32.mrf.mxu0
        %v7318 = vadd.f32 %v7289, %v7317
        %v7319 = vpop.f32.mrf.mxu0
        %v7320 = vadd.f32 %v7291, %v7319
        %7321 = vdwg.mxu0
        %7322 = vmatpush.bf16.msra.mxu0 %v6741
        %7323 = vmatpush.bf16.msra.mxu0 %v6733
        %7324 = vmatpush.bf16.msra.mxu0 %v6725
        %7325 = vmatpush.bf16.msra.mxu0 %v6717
        %7326 = vmatpush.bf16.msra.mxu0 %v6709
        %7327 = vmatpush.bf16.msra.mxu0 %v6701
        %7328 = vmatpush.bf16.msra.mxu0 %v6693
        %7329 = vmatpush.bf16.msra.mxu0 %v6685
        %7330 = vmatmul.bf16.gmra.mxu0 %v5454
        %v7331 = vpop.f32.mrf.mxu0
        %v7332 = vadd.f32 %v7303, %v7331
        %v7333 = vpop.f32.mrf.mxu0
        %v7334 = vadd.f32 %v7305, %v7333
        %7335 = vmatmul.bf16.gmra.mxu0 %v5458
        %v7336 = vpop.f32.mrf.mxu0
        %v7337 = vadd.f32 %v7308, %v7336
        %v7338 = vpop.f32.mrf.mxu0
        %v7339 = vadd.f32 %v7310, %v7338
        %7340 = vmatmul.bf16.gmra.mxu0 %v5462
        %v7341 = vpop.f32.mrf.mxu0
        %v7342 = vadd.f32 %v7313, %v7341
        %v7343 = vpop.f32.mrf.mxu0
        %v7344 = vadd.f32 %v7315, %v7343
        %7345 = vmatmul.bf16.gmra.mxu0 %v5466
        %v7346 = vpop.f32.mrf.mxu0
        %v7347 = vadd.f32 %v7318, %v7346
        %v7348 = vpop.f32.mrf.mxu0
        %v7349 = vadd.f32 %v7320, %v7348
        %7350 = vdwg.mxu0
        %7351 = vmatpush.bf16.msra.mxu0 %v6550
        %7352 = vmatpush.bf16.msra.mxu0 %v6542
        %7353 = vmatpush.bf16.msra.mxu0 %v6534
        %7354 = vmatpush.bf16.msra.mxu0 %v6526
        %7355 = vmatpush.bf16.msra.mxu0 %v6518
        %7356 = vmatpush.bf16.msra.mxu0 %v6510
        %7357 = vmatpush.bf16.msra.mxu0 %v6502
        %7358 = vmatpush.bf16.msra.mxu0 %v6494
        %7359 = vmatmul.bf16.gmra.mxu0 %v5451
        %v7360 = vpop.f32.mrf.mxu0
        %v7361 = vadd.f32 0.0, %v7360
        %v7362 = vpop.f32.mrf.mxu0
        %v7363 = vadd.f32 0.0, %v7362
        %7364 = vmatmul.bf16.gmra.mxu0 %v5455
        %v7365 = vpop.f32.mrf.mxu0
        %v7366 = vadd.f32 0.0, %v7365
        %v7367 = vpop.f32.mrf.mxu0
        %v7368 = vadd.f32 0.0, %v7367
        %7369 = vmatmul.bf16.gmra.mxu0 %v5459
        %v7370 = vpop.f32.mrf.mxu0
        %v7371 = vadd.f32 0.0, %v7370
        %v7372 = vpop.f32.mrf.mxu0
        %v7373 = vadd.f32 0.0, %v7372
        %7374 = vmatmul.bf16.gmra.mxu0 %v5463
        %v7375 = vpop.f32.mrf.mxu0
        %v7376 = vadd.f32 0.0, %v7375
        %v7377 = vpop.f32.mrf.mxu0
        %v7378 = vadd.f32 0.0, %v7377
        %7379 = vdwg.mxu0
        %7380 = vmatpush.bf16.msra.mxu0 %v6614
        %7381 = vmatpush.bf16.msra.mxu0 %v6606
        %7382 = vmatpush.bf16.msra.mxu0 %v6598
        %7383 = vmatpush.bf16.msra.mxu0 %v6590
        %7384 = vmatpush.bf16.msra.mxu0 %v6582
        %7385 = vmatpush.bf16.msra.mxu0 %v6574
        %7386 = vmatpush.bf16.msra.mxu0 %v6566
        %7387 = vmatpush.bf16.msra.mxu0 %v6558
        %7388 = vmatmul.bf16.gmra.mxu0 %v5452
        %v7389 = vpop.f32.mrf.mxu0
        %v7390 = vadd.f32 %v7361, %v7389
        %v7391 = vpop.f32.mrf.mxu0
        %v7392 = vadd.f32 %v7363, %v7391
        %7393 = vmatmul.bf16.gmra.mxu0 %v5456
        %v7394 = vpop.f32.mrf.mxu0
        %v7395 = vadd.f32 %v7366, %v7394
        %v7396 = vpop.f32.mrf.mxu0
        %v7397 = vadd.f32 %v7368, %v7396
        %7398 = vmatmul.bf16.gmra.mxu0 %v5460
        %v7399 = vpop.f32.mrf.mxu0
        %v7400 = vadd.f32 %v7371, %v7399
        %v7401 = vpop.f32.mrf.mxu0
        %v7402 = vadd.f32 %v7373, %v7401
        %7403 = vmatmul.bf16.gmra.mxu0 %v5464
        %v7404 = vpop.f32.mrf.mxu0
        %v7405 = vadd.f32 %v7376, %v7404
        %v7406 = vpop.f32.mrf.mxu0
        %v7407 = vadd.f32 %v7378, %v7406
        %7408 = vdwg.mxu0
        %7409 = vmatpush.bf16.msra.mxu0 %v6678
        %7410 = vmatpush.bf16.msra.mxu0 %v6670
        %7411 = vmatpush.bf16.msra.mxu0 %v6662
        %7412 = vmatpush.bf16.msra.mxu0 %v6654
        %7413 = vmatpush.bf16.msra.mxu0 %v6646
        %7414 = vmatpush.bf16.msra.mxu0 %v6638
        %7415 = vmatpush.bf16.msra.mxu0 %v6630
        %7416 = vmatpush.bf16.msra.mxu0 %v6622
        %7417 = vmatmul.bf16.gmra.mxu0 %v5453
        %v7418 = vpop.f32.mrf.mxu0
        %v7419 = vadd.f32 %v7390, %v7418
        %v7420 = vpop.f32.mrf.mxu0
        %v7421 = vadd.f32 %v7392, %v7420
        %7422 = vmatmul.bf16.gmra.mxu0 %v5457
        %v7423 = vpop.f32.mrf.mxu0
        %v7424 = vadd.f32 %v7395, %v7423
        %v7425 = vpop.f32.mrf.mxu0
        %v7426 = vadd.f32 %v7397, %v7425
        %7427 = vmatmul.bf16.gmra.mxu0 %v5461
        %v7428 = vpop.f32.mrf.mxu0
        %v7429 = vadd.f32 %v7400, %v7428
        %v7430 = vpop.f32.mrf.mxu0
        %v7431 = vadd.f32 %v7402, %v7430
        %7432 = vmatmul.bf16.gmra.mxu0 %v5465
        %v7433 = vpop.f32.mrf.mxu0
        %v7434 = vadd.f32 %v7405, %v7433
        %v7435 = vpop.f32.mrf.mxu0
        %v7436 = vadd.f32 %v7407, %v7435
        %7437 = vdwg.mxu0
        %7438 = vmatpush.bf16.msra.mxu0 %v6742
        %7439 = vmatpush.bf16.msra.mxu0 %v6734
        %7440 = vmatpush.bf16.msra.mxu0 %v6726
        %7441 = vmatpush.bf16.msra.mxu0 %v6718
        %7442 = vmatpush.bf16.msra.mxu0 %v6710
        %7443 = vmatpush.bf16.msra.mxu0 %v6702
        %7444 = vmatpush.bf16.msra.mxu0 %v6694
        %7445 = vmatpush.bf16.msra.mxu0 %v6686
        %7446 = vmatmul.bf16.gmra.mxu0 %v5454
        %v7447 = vpop.f32.mrf.mxu0
        %v7448 = vadd.f32 %v7419, %v7447
        %v7449 = vpop.f32.mrf.mxu0
        %v7450 = vadd.f32 %v7421, %v7449
        %7451 = vmatmul.bf16.gmra.mxu0 %v5458
        %v7452 = vpop.f32.mrf.mxu0
        %v7453 = vadd.f32 %v7424, %v7452
        %v7454 = vpop.f32.mrf.mxu0
        %v7455 = vadd.f32 %v7426, %v7454
        %7456 = vmatmul.bf16.gmra.mxu0 %v5462
        %v7457 = vpop.f32.mrf.mxu0
        %v7458 = vadd.f32 %v7429, %v7457
        %v7459 = vpop.f32.mrf.mxu0
        %v7460 = vadd.f32 %v7431, %v7459
        %7461 = vmatmul.bf16.gmra.mxu0 %v5466
        %v7462 = vpop.f32.mrf.mxu0
        %v7463 = vadd.f32 %v7434, %v7462
        %v7464 = vpop.f32.mrf.mxu0
        %v7465 = vadd.f32 %v7436, %v7464
        %7466 = vdwg.mxu0
        %7467 = vmatpush.bf16.msra.mxu0 %v6551
        %7468 = vmatpush.bf16.msra.mxu0 %v6543
        %7469 = vmatpush.bf16.msra.mxu0 %v6535
        %7470 = vmatpush.bf16.msra.mxu0 %v6527
        %7471 = vmatpush.bf16.msra.mxu0 %v6519
        %7472 = vmatpush.bf16.msra.mxu0 %v6511
        %7473 = vmatpush.bf16.msra.mxu0 %v6503
        %7474 = vmatpush.bf16.msra.mxu0 %v6495
        %7475 = vmatmul.bf16.gmra.mxu0 %v5451
        %v7476 = vpop.f32.mrf.mxu0
        %v7477 = vadd.f32 0.0, %v7476
        %v7478 = vpop.f32.mrf.mxu0
        %v7479 = vadd.f32 0.0, %v7478
        %7480 = vmatmul.bf16.gmra.mxu0 %v5455
        %v7481 = vpop.f32.mrf.mxu0
        %v7482 = vadd.f32 0.0, %v7481
        %v7483 = vpop.f32.mrf.mxu0
        %v7484 = vadd.f32 0.0, %v7483
        %7485 = vmatmul.bf16.gmra.mxu0 %v5459
        %v7486 = vpop.f32.mrf.mxu0
        %v7487 = vadd.f32 0.0, %v7486
        %v7488 = vpop.f32.mrf.mxu0
        %v7489 = vadd.f32 0.0, %v7488
        %7490 = vmatmul.bf16.gmra.mxu0 %v5463
        %v7491 = vpop.f32.mrf.mxu0
        %v7492 = vadd.f32 0.0, %v7491
        %v7493 = vpop.f32.mrf.mxu0
        %v7494 = vadd.f32 0.0, %v7493
        %7495 = vdwg.mxu0
        %7496 = vmatpush.bf16.msra.mxu0 %v6615
        %7497 = vmatpush.bf16.msra.mxu0 %v6607
        %7498 = vmatpush.bf16.msra.mxu0 %v6599
        %7499 = vmatpush.bf16.msra.mxu0 %v6591
        %7500 = vmatpush.bf16.msra.mxu0 %v6583
        %7501 = vmatpush.bf16.msra.mxu0 %v6575
        %7502 = vmatpush.bf16.msra.mxu0 %v6567
        %7503 = vmatpush.bf16.msra.mxu0 %v6559
        %7504 = vmatmul.bf16.gmra.mxu0 %v5452
        %v7505 = vpop.f32.mrf.mxu0
        %v7506 = vadd.f32 %v7477, %v7505
        %v7507 = vpop.f32.mrf.mxu0
        %v7508 = vadd.f32 %v7479, %v7507
        %7509 = vmatmul.bf16.gmra.mxu0 %v5456
        %v7510 = vpop.f32.mrf.mxu0
        %v7511 = vadd.f32 %v7482, %v7510
        %v7512 = vpop.f32.mrf.mxu0
        %v7513 = vadd.f32 %v7484, %v7512
        %7514 = vmatmul.bf16.gmra.mxu0 %v5460
        %v7515 = vpop.f32.mrf.mxu0
        %v7516 = vadd.f32 %v7487, %v7515
        %v7517 = vpop.f32.mrf.mxu0
        %v7518 = vadd.f32 %v7489, %v7517
        %7519 = vmatmul.bf16.gmra.mxu0 %v5464
        %v7520 = vpop.f32.mrf.mxu0
        %v7521 = vadd.f32 %v7492, %v7520
        %v7522 = vpop.f32.mrf.mxu0
        %v7523 = vadd.f32 %v7494, %v7522
        %7524 = vdwg.mxu0
        %7525 = vmatpush.bf16.msra.mxu0 %v6679
        %7526 = vmatpush.bf16.msra.mxu0 %v6671
        %7527 = vmatpush.bf16.msra.mxu0 %v6663
        %7528 = vmatpush.bf16.msra.mxu0 %v6655
        %7529 = vmatpush.bf16.msra.mxu0 %v6647
        %7530 = vmatpush.bf16.msra.mxu0 %v6639
        %7531 = vmatpush.bf16.msra.mxu0 %v6631
        %7532 = vmatpush.bf16.msra.mxu0 %v6623
        %7533 = vmatmul.bf16.gmra.mxu0 %v5453
        %v7534 = vpop.f32.mrf.mxu0
        %v7535 = vadd.f32 %v7506, %v7534
        %v7536 = vpop.f32.mrf.mxu0
        %v7537 = vadd.f32 %v7508, %v7536
        %7538 = vmatmul.bf16.gmra.mxu0 %v5457
        %v7539 = vpop.f32.mrf.mxu0
        %v7540 = vadd.f32 %v7511, %v7539
        %v7541 = vpop.f32.mrf.mxu0
        %v7542 = vadd.f32 %v7513, %v7541
        %7543 = vmatmul.bf16.gmra.mxu0 %v5461
        %v7544 = vpop.f32.mrf.mxu0
        %v7545 = vadd.f32 %v7516, %v7544
        %v7546 = vpop.f32.mrf.mxu0
        %v7547 = vadd.f32 %v7518, %v7546
        %7548 = vmatmul.bf16.gmra.mxu0 %v5465
        %v7549 = vpop.f32.mrf.mxu0
        %v7550 = vadd.f32 %v7521, %v7549
        %v7551 = vpop.f32.mrf.mxu0
        %v7552 = vadd.f32 %v7523, %v7551
        %7553 = vdwg.mxu0
        %7554 = vmatpush.bf16.msra.mxu0 %v6743
        %7555 = vmatpush.bf16.msra.mxu0 %v6735
        %7556 = vmatpush.bf16.msra.mxu0 %v6727
        %7557 = vmatpush.bf16.msra.mxu0 %v6719
        %7558 = vmatpush.bf16.msra.mxu0 %v6711
        %7559 = vmatpush.bf16.msra.mxu0 %v6703
        %7560 = vmatpush.bf16.msra.mxu0 %v6695
        %7561 = vmatpush.bf16.msra.mxu0 %v6687
        %7562 = vmatmul.bf16.gmra.mxu0 %v5454
        %v7563 = vpop.f32.mrf.mxu0
        %v7564 = vadd.f32 %v7535, %v7563
        %v7565 = vpop.f32.mrf.mxu0
        %v7566 = vadd.f32 %v7537, %v7565
        %7567 = vmatmul.bf16.gmra.mxu0 %v5458
        %v7568 = vpop.f32.mrf.mxu0
        %v7569 = vadd.f32 %v7540, %v7568
        %v7570 = vpop.f32.mrf.mxu0
        %v7571 = vadd.f32 %v7542, %v7570
        %7572 = vmatmul.bf16.gmra.mxu0 %v5462
        %v7573 = vpop.f32.mrf.mxu0
        %v7574 = vadd.f32 %v7545, %v7573
        %v7575 = vpop.f32.mrf.mxu0
        %v7576 = vadd.f32 %v7547, %v7575
        %7577 = vmatmul.bf16.gmra.mxu0 %v5466
        %v7578 = vpop.f32.mrf.mxu0
        %v7579 = vadd.f32 %v7550, %v7578
        %v7580 = vpop.f32.mrf.mxu0
        %v7581 = vadd.f32 %v7552, %v7580
        %7582 = vdwg.mxu0
        %7583 = vmatpush.bf16.msra.mxu0 %v6552
        %7584 = vmatpush.bf16.msra.mxu0 %v6544
        %7585 = vmatpush.bf16.msra.mxu0 %v6536
        %7586 = vmatpush.bf16.msra.mxu0 %v6528
        %7587 = vmatpush.bf16.msra.mxu0 %v6520
        %7588 = vmatpush.bf16.msra.mxu0 %v6512
        %7589 = vmatpush.bf16.msra.mxu0 %v6504
        %7590 = vmatpush.bf16.msra.mxu0 %v6496
        %7591 = vmatmul.bf16.gmra.mxu0 %v5451
        %v7592 = vpop.f32.mrf.mxu0
        %v7593 = vadd.f32 0.0, %v7592
        %v7594 = vpop.f32.mrf.mxu0
        %v7595 = vadd.f32 0.0, %v7594
        %7596 = vmatmul.bf16.gmra.mxu0 %v5455
        %v7597 = vpop.f32.mrf.mxu0
        %v7598 = vadd.f32 0.0, %v7597
        %v7599 = vpop.f32.mrf.mxu0
        %v7600 = vadd.f32 0.0, %v7599
        %7601 = vmatmul.bf16.gmra.mxu0 %v5459
        %v7602 = vpop.f32.mrf.mxu0
        %v7603 = vadd.f32 0.0, %v7602
        %v7604 = vpop.f32.mrf.mxu0
        %v7605 = vadd.f32 0.0, %v7604
        %7606 = vmatmul.bf16.gmra.mxu0 %v5463
        %v7607 = vpop.f32.mrf.mxu0
        %v7608 = vadd.f32 0.0, %v7607
        %v7609 = vpop.f32.mrf.mxu0
        %v7610 = vadd.f32 0.0, %v7609
        %7611 = vdwg.mxu0
        %7612 = vmatpush.bf16.msra.mxu0 %v6616
        %7613 = vmatpush.bf16.msra.mxu0 %v6608
        %7614 = vmatpush.bf16.msra.mxu0 %v6600
        %7615 = vmatpush.bf16.msra.mxu0 %v6592
        %7616 = vmatpush.bf16.msra.mxu0 %v6584
        %7617 = vmatpush.bf16.msra.mxu0 %v6576
        %7618 = vmatpush.bf16.msra.mxu0 %v6568
        %7619 = vmatpush.bf16.msra.mxu0 %v6560
        %7620 = vmatmul.bf16.gmra.mxu0 %v5452
        %v7621 = vpop.f32.mrf.mxu0
        %v7622 = vadd.f32 %v7593, %v7621
        %v7623 = vpop.f32.mrf.mxu0
        %v7624 = vadd.f32 %v7595, %v7623
        %7625 = vmatmul.bf16.gmra.mxu0 %v5456
        %v7626 = vpop.f32.mrf.mxu0
        %v7627 = vadd.f32 %v7598, %v7626
        %v7628 = vpop.f32.mrf.mxu0
        %v7629 = vadd.f32 %v7600, %v7628
        %7630 = vmatmul.bf16.gmra.mxu0 %v5460
        %v7631 = vpop.f32.mrf.mxu0
        %v7632 = vadd.f32 %v7603, %v7631
        %v7633 = vpop.f32.mrf.mxu0
        %v7634 = vadd.f32 %v7605, %v7633
        %7635 = vmatmul.bf16.gmra.mxu0 %v5464
        %v7636 = vpop.f32.mrf.mxu0
        %v7637 = vadd.f32 %v7608, %v7636
        %v7638 = vpop.f32.mrf.mxu0
        %v7639 = vadd.f32 %v7610, %v7638
        %7640 = vdwg.mxu0
        %7641 = vmatpush.bf16.msra.mxu0 %v6680
        %7642 = vmatpush.bf16.msra.mxu0 %v6672
        %7643 = vmatpush.bf16.msra.mxu0 %v6664
        %7644 = vmatpush.bf16.msra.mxu0 %v6656
        %7645 = vmatpush.bf16.msra.mxu0 %v6648
        %7646 = vmatpush.bf16.msra.mxu0 %v6640
        %7647 = vmatpush.bf16.msra.mxu0 %v6632
        %7648 = vmatpush.bf16.msra.mxu0 %v6624
        %7649 = vmatmul.bf16.gmra.mxu0 %v5453
        %v7650 = vpop.f32.mrf.mxu0
        %v7651 = vadd.f32 %v7622, %v7650
        %v7652 = vpop.f32.mrf.mxu0
        %v7653 = vadd.f32 %v7624, %v7652
        %7654 = vmatmul.bf16.gmra.mxu0 %v5457
        %v7655 = vpop.f32.mrf.mxu0
        %v7656 = vadd.f32 %v7627, %v7655
        %v7657 = vpop.f32.mrf.mxu0
        %v7658 = vadd.f32 %v7629, %v7657
        %7659 = vmatmul.bf16.gmra.mxu0 %v5461
        %v7660 = vpop.f32.mrf.mxu0
        %v7661 = vadd.f32 %v7632, %v7660
        %v7662 = vpop.f32.mrf.mxu0
        %v7663 = vadd.f32 %v7634, %v7662
        %7664 = vmatmul.bf16.gmra.mxu0 %v5465
        %v7665 = vpop.f32.mrf.mxu0
        %v7666 = vadd.f32 %v7637, %v7665
        %v7667 = vpop.f32.mrf.mxu0
        %v7668 = vadd.f32 %v7639, %v7667
        %7669 = vdwg.mxu0
        %7670 = vmatpush.bf16.msra.mxu0 %v6744
        %7671 = vmatpush.bf16.msra.mxu0 %v6736
        %7672 = vmatpush.bf16.msra.mxu0 %v6728
        %7673 = vmatpush.bf16.msra.mxu0 %v6720
        %7674 = vmatpush.bf16.msra.mxu0 %v6712
        %7675 = vmatpush.bf16.msra.mxu0 %v6704
        %7676 = vmatpush.bf16.msra.mxu0 %v6696
        %7677 = vmatpush.bf16.msra.mxu0 %v6688
        %7678 = vmatmul.bf16.gmra.mxu0 %v5454
        %v7679 = vpop.f32.mrf.mxu0
        %v7680 = vadd.f32 %v7651, %v7679
        %v7681 = vpop.f32.mrf.mxu0
        %v7682 = vadd.f32 %v7653, %v7681
        %7683 = vmatmul.bf16.gmra.mxu0 %v5458
        %v7684 = vpop.f32.mrf.mxu0
        %v7685 = vadd.f32 %v7656, %v7684
        %v7686 = vpop.f32.mrf.mxu0
        %v7687 = vadd.f32 %v7658, %v7686
        %7688 = vmatmul.bf16.gmra.mxu0 %v5462
        %v7689 = vpop.f32.mrf.mxu0
        %v7690 = vadd.f32 %v7661, %v7689
        %v7691 = vpop.f32.mrf.mxu0
        %v7692 = vadd.f32 %v7663, %v7691
        %7693 = vmatmul.bf16.gmra.mxu0 %v5466
        %v7694 = vpop.f32.mrf.mxu0
        %v7695 = vadd.f32 %v7666, %v7694
        %v7696 = vpop.f32.mrf.mxu0
        %v7697 = vadd.f32 %v7668, %v7696
        %7698 = vdwg.mxu0
        %7699 = vmatpush.bf16.msra.mxu0 %v6553
        %7700 = vmatpush.bf16.msra.mxu0 %v6545
        %7701 = vmatpush.bf16.msra.mxu0 %v6537
        %7702 = vmatpush.bf16.msra.mxu0 %v6529
        %7703 = vmatpush.bf16.msra.mxu0 %v6521
        %7704 = vmatpush.bf16.msra.mxu0 %v6513
        %7705 = vmatpush.bf16.msra.mxu0 %v6505
        %7706 = vmatpush.bf16.msra.mxu0 %v6497
        %7707 = vmatmul.bf16.gmra.mxu0 %v5451
        %v7708 = vpop.f32.mrf.mxu0
        %v7709 = vadd.f32 0.0, %v7708
        %v7710 = vpop.f32.mrf.mxu0
        %v7711 = vadd.f32 0.0, %v7710
        %7712 = vmatmul.bf16.gmra.mxu0 %v5455
        %v7713 = vpop.f32.mrf.mxu0
        %v7714 = vadd.f32 0.0, %v7713
        %v7715 = vpop.f32.mrf.mxu0
        %v7716 = vadd.f32 0.0, %v7715
        %7717 = vmatmul.bf16.gmra.mxu0 %v5459
        %v7718 = vpop.f32.mrf.mxu0
        %v7719 = vadd.f32 0.0, %v7718
        %v7720 = vpop.f32.mrf.mxu0
        %v7721 = vadd.f32 0.0, %v7720
        %7722 = vmatmul.bf16.gmra.mxu0 %v5463
        %v7723 = vpop.f32.mrf.mxu0
        %v7724 = vadd.f32 0.0, %v7723
        %v7725 = vpop.f32.mrf.mxu0
        %v7726 = vadd.f32 0.0, %v7725
        %7727 = vdwg.mxu0
        %7728 = vmatpush.bf16.msra.mxu0 %v6617
        %7729 = vmatpush.bf16.msra.mxu0 %v6609
        %7730 = vmatpush.bf16.msra.mxu0 %v6601
        %7731 = vmatpush.bf16.msra.mxu0 %v6593
        %7732 = vmatpush.bf16.msra.mxu0 %v6585
        %7733 = vmatpush.bf16.msra.mxu0 %v6577
        %7734 = vmatpush.bf16.msra.mxu0 %v6569
        %7735 = vmatpush.bf16.msra.mxu0 %v6561
        %7736 = vmatmul.bf16.gmra.mxu0 %v5452
        %v7737 = vpop.f32.mrf.mxu0
        %v7738 = vadd.f32 %v7709, %v7737
        %v7739 = vpop.f32.mrf.mxu0
        %v7740 = vadd.f32 %v7711, %v7739
        %7741 = vmatmul.bf16.gmra.mxu0 %v5456
        %v7742 = vpop.f32.mrf.mxu0
        %v7743 = vadd.f32 %v7714, %v7742
        %v7744 = vpop.f32.mrf.mxu0
        %v7745 = vadd.f32 %v7716, %v7744
        %7746 = vmatmul.bf16.gmra.mxu0 %v5460
        %v7747 = vpop.f32.mrf.mxu0
        %v7748 = vadd.f32 %v7719, %v7747
        %v7749 = vpop.f32.mrf.mxu0
        %v7750 = vadd.f32 %v7721, %v7749
        %7751 = vmatmul.bf16.gmra.mxu0 %v5464
        %v7752 = vpop.f32.mrf.mxu0
        %v7753 = vadd.f32 %v7724, %v7752
        %v7754 = vpop.f32.mrf.mxu0
        %v7755 = vadd.f32 %v7726, %v7754
        %7756 = vdwg.mxu0
        %7757 = vmatpush.bf16.msra.mxu0 %v6681
        %7758 = vmatpush.bf16.msra.mxu0 %v6673
        %7759 = vmatpush.bf16.msra.mxu0 %v6665
        %7760 = vmatpush.bf16.msra.mxu0 %v6657
        %7761 = vmatpush.bf16.msra.mxu0 %v6649
        %7762 = vmatpush.bf16.msra.mxu0 %v6641
        %7763 = vmatpush.bf16.msra.mxu0 %v6633
        %7764 = vmatpush.bf16.msra.mxu0 %v6625
        %7765 = vmatmul.bf16.gmra.mxu0 %v5453
        %v7766 = vpop.f32.mrf.mxu0
        %v7767 = vadd.f32 %v7738, %v7766
        %v7768 = vpop.f32.mrf.mxu0
        %v7769 = vadd.f32 %v7740, %v7768
        %7770 = vmatmul.bf16.gmra.mxu0 %v5457
        %v7771 = vpop.f32.mrf.mxu0
        %v7772 = vadd.f32 %v7743, %v7771
        %v7773 = vpop.f32.mrf.mxu0
        %v7774 = vadd.f32 %v7745, %v7773
        %7775 = vmatmul.bf16.gmra.mxu0 %v5461
        %v7776 = vpop.f32.mrf.mxu0
        %v7777 = vadd.f32 %v7748, %v7776
        %v7778 = vpop.f32.mrf.mxu0
        %v7779 = vadd.f32 %v7750, %v7778
        %7780 = vmatmul.bf16.gmra.mxu0 %v5465
        %v7781 = vpop.f32.mrf.mxu0
        %v7782 = vadd.f32 %v7753, %v7781
        %v7783 = vpop.f32.mrf.mxu0
        %v7784 = vadd.f32 %v7755, %v7783
        %7785 = vdwg.mxu0
        %7786 = vmatpush.bf16.msra.mxu0 %v6745
        %7787 = vmatpush.bf16.msra.mxu0 %v6737
        %7788 = vmatpush.bf16.msra.mxu0 %v6729
        %7789 = vmatpush.bf16.msra.mxu0 %v6721
        %7790 = vmatpush.bf16.msra.mxu0 %v6713
        %7791 = vmatpush.bf16.msra.mxu0 %v6705
        %7792 = vmatpush.bf16.msra.mxu0 %v6697
        %7793 = vmatpush.bf16.msra.mxu0 %v6689
        %7794 = vmatmul.bf16.gmra.mxu0 %v5454
        %v7795 = vpop.f32.mrf.mxu0
        %v7796 = vadd.f32 %v7767, %v7795
        %v7797 = vpop.f32.mrf.mxu0
        %v7798 = vadd.f32 %v7769, %v7797
        %7799 = vmatmul.bf16.gmra.mxu0 %v5458
        %v7800 = vpop.f32.mrf.mxu0
        %v7801 = vadd.f32 %v7772, %v7800
        %v7802 = vpop.f32.mrf.mxu0
        %v7803 = vadd.f32 %v7774, %v7802
        %7804 = vmatmul.bf16.gmra.mxu0 %v5462
        %v7805 = vpop.f32.mrf.mxu0
        %v7806 = vadd.f32 %v7777, %v7805
        %v7807 = vpop.f32.mrf.mxu0
        %v7808 = vadd.f32 %v7779, %v7807
        %7809 = vmatmul.bf16.gmra.mxu0 %v5466
        %v7810 = vpop.f32.mrf.mxu0
        %v7811 = vadd.f32 %v7782, %v7810
        %v7812 = vpop.f32.mrf.mxu0
        %v7813 = vadd.f32 %v7784, %v7812
        %7814 = vdwg.mxu0
        %7815 = vmatpush.bf16.msra.mxu0 %v6554
        %7816 = vmatpush.bf16.msra.mxu0 %v6546
        %7817 = vmatpush.bf16.msra.mxu0 %v6538
        %7818 = vmatpush.bf16.msra.mxu0 %v6530
        %7819 = vmatpush.bf16.msra.mxu0 %v6522
        %7820 = vmatpush.bf16.msra.mxu0 %v6514
        %7821 = vmatpush.bf16.msra.mxu0 %v6506
        %7822 = vmatpush.bf16.msra.mxu0 %v6498
        %7823 = vmatmul.bf16.gmra.mxu0 %v5451
        %v7824 = vpop.f32.mrf.mxu0
        %v7825 = vadd.f32 0.0, %v7824
        %v7826 = vpop.f32.mrf.mxu0
        %v7827 = vadd.f32 0.0, %v7826
        %7828 = vmatmul.bf16.gmra.mxu0 %v5455
        %v7829 = vpop.f32.mrf.mxu0
        %v7830 = vadd.f32 0.0, %v7829
        %v7831 = vpop.f32.mrf.mxu0
        %v7832 = vadd.f32 0.0, %v7831
        %7833 = vmatmul.bf16.gmra.mxu0 %v5459
        %v7834 = vpop.f32.mrf.mxu0
        %v7835 = vadd.f32 0.0, %v7834
        %v7836 = vpop.f32.mrf.mxu0
        %v7837 = vadd.f32 0.0, %v7836
        %7838 = vmatmul.bf16.gmra.mxu0 %v5463
        %v7839 = vpop.f32.mrf.mxu0
        %v7840 = vadd.f32 0.0, %v7839
        %v7841 = vpop.f32.mrf.mxu0
        %v7842 = vadd.f32 0.0, %v7841
        %7843 = vdwg.mxu0
        %7844 = vmatpush.bf16.msra.mxu0 %v6618
        %7845 = vmatpush.bf16.msra.mxu0 %v6610
        %7846 = vmatpush.bf16.msra.mxu0 %v6602
        %7847 = vmatpush.bf16.msra.mxu0 %v6594
        %7848 = vmatpush.bf16.msra.mxu0 %v6586
        %7849 = vmatpush.bf16.msra.mxu0 %v6578
        %7850 = vmatpush.bf16.msra.mxu0 %v6570
        %7851 = vmatpush.bf16.msra.mxu0 %v6562
        %7852 = vmatmul.bf16.gmra.mxu0 %v5452
        %v7853 = vpop.f32.mrf.mxu0
        %v7854 = vadd.f32 %v7825, %v7853
        %v7855 = vpop.f32.mrf.mxu0
        %v7856 = vadd.f32 %v7827, %v7855
        %7857 = vmatmul.bf16.gmra.mxu0 %v5456
        %v7858 = vpop.f32.mrf.mxu0
        %v7859 = vadd.f32 %v7830, %v7858
        %v7860 = vpop.f32.mrf.mxu0
        %v7861 = vadd.f32 %v7832, %v7860
        %7862 = vmatmul.bf16.gmra.mxu0 %v5460
        %v7863 = vpop.f32.mrf.mxu0
        %v7864 = vadd.f32 %v7835, %v7863
        %v7865 = vpop.f32.mrf.mxu0
        %v7866 = vadd.f32 %v7837, %v7865
        %7867 = vmatmul.bf16.gmra.mxu0 %v5464
        %v7868 = vpop.f32.mrf.mxu0
        %v7869 = vadd.f32 %v7840, %v7868
        %v7870 = vpop.f32.mrf.mxu0
        %v7871 = vadd.f32 %v7842, %v7870
        %7872 = vdwg.mxu0
        %7873 = vmatpush.bf16.msra.mxu0 %v6682
        %7874 = vmatpush.bf16.msra.mxu0 %v6674
        %7875 = vmatpush.bf16.msra.mxu0 %v6666
        %7876 = vmatpush.bf16.msra.mxu0 %v6658
        %7877 = vmatpush.bf16.msra.mxu0 %v6650
        %7878 = vmatpush.bf16.msra.mxu0 %v6642
        %7879 = vmatpush.bf16.msra.mxu0 %v6634
        %7880 = vmatpush.bf16.msra.mxu0 %v6626
        %7881 = vmatmul.bf16.gmra.mxu0 %v5453
        %v7882 = vpop.f32.mrf.mxu0
        %v7883 = vadd.f32 %v7854, %v7882
        %v7884 = vpop.f32.mrf.mxu0
        %v7885 = vadd.f32 %v7856, %v7884
        %7886 = vmatmul.bf16.gmra.mxu0 %v5457
        %v7887 = vpop.f32.mrf.mxu0
        %v7888 = vadd.f32 %v7859, %v7887
        %v7889 = vpop.f32.mrf.mxu0
        %v7890 = vadd.f32 %v7861, %v7889
        %7891 = vmatmul.bf16.gmra.mxu0 %v5461
        %v7892 = vpop.f32.mrf.mxu0
        %v7893 = vadd.f32 %v7864, %v7892
        %v7894 = vpop.f32.mrf.mxu0
        %v7895 = vadd.f32 %v7866, %v7894
        %7896 = vmatmul.bf16.gmra.mxu0 %v5465
        %v7897 = vpop.f32.mrf.mxu0
        %v7898 = vadd.f32 %v7869, %v7897
        %v7899 = vpop.f32.mrf.mxu0
        %v7900 = vadd.f32 %v7871, %v7899
        %7901 = vdwg.mxu0
        %7902 = vmatpush.bf16.msra.mxu0 %v6746
        %7903 = vmatpush.bf16.msra.mxu0 %v6738
        %7904 = vmatpush.bf16.msra.mxu0 %v6730
        %7905 = vmatpush.bf16.msra.mxu0 %v6722
        %7906 = vmatpush.bf16.msra.mxu0 %v6714
        %7907 = vmatpush.bf16.msra.mxu0 %v6706
        %7908 = vmatpush.bf16.msra.mxu0 %v6698
        %7909 = vmatpush.bf16.msra.mxu0 %v6690
        %7910 = vmatmul.bf16.gmra.mxu0 %v5454
        %v7911 = vpop.f32.mrf.mxu0
        %v7912 = vadd.f32 %v7883, %v7911
        %v7913 = vpop.f32.mrf.mxu0
        %v7914 = vadd.f32 %v7885, %v7913
        %7915 = vmatmul.bf16.gmra.mxu0 %v5458
        %v7916 = vpop.f32.mrf.mxu0
        %v7917 = vadd.f32 %v7888, %v7916
        %v7918 = vpop.f32.mrf.mxu0
        %v7919 = vadd.f32 %v7890, %v7918
        %7920 = vmatmul.bf16.gmra.mxu0 %v5462
        %v7921 = vpop.f32.mrf.mxu0
        %v7922 = vadd.f32 %v7893, %v7921
        %v7923 = vpop.f32.mrf.mxu0
        %v7924 = vadd.f32 %v7895, %v7923
        %7925 = vmatmul.bf16.gmra.mxu0 %v5466
        %v7926 = vpop.f32.mrf.mxu0
        %v7927 = vadd.f32 %v7898, %v7926
        %v7928 = vpop.f32.mrf.mxu0
        %v7929 = vadd.f32 %v7900, %v7928
        %7930 = vdwg.mxu0
        %7931 = vst [vmem:[%s434] sm:$0xff] %v7100
        %7932 = vst [vmem:[%s434 + $0x8] sm:$0xff] %v7216
        %7933 = vst [vmem:[%s434 + $0x10] sm:$0xff] %v7332
        %7934 = vst [vmem:[%s434 + $0x18] sm:$0xff] %v7448
        %7935 = vst [vmem:[%s434 + $0x20] sm:$0xff] %v7564
        %7936 = vst [vmem:[%s434 + $0x28] sm:$0xff] %v7680
        %7937 = vst [vmem:[%s434 + $0x30] sm:$0xff] %v7796
        %7938 = vst [vmem:[%s434 + $0x38] sm:$0xff] %v7912
        %7939 = vst [vmem:[%s434 + $0x40] sm:$0xff] %v7102
        %7940 = vst [vmem:[%s434 + $0x48] sm:$0xff] %v7218
        %7941 = vst [vmem:[%s434 + $0x50] sm:$0xff] %v7334
        %7942 = vst [vmem:[%s434 + $0x58] sm:$0xff] %v7450
        %7943 = vst [vmem:[%s434 + $0x60] sm:$0xff] %v7566
        %7944 = vst [vmem:[%s434 + $0x68] sm:$0xff] %v7682
        %7945 = vst [vmem:[%s434 + $0x70] sm:$0xff] %v7798
        %7946 = vst [vmem:[%s434 + $0x78] sm:$0xff] %v7914
        %7947 = vst [vmem:[%s434 + $0x80] sm:$0xff] %v7105
        %7948 = vst [vmem:[%s434 + $0x88] sm:$0xff] %v7221
        %7949 = vst [vmem:[%s434 + $0x90] sm:$0xff] %v7337
        %7950 = vst [vmem:[%s434 + $0x98] sm:$0xff] %v7453
        %7951 = vst [vmem:[%s434 + $0xa0] sm:$0xff] %v7569
        %7952 = vst [vmem:[%s434 + $0xa8] sm:$0xff] %v7685
        %7953 = vst [vmem:[%s434 + $0xb0] sm:$0xff] %v7801
        %7954 = vst [vmem:[%s434 + $0xb8] sm:$0xff] %v7917
        %7955 = vst [vmem:[%s434 + $0xc0] sm:$0xff] %v7107
        %7956 = vst [vmem:[%s434 + $0xc8] sm:$0xff] %v7223
        %7957 = vst [vmem:[%s434 + $0xd0] sm:$0xff] %v7339
        %7958 = vst [vmem:[%s434 + $0xd8] sm:$0xff] %v7455
        %7959 = vst [vmem:[%s434 + $0xe0] sm:$0xff] %v7571
        %7960 = vst [vmem:[%s434 + $0xe8] sm:$0xff] %v7687
        %7961 = vst [vmem:[%s434 + $0xf0] sm:$0xff] %v7803
        %7962 = vst [vmem:[%s434 + $0xf8] sm:$0xff] %v7919
        %7963 = vst [vmem:[%s434 + $0x100] sm:$0xff] %v7110
        %7964 = vst [vmem:[%s434 + $0x108] sm:$0xff] %v7226
        %7965 = vst [vmem:[%s434 + $0x110] sm:$0xff] %v7342
        %7966 = vst [vmem:[%s434 + $0x118] sm:$0xff] %v7458
        %7967 = vst [vmem:[%s434 + $0x120] sm:$0xff] %v7574
        %7968 = vst [vmem:[%s434 + $0x128] sm:$0xff] %v7690
        %7969 = vst [vmem:[%s434 + $0x130] sm:$0xff] %v7806
        %7970 = vst [vmem:[%s434 + $0x138] sm:$0xff] %v7922
        %7971 = vst [vmem:[%s434 + $0x140] sm:$0xff] %v7112
        %7972 = vst [vmem:[%s434 + $0x148] sm:$0xff] %v7228
        %7973 = vst [vmem:[%s434 + $0x150] sm:$0xff] %v7344
        %7974 = vst [vmem:[%s434 + $0x158] sm:$0xff] %v7460
        %7975 = vst [vmem:[%s434 + $0x160] sm:$0xff] %v7576
        %7976 = vst [vmem:[%s434 + $0x168] sm:$0xff] %v7692
        %7977 = vst [vmem:[%s434 + $0x170] sm:$0xff] %v7808
        %7978 = vst [vmem:[%s434 + $0x178] sm:$0xff] %v7924
        %7979 = vst [vmem:[%s434 + $0x180] sm:$0xff] %v7115
        %7980 = vst [vmem:[%s434 + $0x188] sm:$0xff] %v7231
        %7981 = vst [vmem:[%s434 + $0x190] sm:$0xff] %v7347
        %7982 = vst [vmem:[%s434 + $0x198] sm:$0xff] %v7463
        %7983 = vst [vmem:[%s434 + $0x1a0] sm:$0xff] %v7579
        %7984 = vst [vmem:[%s434 + $0x1a8] sm:$0xff] %v7695
        %7985 = vst [vmem:[%s434 + $0x1b0] sm:$0xff] %v7811
        %7986 = vst [vmem:[%s434 + $0x1b8] sm:$0xff] %v7927
        %7987 = vst [vmem:[%s434 + $0x1c0] sm:$0xff] %v7117
        %7988 = vst [vmem:[%s434 + $0x1c8] sm:$0xff] %v7233
        %7989 = vst [vmem:[%s434 + $0x1d0] sm:$0xff] %v7349
        %7990 = vst [vmem:[%s434 + $0x1d8] sm:$0xff] %v7465
        %7991 = vst [vmem:[%s434 + $0x1e0] sm:$0xff] %v7581
        %7992 = vst [vmem:[%s434 + $0x1e8] sm:$0xff] %v7697
        %7993 = vst [vmem:[%s434 + $0x1f0] sm:$0xff] %v7813
        %7994 = vst [vmem:[%s434 + $0x1f8] sm:$0xff] %v7929
        %s7995 = smul.u32 8, %s24
        %p7996 = scmp.lt.s32.totalorder %s7995, 15
        %s7997 = scalar_select %p7996, %s7995, 15
        %s7998 = smul.addr %s7997, 8
        %s7999 = smul.addr %s7998, 8
        %s8000 = scalar_lea.vmem %s12, %s7999
        // Predicated region
        $region73: #{backbone_forward.1} parent=67 // pred_check
          %p8001 = pneg %p299
        $region74: #{backbone_forward.1} parent=67 // pred_check_branch
          %8003 = sbr.rel (%p8001) target = $region76
        $region75: #{backbone_forward.1} parent=67 // pred_region
          %s8004 = smul.u32 8, %s24
        $region76: #{backbone_forward.1} parent=67 // pred_fallthru
          _
      $region68: #{backbone_forward.1} parent=5 // pred_fallthru
        _
      %p8005 = scmp.le.s32.totalorder 2, %s19
      // Predicated region
      $region77: #{backbone_forward.1} parent=5 // pred_check
        %p8006 = pneg %p8005
      $region78: #{backbone_forward.1} parent=5 // pred_check_branch
        %8008 = sbr.rel (%p8006) target = $region80
      $region79: #{backbone_forward.1} parent=5 // pred_region
        %s8009 = ssub.s32 %s19, 2
        // Predicated region
        $region81: #{backbone_forward.1} parent=79 // pred_check
          %p8010 = pneg %p305
        $region82: #{backbone_forward.1} parent=79 // pred_check_branch
          %8012 = sbr.rel (%p8010) target = $region84
        $region83: #{backbone_forward.1} parent=79 // pred_region
          %s8013 = smul.u32 8, %s25
          %p8014 = scmp.lt.s32.totalorder %s8013, 15
          %s8015 = scalar_select %p8014, %s8013, 15
          %s8016 = smul.addr %s8015, 8
          %s8017 = smul.addr %s8016, 8
          %s8018 = scalar_lea.vmem %s12, %s8017
        $region84: #{backbone_forward.1} parent=79 // pred_fallthru
          _
      $region80: #{backbone_forward.1} parent=5 // pred_fallthru
        _
    $region6: #{backbone_forward.1} parent=1 // loop_footer
      %s23 = sadd.s32 1, %s19
    $region7: #{backbone_forward.1} parent=1 // loop_footer_branch
      %18 = sbr.rel target = $region3
    $region8: #{backbone_forward.1} parent=1 // loop_exit
      _
    %8019 = vsyncpa [#allocation3], 1
    %s8020 = scalar_lea.sflag [#allocation3], 1
    %8021 = vsyncpa %s8020, 1

</llo_original>
